<compile_context>
chip_gen: v7x
topology: tpu7x:2x2x1
jax: 0.10.0
libtpu: 0.0.40
codegen_flags: <defaults>
</compile_context>

<pallas_src>
import functools

import jax
import jax.numpy as jnp
from jax.experimental import pallas as pl
from jax.experimental.pallas import tpu as pltpu


# ----------------------------------------------------------------------------
# Pallas kernel: one grid step == block_t decoding time steps.
# ----------------------------------------------------------------------------
def _morpheme_ext_kernel(
    # streamed per-block input
    xproj_ref,                       # (TT, B, 4*dhid) bf16: emb@W_ih0^T + b_ih0 + b_hh0
    # resident inputs (constant index map -> stay in VMEM across the grid)
    eg_emb_ref,                      # (B, Tenc, 2*dhid) f32
    mask_ref,                        # (B, Tenc) f32   eg_mask + Wh_enc @ b_dec (bias folded)
    wh_enc_ref,                      # (B, Tenc, dhid) f32
    feat_ref,                        # (B, 2*dinp) f32 cat([vec, char_emb])
    zc_ref,                          # (B, dhid) f32   features @ Wz_f^T + bz
    rc_ref,                          # (B, dfeat) f32  features @ Wr_f^T + br
    w_hh0_ref,                       # (dhid, 4*dhid) bf16
    w_l1_ref,                        # (2*dhid, 4*dhid) bf16  [W_ih1^T ; W_hh1^T]
    b1_ref,                          # (1, 4*dhid) f32
    wra_ref, bra_ref,                # (2*dhid, dhid) bf16, (1, dhid) f32
    w_htop_ref,                      # (dhid, 3*dhid+dfeat) bf16 [Wdec|Wz_h|Wr_h|Wh_h]
    w_att_ref,                       # (dhid, dhid+dfeat)   bf16 [Wz_a|Wr_a]
    w_htfeat_ref,                    # (dfeat, dhid)        bf16 Wh[:, :dfeat]^T
    bht_ref,                         # (1, dhid) f32
    # outputs
    hseq_ref,                        # (TT, B, dhid) f32 block of (T_pad, B, dhid)
    hstate_ref,                      # (2, B, dhid) f32  resident -> recurrent state
    cstate_ref,                      # (2, B, dhid) f32  resident -> recurrent state
    *, block_t, n_valid_last,
):
    pid = pl.program_id(0)
    dhid = w_hh0_ref.shape[0]
    dfeat = rc_ref.shape[1]

    @pl.when(pid == 0)
    def _init():
        hstate_ref[...] = jnp.zeros_like(hstate_ref)
        cstate_ref[...] = jnp.zeros_like(cstate_ref)

    sig = jax.nn.sigmoid

    def mdot(a, w_ref):
        # bf16 MXU matmul with f32 accumulation; weights stay in VMEM refs and
        # are re-read at the point of use (keeps vreg live ranges short).
        return jnp.dot(a.astype(jnp.bfloat16), w_ref[...],
                       preferred_element_type=jnp.float32)

    not_last = pid < pl.num_programs(0) - 1     # only the last block has pad steps

    # recurrent state (carried in registers across the unrolled steps)
    h0 = hstate_ref[0]
    c0 = cstate_ref[0]
    h1 = hstate_ref[1]
    c1 = cstate_ref[1]

    for i in range(block_t):
        x_gates = xproj_ref[i].astype(jnp.float32)                  # (B, 4*dhid)

        # --- LSTM layer 0 (input projection + biases precomputed) ---
        g0 = x_gates + mdot(h0, w_hh0_ref)
        i0 = sig(g0[:, 0 * dhid:1 * dhid])
        f0 = sig(g0[:, 1 * dhid:2 * dhid])
        gg0 = jnp.tanh(g0[:, 2 * dhid:3 * dhid])
        o0 = sig(g0[:, 3 * dhid:4 * dhid])
        c0n = f0 * c0 + i0 * gg0
        h0n = o0 * jnp.tanh(c0n)

        # --- LSTM layer 1 (single fused push: [h0n | h1] @ [W_ih1^T ; W_hh1^T]) ---
        g1 = mdot(jnp.concatenate([h0n, h1], axis=1), w_l1_ref) + b1_ref[...]
        i1 = sig(g1[:, 0 * dhid:1 * dhid])
        f1 = sig(g1[:, 1 * dhid:2 * dhid])
        gg1 = jnp.tanh(g1[:, 2 * dhid:3 * dhid])
        o1 = sig(g1[:, 3 * dhid:4 * dhid])
        c1n = f1 * c1 + i1 * gg1
        h_top = o1 * jnp.tanh(c1n)

        # --- Fused h_top projection: [Wdec | Wz_h | Wr_h | Wh_h] (1 push) ---
        ht_all = mdot(h_top, w_htop_ref)                             # (B, 3*dhid+dfeat)
        wh_dec = ht_all[:, :dhid]
        z_h = ht_all[:, dhid:2 * dhid]
        r_h = ht_all[:, 2 * dhid:2 * dhid + dfeat]
        ht_h = ht_all[:, 2 * dhid + dfeat:]

        # --- Attention (W_dec bias folded into mask; VPU mul + XLU reduce) ---
        score = jnp.sum(wh_enc_ref[...] * wh_dec[:, None, :], axis=-1) + mask_ref[...]
        score = score - jnp.max(score, axis=1, keepdims=True)
        p = jnp.exp(score)
        prob = p * pl.reciprocal(jnp.sum(p, axis=1, keepdims=True), approx=True)
        att_raw = jnp.sum(prob[:, :, None] * eg_emb_ref[...], axis=1)  # (B, 2*dhid)
        att = mdot(att_raw, wra_ref) + bra_ref[...]                    # reshape_att

        # --- Gate (fused [Wz_a | Wr_a] push + K-fused feature push) ---
        att_all = mdot(att, w_att_ref)                               # (B, dhid+dfeat)
        z = sig(zc_ref[...] + att_all[:, :dhid] + z_h)
        r = sig(rc_ref[...] + att_all[:, dhid:] + r_h)               # (B, dfeat)
        feats_full = jnp.concatenate([feat_ref[...], att], axis=1)   # (B, dfeat)
        h_til = jnp.tanh(mdot(r * feats_full, w_htfeat_ref) + ht_h + bht_ref[...])
        h_new = (1.0 - z) * h_top + z * h_til

        hseq_ref[i] = h_new

        # Carry: only the statically-known trailing steps can be padding, and
        # only in the last grid block -> selects appear only for those steps.
        if i < n_valid_last:
            h0, c0, h1, c1 = h0n, c0n, h_new, c1n
        else:
            h0 = jnp.where(not_last, h0n, h0)
            c0 = jnp.where(not_last, c0n, c0)
            h1 = jnp.where(not_last, h_new, h1)
            c1 = jnp.where(not_last, c1n, c1)

    hstate_ref[0] = h0
    cstate_ref[0] = c0
    hstate_ref[1] = h1
    cstate_ref[1] = c1


# ----------------------------------------------------------------------------
# JAX wrapper: hoisted matmuls, output-axis weight fusion, bf16 casts,
# pallas_call, and the readout applied once to the whole output sequence.
# ----------------------------------------------------------------------------
@functools.partial(jax.jit, static_argnames=("block_t",))
def morpheme_ext_forward(params, input_ids, vec, char_emb, eg_emb_tb, eg_mask_tb,
                         block_t=8):
    f32 = lambda a: jnp.asarray(a, jnp.float32)
    bf = lambda a: a.astype(jnp.bfloat16)
    dinp = params["embedding"].shape[1]
    dhid = params["w_hh0"].shape[1]
    ntoken = params["readout_w"].shape[0]
    nlayers = 2
    B = input_ids.shape[1]
    dfeat_wv = 2 * dinp                 # [vec, char_emb]
    dfeat = dfeat_wv + dhid             # + att_result (use_eg)

    vec = f32(vec)
    char_emb = f32(char_emb)
    eg_emb_tb = f32(eg_emb_tb)
    eg_mask_tb = f32(eg_mask_tb)

    # ---- hoisted time-invariant work ----
    # seed_vec = vec (use_wordvec, not use_morpheme); seed_feeding=True
    tok_emb = jnp.take(f32(params["embedding"]), input_ids, axis=0)   # (T_in, B, dinp)
    emb = jnp.concatenate([vec[None], tok_emb], axis=0)               # (T, B, dinp)
    T = emb.shape[0]

    # layer-0 input projection for ALL timesteps in one big matmul -> bf16 stream
    b0 = f32(params["b_ih0"] + params["b_hh0"])
    x_proj = bf(jnp.einsum("tbd,gd->tbg", emb, f32(params["w_ih0"])) + b0)

    n_blocks = (T + block_t - 1) // block_t
    t_pad = n_blocks * block_t
    if t_pad != T:
        x_proj = jnp.concatenate(
            [x_proj, jnp.zeros((t_pad - T, B, 4 * dhid), x_proj.dtype)], axis=0)
    n_valid_last = T - (n_blocks - 1) * block_t    # static: valid steps in last block

    # Attention.map_enc_states + fold W_dec bias into the mask
    wh_enc = (jnp.einsum("tbe,ae->tba", eg_emb_tb, f32(params["att_Wenc_w"]))
              + f32(params["att_Wenc_b"])).transpose(1, 0, 2)          # (B, Tenc, dhid)
    eg_emb_b = eg_emb_tb.transpose(1, 0, 2)                            # (B, Tenc, 2*dhid)
    mask_b = eg_mask_tb.T + jnp.einsum("btd,d->bt", wh_enc, f32(params["att_Wdec_b"]))

    # Gate: split weights by input block [features | att | h]; hoist feat terms
    features = jnp.concatenate([vec, char_emb], axis=1)                # (B, 2*dinp)
    wz = f32(params["gate_z_w"])
    wr = f32(params["gate_r_w"])
    wh = f32(params["gate_h_w"])
    wz_f, wz_a, wz_h = wz[:, :dfeat_wv], wz[:, dfeat_wv:dfeat], wz[:, dfeat:]
    wr_f, wr_a, wr_h = wr[:, :dfeat_wv], wr[:, dfeat_wv:dfeat], wr[:, dfeat:]
    wh_feat, wh_h = wh[:, :dfeat], wh[:, dfeat:]
    z_const = features @ wz_f.T + f32(params["gate_z_b"])              # (B, dhid)
    r_const = features @ wr_f.T + f32(params["gate_r_b"])              # (B, dfeat)

    # ---- output-axis weight fusion (fewer MXU pushes per step) ----
    w_htop = jnp.concatenate(
        [f32(params["att_Wdec_w"]).T, wz_h.T, wr_h.T, wh_h.T], axis=1)  # (dhid, 3*dhid+dfeat)
    w_att = jnp.concatenate([wz_a.T, wr_a.T], axis=1)                   # (dhid, dhid+dfeat)
    w_l1 = jnp.concatenate(
        [f32(params["w_ih1"]).T, f32(params["w_hh1"]).T], axis=0)       # (2*dhid, 4*dhid)

    kernel_inputs = [
        x_proj,
        eg_emb_b, mask_b, wh_enc, features, z_const, r_const,
        bf(f32(params["w_hh0"]).T), bf(w_l1),
        f32(params["b_ih1"] + params["b_hh1"]).reshape(1, -1),
        bf(f32(params["reshape_att_w"]).T), f32(params["reshape_att_b"]).reshape(1, -1),
        bf(w_htop), bf(w_att), bf(wh_feat.T),
        f32(params["gate_h_b"]).reshape(1, -1),
    ]

    def resident_spec(arr):
        nd = arr.ndim
        return pl.BlockSpec(arr.shape, lambda g, nd=nd: (0,) * nd)

    in_specs = [pl.BlockSpec((block_t, B, 4 * dhid), lambda g: (g, 0, 0))]
    in_specs += [resident_spec(a) for a in kernel_inputs[1:]]

    out_shape = (
        jax.ShapeDtypeStruct((t_pad, B, dhid), jnp.float32),
        jax.ShapeDtypeStruct((nlayers, B, dhid), jnp.float32),
        jax.ShapeDtypeStruct((nlayers, B, dhid), jnp.float32),
    )
    out_specs = (
        pl.BlockSpec((block_t, B, dhid), lambda g: (g, 0, 0)),
        pl.BlockSpec((nlayers, B, dhid), lambda g: (0, 0, 0)),
        pl.BlockSpec((nlayers, B, dhid), lambda g: (0, 0, 0)),
    )

    # VMEM budget from actual shapes, capped by the physical per-core VMEM.
    def nbytes(a):
        return int(a.size) * jnp.dtype(a.dtype).itemsize
    stream_bytes = 2 * nbytes(x_proj[:block_t])                 # double-buffered input block
    out_blk_bytes = 2 * block_t * B * dhid * 4                  # double-buffered hseq block
    resident_bytes = (sum(nbytes(a) for a in kernel_inputs[1:])
                      + 2 * nlayers * B * dhid * 4)
    need = stream_bytes + out_blk_bytes + resident_bytes
    try:
        phys = int(pltpu.get_tpu_info().vmem_capacity_bytes)
    except Exception:
        phys = 64 * 1024 * 1024                                  # v7x per-core floor
    vmem_limit = int(min(phys - (2 << 20),
                         max(32 * 1024 * 1024, 2 * need + (8 << 20))))

    kernel = functools.partial(_morpheme_ext_kernel,
                               block_t=block_t, n_valid_last=n_valid_last)

    hseq, h_final, c_final = pl.pallas_call(
        kernel,
        out_shape=out_shape,
        grid_spec=pltpu.PrefetchScalarGridSpec(
            num_scalar_prefetch=0,
            grid=(n_blocks,),
            in_specs=in_specs,
            out_specs=out_specs,
        ),
        compiler_params=pltpu.CompilerParams(
            dimension_semantics=("arbitrary",),   # recurrence: sequential grid
            vmem_limit_bytes=vmem_limit),
    )(*kernel_inputs)

    # Readout hoisted out of the serial loop: one (T*B, dhid) x (dhid, ntoken) matmul.
    hseq = hseq[:T]
    decoded = (hseq.reshape(T * B, dhid) @ f32(params["readout_w"]).T
               + f32(params["readout_b"])).reshape(T, B, ntoken)
    return decoded, (h_final, c_final)


# ----------------------------------------------------------------------------
# Pure-JAX reference (mirrors the PyTorch forward, dropout=0, teacher forcing)
# ----------------------------------------------------------------------------
def reference_forward(params, input_ids, vec, char_emb, eg_emb_tb, eg_mask_tb):
    dhid = params["w_hh0"].shape[1]
    sigmoid = jax.nn.sigmoid

    def linear(x, w, b):
        return x @ w.T + b

    def lstm_cell(x, h, c, w_ih, w_hh, b_ih, b_hh):
        g = x @ w_ih.T + b_ih + h @ w_hh.T + b_hh
        i, f, gg, o = (sigmoid(g[:, :dhid]), sigmoid(g[:, dhid:2 * dhid]),
                       jnp.tanh(g[:, 2 * dhid:3 * dhid]), sigmoid(g[:, 3 * dhid:]))
        c_new = f * c + i * gg
        return o * jnp.tanh(c_new), c_new

    tok_emb = jnp.take(params["embedding"], input_ids, axis=0)
    emb = jnp.concatenate([vec[None], tok_emb], axis=0)
    features = jnp.concatenate([vec, char_emb], axis=1)

    wh_enc = (jnp.einsum("tbe,ae->tba", eg_emb_tb, params["att_Wenc_w"])
              + params["att_Wenc_b"]).transpose(1, 0, 2)
    h_enc_b = eg_emb_tb.transpose(1, 0, 2)
    mask_b = eg_mask_tb.T

    B = input_ids.shape[1]
    h = [jnp.zeros((B, dhid)), jnp.zeros((B, dhid))]
    c = [jnp.zeros((B, dhid)), jnp.zeros((B, dhid))]
    outs = []
    for t in range(emb.shape[0]):
        x = emb[t]
        h[0], c[0] = lstm_cell(x, h[0], c[0], params["w_ih0"], params["w_hh0"],
                               params["b_ih0"], params["b_hh0"])
        h[1], c[1] = lstm_cell(h[0], h[1], c[1], params["w_ih1"], params["w_hh1"],
                               params["b_ih1"], params["b_hh1"])
        # attention
        wh_dec = linear(h[1], params["att_Wdec_w"], params["att_Wdec_b"])
        score = jnp.sum(wh_enc * wh_dec[:, None, :], axis=-1) + mask_b
        prob = jax.nn.softmax(score, axis=1)
        att = jnp.sum(prob[:, :, None] * h_enc_b, axis=1)
        att = linear(att, params["reshape_att_w"], params["reshape_att_b"])
        # gate
        gate_feat = jnp.concatenate([features, att], axis=1)
        fh = jnp.concatenate([gate_feat, h[1]], axis=1)
        z = sigmoid(linear(fh, params["gate_z_w"], params["gate_z_b"]))
        r = sigmoid(linear(fh, params["gate_r_w"], params["gate_r_b"]))
        rfh = jnp.concatenate([r * gate_feat, h[1]], axis=1)
        h_tilde = jnp.tanh(linear(rfh, params["gate_h_w"], params["gate_h_b"]))
        h[1] = (1 - z) * h[1] + z * h_tilde
        outs.append(h[1])
    outs = jnp.stack(outs, axis=0)
    decoded = outs @ params["readout_w"].T + params["readout_b"]
    return decoded, (jnp.stack(h), jnp.stack(c))


# ----------------------------------------------------------------------------
# Deterministic parameter / input construction
# ----------------------------------------------------------------------------
def make_params(key, ntoken, dinp, dhid, dfeat):
    ks = iter(jax.random.split(key, 32))
    u = lambda shape, a=0.1: jax.random.uniform(next(ks), shape, jnp.float32, -a, a)
    z = lambda shape: jnp.zeros(shape, jnp.float32)
    return {
        "embedding": u((ntoken, dinp)),
        "w_ih0": u((4 * dhid, dinp)), "w_hh0": u((4 * dhid, dhid)),
        "b_ih0": u((4 * dhid,)), "b_hh0": u((4 * dhid,)),
        "w_ih1": u((4 * dhid, dhid)), "w_hh1": u((4 * dhid, dhid)),
        "b_ih1": u((4 * dhid,)), "b_hh1": u((4 * dhid,)),
        "att_Wenc_w": u((dhid, 2 * dhid)), "att_Wenc_b": z((dhid,)),
        "att_Wdec_w": u((dhid, dhid)), "att_Wdec_b": z((dhid,)),
        "reshape_att_w": u((dhid, 2 * dhid)), "reshape_att_b": z((dhid,)),
        "gate_z_w": u((dhid, dhid + dfeat)), "gate_z_b": z((dhid,)),
        "gate_r_w": u((dfeat, dhid + dfeat)), "gate_r_b": z((dfeat,)),
        "gate_h_w": u((dhid, dhid + dfeat)), "gate_h_b": z((dhid,)),
        "readout_w": u((ntoken, dhid)), "readout_b": z((ntoken,)),
    }


if __name__ == "__main__":
    # small shapes; T = T_in + 1 = 14 -> 2 grid blocks of 8 (exercises the
    # cross-block state carry AND the trailing-pad masking).
    ntoken, dinp, dhid = 50, 32, 32          # dinp == dhid (tie-compatible)
    B, T_in, Tenc = 2, 13, 8
    dfeat = dhid + 2 * dinp                  # use_eg (dhid) + wordvec (dinp+dinp)

    key = jax.random.PRNGKey(0)
    kp, k1, k2, k3, k4 = jax.random.split(key, 5)
    params = make_params(kp, ntoken, dinp, dhid, dfeat)

    input_ids = jax.random.randint(k1, (T_in, B), 0, ntoken)           # (T_in, B)
    vec = jax.random.normal(k2, (B, dinp), jnp.float32)                # word vector
    char_emb = jax.random.normal(k3, (B, dinp), jnp.float32)           # char embedding
    eg_emb_tb = jax.random.normal(k4, (Tenc, B, 2 * dhid), jnp.float32)  # encoder states
    lengths = jnp.array([6, 8])
    eg_mask_tb = jnp.where(jnp.arange(Tenc)[:, None] < lengths[None, :],
                           0.0, -1e9).astype(jnp.float32)              # (Tenc, B)

    decoded, (h_f, c_f) = morpheme_ext_forward(
        params, input_ids, vec, char_emb, eg_emb_tb, eg_mask_tb)
    jax.block_until_ready(decoded)

    dec_ref, (h_ref, c_ref) = reference_forward(
        params, input_ids, vec, char_emb, eg_emb_tb, eg_mask_tb)

    err = max(float(jnp.max(jnp.abs(decoded - dec_ref))),
              float(jnp.max(jnp.abs(h_f - h_ref))),
              float(jnp.max(jnp.abs(c_f - c_ref))))
    # Tolerance 5e-2 (vs 1e-2 previously): the kernel now runs bf16 weights and
    # a bf16 input-projection stream on the MXU (f32 accumulation / state math),
    # as requested by the performance review; the f32 reference stays exact.
    if err > 5e-2:
        raise RuntimeError(f"Pallas kernel mismatch vs reference: max abs err {err}")
    print("KERNEL_OK")
</pallas_src>

<mosaic_0001>
module attributes {stable_mosaic.version = 11 : i64} {
  func.func @_morpheme_ext_kernel(%arg0: i32, %arg1: memref<8x2x128xbf16, #tpu.memory_space<vmem>>, %arg2: memref<2x8x64xf32, #tpu.memory_space<vmem>>, %arg3: memref<2x8xf32, #tpu.memory_space<vmem>>, %arg4: memref<2x8x32xf32, #tpu.memory_space<vmem>>, %arg5: memref<2x64xf32, #tpu.memory_space<vmem>>, %arg6: memref<2x32xf32, #tpu.memory_space<vmem>>, %arg7: memref<2x96xf32, #tpu.memory_space<vmem>>, %arg8: memref<32x128xbf16, #tpu.memory_space<vmem>>, %arg9: memref<64x128xbf16, #tpu.memory_space<vmem>>, %arg10: memref<1x128xf32, #tpu.memory_space<vmem>>, %arg11: memref<64x32xbf16, #tpu.memory_space<vmem>>, %arg12: memref<1x32xf32, #tpu.memory_space<vmem>>, %arg13: memref<32x192xbf16, #tpu.memory_space<vmem>>, %arg14: memref<32x128xbf16, #tpu.memory_space<vmem>>, %arg15: memref<96x32xbf16, #tpu.memory_space<vmem>>, %arg16: memref<1x32xf32, #tpu.memory_space<vmem>>, %arg17: memref<8x2x32xf32, #tpu.memory_space<vmem>>, %arg18: memref<2x2x32xf32, #tpu.memory_space<vmem>>, %arg19: memref<2x2x32xf32, #tpu.memory_space<vmem>>) attributes {dimension_semantics = [#tpu.dimension_semantics<arbitrary>], iteration_bounds = array<i64: 2>, scalar_prefetch = 0 : i64, scratch_operands = 0 : i64, tpu.core_type = #tpu.core_type<tc>, window_params = [{transform_indices = @transform_0, window_bounds = array<i64: 8, 2, 128>}, {pipeline_mode = #tpu.pipeline_mode<synchronous>, transform_indices = @transform_1, window_bounds = array<i64: 2, 8, 64>}, {pipeline_mode = #tpu.pipeline_mode<synchronous>, transform_indices = @transform_2, window_bounds = array<i64: 2, 8>}, {pipeline_mode = #tpu.pipeline_mode<synchronous>, transform_indices = @transform_3, window_bounds = array<i64: 2, 8, 32>}, {pipeline_mode = #tpu.pipeline_mode<synchronous>, transform_indices = @transform_4, window_bounds = array<i64: 2, 64>}, {pipeline_mode = #tpu.pipeline_mode<synchronous>, transform_indices = @transform_5, window_bounds = array<i64: 2, 32>}, {pipeline_mode = #tpu.pipeline_mode<synchronous>, transform_indices = @transform_6, window_bounds = array<i64: 2, 96>}, {pipeline_mode = #tpu.pipeline_mode<synchronous>, transform_indices = @transform_7, window_bounds = array<i64: 32, 128>}, {pipeline_mode = #tpu.pipeline_mode<synchronous>, transform_indices = @transform_8, window_bounds = array<i64: 64, 128>}, {pipeline_mode = #tpu.pipeline_mode<synchronous>, transform_indices = @transform_9, window_bounds = array<i64: 1, 128>}, {pipeline_mode = #tpu.pipeline_mode<synchronous>, transform_indices = @transform_10, window_bounds = array<i64: 64, 32>}, {pipeline_mode = #tpu.pipeline_mode<synchronous>, transform_indices = @transform_11, window_bounds = array<i64: 1, 32>}, {pipeline_mode = #tpu.pipeline_mode<synchronous>, transform_indices = @transform_12, window_bounds = array<i64: 32, 192>}, {pipeline_mode = #tpu.pipeline_mode<synchronous>, transform_indices = @transform_13, window_bounds = array<i64: 32, 128>}, {pipeline_mode = #tpu.pipeline_mode<synchronous>, transform_indices = @transform_14, window_bounds = array<i64: 96, 32>}, {pipeline_mode = #tpu.pipeline_mode<synchronous>, transform_indices = @transform_15, window_bounds = array<i64: 1, 32>}, {transform_indices = @transform_16, window_bounds = array<i64: 8, 2, 32>}, {pipeline_mode = #tpu.pipeline_mode<synchronous>, transform_indices = @transform_17, window_bounds = array<i64: 2, 2, 32>}, {pipeline_mode = #tpu.pipeline_mode<synchronous>, transform_indices = @transform_18, window_bounds = array<i64: 2, 2, 32>}]} {
    %c0_i32 = arith.constant 0 : i32
    %0 = arith.cmpi eq, %arg0, %c0_i32 : i32
    %1 = arith.extui %0 : i1 to i32
    %c0_i32_0 = arith.constant 0 : i32
    %2 = arith.cmpi ne, %1, %c0_i32_0 : i32
    scf.if %2 {
      %cst_472 = arith.constant 0.000000e+00 : f32
      %1144 = vector.broadcast %cst_472 : f32 to vector<2x2x32xf32>
      %c0_473 = arith.constant 0 : index
      %c0_474 = arith.constant 0 : index
      %c0_475 = arith.constant 0 : index
      %1145 = vector.load %arg18[%c0_473, %c0_474, %c0_475] : memref<2x2x32xf32, #tpu.memory_space<vmem>>, vector<2x2x32xf32>
      tpu.vector_store %arg18[%c0_473, %c0_474, %c0_475], %1144 {strides = array<i32>} : memref<2x2x32xf32, #tpu.memory_space<vmem>>, vector<2x2x32xf32>,
      %cst_476 = arith.constant 0.000000e+00 : f32
      %1146 = vector.broadcast %cst_476 : f32 to vector<2x2x32xf32>
      %c0_477 = arith.constant 0 : index
      %c0_478 = arith.constant 0 : index
      %c0_479 = arith.constant 0 : index
      %1147 = vector.load %arg19[%c0_477, %c0_478, %c0_479] : memref<2x2x32xf32, #tpu.memory_space<vmem>>, vector<2x2x32xf32>
      tpu.vector_store %arg19[%c0_477, %c0_478, %c0_479], %1146 {strides = array<i32>} : memref<2x2x32xf32, #tpu.memory_space<vmem>>, vector<2x2x32xf32>,
    } else {
    }
    %c1_i32 = arith.constant 1 : i32
    %3 = arith.cmpi slt, %arg0, %c1_i32 : i32
    %c0 = arith.constant 0 : index
    %c0_1 = arith.constant 0 : index
    %c0_2 = arith.constant 0 : index
    %4 = vector.load %arg18[%c0, %c0_1, %c0_2] : memref<2x2x32xf32, #tpu.memory_space<vmem>>, vector<1x2x32xf32>
    %5 = vector.shape_cast %4 : vector<1x2x32xf32> to vector<2x32xf32>
    %c0_3 = arith.constant 0 : index
    %c0_4 = arith.constant 0 : index
    %c0_5 = arith.constant 0 : index
    %6 = vector.load %arg19[%c0_3, %c0_4, %c0_5] : memref<2x2x32xf32, #tpu.memory_space<vmem>>, vector<1x2x32xf32>
    %7 = vector.shape_cast %6 : vector<1x2x32xf32> to vector<2x32xf32>
    %c1 = arith.constant 1 : index
    %c0_6 = arith.constant 0 : index
    %c0_7 = arith.constant 0 : index
    %8 = vector.load %arg18[%c1, %c0_6, %c0_7] : memref<2x2x32xf32, #tpu.memory_space<vmem>>, vector<1x2x32xf32>
    %9 = vector.shape_cast %8 : vector<1x2x32xf32> to vector<2x32xf32>
    %c1_8 = arith.constant 1 : index
    %c0_9 = arith.constant 0 : index
    %c0_10 = arith.constant 0 : index
    %10 = vector.load %arg19[%c1_8, %c0_9, %c0_10] : memref<2x2x32xf32, #tpu.memory_space<vmem>>, vector<1x2x32xf32>
    %11 = vector.shape_cast %10 : vector<1x2x32xf32> to vector<2x32xf32>
    %c0_11 = arith.constant 0 : index
    %c0_12 = arith.constant 0 : index
    %c0_13 = arith.constant 0 : index
    %12 = vector.load %arg1[%c0_11, %c0_12, %c0_13] : memref<8x2x128xbf16, #tpu.memory_space<vmem>>, vector<1x2x128xbf16>
    %13 = vector.shape_cast %12 : vector<1x2x128xbf16> to vector<2x128xbf16>
    %14 = arith.extf %13 : vector<2x128xbf16> to vector<2x128xf32>
    %15 = arith.truncf %5 : vector<2x32xf32> to vector<2x32xbf16>
    %c0_14 = arith.constant 0 : index
    %c0_15 = arith.constant 0 : index
    %16 = vector.load %arg8[%c0_14, %c0_15] : memref<32x128xbf16, #tpu.memory_space<vmem>>, vector<32x128xbf16>
    %cst = arith.constant dense<0.000000e+00> : vector<2x128xf32>
    %17 = tpu.matmul %15, %16, %cst {dimension_numbers = #tpu.dot_dimension_numbers<[1], [0], [0], [1], [0, 0, 1, 1], [], []>} : vector<2x32xbf16>, vector<32x128xbf16>, vector<2x128xf32> -> vector<2x128xf32>
    %18 = arith.addf %14, %17 : vector<2x128xf32>
    %19 = vector.extract_strided_slice %18 {offsets = [0, 0], sizes = [2, 32], strides = [1, 1]} : vector<2x128xf32> to vector<2x32xf32>
    %20 = arith.negf %19 : vector<2x32xf32>
    %21 = math.exp %20 : vector<2x32xf32>
    %cst_16 = arith.constant 1.000000e+00 : f32
    %22 = vector.broadcast %cst_16 : f32 to vector<2x32xf32>
    %23 = arith.addf %22, %21 : vector<2x32xf32>
    %24 = arith.divf %22, %23 : vector<2x32xf32>
    %25 = vector.extract_strided_slice %18 {offsets = [0, 32], sizes = [2, 32], strides = [1, 1]} : vector<2x128xf32> to vector<2x32xf32>
    %26 = arith.negf %25 : vector<2x32xf32>
    %27 = math.exp %26 : vector<2x32xf32>
    %cst_17 = arith.constant 1.000000e+00 : f32
    %28 = vector.broadcast %cst_17 : f32 to vector<2x32xf32>
    %29 = arith.addf %28, %27 : vector<2x32xf32>
    %30 = arith.divf %28, %29 : vector<2x32xf32>
    %31 = vector.extract_strided_slice %18 {offsets = [0, 64], sizes = [2, 32], strides = [1, 1]} : vector<2x128xf32> to vector<2x32xf32>
    %32 = math.tanh %31 : vector<2x32xf32>
    %33 = vector.extract_strided_slice %18 {offsets = [0, 96], sizes = [2, 32], strides = [1, 1]} : vector<2x128xf32> to vector<2x32xf32>
    %34 = arith.negf %33 : vector<2x32xf32>
    %35 = math.exp %34 : vector<2x32xf32>
    %cst_18 = arith.constant 1.000000e+00 : f32
    %36 = vector.broadcast %cst_18 : f32 to vector<2x32xf32>
    %37 = arith.addf %36, %35 : vector<2x32xf32>
    %38 = arith.divf %36, %37 : vector<2x32xf32>
    %39 = arith.mulf %30, %7 : vector<2x32xf32>
    %40 = arith.mulf %24, %32 : vector<2x32xf32>
    %41 = arith.addf %39, %40 : vector<2x32xf32>
    %42 = math.tanh %41 : vector<2x32xf32>
    %43 = arith.mulf %38, %42 : vector<2x32xf32>
    %44 = tpu.concatenate %43, %9 in 1 : vector<2x32xf32>, vector<2x32xf32> -> vector<2x64xf32>
    %45 = arith.truncf %44 : vector<2x64xf32> to vector<2x64xbf16>
    %c0_19 = arith.constant 0 : index
    %c0_20 = arith.constant 0 : index
    %46 = vector.load %arg9[%c0_19, %c0_20] : memref<64x128xbf16, #tpu.memory_space<vmem>>, vector<64x128xbf16>
    %cst_21 = arith.constant dense<0.000000e+00> : vector<2x128xf32>
    %47 = tpu.matmul %45, %46, %cst_21 {dimension_numbers = #tpu.dot_dimension_numbers<[1], [0], [0], [1], [0, 0, 1, 1], [], []>} : vector<2x64xbf16>, vector<64x128xbf16>, vector<2x128xf32> -> vector<2x128xf32>
    %c0_22 = arith.constant 0 : index
    %c0_23 = arith.constant 0 : index
    %48 = vector.load %arg10[%c0_22, %c0_23] : memref<1x128xf32, #tpu.memory_space<vmem>>, vector<1x128xf32>
    %49 = vector.broadcast %48 : vector<1x128xf32> to vector<2x128xf32>
    %50 = arith.addf %47, %49 : vector<2x128xf32>
    %51 = vector.extract_strided_slice %50 {offsets = [0, 0], sizes = [2, 32], strides = [1, 1]} : vector<2x128xf32> to vector<2x32xf32>
    %52 = arith.negf %51 : vector<2x32xf32>
    %53 = math.exp %52 : vector<2x32xf32>
    %cst_24 = arith.constant 1.000000e+00 : f32
    %54 = vector.broadcast %cst_24 : f32 to vector<2x32xf32>
    %55 = arith.addf %54, %53 : vector<2x32xf32>
    %56 = arith.divf %54, %55 : vector<2x32xf32>
    %57 = vector.extract_strided_slice %50 {offsets = [0, 32], sizes = [2, 32], strides = [1, 1]} : vector<2x128xf32> to vector<2x32xf32>
    %58 = arith.negf %57 : vector<2x32xf32>
    %59 = math.exp %58 : vector<2x32xf32>
    %cst_25 = arith.constant 1.000000e+00 : f32
    %60 = vector.broadcast %cst_25 : f32 to vector<2x32xf32>
    %61 = arith.addf %60, %59 : vector<2x32xf32>
    %62 = arith.divf %60, %61 : vector<2x32xf32>
    %63 = vector.extract_strided_slice %50 {offsets = [0, 64], sizes = [2, 32], strides = [1, 1]} : vector<2x128xf32> to vector<2x32xf32>
    %64 = math.tanh %63 : vector<2x32xf32>
    %65 = vector.extract_strided_slice %50 {offsets = [0, 96], sizes = [2, 32], strides = [1, 1]} : vector<2x128xf32> to vector<2x32xf32>
    %66 = arith.negf %65 : vector<2x32xf32>
    %67 = math.exp %66 : vector<2x32xf32>
    %cst_26 = arith.constant 1.000000e+00 : f32
    %68 = vector.broadcast %cst_26 : f32 to vector<2x32xf32>
    %69 = arith.addf %68, %67 : vector<2x32xf32>
    %70 = arith.divf %68, %69 : vector<2x32xf32>
    %71 = arith.mulf %62, %11 : vector<2x32xf32>
    %72 = arith.mulf %56, %64 : vector<2x32xf32>
    %73 = arith.addf %71, %72 : vector<2x32xf32>
    %74 = math.tanh %73 : vector<2x32xf32>
    %75 = arith.mulf %70, %74 : vector<2x32xf32>
    %76 = arith.truncf %75 : vector<2x32xf32> to vector<2x32xbf16>
    %c0_27 = arith.constant 0 : index
    %c0_28 = arith.constant 0 : index
    %77 = vector.load %arg13[%c0_27, %c0_28] : memref<32x192xbf16, #tpu.memory_space<vmem>>, vector<32x192xbf16>
    %cst_29 = arith.constant dense<0.000000e+00> : vector<2x192xf32>
    %78 = tpu.matmul %76, %77, %cst_29 {dimension_numbers = #tpu.dot_dimension_numbers<[1], [0], [0], [1], [0, 0, 1, 1], [], []>} : vector<2x32xbf16>, vector<32x192xbf16>, vector<2x192xf32> -> vector<2x192xf32>
    %79 = vector.extract_strided_slice %78 {offsets = [0, 0], sizes = [2, 32], strides = [1, 1]} : vector<2x192xf32> to vector<2x32xf32>
    %80 = vector.extract_strided_slice %78 {offsets = [0, 32], sizes = [2, 32], strides = [1, 1]} : vector<2x192xf32> to vector<2x32xf32>
    %81 = vector.extract_strided_slice %78 {offsets = [0, 64], sizes = [2, 96], strides = [1, 1]} : vector<2x192xf32> to vector<2x96xf32>
    %82 = vector.extract_strided_slice %78 {offsets = [0, 160], sizes = [2, 32], strides = [1, 1]} : vector<2x192xf32> to vector<2x32xf32>
    %c0_30 = arith.constant 0 : index
    %c0_31 = arith.constant 0 : index
    %c0_32 = arith.constant 0 : index
    %83 = vector.load %arg4[%c0_30, %c0_31, %c0_32] : memref<2x8x32xf32, #tpu.memory_space<vmem>>, vector<2x8x32xf32>
    %84 = vector.shape_cast %79 : vector<2x32xf32> to vector<2x1x32xf32>
    %85 = vector.broadcast %84 : vector<2x1x32xf32> to vector<2x8x32xf32>
    %86 = arith.mulf %83, %85 : vector<2x8x32xf32>
    %cst_33 = arith.constant dense<0.000000e+00> : vector<2x8xf32>
    %87 = vector.multi_reduction <add>, %86, %cst_33 [2] : vector<2x8x32xf32> to vector<2x8xf32>
    %c0_34 = arith.constant 0 : index
    %c0_35 = arith.constant 0 : index
    %88 = vector.load %arg3[%c0_34, %c0_35] : memref<2x8xf32, #tpu.memory_space<vmem>>, vector<2x8xf32>
    %89 = arith.addf %87, %88 : vector<2x8xf32>
    %cst_36 = arith.constant dense<0xFF800000> : vector<2xf32>
    %90 = vector.multi_reduction <maximumf>, %89, %cst_36 [1] : vector<2x8xf32> to vector<2xf32>
    %91 = vector.shape_cast %90 : vector<2xf32> to vector<2x1xf32>
    %92 = vector.broadcast %91 : vector<2x1xf32> to vector<2x8xf32>
    %93 = arith.subf %89, %92 : vector<2x8xf32>
    %94 = math.exp %93 : vector<2x8xf32>
    %cst_37 = arith.constant dense<0.000000e+00> : vector<2xf32>
    %95 = vector.multi_reduction <add>, %94, %cst_37 [1] : vector<2x8xf32> to vector<2xf32>
    %96 = vector.shape_cast %95 : vector<2xf32> to vector<2x1xf32>
    %97 = tpu.reciprocal %96 {approx = true} : vector<2x1xf32> -> vector<2x1xf32>
    %98 = vector.broadcast %97 : vector<2x1xf32> to vector<2x8xf32>
    %99 = arith.mulf %94, %98 : vector<2x8xf32>
    %100 = vector.shape_cast %99 : vector<2x8xf32> to vector<2x8x1xf32>
    %c0_38 = arith.constant 0 : index
    %c0_39 = arith.constant 0 : index
    %c0_40 = arith.constant 0 : index
    %101 = vector.load %arg2[%c0_38, %c0_39, %c0_40] : memref<2x8x64xf32, #tpu.memory_space<vmem>>, vector<2x8x64xf32>
    %102 = vector.broadcast %100 : vector<2x8x1xf32> to vector<2x8x64xf32>
    %103 = arith.mulf %102, %101 : vector<2x8x64xf32>
    %cst_41 = arith.constant dense<0.000000e+00> : vector<2x64xf32>
    %104 = vector.multi_reduction <add>, %103, %cst_41 [1] : vector<2x8x64xf32> to vector<2x64xf32>
    %105 = arith.truncf %104 : vector<2x64xf32> to vector<2x64xbf16>
    %c0_42 = arith.constant 0 : index
    %c0_43 = arith.constant 0 : index
    %106 = vector.load %arg11[%c0_42, %c0_43] : memref<64x32xbf16, #tpu.memory_space<vmem>>, vector<64x32xbf16>
    %cst_44 = arith.constant dense<0.000000e+00> : vector<2x32xf32>
    %107 = tpu.matmul %105, %106, %cst_44 {dimension_numbers = #tpu.dot_dimension_numbers<[1], [0], [0], [1], [0, 0, 1, 1], [], []>} : vector<2x64xbf16>, vector<64x32xbf16>, vector<2x32xf32> -> vector<2x32xf32>
    %c0_45 = arith.constant 0 : index
    %c0_46 = arith.constant 0 : index
    %108 = vector.load %arg12[%c0_45, %c0_46] : memref<1x32xf32, #tpu.memory_space<vmem>>, vector<1x32xf32>
    %109 = vector.broadcast %108 : vector<1x32xf32> to vector<2x32xf32>
    %110 = arith.addf %107, %109 : vector<2x32xf32>
    %111 = arith.truncf %110 : vector<2x32xf32> to vector<2x32xbf16>
    %c0_47 = arith.constant 0 : index
    %c0_48 = arith.constant 0 : index
    %112 = vector.load %arg14[%c0_47, %c0_48] : memref<32x128xbf16, #tpu.memory_space<vmem>>, vector<32x128xbf16>
    %cst_49 = arith.constant dense<0.000000e+00> : vector<2x128xf32>
    %113 = tpu.matmul %111, %112, %cst_49 {dimension_numbers = #tpu.dot_dimension_numbers<[1], [0], [0], [1], [0, 0, 1, 1], [], []>} : vector<2x32xbf16>, vector<32x128xbf16>, vector<2x128xf32> -> vector<2x128xf32>
    %c0_50 = arith.constant 0 : index
    %c0_51 = arith.constant 0 : index
    %114 = vector.load %arg6[%c0_50, %c0_51] : memref<2x32xf32, #tpu.memory_space<vmem>>, vector<2x32xf32>
    %115 = vector.extract_strided_slice %113 {offsets = [0, 0], sizes = [2, 32], strides = [1, 1]} : vector<2x128xf32> to vector<2x32xf32>
    %116 = arith.addf %114, %115 : vector<2x32xf32>
    %117 = arith.addf %116, %80 : vector<2x32xf32>
    %118 = arith.negf %117 : vector<2x32xf32>
    %119 = math.exp %118 : vector<2x32xf32>
    %cst_52 = arith.constant 1.000000e+00 : f32
    %120 = vector.broadcast %cst_52 : f32 to vector<2x32xf32>
    %121 = arith.addf %120, %119 : vector<2x32xf32>
    %122 = arith.divf %120, %121 : vector<2x32xf32>
    %c0_53 = arith.constant 0 : index
    %c0_54 = arith.constant 0 : index
    %123 = vector.load %arg7[%c0_53, %c0_54] : memref<2x96xf32, #tpu.memory_space<vmem>>, vector<2x96xf32>
    %124 = vector.extract_strided_slice %113 {offsets = [0, 32], sizes = [2, 96], strides = [1, 1]} : vector<2x128xf32> to vector<2x96xf32>
    %125 = arith.addf %123, %124 : vector<2x96xf32>
    %126 = arith.addf %125, %81 : vector<2x96xf32>
    %127 = arith.negf %126 : vector<2x96xf32>
    %128 = math.exp %127 : vector<2x96xf32>
    %cst_55 = arith.constant 1.000000e+00 : f32
    %129 = vector.broadcast %cst_55 : f32 to vector<2x96xf32>
    %130 = arith.addf %129, %128 : vector<2x96xf32>
    %131 = arith.divf %129, %130 : vector<2x96xf32>
    %c0_56 = arith.constant 0 : index
    %c0_57 = arith.constant 0 : index
    %132 = vector.load %arg5[%c0_56, %c0_57] : memref<2x64xf32, #tpu.memory_space<vmem>>, vector<2x64xf32>
    %133 = tpu.concatenate %132, %110 in 1 : vector<2x64xf32>, vector<2x32xf32> -> vector<2x96xf32>
    %134 = arith.mulf %131, %133 : vector<2x96xf32>
    %135 = arith.truncf %134 : vector<2x96xf32> to vector<2x96xbf16>
    %c0_58 = arith.constant 0 : index
    %c0_59 = arith.constant 0 : index
    %136 = vector.load %arg15[%c0_58, %c0_59] : memref<96x32xbf16, #tpu.memory_space<vmem>>, vector<96x32xbf16>
    %cst_60 = arith.constant dense<0.000000e+00> : vector<2x32xf32>
    %137 = tpu.matmul %135, %136, %cst_60 {dimension_numbers = #tpu.dot_dimension_numbers<[1], [0], [0], [1], [0, 0, 1, 1], [], []>} : vector<2x96xbf16>, vector<96x32xbf16>, vector<2x32xf32> -> vector<2x32xf32>
    %138 = arith.addf %137, %82 : vector<2x32xf32>
    %c0_61 = arith.constant 0 : index
    %c0_62 = arith.constant 0 : index
    %139 = vector.load %arg16[%c0_61, %c0_62] : memref<1x32xf32, #tpu.memory_space<vmem>>, vector<1x32xf32>
    %140 = vector.broadcast %139 : vector<1x32xf32> to vector<2x32xf32>
    %141 = arith.addf %138, %140 : vector<2x32xf32>
    %142 = math.tanh %141 : vector<2x32xf32>
    %cst_63 = arith.constant 1.000000e+00 : f32
    %143 = vector.broadcast %cst_63 : f32 to vector<2x32xf32>
    %144 = arith.subf %143, %122 : vector<2x32xf32>
    %145 = arith.mulf %144, %75 : vector<2x32xf32>
    %146 = arith.mulf %122, %142 : vector<2x32xf32>
    %147 = arith.addf %145, %146 : vector<2x32xf32>
    %c0_64 = arith.constant 0 : index
    %c0_65 = arith.constant 0 : index
    %c0_66 = arith.constant 0 : index
    %148 = vector.load %arg17[%c0_64, %c0_65, %c0_66] : memref<8x2x32xf32, #tpu.memory_space<vmem>>, vector<1x2x32xf32>
    %149 = vector.shape_cast %148 : vector<1x2x32xf32> to vector<2x32xf32>
    %150 = vector.shape_cast %147 : vector<2x32xf32> to vector<1x2x32xf32>
    tpu.vector_store %arg17[%c0_64, %c0_65, %c0_66], %150 {strides = array<i32>} : memref<8x2x32xf32, #tpu.memory_space<vmem>>, vector<1x2x32xf32>,
    %c1_67 = arith.constant 1 : index
    %c0_68 = arith.constant 0 : index
    %c0_69 = arith.constant 0 : index
    %151 = vector.load %arg1[%c1_67, %c0_68, %c0_69] : memref<8x2x128xbf16, #tpu.memory_space<vmem>>, vector<1x2x128xbf16>
    %152 = vector.shape_cast %151 : vector<1x2x128xbf16> to vector<2x128xbf16>
    %153 = arith.extf %152 : vector<2x128xbf16> to vector<2x128xf32>
    %154 = arith.truncf %43 : vector<2x32xf32> to vector<2x32xbf16>
    %c0_70 = arith.constant 0 : index
    %c0_71 = arith.constant 0 : index
    %155 = vector.load %arg8[%c0_70, %c0_71] : memref<32x128xbf16, #tpu.memory_space<vmem>>, vector<32x128xbf16>
    %cst_72 = arith.constant dense<0.000000e+00> : vector<2x128xf32>
    %156 = tpu.matmul %154, %155, %cst_72 {dimension_numbers = #tpu.dot_dimension_numbers<[1], [0], [0], [1], [0, 0, 1, 1], [], []>} : vector<2x32xbf16>, vector<32x128xbf16>, vector<2x128xf32> -> vector<2x128xf32>
    %157 = arith.addf %153, %156 : vector<2x128xf32>
    %158 = vector.extract_strided_slice %157 {offsets = [0, 0], sizes = [2, 32], strides = [1, 1]} : vector<2x128xf32> to vector<2x32xf32>
    %159 = arith.negf %158 : vector<2x32xf32>
    %160 = math.exp %159 : vector<2x32xf32>
    %cst_73 = arith.constant 1.000000e+00 : f32
    %161 = vector.broadcast %cst_73 : f32 to vector<2x32xf32>
    %162 = arith.addf %161, %160 : vector<2x32xf32>
    %163 = arith.divf %161, %162 : vector<2x32xf32>
    %164 = vector.extract_strided_slice %157 {offsets = [0, 32], sizes = [2, 32], strides = [1, 1]} : vector<2x128xf32> to vector<2x32xf32>
    %165 = arith.negf %164 : vector<2x32xf32>
    %166 = math.exp %165 : vector<2x32xf32>
    %cst_74 = arith.constant 1.000000e+00 : f32
    %167 = vector.broadcast %cst_74 : f32 to vector<2x32xf32>
    %168 = arith.addf %167, %166 : vector<2x32xf32>
    %169 = arith.divf %167, %168 : vector<2x32xf32>
    %170 = vector.extract_strided_slice %157 {offsets = [0, 64], sizes = [2, 32], strides = [1, 1]} : vector<2x128xf32> to vector<2x32xf32>
    %171 = math.tanh %170 : vector<2x32xf32>
    %172 = vector.extract_strided_slice %157 {offsets = [0, 96], sizes = [2, 32], strides = [1, 1]} : vector<2x128xf32> to vector<2x32xf32>
    %173 = arith.negf %172 : vector<2x32xf32>
    %174 = math.exp %173 : vector<2x32xf32>
    %cst_75 = arith.constant 1.000000e+00 : f32
    %175 = vector.broadcast %cst_75 : f32 to vector<2x32xf32>
    %176 = arith.addf %175, %174 : vector<2x32xf32>
    %177 = arith.divf %175, %176 : vector<2x32xf32>
    %178 = arith.mulf %169, %41 : vector<2x32xf32>
    %179 = arith.mulf %163, %171 : vector<2x32xf32>
    %180 = arith.addf %178, %179 : vector<2x32xf32>
    %181 = math.tanh %180 : vector<2x32xf32>
    %182 = arith.mulf %177, %181 : vector<2x32xf32>
    %183 = tpu.concatenate %182, %147 in 1 : vector<2x32xf32>, vector<2x32xf32> -> vector<2x64xf32>
    %184 = arith.truncf %183 : vector<2x64xf32> to vector<2x64xbf16>
    %c0_76 = arith.constant 0 : index
    %c0_77 = arith.constant 0 : index
    %185 = vector.load %arg9[%c0_76, %c0_77] : memref<64x128xbf16, #tpu.memory_space<vmem>>, vector<64x128xbf16>
    %cst_78 = arith.constant dense<0.000000e+00> : vector<2x128xf32>
    %186 = tpu.matmul %184, %185, %cst_78 {dimension_numbers = #tpu.dot_dimension_numbers<[1], [0], [0], [1], [0, 0, 1, 1], [], []>} : vector<2x64xbf16>, vector<64x128xbf16>, vector<2x128xf32> -> vector<2x128xf32>
    %c0_79 = arith.constant 0 : index
    %c0_80 = arith.constant 0 : index
    %187 = vector.load %arg10[%c0_79, %c0_80] : memref<1x128xf32, #tpu.memory_space<vmem>>, vector<1x128xf32>
    %188 = vector.broadcast %187 : vector<1x128xf32> to vector<2x128xf32>
    %189 = arith.addf %186, %188 : vector<2x128xf32>
    %190 = vector.extract_strided_slice %189 {offsets = [0, 0], sizes = [2, 32], strides = [1, 1]} : vector<2x128xf32> to vector<2x32xf32>
    %191 = arith.negf %190 : vector<2x32xf32>
    %192 = math.exp %191 : vector<2x32xf32>
    %cst_81 = arith.constant 1.000000e+00 : f32
    %193 = vector.broadcast %cst_81 : f32 to vector<2x32xf32>
    %194 = arith.addf %193, %192 : vector<2x32xf32>
    %195 = arith.divf %193, %194 : vector<2x32xf32>
    %196 = vector.extract_strided_slice %189 {offsets = [0, 32], sizes = [2, 32], strides = [1, 1]} : vector<2x128xf32> to vector<2x32xf32>
    %197 = arith.negf %196 : vector<2x32xf32>
    %198 = math.exp %197 : vector<2x32xf32>
    %cst_82 = arith.constant 1.000000e+00 : f32
    %199 = vector.broadcast %cst_82 : f32 to vector<2x32xf32>
    %200 = arith.addf %199, %198 : vector<2x32xf32>
    %201 = arith.divf %199, %200 : vector<2x32xf32>
    %202 = vector.extract_strided_slice %189 {offsets = [0, 64], sizes = [2, 32], strides = [1, 1]} : vector<2x128xf32> to vector<2x32xf32>
    %203 = math.tanh %202 : vector<2x32xf32>
    %204 = vector.extract_strided_slice %189 {offsets = [0, 96], sizes = [2, 32], strides = [1, 1]} : vector<2x128xf32> to vector<2x32xf32>
    %205 = arith.negf %204 : vector<2x32xf32>
    %206 = math.exp %205 : vector<2x32xf32>
    %cst_83 = arith.constant 1.000000e+00 : f32
    %207 = vector.broadcast %cst_83 : f32 to vector<2x32xf32>
    %208 = arith.addf %207, %206 : vector<2x32xf32>
    %209 = arith.divf %207, %208 : vector<2x32xf32>
    %210 = arith.mulf %201, %73 : vector<2x32xf32>
    %211 = arith.mulf %195, %203 : vector<2x32xf32>
    %212 = arith.addf %210, %211 : vector<2x32xf32>
    %213 = math.tanh %212 : vector<2x32xf32>
    %214 = arith.mulf %209, %213 : vector<2x32xf32>
    %215 = arith.truncf %214 : vector<2x32xf32> to vector<2x32xbf16>
    %c0_84 = arith.constant 0 : index
    %c0_85 = arith.constant 0 : index
    %216 = vector.load %arg13[%c0_84, %c0_85] : memref<32x192xbf16, #tpu.memory_space<vmem>>, vector<32x192xbf16>
    %cst_86 = arith.constant dense<0.000000e+00> : vector<2x192xf32>
    %217 = tpu.matmul %215, %216, %cst_86 {dimension_numbers = #tpu.dot_dimension_numbers<[1], [0], [0], [1], [0, 0, 1, 1], [], []>} : vector<2x32xbf16>, vector<32x192xbf16>, vector<2x192xf32> -> vector<2x192xf32>
    %218 = vector.extract_strided_slice %217 {offsets = [0, 0], sizes = [2, 32], strides = [1, 1]} : vector<2x192xf32> to vector<2x32xf32>
    %219 = vector.extract_strided_slice %217 {offsets = [0, 32], sizes = [2, 32], strides = [1, 1]} : vector<2x192xf32> to vector<2x32xf32>
    %220 = vector.extract_strided_slice %217 {offsets = [0, 64], sizes = [2, 96], strides = [1, 1]} : vector<2x192xf32> to vector<2x96xf32>
    %221 = vector.extract_strided_slice %217 {offsets = [0, 160], sizes = [2, 32], strides = [1, 1]} : vector<2x192xf32> to vector<2x32xf32>
    %c0_87 = arith.constant 0 : index
    %c0_88 = arith.constant 0 : index
    %c0_89 = arith.constant 0 : index
    %222 = vector.load %arg4[%c0_87, %c0_88, %c0_89] : memref<2x8x32xf32, #tpu.memory_space<vmem>>, vector<2x8x32xf32>
    %223 = vector.shape_cast %218 : vector<2x32xf32> to vector<2x1x32xf32>
    %224 = vector.broadcast %223 : vector<2x1x32xf32> to vector<2x8x32xf32>
    %225 = arith.mulf %222, %224 : vector<2x8x32xf32>
    %cst_90 = arith.constant dense<0.000000e+00> : vector<2x8xf32>
    %226 = vector.multi_reduction <add>, %225, %cst_90 [2] : vector<2x8x32xf32> to vector<2x8xf32>
    %c0_91 = arith.constant 0 : index
    %c0_92 = arith.constant 0 : index
    %227 = vector.load %arg3[%c0_91, %c0_92] : memref<2x8xf32, #tpu.memory_space<vmem>>, vector<2x8xf32>
    %228 = arith.addf %226, %227 : vector<2x8xf32>
    %cst_93 = arith.constant dense<0xFF800000> : vector<2xf32>
    %229 = vector.multi_reduction <maximumf>, %228, %cst_93 [1] : vector<2x8xf32> to vector<2xf32>
    %230 = vector.shape_cast %229 : vector<2xf32> to vector<2x1xf32>
    %231 = vector.broadcast %230 : vector<2x1xf32> to vector<2x8xf32>
    %232 = arith.subf %228, %231 : vector<2x8xf32>
    %233 = math.exp %232 : vector<2x8xf32>
    %cst_94 = arith.constant dense<0.000000e+00> : vector<2xf32>
    %234 = vector.multi_reduction <add>, %233, %cst_94 [1] : vector<2x8xf32> to vector<2xf32>
    %235 = vector.shape_cast %234 : vector<2xf32> to vector<2x1xf32>
    %236 = tpu.reciprocal %235 {approx = true} : vector<2x1xf32> -> vector<2x1xf32>
    %237 = vector.broadcast %236 : vector<2x1xf32> to vector<2x8xf32>
    %238 = arith.mulf %233, %237 : vector<2x8xf32>
    %239 = vector.shape_cast %238 : vector<2x8xf32> to vector<2x8x1xf32>
    %c0_95 = arith.constant 0 : index
    %c0_96 = arith.constant 0 : index
    %c0_97 = arith.constant 0 : index
    %240 = vector.load %arg2[%c0_95, %c0_96, %c0_97] : memref<2x8x64xf32, #tpu.memory_space<vmem>>, vector<2x8x64xf32>
    %241 = vector.broadcast %239 : vector<2x8x1xf32> to vector<2x8x64xf32>
    %242 = arith.mulf %241, %240 : vector<2x8x64xf32>
    %cst_98 = arith.constant dense<0.000000e+00> : vector<2x64xf32>
    %243 = vector.multi_reduction <add>, %242, %cst_98 [1] : vector<2x8x64xf32> to vector<2x64xf32>
    %244 = arith.truncf %243 : vector<2x64xf32> to vector<2x64xbf16>
    %c0_99 = arith.constant 0 : index
    %c0_100 = arith.constant 0 : index
    %245 = vector.load %arg11[%c0_99, %c0_100] : memref<64x32xbf16, #tpu.memory_space<vmem>>, vector<64x32xbf16>
    %cst_101 = arith.constant dense<0.000000e+00> : vector<2x32xf32>
    %246 = tpu.matmul %244, %245, %cst_101 {dimension_numbers = #tpu.dot_dimension_numbers<[1], [0], [0], [1], [0, 0, 1, 1], [], []>} : vector<2x64xbf16>, vector<64x32xbf16>, vector<2x32xf32> -> vector<2x32xf32>
    %c0_102 = arith.constant 0 : index
    %c0_103 = arith.constant 0 : index
    %247 = vector.load %arg12[%c0_102, %c0_103] : memref<1x32xf32, #tpu.memory_space<vmem>>, vector<1x32xf32>
    %248 = vector.broadcast %247 : vector<1x32xf32> to vector<2x32xf32>
    %249 = arith.addf %246, %248 : vector<2x32xf32>
    %250 = arith.truncf %249 : vector<2x32xf32> to vector<2x32xbf16>
    %c0_104 = arith.constant 0 : index
    %c0_105 = arith.constant 0 : index
    %251 = vector.load %arg14[%c0_104, %c0_105] : memref<32x128xbf16, #tpu.memory_space<vmem>>, vector<32x128xbf16>
    %cst_106 = arith.constant dense<0.000000e+00> : vector<2x128xf32>
    %252 = tpu.matmul %250, %251, %cst_106 {dimension_numbers = #tpu.dot_dimension_numbers<[1], [0], [0], [1], [0, 0, 1, 1], [], []>} : vector<2x32xbf16>, vector<32x128xbf16>, vector<2x128xf32> -> vector<2x128xf32>
    %c0_107 = arith.constant 0 : index
    %c0_108 = arith.constant 0 : index
    %253 = vector.load %arg6[%c0_107, %c0_108] : memref<2x32xf32, #tpu.memory_space<vmem>>, vector<2x32xf32>
    %254 = vector.extract_strided_slice %252 {offsets = [0, 0], sizes = [2, 32], strides = [1, 1]} : vector<2x128xf32> to vector<2x32xf32>
    %255 = arith.addf %253, %254 : vector<2x32xf32>
    %256 = arith.addf %255, %219 : vector<2x32xf32>
    %257 = arith.negf %256 : vector<2x32xf32>
    %258 = math.exp %257 : vector<2x32xf32>
    %cst_109 = arith.constant 1.000000e+00 : f32
    %259 = vector.broadcast %cst_109 : f32 to vector<2x32xf32>
    %260 = arith.addf %259, %258 : vector<2x32xf32>
    %261 = arith.divf %259, %260 : vector<2x32xf32>
    %c0_110 = arith.constant 0 : index
    %c0_111 = arith.constant 0 : index
    %262 = vector.load %arg7[%c0_110, %c0_111] : memref<2x96xf32, #tpu.memory_space<vmem>>, vector<2x96xf32>
    %263 = vector.extract_strided_slice %252 {offsets = [0, 32], sizes = [2, 96], strides = [1, 1]} : vector<2x128xf32> to vector<2x96xf32>
    %264 = arith.addf %262, %263 : vector<2x96xf32>
    %265 = arith.addf %264, %220 : vector<2x96xf32>
    %266 = arith.negf %265 : vector<2x96xf32>
    %267 = math.exp %266 : vector<2x96xf32>
    %cst_112 = arith.constant 1.000000e+00 : f32
    %268 = vector.broadcast %cst_112 : f32 to vector<2x96xf32>
    %269 = arith.addf %268, %267 : vector<2x96xf32>
    %270 = arith.divf %268, %269 : vector<2x96xf32>
    %c0_113 = arith.constant 0 : index
    %c0_114 = arith.constant 0 : index
    %271 = vector.load %arg5[%c0_113, %c0_114] : memref<2x64xf32, #tpu.memory_space<vmem>>, vector<2x64xf32>
    %272 = tpu.concatenate %271, %249 in 1 : vector<2x64xf32>, vector<2x32xf32> -> vector<2x96xf32>
    %273 = arith.mulf %270, %272 : vector<2x96xf32>
    %274 = arith.truncf %273 : vector<2x96xf32> to vector<2x96xbf16>
    %c0_115 = arith.constant 0 : index
    %c0_116 = arith.constant 0 : index
    %275 = vector.load %arg15[%c0_115, %c0_116] : memref<96x32xbf16, #tpu.memory_space<vmem>>, vector<96x32xbf16>
    %cst_117 = arith.constant dense<0.000000e+00> : vector<2x32xf32>
    %276 = tpu.matmul %274, %275, %cst_117 {dimension_numbers = #tpu.dot_dimension_numbers<[1], [0], [0], [1], [0, 0, 1, 1], [], []>} : vector<2x96xbf16>, vector<96x32xbf16>, vector<2x32xf32> -> vector<2x32xf32>
    %277 = arith.addf %276, %221 : vector<2x32xf32>
    %c0_118 = arith.constant 0 : index
    %c0_119 = arith.constant 0 : index
    %278 = vector.load %arg16[%c0_118, %c0_119] : memref<1x32xf32, #tpu.memory_space<vmem>>, vector<1x32xf32>
    %279 = vector.broadcast %278 : vector<1x32xf32> to vector<2x32xf32>
    %280 = arith.addf %277, %279 : vector<2x32xf32>
    %281 = math.tanh %280 : vector<2x32xf32>
    %cst_120 = arith.constant 1.000000e+00 : f32
    %282 = vector.broadcast %cst_120 : f32 to vector<2x32xf32>
    %283 = arith.subf %282, %261 : vector<2x32xf32>
    %284 = arith.mulf %283, %214 : vector<2x32xf32>
    %285 = arith.mulf %261, %281 : vector<2x32xf32>
    %286 = arith.addf %284, %285 : vector<2x32xf32>
    %c1_121 = arith.constant 1 : index
    %c0_122 = arith.constant 0 : index
    %c0_123 = arith.constant 0 : index
    %287 = vector.load %arg17[%c1_121, %c0_122, %c0_123] : memref<8x2x32xf32, #tpu.memory_space<vmem>>, vector<1x2x32xf32>
    %288 = vector.shape_cast %287 : vector<1x2x32xf32> to vector<2x32xf32>
    %289 = vector.shape_cast %286 : vector<2x32xf32> to vector<1x2x32xf32>
    tpu.vector_store %arg17[%c1_121, %c0_122, %c0_123], %289 {strides = array<i32>} : memref<8x2x32xf32, #tpu.memory_space<vmem>>, vector<1x2x32xf32>,
    %c2 = arith.constant 2 : index
    %c0_124 = arith.constant 0 : index
    %c0_125 = arith.constant 0 : index
    %290 = vector.load %arg1[%c2, %c0_124, %c0_125] : memref<8x2x128xbf16, #tpu.memory_space<vmem>>, vector<1x2x128xbf16>
    %291 = vector.shape_cast %290 : vector<1x2x128xbf16> to vector<2x128xbf16>
    %292 = arith.extf %291 : vector<2x128xbf16> to vector<2x128xf32>
    %293 = arith.truncf %182 : vector<2x32xf32> to vector<2x32xbf16>
    %c0_126 = arith.constant 0 : index
    %c0_127 = arith.constant 0 : index
    %294 = vector.load %arg8[%c0_126, %c0_127] : memref<32x128xbf16, #tpu.memory_space<vmem>>, vector<32x128xbf16>
    %cst_128 = arith.constant dense<0.000000e+00> : vector<2x128xf32>
    %295 = tpu.matmul %293, %294, %cst_128 {dimension_numbers = #tpu.dot_dimension_numbers<[1], [0], [0], [1], [0, 0, 1, 1], [], []>} : vector<2x32xbf16>, vector<32x128xbf16>, vector<2x128xf32> -> vector<2x128xf32>
    %296 = arith.addf %292, %295 : vector<2x128xf32>
    %297 = vector.extract_strided_slice %296 {offsets = [0, 0], sizes = [2, 32], strides = [1, 1]} : vector<2x128xf32> to vector<2x32xf32>
    %298 = arith.negf %297 : vector<2x32xf32>
    %299 = math.exp %298 : vector<2x32xf32>
    %cst_129 = arith.constant 1.000000e+00 : f32
    %300 = vector.broadcast %cst_129 : f32 to vector<2x32xf32>
    %301 = arith.addf %300, %299 : vector<2x32xf32>
    %302 = arith.divf %300, %301 : vector<2x32xf32>
    %303 = vector.extract_strided_slice %296 {offsets = [0, 32], sizes = [2, 32], strides = [1, 1]} : vector<2x128xf32> to vector<2x32xf32>
    %304 = arith.negf %303 : vector<2x32xf32>
    %305 = math.exp %304 : vector<2x32xf32>
    %cst_130 = arith.constant 1.000000e+00 : f32
    %306 = vector.broadcast %cst_130 : f32 to vector<2x32xf32>
    %307 = arith.addf %306, %305 : vector<2x32xf32>
    %308 = arith.divf %306, %307 : vector<2x32xf32>
    %309 = vector.extract_strided_slice %296 {offsets = [0, 64], sizes = [2, 32], strides = [1, 1]} : vector<2x128xf32> to vector<2x32xf32>
    %310 = math.tanh %309 : vector<2x32xf32>
    %311 = vector.extract_strided_slice %296 {offsets = [0, 96], sizes = [2, 32], strides = [1, 1]} : vector<2x128xf32> to vector<2x32xf32>
    %312 = arith.negf %311 : vector<2x32xf32>
    %313 = math.exp %312 : vector<2x32xf32>
    %cst_131 = arith.constant 1.000000e+00 : f32
    %314 = vector.broadcast %cst_131 : f32 to vector<2x32xf32>
    %315 = arith.addf %314, %313 : vector<2x32xf32>
    %316 = arith.divf %314, %315 : vector<2x32xf32>
    %317 = arith.mulf %308, %180 : vector<2x32xf32>
    %318 = arith.mulf %302, %310 : vector<2x32xf32>
    %319 = arith.addf %317, %318 : vector<2x32xf32>
    %320 = math.tanh %319 : vector<2x32xf32>
    %321 = arith.mulf %316, %320 : vector<2x32xf32>
    %322 = tpu.concatenate %321, %286 in 1 : vector<2x32xf32>, vector<2x32xf32> -> vector<2x64xf32>
    %323 = arith.truncf %322 : vector<2x64xf32> to vector<2x64xbf16>
    %c0_132 = arith.constant 0 : index
    %c0_133 = arith.constant 0 : index
    %324 = vector.load %arg9[%c0_132, %c0_133] : memref<64x128xbf16, #tpu.memory_space<vmem>>, vector<64x128xbf16>
    %cst_134 = arith.constant dense<0.000000e+00> : vector<2x128xf32>
    %325 = tpu.matmul %323, %324, %cst_134 {dimension_numbers = #tpu.dot_dimension_numbers<[1], [0], [0], [1], [0, 0, 1, 1], [], []>} : vector<2x64xbf16>, vector<64x128xbf16>, vector<2x128xf32> -> vector<2x128xf32>
    %c0_135 = arith.constant 0 : index
    %c0_136 = arith.constant 0 : index
    %326 = vector.load %arg10[%c0_135, %c0_136] : memref<1x128xf32, #tpu.memory_space<vmem>>, vector<1x128xf32>
    %327 = vector.broadcast %326 : vector<1x128xf32> to vector<2x128xf32>
    %328 = arith.addf %325, %327 : vector<2x128xf32>
    %329 = vector.extract_strided_slice %328 {offsets = [0, 0], sizes = [2, 32], strides = [1, 1]} : vector<2x128xf32> to vector<2x32xf32>
    %330 = arith.negf %329 : vector<2x32xf32>
    %331 = math.exp %330 : vector<2x32xf32>
    %cst_137 = arith.constant 1.000000e+00 : f32
    %332 = vector.broadcast %cst_137 : f32 to vector<2x32xf32>
    %333 = arith.addf %332, %331 : vector<2x32xf32>
    %334 = arith.divf %332, %333 : vector<2x32xf32>
    %335 = vector.extract_strided_slice %328 {offsets = [0, 32], sizes = [2, 32], strides = [1, 1]} : vector<2x128xf32> to vector<2x32xf32>
    %336 = arith.negf %335 : vector<2x32xf32>
    %337 = math.exp %336 : vector<2x32xf32>
    %cst_138 = arith.constant 1.000000e+00 : f32
    %338 = vector.broadcast %cst_138 : f32 to vector<2x32xf32>
    %339 = arith.addf %338, %337 : vector<2x32xf32>
    %340 = arith.divf %338, %339 : vector<2x32xf32>
    %341 = vector.extract_strided_slice %328 {offsets = [0, 64], sizes = [2, 32], strides = [1, 1]} : vector<2x128xf32> to vector<2x32xf32>
    %342 = math.tanh %341 : vector<2x32xf32>
    %343 = vector.extract_strided_slice %328 {offsets = [0, 96], sizes = [2, 32], strides = [1, 1]} : vector<2x128xf32> to vector<2x32xf32>
    %344 = arith.negf %343 : vector<2x32xf32>
    %345 = math.exp %344 : vector<2x32xf32>
    %cst_139 = arith.constant 1.000000e+00 : f32
    %346 = vector.broadcast %cst_139 : f32 to vector<2x32xf32>
    %347 = arith.addf %346, %345 : vector<2x32xf32>
    %348 = arith.divf %346, %347 : vector<2x32xf32>
    %349 = arith.mulf %340, %212 : vector<2x32xf32>
    %350 = arith.mulf %334, %342 : vector<2x32xf32>
    %351 = arith.addf %349, %350 : vector<2x32xf32>
    %352 = math.tanh %351 : vector<2x32xf32>
    %353 = arith.mulf %348, %352 : vector<2x32xf32>
    %354 = arith.truncf %353 : vector<2x32xf32> to vector<2x32xbf16>
    %c0_140 = arith.constant 0 : index
    %c0_141 = arith.constant 0 : index
    %355 = vector.load %arg13[%c0_140, %c0_141] : memref<32x192xbf16, #tpu.memory_space<vmem>>, vector<32x192xbf16>
    %cst_142 = arith.constant dense<0.000000e+00> : vector<2x192xf32>
    %356 = tpu.matmul %354, %355, %cst_142 {dimension_numbers = #tpu.dot_dimension_numbers<[1], [0], [0], [1], [0, 0, 1, 1], [], []>} : vector<2x32xbf16>, vector<32x192xbf16>, vector<2x192xf32> -> vector<2x192xf32>
    %357 = vector.extract_strided_slice %356 {offsets = [0, 0], sizes = [2, 32], strides = [1, 1]} : vector<2x192xf32> to vector<2x32xf32>
    %358 = vector.extract_strided_slice %356 {offsets = [0, 32], sizes = [2, 32], strides = [1, 1]} : vector<2x192xf32> to vector<2x32xf32>
    %359 = vector.extract_strided_slice %356 {offsets = [0, 64], sizes = [2, 96], strides = [1, 1]} : vector<2x192xf32> to vector<2x96xf32>
    %360 = vector.extract_strided_slice %356 {offsets = [0, 160], sizes = [2, 32], strides = [1, 1]} : vector<2x192xf32> to vector<2x32xf32>
    %c0_143 = arith.constant 0 : index
    %c0_144 = arith.constant 0 : index
    %c0_145 = arith.constant 0 : index
    %361 = vector.load %arg4[%c0_143, %c0_144, %c0_145] : memref<2x8x32xf32, #tpu.memory_space<vmem>>, vector<2x8x32xf32>
    %362 = vector.shape_cast %357 : vector<2x32xf32> to vector<2x1x32xf32>
    %363 = vector.broadcast %362 : vector<2x1x32xf32> to vector<2x8x32xf32>
    %364 = arith.mulf %361, %363 : vector<2x8x32xf32>
    %cst_146 = arith.constant dense<0.000000e+00> : vector<2x8xf32>
    %365 = vector.multi_reduction <add>, %364, %cst_146 [2] : vector<2x8x32xf32> to vector<2x8xf32>
    %c0_147 = arith.constant 0 : index
    %c0_148 = arith.constant 0 : index
    %366 = vector.load %arg3[%c0_147, %c0_148] : memref<2x8xf32, #tpu.memory_space<vmem>>, vector<2x8xf32>
    %367 = arith.addf %365, %366 : vector<2x8xf32>
    %cst_149 = arith.constant dense<0xFF800000> : vector<2xf32>
    %368 = vector.multi_reduction <maximumf>, %367, %cst_149 [1] : vector<2x8xf32> to vector<2xf32>
    %369 = vector.shape_cast %368 : vector<2xf32> to vector<2x1xf32>
    %370 = vector.broadcast %369 : vector<2x1xf32> to vector<2x8xf32>
    %371 = arith.subf %367, %370 : vector<2x8xf32>
    %372 = math.exp %371 : vector<2x8xf32>
    %cst_150 = arith.constant dense<0.000000e+00> : vector<2xf32>
    %373 = vector.multi_reduction <add>, %372, %cst_150 [1] : vector<2x8xf32> to vector<2xf32>
    %374 = vector.shape_cast %373 : vector<2xf32> to vector<2x1xf32>
    %375 = tpu.reciprocal %374 {approx = true} : vector<2x1xf32> -> vector<2x1xf32>
    %376 = vector.broadcast %375 : vector<2x1xf32> to vector<2x8xf32>
    %377 = arith.mulf %372, %376 : vector<2x8xf32>
    %378 = vector.shape_cast %377 : vector<2x8xf32> to vector<2x8x1xf32>
    %c0_151 = arith.constant 0 : index
    %c0_152 = arith.constant 0 : index
    %c0_153 = arith.constant 0 : index
    %379 = vector.load %arg2[%c0_151, %c0_152, %c0_153] : memref<2x8x64xf32, #tpu.memory_space<vmem>>, vector<2x8x64xf32>
    %380 = vector.broadcast %378 : vector<2x8x1xf32> to vector<2x8x64xf32>
    %381 = arith.mulf %380, %379 : vector<2x8x64xf32>
    %cst_154 = arith.constant dense<0.000000e+00> : vector<2x64xf32>
    %382 = vector.multi_reduction <add>, %381, %cst_154 [1] : vector<2x8x64xf32> to vector<2x64xf32>
    %383 = arith.truncf %382 : vector<2x64xf32> to vector<2x64xbf16>
    %c0_155 = arith.constant 0 : index
    %c0_156 = arith.constant 0 : index
    %384 = vector.load %arg11[%c0_155, %c0_156] : memref<64x32xbf16, #tpu.memory_space<vmem>>, vector<64x32xbf16>
    %cst_157 = arith.constant dense<0.000000e+00> : vector<2x32xf32>
    %385 = tpu.matmul %383, %384, %cst_157 {dimension_numbers = #tpu.dot_dimension_numbers<[1], [0], [0], [1], [0, 0, 1, 1], [], []>} : vector<2x64xbf16>, vector<64x32xbf16>, vector<2x32xf32> -> vector<2x32xf32>
    %c0_158 = arith.constant 0 : index
    %c0_159 = arith.constant 0 : index
    %386 = vector.load %arg12[%c0_158, %c0_159] : memref<1x32xf32, #tpu.memory_space<vmem>>, vector<1x32xf32>
    %387 = vector.broadcast %386 : vector<1x32xf32> to vector<2x32xf32>
    %388 = arith.addf %385, %387 : vector<2x32xf32>
    %389 = arith.truncf %388 : vector<2x32xf32> to vector<2x32xbf16>
    %c0_160 = arith.constant 0 : index
    %c0_161 = arith.constant 0 : index
    %390 = vector.load %arg14[%c0_160, %c0_161] : memref<32x128xbf16, #tpu.memory_space<vmem>>, vector<32x128xbf16>
    %cst_162 = arith.constant dense<0.000000e+00> : vector<2x128xf32>
    %391 = tpu.matmul %389, %390, %cst_162 {dimension_numbers = #tpu.dot_dimension_numbers<[1], [0], [0], [1], [0, 0, 1, 1], [], []>} : vector<2x32xbf16>, vector<32x128xbf16>, vector<2x128xf32> -> vector<2x128xf32>
    %c0_163 = arith.constant 0 : index
    %c0_164 = arith.constant 0 : index
    %392 = vector.load %arg6[%c0_163, %c0_164] : memref<2x32xf32, #tpu.memory_space<vmem>>, vector<2x32xf32>
    %393 = vector.extract_strided_slice %391 {offsets = [0, 0], sizes = [2, 32], strides = [1, 1]} : vector<2x128xf32> to vector<2x32xf32>
    %394 = arith.addf %392, %393 : vector<2x32xf32>
    %395 = arith.addf %394, %358 : vector<2x32xf32>
    %396 = arith.negf %395 : vector<2x32xf32>
    %397 = math.exp %396 : vector<2x32xf32>
    %cst_165 = arith.constant 1.000000e+00 : f32
    %398 = vector.broadcast %cst_165 : f32 to vector<2x32xf32>
    %399 = arith.addf %398, %397 : vector<2x32xf32>
    %400 = arith.divf %398, %399 : vector<2x32xf32>
    %c0_166 = arith.constant 0 : index
    %c0_167 = arith.constant 0 : index
    %401 = vector.load %arg7[%c0_166, %c0_167] : memref<2x96xf32, #tpu.memory_space<vmem>>, vector<2x96xf32>
    %402 = vector.extract_strided_slice %391 {offsets = [0, 32], sizes = [2, 96], strides = [1, 1]} : vector<2x128xf32> to vector<2x96xf32>
    %403 = arith.addf %401, %402 : vector<2x96xf32>
    %404 = arith.addf %403, %359 : vector<2x96xf32>
    %405 = arith.negf %404 : vector<2x96xf32>
    %406 = math.exp %405 : vector<2x96xf32>
    %cst_168 = arith.constant 1.000000e+00 : f32
    %407 = vector.broadcast %cst_168 : f32 to vector<2x96xf32>
    %408 = arith.addf %407, %406 : vector<2x96xf32>
    %409 = arith.divf %407, %408 : vector<2x96xf32>
    %c0_169 = arith.constant 0 : index
    %c0_170 = arith.constant 0 : index
    %410 = vector.load %arg5[%c0_169, %c0_170] : memref<2x64xf32, #tpu.memory_space<vmem>>, vector<2x64xf32>
    %411 = tpu.concatenate %410, %388 in 1 : vector<2x64xf32>, vector<2x32xf32> -> vector<2x96xf32>
    %412 = arith.mulf %409, %411 : vector<2x96xf32>
    %413 = arith.truncf %412 : vector<2x96xf32> to vector<2x96xbf16>
    %c0_171 = arith.constant 0 : index
    %c0_172 = arith.constant 0 : index
    %414 = vector.load %arg15[%c0_171, %c0_172] : memref<96x32xbf16, #tpu.memory_space<vmem>>, vector<96x32xbf16>
    %cst_173 = arith.constant dense<0.000000e+00> : vector<2x32xf32>
    %415 = tpu.matmul %413, %414, %cst_173 {dimension_numbers = #tpu.dot_dimension_numbers<[1], [0], [0], [1], [0, 0, 1, 1], [], []>} : vector<2x96xbf16>, vector<96x32xbf16>, vector<2x32xf32> -> vector<2x32xf32>
    %416 = arith.addf %415, %360 : vector<2x32xf32>
    %c0_174 = arith.constant 0 : index
    %c0_175 = arith.constant 0 : index
    %417 = vector.load %arg16[%c0_174, %c0_175] : memref<1x32xf32, #tpu.memory_space<vmem>>, vector<1x32xf32>
    %418 = vector.broadcast %417 : vector<1x32xf32> to vector<2x32xf32>
    %419 = arith.addf %416, %418 : vector<2x32xf32>
    %420 = math.tanh %419 : vector<2x32xf32>
    %cst_176 = arith.constant 1.000000e+00 : f32
    %421 = vector.broadcast %cst_176 : f32 to vector<2x32xf32>
    %422 = arith.subf %421, %400 : vector<2x32xf32>
    %423 = arith.mulf %422, %353 : vector<2x32xf32>
    %424 = arith.mulf %400, %420 : vector<2x32xf32>
    %425 = arith.addf %423, %424 : vector<2x32xf32>
    %c2_177 = arith.constant 2 : index
    %c0_178 = arith.constant 0 : index
    %c0_179 = arith.constant 0 : index
    %426 = vector.load %arg17[%c2_177, %c0_178, %c0_179] : memref<8x2x32xf32, #tpu.memory_space<vmem>>, vector<1x2x32xf32>
    %427 = vector.shape_cast %426 : vector<1x2x32xf32> to vector<2x32xf32>
    %428 = vector.shape_cast %425 : vector<2x32xf32> to vector<1x2x32xf32>
    tpu.vector_store %arg17[%c2_177, %c0_178, %c0_179], %428 {strides = array<i32>} : memref<8x2x32xf32, #tpu.memory_space<vmem>>, vector<1x2x32xf32>,
    %c3 = arith.constant 3 : index
    %c0_180 = arith.constant 0 : index
    %c0_181 = arith.constant 0 : index
    %429 = vector.load %arg1[%c3, %c0_180, %c0_181] : memref<8x2x128xbf16, #tpu.memory_space<vmem>>, vector<1x2x128xbf16>
    %430 = vector.shape_cast %429 : vector<1x2x128xbf16> to vector<2x128xbf16>
    %431 = arith.extf %430 : vector<2x128xbf16> to vector<2x128xf32>
    %432 = arith.truncf %321 : vector<2x32xf32> to vector<2x32xbf16>
    %c0_182 = arith.constant 0 : index
    %c0_183 = arith.constant 0 : index
    %433 = vector.load %arg8[%c0_182, %c0_183] : memref<32x128xbf16, #tpu.memory_space<vmem>>, vector<32x128xbf16>
    %cst_184 = arith.constant dense<0.000000e+00> : vector<2x128xf32>
    %434 = tpu.matmul %432, %433, %cst_184 {dimension_numbers = #tpu.dot_dimension_numbers<[1], [0], [0], [1], [0, 0, 1, 1], [], []>} : vector<2x32xbf16>, vector<32x128xbf16>, vector<2x128xf32> -> vector<2x128xf32>
    %435 = arith.addf %431, %434 : vector<2x128xf32>
    %436 = vector.extract_strided_slice %435 {offsets = [0, 0], sizes = [2, 32], strides = [1, 1]} : vector<2x128xf32> to vector<2x32xf32>
    %437 = arith.negf %436 : vector<2x32xf32>
    %438 = math.exp %437 : vector<2x32xf32>
    %cst_185 = arith.constant 1.000000e+00 : f32
    %439 = vector.broadcast %cst_185 : f32 to vector<2x32xf32>
    %440 = arith.addf %439, %438 : vector<2x32xf32>
    %441 = arith.divf %439, %440 : vector<2x32xf32>
    %442 = vector.extract_strided_slice %435 {offsets = [0, 32], sizes = [2, 32], strides = [1, 1]} : vector<2x128xf32> to vector<2x32xf32>
    %443 = arith.negf %442 : vector<2x32xf32>
    %444 = math.exp %443 : vector<2x32xf32>
    %cst_186 = arith.constant 1.000000e+00 : f32
    %445 = vector.broadcast %cst_186 : f32 to vector<2x32xf32>
    %446 = arith.addf %445, %444 : vector<2x32xf32>
    %447 = arith.divf %445, %446 : vector<2x32xf32>
    %448 = vector.extract_strided_slice %435 {offsets = [0, 64], sizes = [2, 32], strides = [1, 1]} : vector<2x128xf32> to vector<2x32xf32>
    %449 = math.tanh %448 : vector<2x32xf32>
    %450 = vector.extract_strided_slice %435 {offsets = [0, 96], sizes = [2, 32], strides = [1, 1]} : vector<2x128xf32> to vector<2x32xf32>
    %451 = arith.negf %450 : vector<2x32xf32>
    %452 = math.exp %451 : vector<2x32xf32>
    %cst_187 = arith.constant 1.000000e+00 : f32
    %453 = vector.broadcast %cst_187 : f32 to vector<2x32xf32>
    %454 = arith.addf %453, %452 : vector<2x32xf32>
    %455 = arith.divf %453, %454 : vector<2x32xf32>
    %456 = arith.mulf %447, %319 : vector<2x32xf32>
    %457 = arith.mulf %441, %449 : vector<2x32xf32>
    %458 = arith.addf %456, %457 : vector<2x32xf32>
    %459 = math.tanh %458 : vector<2x32xf32>
    %460 = arith.mulf %455, %459 : vector<2x32xf32>
    %461 = tpu.concatenate %460, %425 in 1 : vector<2x32xf32>, vector<2x32xf32> -> vector<2x64xf32>
    %462 = arith.truncf %461 : vector<2x64xf32> to vector<2x64xbf16>
    %c0_188 = arith.constant 0 : index
    %c0_189 = arith.constant 0 : index
    %463 = vector.load %arg9[%c0_188, %c0_189] : memref<64x128xbf16, #tpu.memory_space<vmem>>, vector<64x128xbf16>
    %cst_190 = arith.constant dense<0.000000e+00> : vector<2x128xf32>
    %464 = tpu.matmul %462, %463, %cst_190 {dimension_numbers = #tpu.dot_dimension_numbers<[1], [0], [0], [1], [0, 0, 1, 1], [], []>} : vector<2x64xbf16>, vector<64x128xbf16>, vector<2x128xf32> -> vector<2x128xf32>
    %c0_191 = arith.constant 0 : index
    %c0_192 = arith.constant 0 : index
    %465 = vector.load %arg10[%c0_191, %c0_192] : memref<1x128xf32, #tpu.memory_space<vmem>>, vector<1x128xf32>
    %466 = vector.broadcast %465 : vector<1x128xf32> to vector<2x128xf32>
    %467 = arith.addf %464, %466 : vector<2x128xf32>
    %468 = vector.extract_strided_slice %467 {offsets = [0, 0], sizes = [2, 32], strides = [1, 1]} : vector<2x128xf32> to vector<2x32xf32>
    %469 = arith.negf %468 : vector<2x32xf32>
    %470 = math.exp %469 : vector<2x32xf32>
    %cst_193 = arith.constant 1.000000e+00 : f32
    %471 = vector.broadcast %cst_193 : f32 to vector<2x32xf32>
    %472 = arith.addf %471, %470 : vector<2x32xf32>
    %473 = arith.divf %471, %472 : vector<2x32xf32>
    %474 = vector.extract_strided_slice %467 {offsets = [0, 32], sizes = [2, 32], strides = [1, 1]} : vector<2x128xf32> to vector<2x32xf32>
    %475 = arith.negf %474 : vector<2x32xf32>
    %476 = math.exp %475 : vector<2x32xf32>
    %cst_194 = arith.constant 1.000000e+00 : f32
    %477 = vector.broadcast %cst_194 : f32 to vector<2x32xf32>
    %478 = arith.addf %477, %476 : vector<2x32xf32>
    %479 = arith.divf %477, %478 : vector<2x32xf32>
    %480 = vector.extract_strided_slice %467 {offsets = [0, 64], sizes = [2, 32], strides = [1, 1]} : vector<2x128xf32> to vector<2x32xf32>
    %481 = math.tanh %480 : vector<2x32xf32>
    %482 = vector.extract_strided_slice %467 {offsets = [0, 96], sizes = [2, 32], strides = [1, 1]} : vector<2x128xf32> to vector<2x32xf32>
    %483 = arith.negf %482 : vector<2x32xf32>
    %484 = math.exp %483 : vector<2x32xf32>
    %cst_195 = arith.constant 1.000000e+00 : f32
    %485 = vector.broadcast %cst_195 : f32 to vector<2x32xf32>
    %486 = arith.addf %485, %484 : vector<2x32xf32>
    %487 = arith.divf %485, %486 : vector<2x32xf32>
    %488 = arith.mulf %479, %351 : vector<2x32xf32>
    %489 = arith.mulf %473, %481 : vector<2x32xf32>
    %490 = arith.addf %488, %489 : vector<2x32xf32>
    %491 = math.tanh %490 : vector<2x32xf32>
    %492 = arith.mulf %487, %491 : vector<2x32xf32>
    %493 = arith.truncf %492 : vector<2x32xf32> to vector<2x32xbf16>
    %c0_196 = arith.constant 0 : index
    %c0_197 = arith.constant 0 : index
    %494 = vector.load %arg13[%c0_196, %c0_197] : memref<32x192xbf16, #tpu.memory_space<vmem>>, vector<32x192xbf16>
    %cst_198 = arith.constant dense<0.000000e+00> : vector<2x192xf32>
    %495 = tpu.matmul %493, %494, %cst_198 {dimension_numbers = #tpu.dot_dimension_numbers<[1], [0], [0], [1], [0, 0, 1, 1], [], []>} : vector<2x32xbf16>, vector<32x192xbf16>, vector<2x192xf32> -> vector<2x192xf32>
    %496 = vector.extract_strided_slice %495 {offsets = [0, 0], sizes = [2, 32], strides = [1, 1]} : vector<2x192xf32> to vector<2x32xf32>
    %497 = vector.extract_strided_slice %495 {offsets = [0, 32], sizes = [2, 32], strides = [1, 1]} : vector<2x192xf32> to vector<2x32xf32>
    %498 = vector.extract_strided_slice %495 {offsets = [0, 64], sizes = [2, 96], strides = [1, 1]} : vector<2x192xf32> to vector<2x96xf32>
    %499 = vector.extract_strided_slice %495 {offsets = [0, 160], sizes = [2, 32], strides = [1, 1]} : vector<2x192xf32> to vector<2x32xf32>
    %c0_199 = arith.constant 0 : index
    %c0_200 = arith.constant 0 : index
    %c0_201 = arith.constant 0 : index
    %500 = vector.load %arg4[%c0_199, %c0_200, %c0_201] : memref<2x8x32xf32, #tpu.memory_space<vmem>>, vector<2x8x32xf32>
    %501 = vector.shape_cast %496 : vector<2x32xf32> to vector<2x1x32xf32>
    %502 = vector.broadcast %501 : vector<2x1x32xf32> to vector<2x8x32xf32>
    %503 = arith.mulf %500, %502 : vector<2x8x32xf32>
    %cst_202 = arith.constant dense<0.000000e+00> : vector<2x8xf32>
    %504 = vector.multi_reduction <add>, %503, %cst_202 [2] : vector<2x8x32xf32> to vector<2x8xf32>
    %c0_203 = arith.constant 0 : index
    %c0_204 = arith.constant 0 : index
    %505 = vector.load %arg3[%c0_203, %c0_204] : memref<2x8xf32, #tpu.memory_space<vmem>>, vector<2x8xf32>
    %506 = arith.addf %504, %505 : vector<2x8xf32>
    %cst_205 = arith.constant dense<0xFF800000> : vector<2xf32>
    %507 = vector.multi_reduction <maximumf>, %506, %cst_205 [1] : vector<2x8xf32> to vector<2xf32>
    %508 = vector.shape_cast %507 : vector<2xf32> to vector<2x1xf32>
    %509 = vector.broadcast %508 : vector<2x1xf32> to vector<2x8xf32>
    %510 = arith.subf %506, %509 : vector<2x8xf32>
    %511 = math.exp %510 : vector<2x8xf32>
    %cst_206 = arith.constant dense<0.000000e+00> : vector<2xf32>
    %512 = vector.multi_reduction <add>, %511, %cst_206 [1] : vector<2x8xf32> to vector<2xf32>
    %513 = vector.shape_cast %512 : vector<2xf32> to vector<2x1xf32>
    %514 = tpu.reciprocal %513 {approx = true} : vector<2x1xf32> -> vector<2x1xf32>
    %515 = vector.broadcast %514 : vector<2x1xf32> to vector<2x8xf32>
    %516 = arith.mulf %511, %515 : vector<2x8xf32>
    %517 = vector.shape_cast %516 : vector<2x8xf32> to vector<2x8x1xf32>
    %c0_207 = arith.constant 0 : index
    %c0_208 = arith.constant 0 : index
    %c0_209 = arith.constant 0 : index
    %518 = vector.load %arg2[%c0_207, %c0_208, %c0_209] : memref<2x8x64xf32, #tpu.memory_space<vmem>>, vector<2x8x64xf32>
    %519 = vector.broadcast %517 : vector<2x8x1xf32> to vector<2x8x64xf32>
    %520 = arith.mulf %519, %518 : vector<2x8x64xf32>
    %cst_210 = arith.constant dense<0.000000e+00> : vector<2x64xf32>
    %521 = vector.multi_reduction <add>, %520, %cst_210 [1] : vector<2x8x64xf32> to vector<2x64xf32>
    %522 = arith.truncf %521 : vector<2x64xf32> to vector<2x64xbf16>
    %c0_211 = arith.constant 0 : index
    %c0_212 = arith.constant 0 : index
    %523 = vector.load %arg11[%c0_211, %c0_212] : memref<64x32xbf16, #tpu.memory_space<vmem>>, vector<64x32xbf16>
    %cst_213 = arith.constant dense<0.000000e+00> : vector<2x32xf32>
    %524 = tpu.matmul %522, %523, %cst_213 {dimension_numbers = #tpu.dot_dimension_numbers<[1], [0], [0], [1], [0, 0, 1, 1], [], []>} : vector<2x64xbf16>, vector<64x32xbf16>, vector<2x32xf32> -> vector<2x32xf32>
    %c0_214 = arith.constant 0 : index
    %c0_215 = arith.constant 0 : index
    %525 = vector.load %arg12[%c0_214, %c0_215] : memref<1x32xf32, #tpu.memory_space<vmem>>, vector<1x32xf32>
    %526 = vector.broadcast %525 : vector<1x32xf32> to vector<2x32xf32>
    %527 = arith.addf %524, %526 : vector<2x32xf32>
    %528 = arith.truncf %527 : vector<2x32xf32> to vector<2x32xbf16>
    %c0_216 = arith.constant 0 : index
    %c0_217 = arith.constant 0 : index
    %529 = vector.load %arg14[%c0_216, %c0_217] : memref<32x128xbf16, #tpu.memory_space<vmem>>, vector<32x128xbf16>
    %cst_218 = arith.constant dense<0.000000e+00> : vector<2x128xf32>
    %530 = tpu.matmul %528, %529, %cst_218 {dimension_numbers = #tpu.dot_dimension_numbers<[1], [0], [0], [1], [0, 0, 1, 1], [], []>} : vector<2x32xbf16>, vector<32x128xbf16>, vector<2x128xf32> -> vector<2x128xf32>
    %c0_219 = arith.constant 0 : index
    %c0_220 = arith.constant 0 : index
    %531 = vector.load %arg6[%c0_219, %c0_220] : memref<2x32xf32, #tpu.memory_space<vmem>>, vector<2x32xf32>
    %532 = vector.extract_strided_slice %530 {offsets = [0, 0], sizes = [2, 32], strides = [1, 1]} : vector<2x128xf32> to vector<2x32xf32>
    %533 = arith.addf %531, %532 : vector<2x32xf32>
    %534 = arith.addf %533, %497 : vector<2x32xf32>
    %535 = arith.negf %534 : vector<2x32xf32>
    %536 = math.exp %535 : vector<2x32xf32>
    %cst_221 = arith.constant 1.000000e+00 : f32
    %537 = vector.broadcast %cst_221 : f32 to vector<2x32xf32>
    %538 = arith.addf %537, %536 : vector<2x32xf32>
    %539 = arith.divf %537, %538 : vector<2x32xf32>
    %c0_222 = arith.constant 0 : index
    %c0_223 = arith.constant 0 : index
    %540 = vector.load %arg7[%c0_222, %c0_223] : memref<2x96xf32, #tpu.memory_space<vmem>>, vector<2x96xf32>
    %541 = vector.extract_strided_slice %530 {offsets = [0, 32], sizes = [2, 96], strides = [1, 1]} : vector<2x128xf32> to vector<2x96xf32>
    %542 = arith.addf %540, %541 : vector<2x96xf32>
    %543 = arith.addf %542, %498 : vector<2x96xf32>
    %544 = arith.negf %543 : vector<2x96xf32>
    %545 = math.exp %544 : vector<2x96xf32>
    %cst_224 = arith.constant 1.000000e+00 : f32
    %546 = vector.broadcast %cst_224 : f32 to vector<2x96xf32>
    %547 = arith.addf %546, %545 : vector<2x96xf32>
    %548 = arith.divf %546, %547 : vector<2x96xf32>
    %c0_225 = arith.constant 0 : index
    %c0_226 = arith.constant 0 : index
    %549 = vector.load %arg5[%c0_225, %c0_226] : memref<2x64xf32, #tpu.memory_space<vmem>>, vector<2x64xf32>
    %550 = tpu.concatenate %549, %527 in 1 : vector<2x64xf32>, vector<2x32xf32> -> vector<2x96xf32>
    %551 = arith.mulf %548, %550 : vector<2x96xf32>
    %552 = arith.truncf %551 : vector<2x96xf32> to vector<2x96xbf16>
    %c0_227 = arith.constant 0 : index
    %c0_228 = arith.constant 0 : index
    %553 = vector.load %arg15[%c0_227, %c0_228] : memref<96x32xbf16, #tpu.memory_space<vmem>>, vector<96x32xbf16>
    %cst_229 = arith.constant dense<0.000000e+00> : vector<2x32xf32>
    %554 = tpu.matmul %552, %553, %cst_229 {dimension_numbers = #tpu.dot_dimension_numbers<[1], [0], [0], [1], [0, 0, 1, 1], [], []>} : vector<2x96xbf16>, vector<96x32xbf16>, vector<2x32xf32> -> vector<2x32xf32>
    %555 = arith.addf %554, %499 : vector<2x32xf32>
    %c0_230 = arith.constant 0 : index
    %c0_231 = arith.constant 0 : index
    %556 = vector.load %arg16[%c0_230, %c0_231] : memref<1x32xf32, #tpu.memory_space<vmem>>, vector<1x32xf32>
    %557 = vector.broadcast %556 : vector<1x32xf32> to vector<2x32xf32>
    %558 = arith.addf %555, %557 : vector<2x32xf32>
    %559 = math.tanh %558 : vector<2x32xf32>
    %cst_232 = arith.constant 1.000000e+00 : f32
    %560 = vector.broadcast %cst_232 : f32 to vector<2x32xf32>
    %561 = arith.subf %560, %539 : vector<2x32xf32>
    %562 = arith.mulf %561, %492 : vector<2x32xf32>
    %563 = arith.mulf %539, %559 : vector<2x32xf32>
    %564 = arith.addf %562, %563 : vector<2x32xf32>
    %c3_233 = arith.constant 3 : index
    %c0_234 = arith.constant 0 : index
    %c0_235 = arith.constant 0 : index
    %565 = vector.load %arg17[%c3_233, %c0_234, %c0_235] : memref<8x2x32xf32, #tpu.memory_space<vmem>>, vector<1x2x32xf32>
    %566 = vector.shape_cast %565 : vector<1x2x32xf32> to vector<2x32xf32>
    %567 = vector.shape_cast %564 : vector<2x32xf32> to vector<1x2x32xf32>
    tpu.vector_store %arg17[%c3_233, %c0_234, %c0_235], %567 {strides = array<i32>} : memref<8x2x32xf32, #tpu.memory_space<vmem>>, vector<1x2x32xf32>,
    %c4 = arith.constant 4 : index
    %c0_236 = arith.constant 0 : index
    %c0_237 = arith.constant 0 : index
    %568 = vector.load %arg1[%c4, %c0_236, %c0_237] : memref<8x2x128xbf16, #tpu.memory_space<vmem>>, vector<1x2x128xbf16>
    %569 = vector.shape_cast %568 : vector<1x2x128xbf16> to vector<2x128xbf16>
    %570 = arith.extf %569 : vector<2x128xbf16> to vector<2x128xf32>
    %571 = arith.truncf %460 : vector<2x32xf32> to vector<2x32xbf16>
    %c0_238 = arith.constant 0 : index
    %c0_239 = arith.constant 0 : index
    %572 = vector.load %arg8[%c0_238, %c0_239] : memref<32x128xbf16, #tpu.memory_space<vmem>>, vector<32x128xbf16>
    %cst_240 = arith.constant dense<0.000000e+00> : vector<2x128xf32>
    %573 = tpu.matmul %571, %572, %cst_240 {dimension_numbers = #tpu.dot_dimension_numbers<[1], [0], [0], [1], [0, 0, 1, 1], [], []>} : vector<2x32xbf16>, vector<32x128xbf16>, vector<2x128xf32> -> vector<2x128xf32>
    %574 = arith.addf %570, %573 : vector<2x128xf32>
    %575 = vector.extract_strided_slice %574 {offsets = [0, 0], sizes = [2, 32], strides = [1, 1]} : vector<2x128xf32> to vector<2x32xf32>
    %576 = arith.negf %575 : vector<2x32xf32>
    %577 = math.exp %576 : vector<2x32xf32>
    %cst_241 = arith.constant 1.000000e+00 : f32
    %578 = vector.broadcast %cst_241 : f32 to vector<2x32xf32>
    %579 = arith.addf %578, %577 : vector<2x32xf32>
    %580 = arith.divf %578, %579 : vector<2x32xf32>
    %581 = vector.extract_strided_slice %574 {offsets = [0, 32], sizes = [2, 32], strides = [1, 1]} : vector<2x128xf32> to vector<2x32xf32>
    %582 = arith.negf %581 : vector<2x32xf32>
    %583 = math.exp %582 : vector<2x32xf32>
    %cst_242 = arith.constant 1.000000e+00 : f32
    %584 = vector.broadcast %cst_242 : f32 to vector<2x32xf32>
    %585 = arith.addf %584, %583 : vector<2x32xf32>
    %586 = arith.divf %584, %585 : vector<2x32xf32>
    %587 = vector.extract_strided_slice %574 {offsets = [0, 64], sizes = [2, 32], strides = [1, 1]} : vector<2x128xf32> to vector<2x32xf32>
    %588 = math.tanh %587 : vector<2x32xf32>
    %589 = vector.extract_strided_slice %574 {offsets = [0, 96], sizes = [2, 32], strides = [1, 1]} : vector<2x128xf32> to vector<2x32xf32>
    %590 = arith.negf %589 : vector<2x32xf32>
    %591 = math.exp %590 : vector<2x32xf32>
    %cst_243 = arith.constant 1.000000e+00 : f32
    %592 = vector.broadcast %cst_243 : f32 to vector<2x32xf32>
    %593 = arith.addf %592, %591 : vector<2x32xf32>
    %594 = arith.divf %592, %593 : vector<2x32xf32>
    %595 = arith.mulf %586, %458 : vector<2x32xf32>
    %596 = arith.mulf %580, %588 : vector<2x32xf32>
    %597 = arith.addf %595, %596 : vector<2x32xf32>
    %598 = math.tanh %597 : vector<2x32xf32>
    %599 = arith.mulf %594, %598 : vector<2x32xf32>
    %600 = tpu.concatenate %599, %564 in 1 : vector<2x32xf32>, vector<2x32xf32> -> vector<2x64xf32>
    %601 = arith.truncf %600 : vector<2x64xf32> to vector<2x64xbf16>
    %c0_244 = arith.constant 0 : index
    %c0_245 = arith.constant 0 : index
    %602 = vector.load %arg9[%c0_244, %c0_245] : memref<64x128xbf16, #tpu.memory_space<vmem>>, vector<64x128xbf16>
    %cst_246 = arith.constant dense<0.000000e+00> : vector<2x128xf32>
    %603 = tpu.matmul %601, %602, %cst_246 {dimension_numbers = #tpu.dot_dimension_numbers<[1], [0], [0], [1], [0, 0, 1, 1], [], []>} : vector<2x64xbf16>, vector<64x128xbf16>, vector<2x128xf32> -> vector<2x128xf32>
    %c0_247 = arith.constant 0 : index
    %c0_248 = arith.constant 0 : index
    %604 = vector.load %arg10[%c0_247, %c0_248] : memref<1x128xf32, #tpu.memory_space<vmem>>, vector<1x128xf32>
    %605 = vector.broadcast %604 : vector<1x128xf32> to vector<2x128xf32>
    %606 = arith.addf %603, %605 : vector<2x128xf32>
    %607 = vector.extract_strided_slice %606 {offsets = [0, 0], sizes = [2, 32], strides = [1, 1]} : vector<2x128xf32> to vector<2x32xf32>
    %608 = arith.negf %607 : vector<2x32xf32>
    %609 = math.exp %608 : vector<2x32xf32>
    %cst_249 = arith.constant 1.000000e+00 : f32
    %610 = vector.broadcast %cst_249 : f32 to vector<2x32xf32>
    %611 = arith.addf %610, %609 : vector<2x32xf32>
    %612 = arith.divf %610, %611 : vector<2x32xf32>
    %613 = vector.extract_strided_slice %606 {offsets = [0, 32], sizes = [2, 32], strides = [1, 1]} : vector<2x128xf32> to vector<2x32xf32>
    %614 = arith.negf %613 : vector<2x32xf32>
    %615 = math.exp %614 : vector<2x32xf32>
    %cst_250 = arith.constant 1.000000e+00 : f32
    %616 = vector.broadcast %cst_250 : f32 to vector<2x32xf32>
    %617 = arith.addf %616, %615 : vector<2x32xf32>
    %618 = arith.divf %616, %617 : vector<2x32xf32>
    %619 = vector.extract_strided_slice %606 {offsets = [0, 64], sizes = [2, 32], strides = [1, 1]} : vector<2x128xf32> to vector<2x32xf32>
    %620 = math.tanh %619 : vector<2x32xf32>
    %621 = vector.extract_strided_slice %606 {offsets = [0, 96], sizes = [2, 32], strides = [1, 1]} : vector<2x128xf32> to vector<2x32xf32>
    %622 = arith.negf %621 : vector<2x32xf32>
    %623 = math.exp %622 : vector<2x32xf32>
    %cst_251 = arith.constant 1.000000e+00 : f32
    %624 = vector.broadcast %cst_251 : f32 to vector<2x32xf32>
    %625 = arith.addf %624, %623 : vector<2x32xf32>
    %626 = arith.divf %624, %625 : vector<2x32xf32>
    %627 = arith.mulf %618, %490 : vector<2x32xf32>
    %628 = arith.mulf %612, %620 : vector<2x32xf32>
    %629 = arith.addf %627, %628 : vector<2x32xf32>
    %630 = math.tanh %629 : vector<2x32xf32>
    %631 = arith.mulf %626, %630 : vector<2x32xf32>
    %632 = arith.truncf %631 : vector<2x32xf32> to vector<2x32xbf16>
    %c0_252 = arith.constant 0 : index
    %c0_253 = arith.constant 0 : index
    %633 = vector.load %arg13[%c0_252, %c0_253] : memref<32x192xbf16, #tpu.memory_space<vmem>>, vector<32x192xbf16>
    %cst_254 = arith.constant dense<0.000000e+00> : vector<2x192xf32>
    %634 = tpu.matmul %632, %633, %cst_254 {dimension_numbers = #tpu.dot_dimension_numbers<[1], [0], [0], [1], [0, 0, 1, 1], [], []>} : vector<2x32xbf16>, vector<32x192xbf16>, vector<2x192xf32> -> vector<2x192xf32>
    %635 = vector.extract_strided_slice %634 {offsets = [0, 0], sizes = [2, 32], strides = [1, 1]} : vector<2x192xf32> to vector<2x32xf32>
    %636 = vector.extract_strided_slice %634 {offsets = [0, 32], sizes = [2, 32], strides = [1, 1]} : vector<2x192xf32> to vector<2x32xf32>
    %637 = vector.extract_strided_slice %634 {offsets = [0, 64], sizes = [2, 96], strides = [1, 1]} : vector<2x192xf32> to vector<2x96xf32>
    %638 = vector.extract_strided_slice %634 {offsets = [0, 160], sizes = [2, 32], strides = [1, 1]} : vector<2x192xf32> to vector<2x32xf32>
    %c0_255 = arith.constant 0 : index
    %c0_256 = arith.constant 0 : index
    %c0_257 = arith.constant 0 : index
    %639 = vector.load %arg4[%c0_255, %c0_256, %c0_257] : memref<2x8x32xf32, #tpu.memory_space<vmem>>, vector<2x8x32xf32>
    %640 = vector.shape_cast %635 : vector<2x32xf32> to vector<2x1x32xf32>
    %641 = vector.broadcast %640 : vector<2x1x32xf32> to vector<2x8x32xf32>
    %642 = arith.mulf %639, %641 : vector<2x8x32xf32>
    %cst_258 = arith.constant dense<0.000000e+00> : vector<2x8xf32>
    %643 = vector.multi_reduction <add>, %642, %cst_258 [2] : vector<2x8x32xf32> to vector<2x8xf32>
    %c0_259 = arith.constant 0 : index
    %c0_260 = arith.constant 0 : index
    %644 = vector.load %arg3[%c0_259, %c0_260] : memref<2x8xf32, #tpu.memory_space<vmem>>, vector<2x8xf32>
    %645 = arith.addf %643, %644 : vector<2x8xf32>
    %cst_261 = arith.constant dense<0xFF800000> : vector<2xf32>
    %646 = vector.multi_reduction <maximumf>, %645, %cst_261 [1] : vector<2x8xf32> to vector<2xf32>
    %647 = vector.shape_cast %646 : vector<2xf32> to vector<2x1xf32>
    %648 = vector.broadcast %647 : vector<2x1xf32> to vector<2x8xf32>
    %649 = arith.subf %645, %648 : vector<2x8xf32>
    %650 = math.exp %649 : vector<2x8xf32>
    %cst_262 = arith.constant dense<0.000000e+00> : vector<2xf32>
    %651 = vector.multi_reduction <add>, %650, %cst_262 [1] : vector<2x8xf32> to vector<2xf32>
    %652 = vector.shape_cast %651 : vector<2xf32> to vector<2x1xf32>
    %653 = tpu.reciprocal %652 {approx = true} : vector<2x1xf32> -> vector<2x1xf32>
    %654 = vector.broadcast %653 : vector<2x1xf32> to vector<2x8xf32>
    %655 = arith.mulf %650, %654 : vector<2x8xf32>
    %656 = vector.shape_cast %655 : vector<2x8xf32> to vector<2x8x1xf32>
    %c0_263 = arith.constant 0 : index
    %c0_264 = arith.constant 0 : index
    %c0_265 = arith.constant 0 : index
    %657 = vector.load %arg2[%c0_263, %c0_264, %c0_265] : memref<2x8x64xf32, #tpu.memory_space<vmem>>, vector<2x8x64xf32>
    %658 = vector.broadcast %656 : vector<2x8x1xf32> to vector<2x8x64xf32>
    %659 = arith.mulf %658, %657 : vector<2x8x64xf32>
    %cst_266 = arith.constant dense<0.000000e+00> : vector<2x64xf32>
    %660 = vector.multi_reduction <add>, %659, %cst_266 [1] : vector<2x8x64xf32> to vector<2x64xf32>
    %661 = arith.truncf %660 : vector<2x64xf32> to vector<2x64xbf16>
    %c0_267 = arith.constant 0 : index
    %c0_268 = arith.constant 0 : index
    %662 = vector.load %arg11[%c0_267, %c0_268] : memref<64x32xbf16, #tpu.memory_space<vmem>>, vector<64x32xbf16>
    %cst_269 = arith.constant dense<0.000000e+00> : vector<2x32xf32>
    %663 = tpu.matmul %661, %662, %cst_269 {dimension_numbers = #tpu.dot_dimension_numbers<[1], [0], [0], [1], [0, 0, 1, 1], [], []>} : vector<2x64xbf16>, vector<64x32xbf16>, vector<2x32xf32> -> vector<2x32xf32>
    %c0_270 = arith.constant 0 : index
    %c0_271 = arith.constant 0 : index
    %664 = vector.load %arg12[%c0_270, %c0_271] : memref<1x32xf32, #tpu.memory_space<vmem>>, vector<1x32xf32>
    %665 = vector.broadcast %664 : vector<1x32xf32> to vector<2x32xf32>
    %666 = arith.addf %663, %665 : vector<2x32xf32>
    %667 = arith.truncf %666 : vector<2x32xf32> to vector<2x32xbf16>
    %c0_272 = arith.constant 0 : index
    %c0_273 = arith.constant 0 : index
    %668 = vector.load %arg14[%c0_272, %c0_273] : memref<32x128xbf16, #tpu.memory_space<vmem>>, vector<32x128xbf16>
    %cst_274 = arith.constant dense<0.000000e+00> : vector<2x128xf32>
    %669 = tpu.matmul %667, %668, %cst_274 {dimension_numbers = #tpu.dot_dimension_numbers<[1], [0], [0], [1], [0, 0, 1, 1], [], []>} : vector<2x32xbf16>, vector<32x128xbf16>, vector<2x128xf32> -> vector<2x128xf32>
    %c0_275 = arith.constant 0 : index
    %c0_276 = arith.constant 0 : index
    %670 = vector.load %arg6[%c0_275, %c0_276] : memref<2x32xf32, #tpu.memory_space<vmem>>, vector<2x32xf32>
    %671 = vector.extract_strided_slice %669 {offsets = [0, 0], sizes = [2, 32], strides = [1, 1]} : vector<2x128xf32> to vector<2x32xf32>
    %672 = arith.addf %670, %671 : vector<2x32xf32>
    %673 = arith.addf %672, %636 : vector<2x32xf32>
    %674 = arith.negf %673 : vector<2x32xf32>
    %675 = math.exp %674 : vector<2x32xf32>
    %cst_277 = arith.constant 1.000000e+00 : f32
    %676 = vector.broadcast %cst_277 : f32 to vector<2x32xf32>
    %677 = arith.addf %676, %675 : vector<2x32xf32>
    %678 = arith.divf %676, %677 : vector<2x32xf32>
    %c0_278 = arith.constant 0 : index
    %c0_279 = arith.constant 0 : index
    %679 = vector.load %arg7[%c0_278, %c0_279] : memref<2x96xf32, #tpu.memory_space<vmem>>, vector<2x96xf32>
    %680 = vector.extract_strided_slice %669 {offsets = [0, 32], sizes = [2, 96], strides = [1, 1]} : vector<2x128xf32> to vector<2x96xf32>
    %681 = arith.addf %679, %680 : vector<2x96xf32>
    %682 = arith.addf %681, %637 : vector<2x96xf32>
    %683 = arith.negf %682 : vector<2x96xf32>
    %684 = math.exp %683 : vector<2x96xf32>
    %cst_280 = arith.constant 1.000000e+00 : f32
    %685 = vector.broadcast %cst_280 : f32 to vector<2x96xf32>
    %686 = arith.addf %685, %684 : vector<2x96xf32>
    %687 = arith.divf %685, %686 : vector<2x96xf32>
    %c0_281 = arith.constant 0 : index
    %c0_282 = arith.constant 0 : index
    %688 = vector.load %arg5[%c0_281, %c0_282] : memref<2x64xf32, #tpu.memory_space<vmem>>, vector<2x64xf32>
    %689 = tpu.concatenate %688, %666 in 1 : vector<2x64xf32>, vector<2x32xf32> -> vector<2x96xf32>
    %690 = arith.mulf %687, %689 : vector<2x96xf32>
    %691 = arith.truncf %690 : vector<2x96xf32> to vector<2x96xbf16>
    %c0_283 = arith.constant 0 : index
    %c0_284 = arith.constant 0 : index
    %692 = vector.load %arg15[%c0_283, %c0_284] : memref<96x32xbf16, #tpu.memory_space<vmem>>, vector<96x32xbf16>
    %cst_285 = arith.constant dense<0.000000e+00> : vector<2x32xf32>
    %693 = tpu.matmul %691, %692, %cst_285 {dimension_numbers = #tpu.dot_dimension_numbers<[1], [0], [0], [1], [0, 0, 1, 1], [], []>} : vector<2x96xbf16>, vector<96x32xbf16>, vector<2x32xf32> -> vector<2x32xf32>
    %694 = arith.addf %693, %638 : vector<2x32xf32>
    %c0_286 = arith.constant 0 : index
    %c0_287 = arith.constant 0 : index
    %695 = vector.load %arg16[%c0_286, %c0_287] : memref<1x32xf32, #tpu.memory_space<vmem>>, vector<1x32xf32>
    %696 = vector.broadcast %695 : vector<1x32xf32> to vector<2x32xf32>
    %697 = arith.addf %694, %696 : vector<2x32xf32>
    %698 = math.tanh %697 : vector<2x32xf32>
    %cst_288 = arith.constant 1.000000e+00 : f32
    %699 = vector.broadcast %cst_288 : f32 to vector<2x32xf32>
    %700 = arith.subf %699, %678 : vector<2x32xf32>
    %701 = arith.mulf %700, %631 : vector<2x32xf32>
    %702 = arith.mulf %678, %698 : vector<2x32xf32>
    %703 = arith.addf %701, %702 : vector<2x32xf32>
    %c4_289 = arith.constant 4 : index
    %c0_290 = arith.constant 0 : index
    %c0_291 = arith.constant 0 : index
    %704 = vector.load %arg17[%c4_289, %c0_290, %c0_291] : memref<8x2x32xf32, #tpu.memory_space<vmem>>, vector<1x2x32xf32>
    %705 = vector.shape_cast %704 : vector<1x2x32xf32> to vector<2x32xf32>
    %706 = vector.shape_cast %703 : vector<2x32xf32> to vector<1x2x32xf32>
    tpu.vector_store %arg17[%c4_289, %c0_290, %c0_291], %706 {strides = array<i32>} : memref<8x2x32xf32, #tpu.memory_space<vmem>>, vector<1x2x32xf32>,
    %c5 = arith.constant 5 : index
    %c0_292 = arith.constant 0 : index
    %c0_293 = arith.constant 0 : index
    %707 = vector.load %arg1[%c5, %c0_292, %c0_293] : memref<8x2x128xbf16, #tpu.memory_space<vmem>>, vector<1x2x128xbf16>
    %708 = vector.shape_cast %707 : vector<1x2x128xbf16> to vector<2x128xbf16>
    %709 = arith.extf %708 : vector<2x128xbf16> to vector<2x128xf32>
    %710 = arith.truncf %599 : vector<2x32xf32> to vector<2x32xbf16>
    %c0_294 = arith.constant 0 : index
    %c0_295 = arith.constant 0 : index
    %711 = vector.load %arg8[%c0_294, %c0_295] : memref<32x128xbf16, #tpu.memory_space<vmem>>, vector<32x128xbf16>
    %cst_296 = arith.constant dense<0.000000e+00> : vector<2x128xf32>
    %712 = tpu.matmul %710, %711, %cst_296 {dimension_numbers = #tpu.dot_dimension_numbers<[1], [0], [0], [1], [0, 0, 1, 1], [], []>} : vector<2x32xbf16>, vector<32x128xbf16>, vector<2x128xf32> -> vector<2x128xf32>
    %713 = arith.addf %709, %712 : vector<2x128xf32>
    %714 = vector.extract_strided_slice %713 {offsets = [0, 0], sizes = [2, 32], strides = [1, 1]} : vector<2x128xf32> to vector<2x32xf32>
    %715 = arith.negf %714 : vector<2x32xf32>
    %716 = math.exp %715 : vector<2x32xf32>
    %cst_297 = arith.constant 1.000000e+00 : f32
    %717 = vector.broadcast %cst_297 : f32 to vector<2x32xf32>
    %718 = arith.addf %717, %716 : vector<2x32xf32>
    %719 = arith.divf %717, %718 : vector<2x32xf32>
    %720 = vector.extract_strided_slice %713 {offsets = [0, 32], sizes = [2, 32], strides = [1, 1]} : vector<2x128xf32> to vector<2x32xf32>
    %721 = arith.negf %720 : vector<2x32xf32>
    %722 = math.exp %721 : vector<2x32xf32>
    %cst_298 = arith.constant 1.000000e+00 : f32
    %723 = vector.broadcast %cst_298 : f32 to vector<2x32xf32>
    %724 = arith.addf %723, %722 : vector<2x32xf32>
    %725 = arith.divf %723, %724 : vector<2x32xf32>
    %726 = vector.extract_strided_slice %713 {offsets = [0, 64], sizes = [2, 32], strides = [1, 1]} : vector<2x128xf32> to vector<2x32xf32>
    %727 = math.tanh %726 : vector<2x32xf32>
    %728 = vector.extract_strided_slice %713 {offsets = [0, 96], sizes = [2, 32], strides = [1, 1]} : vector<2x128xf32> to vector<2x32xf32>
    %729 = arith.negf %728 : vector<2x32xf32>
    %730 = math.exp %729 : vector<2x32xf32>
    %cst_299 = arith.constant 1.000000e+00 : f32
    %731 = vector.broadcast %cst_299 : f32 to vector<2x32xf32>
    %732 = arith.addf %731, %730 : vector<2x32xf32>
    %733 = arith.divf %731, %732 : vector<2x32xf32>
    %734 = arith.mulf %725, %597 : vector<2x32xf32>
    %735 = arith.mulf %719, %727 : vector<2x32xf32>
    %736 = arith.addf %734, %735 : vector<2x32xf32>
    %737 = math.tanh %736 : vector<2x32xf32>
    %738 = arith.mulf %733, %737 : vector<2x32xf32>
    %739 = tpu.concatenate %738, %703 in 1 : vector<2x32xf32>, vector<2x32xf32> -> vector<2x64xf32>
    %740 = arith.truncf %739 : vector<2x64xf32> to vector<2x64xbf16>
    %c0_300 = arith.constant 0 : index
    %c0_301 = arith.constant 0 : index
    %741 = vector.load %arg9[%c0_300, %c0_301] : memref<64x128xbf16, #tpu.memory_space<vmem>>, vector<64x128xbf16>
    %cst_302 = arith.constant dense<0.000000e+00> : vector<2x128xf32>
    %742 = tpu.matmul %740, %741, %cst_302 {dimension_numbers = #tpu.dot_dimension_numbers<[1], [0], [0], [1], [0, 0, 1, 1], [], []>} : vector<2x64xbf16>, vector<64x128xbf16>, vector<2x128xf32> -> vector<2x128xf32>
    %c0_303 = arith.constant 0 : index
    %c0_304 = arith.constant 0 : index
    %743 = vector.load %arg10[%c0_303, %c0_304] : memref<1x128xf32, #tpu.memory_space<vmem>>, vector<1x128xf32>
    %744 = vector.broadcast %743 : vector<1x128xf32> to vector<2x128xf32>
    %745 = arith.addf %742, %744 : vector<2x128xf32>
    %746 = vector.extract_strided_slice %745 {offsets = [0, 0], sizes = [2, 32], strides = [1, 1]} : vector<2x128xf32> to vector<2x32xf32>
    %747 = arith.negf %746 : vector<2x32xf32>
    %748 = math.exp %747 : vector<2x32xf32>
    %cst_305 = arith.constant 1.000000e+00 : f32
    %749 = vector.broadcast %cst_305 : f32 to vector<2x32xf32>
    %750 = arith.addf %749, %748 : vector<2x32xf32>
    %751 = arith.divf %749, %750 : vector<2x32xf32>
    %752 = vector.extract_strided_slice %745 {offsets = [0, 32], sizes = [2, 32], strides = [1, 1]} : vector<2x128xf32> to vector<2x32xf32>
    %753 = arith.negf %752 : vector<2x32xf32>
    %754 = math.exp %753 : vector<2x32xf32>
    %cst_306 = arith.constant 1.000000e+00 : f32
    %755 = vector.broadcast %cst_306 : f32 to vector<2x32xf32>
    %756 = arith.addf %755, %754 : vector<2x32xf32>
    %757 = arith.divf %755, %756 : vector<2x32xf32>
    %758 = vector.extract_strided_slice %745 {offsets = [0, 64], sizes = [2, 32], strides = [1, 1]} : vector<2x128xf32> to vector<2x32xf32>
    %759 = math.tanh %758 : vector<2x32xf32>
    %760 = vector.extract_strided_slice %745 {offsets = [0, 96], sizes = [2, 32], strides = [1, 1]} : vector<2x128xf32> to vector<2x32xf32>
    %761 = arith.negf %760 : vector<2x32xf32>
    %762 = math.exp %761 : vector<2x32xf32>
    %cst_307 = arith.constant 1.000000e+00 : f32
    %763 = vector.broadcast %cst_307 : f32 to vector<2x32xf32>
    %764 = arith.addf %763, %762 : vector<2x32xf32>
    %765 = arith.divf %763, %764 : vector<2x32xf32>
    %766 = arith.mulf %757, %629 : vector<2x32xf32>
    %767 = arith.mulf %751, %759 : vector<2x32xf32>
    %768 = arith.addf %766, %767 : vector<2x32xf32>
    %769 = math.tanh %768 : vector<2x32xf32>
    %770 = arith.mulf %765, %769 : vector<2x32xf32>
    %771 = arith.truncf %770 : vector<2x32xf32> to vector<2x32xbf16>
    %c0_308 = arith.constant 0 : index
    %c0_309 = arith.constant 0 : index
    %772 = vector.load %arg13[%c0_308, %c0_309] : memref<32x192xbf16, #tpu.memory_space<vmem>>, vector<32x192xbf16>
    %cst_310 = arith.constant dense<0.000000e+00> : vector<2x192xf32>
    %773 = tpu.matmul %771, %772, %cst_310 {dimension_numbers = #tpu.dot_dimension_numbers<[1], [0], [0], [1], [0, 0, 1, 1], [], []>} : vector<2x32xbf16>, vector<32x192xbf16>, vector<2x192xf32> -> vector<2x192xf32>
    %774 = vector.extract_strided_slice %773 {offsets = [0, 0], sizes = [2, 32], strides = [1, 1]} : vector<2x192xf32> to vector<2x32xf32>
    %775 = vector.extract_strided_slice %773 {offsets = [0, 32], sizes = [2, 32], strides = [1, 1]} : vector<2x192xf32> to vector<2x32xf32>
    %776 = vector.extract_strided_slice %773 {offsets = [0, 64], sizes = [2, 96], strides = [1, 1]} : vector<2x192xf32> to vector<2x96xf32>
    %777 = vector.extract_strided_slice %773 {offsets = [0, 160], sizes = [2, 32], strides = [1, 1]} : vector<2x192xf32> to vector<2x32xf32>
    %c0_311 = arith.constant 0 : index
    %c0_312 = arith.constant 0 : index
    %c0_313 = arith.constant 0 : index
    %778 = vector.load %arg4[%c0_311, %c0_312, %c0_313] : memref<2x8x32xf32, #tpu.memory_space<vmem>>, vector<2x8x32xf32>
    %779 = vector.shape_cast %774 : vector<2x32xf32> to vector<2x1x32xf32>
    %780 = vector.broadcast %779 : vector<2x1x32xf32> to vector<2x8x32xf32>
    %781 = arith.mulf %778, %780 : vector<2x8x32xf32>
    %cst_314 = arith.constant dense<0.000000e+00> : vector<2x8xf32>
    %782 = vector.multi_reduction <add>, %781, %cst_314 [2] : vector<2x8x32xf32> to vector<2x8xf32>
    %c0_315 = arith.constant 0 : index
    %c0_316 = arith.constant 0 : index
    %783 = vector.load %arg3[%c0_315, %c0_316] : memref<2x8xf32, #tpu.memory_space<vmem>>, vector<2x8xf32>
    %784 = arith.addf %782, %783 : vector<2x8xf32>
    %cst_317 = arith.constant dense<0xFF800000> : vector<2xf32>
    %785 = vector.multi_reduction <maximumf>, %784, %cst_317 [1] : vector<2x8xf32> to vector<2xf32>
    %786 = vector.shape_cast %785 : vector<2xf32> to vector<2x1xf32>
    %787 = vector.broadcast %786 : vector<2x1xf32> to vector<2x8xf32>
    %788 = arith.subf %784, %787 : vector<2x8xf32>
    %789 = math.exp %788 : vector<2x8xf32>
    %cst_318 = arith.constant dense<0.000000e+00> : vector<2xf32>
    %790 = vector.multi_reduction <add>, %789, %cst_318 [1] : vector<2x8xf32> to vector<2xf32>
    %791 = vector.shape_cast %790 : vector<2xf32> to vector<2x1xf32>
    %792 = tpu.reciprocal %791 {approx = true} : vector<2x1xf32> -> vector<2x1xf32>
    %793 = vector.broadcast %792 : vector<2x1xf32> to vector<2x8xf32>
    %794 = arith.mulf %789, %793 : vector<2x8xf32>
    %795 = vector.shape_cast %794 : vector<2x8xf32> to vector<2x8x1xf32>
    %c0_319 = arith.constant 0 : index
    %c0_320 = arith.constant 0 : index
    %c0_321 = arith.constant 0 : index
    %796 = vector.load %arg2[%c0_319, %c0_320, %c0_321] : memref<2x8x64xf32, #tpu.memory_space<vmem>>, vector<2x8x64xf32>
    %797 = vector.broadcast %795 : vector<2x8x1xf32> to vector<2x8x64xf32>
    %798 = arith.mulf %797, %796 : vector<2x8x64xf32>
    %cst_322 = arith.constant dense<0.000000e+00> : vector<2x64xf32>
    %799 = vector.multi_reduction <add>, %798, %cst_322 [1] : vector<2x8x64xf32> to vector<2x64xf32>
    %800 = arith.truncf %799 : vector<2x64xf32> to vector<2x64xbf16>
    %c0_323 = arith.constant 0 : index
    %c0_324 = arith.constant 0 : index
    %801 = vector.load %arg11[%c0_323, %c0_324] : memref<64x32xbf16, #tpu.memory_space<vmem>>, vector<64x32xbf16>
    %cst_325 = arith.constant dense<0.000000e+00> : vector<2x32xf32>
    %802 = tpu.matmul %800, %801, %cst_325 {dimension_numbers = #tpu.dot_dimension_numbers<[1], [0], [0], [1], [0, 0, 1, 1], [], []>} : vector<2x64xbf16>, vector<64x32xbf16>, vector<2x32xf32> -> vector<2x32xf32>
    %c0_326 = arith.constant 0 : index
    %c0_327 = arith.constant 0 : index
    %803 = vector.load %arg12[%c0_326, %c0_327] : memref<1x32xf32, #tpu.memory_space<vmem>>, vector<1x32xf32>
    %804 = vector.broadcast %803 : vector<1x32xf32> to vector<2x32xf32>
    %805 = arith.addf %802, %804 : vector<2x32xf32>
    %806 = arith.truncf %805 : vector<2x32xf32> to vector<2x32xbf16>
    %c0_328 = arith.constant 0 : index
    %c0_329 = arith.constant 0 : index
    %807 = vector.load %arg14[%c0_328, %c0_329] : memref<32x128xbf16, #tpu.memory_space<vmem>>, vector<32x128xbf16>
    %cst_330 = arith.constant dense<0.000000e+00> : vector<2x128xf32>
    %808 = tpu.matmul %806, %807, %cst_330 {dimension_numbers = #tpu.dot_dimension_numbers<[1], [0], [0], [1], [0, 0, 1, 1], [], []>} : vector<2x32xbf16>, vector<32x128xbf16>, vector<2x128xf32> -> vector<2x128xf32>
    %c0_331 = arith.constant 0 : index
    %c0_332 = arith.constant 0 : index
    %809 = vector.load %arg6[%c0_331, %c0_332] : memref<2x32xf32, #tpu.memory_space<vmem>>, vector<2x32xf32>
    %810 = vector.extract_strided_slice %808 {offsets = [0, 0], sizes = [2, 32], strides = [1, 1]} : vector<2x128xf32> to vector<2x32xf32>
    %811 = arith.addf %809, %810 : vector<2x32xf32>
    %812 = arith.addf %811, %775 : vector<2x32xf32>
    %813 = arith.negf %812 : vector<2x32xf32>
    %814 = math.exp %813 : vector<2x32xf32>
    %cst_333 = arith.constant 1.000000e+00 : f32
    %815 = vector.broadcast %cst_333 : f32 to vector<2x32xf32>
    %816 = arith.addf %815, %814 : vector<2x32xf32>
    %817 = arith.divf %815, %816 : vector<2x32xf32>
    %c0_334 = arith.constant 0 : index
    %c0_335 = arith.constant 0 : index
    %818 = vector.load %arg7[%c0_334, %c0_335] : memref<2x96xf32, #tpu.memory_space<vmem>>, vector<2x96xf32>
    %819 = vector.extract_strided_slice %808 {offsets = [0, 32], sizes = [2, 96], strides = [1, 1]} : vector<2x128xf32> to vector<2x96xf32>
    %820 = arith.addf %818, %819 : vector<2x96xf32>
    %821 = arith.addf %820, %776 : vector<2x96xf32>
    %822 = arith.negf %821 : vector<2x96xf32>
    %823 = math.exp %822 : vector<2x96xf32>
    %cst_336 = arith.constant 1.000000e+00 : f32
    %824 = vector.broadcast %cst_336 : f32 to vector<2x96xf32>
    %825 = arith.addf %824, %823 : vector<2x96xf32>
    %826 = arith.divf %824, %825 : vector<2x96xf32>
    %c0_337 = arith.constant 0 : index
    %c0_338 = arith.constant 0 : index
    %827 = vector.load %arg5[%c0_337, %c0_338] : memref<2x64xf32, #tpu.memory_space<vmem>>, vector<2x64xf32>
    %828 = tpu.concatenate %827, %805 in 1 : vector<2x64xf32>, vector<2x32xf32> -> vector<2x96xf32>
    %829 = arith.mulf %826, %828 : vector<2x96xf32>
    %830 = arith.truncf %829 : vector<2x96xf32> to vector<2x96xbf16>
    %c0_339 = arith.constant 0 : index
    %c0_340 = arith.constant 0 : index
    %831 = vector.load %arg15[%c0_339, %c0_340] : memref<96x32xbf16, #tpu.memory_space<vmem>>, vector<96x32xbf16>
    %cst_341 = arith.constant dense<0.000000e+00> : vector<2x32xf32>
    %832 = tpu.matmul %830, %831, %cst_341 {dimension_numbers = #tpu.dot_dimension_numbers<[1], [0], [0], [1], [0, 0, 1, 1], [], []>} : vector<2x96xbf16>, vector<96x32xbf16>, vector<2x32xf32> -> vector<2x32xf32>
    %833 = arith.addf %832, %777 : vector<2x32xf32>
    %c0_342 = arith.constant 0 : index
    %c0_343 = arith.constant 0 : index
    %834 = vector.load %arg16[%c0_342, %c0_343] : memref<1x32xf32, #tpu.memory_space<vmem>>, vector<1x32xf32>
    %835 = vector.broadcast %834 : vector<1x32xf32> to vector<2x32xf32>
    %836 = arith.addf %833, %835 : vector<2x32xf32>
    %837 = math.tanh %836 : vector<2x32xf32>
    %cst_344 = arith.constant 1.000000e+00 : f32
    %838 = vector.broadcast %cst_344 : f32 to vector<2x32xf32>
    %839 = arith.subf %838, %817 : vector<2x32xf32>
    %840 = arith.mulf %839, %770 : vector<2x32xf32>
    %841 = arith.mulf %817, %837 : vector<2x32xf32>
    %842 = arith.addf %840, %841 : vector<2x32xf32>
    %c5_345 = arith.constant 5 : index
    %c0_346 = arith.constant 0 : index
    %c0_347 = arith.constant 0 : index
    %843 = vector.load %arg17[%c5_345, %c0_346, %c0_347] : memref<8x2x32xf32, #tpu.memory_space<vmem>>, vector<1x2x32xf32>
    %844 = vector.shape_cast %843 : vector<1x2x32xf32> to vector<2x32xf32>
    %845 = vector.shape_cast %842 : vector<2x32xf32> to vector<1x2x32xf32>
    tpu.vector_store %arg17[%c5_345, %c0_346, %c0_347], %845 {strides = array<i32>} : memref<8x2x32xf32, #tpu.memory_space<vmem>>, vector<1x2x32xf32>,
    %c6 = arith.constant 6 : index
    %c0_348 = arith.constant 0 : index
    %c0_349 = arith.constant 0 : index
    %846 = vector.load %arg1[%c6, %c0_348, %c0_349] : memref<8x2x128xbf16, #tpu.memory_space<vmem>>, vector<1x2x128xbf16>
    %847 = vector.shape_cast %846 : vector<1x2x128xbf16> to vector<2x128xbf16>
    %848 = arith.extf %847 : vector<2x128xbf16> to vector<2x128xf32>
    %849 = arith.truncf %738 : vector<2x32xf32> to vector<2x32xbf16>
    %c0_350 = arith.constant 0 : index
    %c0_351 = arith.constant 0 : index
    %850 = vector.load %arg8[%c0_350, %c0_351] : memref<32x128xbf16, #tpu.memory_space<vmem>>, vector<32x128xbf16>
    %cst_352 = arith.constant dense<0.000000e+00> : vector<2x128xf32>
    %851 = tpu.matmul %849, %850, %cst_352 {dimension_numbers = #tpu.dot_dimension_numbers<[1], [0], [0], [1], [0, 0, 1, 1], [], []>} : vector<2x32xbf16>, vector<32x128xbf16>, vector<2x128xf32> -> vector<2x128xf32>
    %852 = arith.addf %848, %851 : vector<2x128xf32>
    %853 = vector.extract_strided_slice %852 {offsets = [0, 0], sizes = [2, 32], strides = [1, 1]} : vector<2x128xf32> to vector<2x32xf32>
    %854 = arith.negf %853 : vector<2x32xf32>
    %855 = math.exp %854 : vector<2x32xf32>
    %cst_353 = arith.constant 1.000000e+00 : f32
    %856 = vector.broadcast %cst_353 : f32 to vector<2x32xf32>
    %857 = arith.addf %856, %855 : vector<2x32xf32>
    %858 = arith.divf %856, %857 : vector<2x32xf32>
    %859 = vector.extract_strided_slice %852 {offsets = [0, 32], sizes = [2, 32], strides = [1, 1]} : vector<2x128xf32> to vector<2x32xf32>
    %860 = arith.negf %859 : vector<2x32xf32>
    %861 = math.exp %860 : vector<2x32xf32>
    %cst_354 = arith.constant 1.000000e+00 : f32
    %862 = vector.broadcast %cst_354 : f32 to vector<2x32xf32>
    %863 = arith.addf %862, %861 : vector<2x32xf32>
    %864 = arith.divf %862, %863 : vector<2x32xf32>
    %865 = vector.extract_strided_slice %852 {offsets = [0, 64], sizes = [2, 32], strides = [1, 1]} : vector<2x128xf32> to vector<2x32xf32>
    %866 = math.tanh %865 : vector<2x32xf32>
    %867 = vector.extract_strided_slice %852 {offsets = [0, 96], sizes = [2, 32], strides = [1, 1]} : vector<2x128xf32> to vector<2x32xf32>
    %868 = arith.negf %867 : vector<2x32xf32>
    %869 = math.exp %868 : vector<2x32xf32>
    %cst_355 = arith.constant 1.000000e+00 : f32
    %870 = vector.broadcast %cst_355 : f32 to vector<2x32xf32>
    %871 = arith.addf %870, %869 : vector<2x32xf32>
    %872 = arith.divf %870, %871 : vector<2x32xf32>
    %873 = arith.mulf %864, %736 : vector<2x32xf32>
    %874 = arith.mulf %858, %866 : vector<2x32xf32>
    %875 = arith.addf %873, %874 : vector<2x32xf32>
    %876 = math.tanh %875 : vector<2x32xf32>
    %877 = arith.mulf %872, %876 : vector<2x32xf32>
    %878 = tpu.concatenate %877, %842 in 1 : vector<2x32xf32>, vector<2x32xf32> -> vector<2x64xf32>
    %879 = arith.truncf %878 : vector<2x64xf32> to vector<2x64xbf16>
    %c0_356 = arith.constant 0 : index
    %c0_357 = arith.constant 0 : index
    %880 = vector.load %arg9[%c0_356, %c0_357] : memref<64x128xbf16, #tpu.memory_space<vmem>>, vector<64x128xbf16>
    %cst_358 = arith.constant dense<0.000000e+00> : vector<2x128xf32>
    %881 = tpu.matmul %879, %880, %cst_358 {dimension_numbers = #tpu.dot_dimension_numbers<[1], [0], [0], [1], [0, 0, 1, 1], [], []>} : vector<2x64xbf16>, vector<64x128xbf16>, vector<2x128xf32> -> vector<2x128xf32>
    %c0_359 = arith.constant 0 : index
    %c0_360 = arith.constant 0 : index
    %882 = vector.load %arg10[%c0_359, %c0_360] : memref<1x128xf32, #tpu.memory_space<vmem>>, vector<1x128xf32>
    %883 = vector.broadcast %882 : vector<1x128xf32> to vector<2x128xf32>
    %884 = arith.addf %881, %883 : vector<2x128xf32>
    %885 = vector.extract_strided_slice %884 {offsets = [0, 0], sizes = [2, 32], strides = [1, 1]} : vector<2x128xf32> to vector<2x32xf32>
    %886 = arith.negf %885 : vector<2x32xf32>
    %887 = math.exp %886 : vector<2x32xf32>
    %cst_361 = arith.constant 1.000000e+00 : f32
    %888 = vector.broadcast %cst_361 : f32 to vector<2x32xf32>
    %889 = arith.addf %888, %887 : vector<2x32xf32>
    %890 = arith.divf %888, %889 : vector<2x32xf32>
    %891 = vector.extract_strided_slice %884 {offsets = [0, 32], sizes = [2, 32], strides = [1, 1]} : vector<2x128xf32> to vector<2x32xf32>
    %892 = arith.negf %891 : vector<2x32xf32>
    %893 = math.exp %892 : vector<2x32xf32>
    %cst_362 = arith.constant 1.000000e+00 : f32
    %894 = vector.broadcast %cst_362 : f32 to vector<2x32xf32>
    %895 = arith.addf %894, %893 : vector<2x32xf32>
    %896 = arith.divf %894, %895 : vector<2x32xf32>
    %897 = vector.extract_strided_slice %884 {offsets = [0, 64], sizes = [2, 32], strides = [1, 1]} : vector<2x128xf32> to vector<2x32xf32>
    %898 = math.tanh %897 : vector<2x32xf32>
    %899 = vector.extract_strided_slice %884 {offsets = [0, 96], sizes = [2, 32], strides = [1, 1]} : vector<2x128xf32> to vector<2x32xf32>
    %900 = arith.negf %899 : vector<2x32xf32>
    %901 = math.exp %900 : vector<2x32xf32>
    %cst_363 = arith.constant 1.000000e+00 : f32
    %902 = vector.broadcast %cst_363 : f32 to vector<2x32xf32>
    %903 = arith.addf %902, %901 : vector<2x32xf32>
    %904 = arith.divf %902, %903 : vector<2x32xf32>
    %905 = arith.mulf %896, %768 : vector<2x32xf32>
    %906 = arith.mulf %890, %898 : vector<2x32xf32>
    %907 = arith.addf %905, %906 : vector<2x32xf32>
    %908 = math.tanh %907 : vector<2x32xf32>
    %909 = arith.mulf %904, %908 : vector<2x32xf32>
    %910 = arith.truncf %909 : vector<2x32xf32> to vector<2x32xbf16>
    %c0_364 = arith.constant 0 : index
    %c0_365 = arith.constant 0 : index
    %911 = vector.load %arg13[%c0_364, %c0_365] : memref<32x192xbf16, #tpu.memory_space<vmem>>, vector<32x192xbf16>
    %cst_366 = arith.constant dense<0.000000e+00> : vector<2x192xf32>
    %912 = tpu.matmul %910, %911, %cst_366 {dimension_numbers = #tpu.dot_dimension_numbers<[1], [0], [0], [1], [0, 0, 1, 1], [], []>} : vector<2x32xbf16>, vector<32x192xbf16>, vector<2x192xf32> -> vector<2x192xf32>
    %913 = vector.extract_strided_slice %912 {offsets = [0, 0], sizes = [2, 32], strides = [1, 1]} : vector<2x192xf32> to vector<2x32xf32>
    %914 = vector.extract_strided_slice %912 {offsets = [0, 32], sizes = [2, 32], strides = [1, 1]} : vector<2x192xf32> to vector<2x32xf32>
    %915 = vector.extract_strided_slice %912 {offsets = [0, 64], sizes = [2, 96], strides = [1, 1]} : vector<2x192xf32> to vector<2x96xf32>
    %916 = vector.extract_strided_slice %912 {offsets = [0, 160], sizes = [2, 32], strides = [1, 1]} : vector<2x192xf32> to vector<2x32xf32>
    %c0_367 = arith.constant 0 : index
    %c0_368 = arith.constant 0 : index
    %c0_369 = arith.constant 0 : index
    %917 = vector.load %arg4[%c0_367, %c0_368, %c0_369] : memref<2x8x32xf32, #tpu.memory_space<vmem>>, vector<2x8x32xf32>
    %918 = vector.shape_cast %913 : vector<2x32xf32> to vector<2x1x32xf32>
    %919 = vector.broadcast %918 : vector<2x1x32xf32> to vector<2x8x32xf32>
    %920 = arith.mulf %917, %919 : vector<2x8x32xf32>
    %cst_370 = arith.constant dense<0.000000e+00> : vector<2x8xf32>
    %921 = vector.multi_reduction <add>, %920, %cst_370 [2] : vector<2x8x32xf32> to vector<2x8xf32>
    %c0_371 = arith.constant 0 : index
    %c0_372 = arith.constant 0 : index
    %922 = vector.load %arg3[%c0_371, %c0_372] : memref<2x8xf32, #tpu.memory_space<vmem>>, vector<2x8xf32>
    %923 = arith.addf %921, %922 : vector<2x8xf32>
    %cst_373 = arith.constant dense<0xFF800000> : vector<2xf32>
    %924 = vector.multi_reduction <maximumf>, %923, %cst_373 [1] : vector<2x8xf32> to vector<2xf32>
    %925 = vector.shape_cast %924 : vector<2xf32> to vector<2x1xf32>
    %926 = vector.broadcast %925 : vector<2x1xf32> to vector<2x8xf32>
    %927 = arith.subf %923, %926 : vector<2x8xf32>
    %928 = math.exp %927 : vector<2x8xf32>
    %cst_374 = arith.constant dense<0.000000e+00> : vector<2xf32>
    %929 = vector.multi_reduction <add>, %928, %cst_374 [1] : vector<2x8xf32> to vector<2xf32>
    %930 = vector.shape_cast %929 : vector<2xf32> to vector<2x1xf32>
    %931 = tpu.reciprocal %930 {approx = true} : vector<2x1xf32> -> vector<2x1xf32>
    %932 = vector.broadcast %931 : vector<2x1xf32> to vector<2x8xf32>
    %933 = arith.mulf %928, %932 : vector<2x8xf32>
    %934 = vector.shape_cast %933 : vector<2x8xf32> to vector<2x8x1xf32>
    %c0_375 = arith.constant 0 : index
    %c0_376 = arith.constant 0 : index
    %c0_377 = arith.constant 0 : index
    %935 = vector.load %arg2[%c0_375, %c0_376, %c0_377] : memref<2x8x64xf32, #tpu.memory_space<vmem>>, vector<2x8x64xf32>
    %936 = vector.broadcast %934 : vector<2x8x1xf32> to vector<2x8x64xf32>
    %937 = arith.mulf %936, %935 : vector<2x8x64xf32>
    %cst_378 = arith.constant dense<0.000000e+00> : vector<2x64xf32>
    %938 = vector.multi_reduction <add>, %937, %cst_378 [1] : vector<2x8x64xf32> to vector<2x64xf32>
    %939 = arith.truncf %938 : vector<2x64xf32> to vector<2x64xbf16>
    %c0_379 = arith.constant 0 : index
    %c0_380 = arith.constant 0 : index
    %940 = vector.load %arg11[%c0_379, %c0_380] : memref<64x32xbf16, #tpu.memory_space<vmem>>, vector<64x32xbf16>
    %cst_381 = arith.constant dense<0.000000e+00> : vector<2x32xf32>
    %941 = tpu.matmul %939, %940, %cst_381 {dimension_numbers = #tpu.dot_dimension_numbers<[1], [0], [0], [1], [0, 0, 1, 1], [], []>} : vector<2x64xbf16>, vector<64x32xbf16>, vector<2x32xf32> -> vector<2x32xf32>
    %c0_382 = arith.constant 0 : index
    %c0_383 = arith.constant 0 : index
    %942 = vector.load %arg12[%c0_382, %c0_383] : memref<1x32xf32, #tpu.memory_space<vmem>>, vector<1x32xf32>
    %943 = vector.broadcast %942 : vector<1x32xf32> to vector<2x32xf32>
    %944 = arith.addf %941, %943 : vector<2x32xf32>
    %945 = arith.truncf %944 : vector<2x32xf32> to vector<2x32xbf16>
    %c0_384 = arith.constant 0 : index
    %c0_385 = arith.constant 0 : index
    %946 = vector.load %arg14[%c0_384, %c0_385] : memref<32x128xbf16, #tpu.memory_space<vmem>>, vector<32x128xbf16>
    %cst_386 = arith.constant dense<0.000000e+00> : vector<2x128xf32>
    %947 = tpu.matmul %945, %946, %cst_386 {dimension_numbers = #tpu.dot_dimension_numbers<[1], [0], [0], [1], [0, 0, 1, 1], [], []>} : vector<2x32xbf16>, vector<32x128xbf16>, vector<2x128xf32> -> vector<2x128xf32>
    %c0_387 = arith.constant 0 : index
    %c0_388 = arith.constant 0 : index
    %948 = vector.load %arg6[%c0_387, %c0_388] : memref<2x32xf32, #tpu.memory_space<vmem>>, vector<2x32xf32>
    %949 = vector.extract_strided_slice %947 {offsets = [0, 0], sizes = [2, 32], strides = [1, 1]} : vector<2x128xf32> to vector<2x32xf32>
    %950 = arith.addf %948, %949 : vector<2x32xf32>
    %951 = arith.addf %950, %914 : vector<2x32xf32>
    %952 = arith.negf %951 : vector<2x32xf32>
    %953 = math.exp %952 : vector<2x32xf32>
    %cst_389 = arith.constant 1.000000e+00 : f32
    %954 = vector.broadcast %cst_389 : f32 to vector<2x32xf32>
    %955 = arith.addf %954, %953 : vector<2x32xf32>
    %956 = arith.divf %954, %955 : vector<2x32xf32>
    %c0_390 = arith.constant 0 : index
    %c0_391 = arith.constant 0 : index
    %957 = vector.load %arg7[%c0_390, %c0_391] : memref<2x96xf32, #tpu.memory_space<vmem>>, vector<2x96xf32>
    %958 = vector.extract_strided_slice %947 {offsets = [0, 32], sizes = [2, 96], strides = [1, 1]} : vector<2x128xf32> to vector<2x96xf32>
    %959 = arith.addf %957, %958 : vector<2x96xf32>
    %960 = arith.addf %959, %915 : vector<2x96xf32>
    %961 = arith.negf %960 : vector<2x96xf32>
    %962 = math.exp %961 : vector<2x96xf32>
    %cst_392 = arith.constant 1.000000e+00 : f32
    %963 = vector.broadcast %cst_392 : f32 to vector<2x96xf32>
    %964 = arith.addf %963, %962 : vector<2x96xf32>
    %965 = arith.divf %963, %964 : vector<2x96xf32>
    %c0_393 = arith.constant 0 : index
    %c0_394 = arith.constant 0 : index
    %966 = vector.load %arg5[%c0_393, %c0_394] : memref<2x64xf32, #tpu.memory_space<vmem>>, vector<2x64xf32>
    %967 = tpu.concatenate %966, %944 in 1 : vector<2x64xf32>, vector<2x32xf32> -> vector<2x96xf32>
    %968 = arith.mulf %965, %967 : vector<2x96xf32>
    %969 = arith.truncf %968 : vector<2x96xf32> to vector<2x96xbf16>
    %c0_395 = arith.constant 0 : index
    %c0_396 = arith.constant 0 : index
    %970 = vector.load %arg15[%c0_395, %c0_396] : memref<96x32xbf16, #tpu.memory_space<vmem>>, vector<96x32xbf16>
    %cst_397 = arith.constant dense<0.000000e+00> : vector<2x32xf32>
    %971 = tpu.matmul %969, %970, %cst_397 {dimension_numbers = #tpu.dot_dimension_numbers<[1], [0], [0], [1], [0, 0, 1, 1], [], []>} : vector<2x96xbf16>, vector<96x32xbf16>, vector<2x32xf32> -> vector<2x32xf32>
    %972 = arith.addf %971, %916 : vector<2x32xf32>
    %c0_398 = arith.constant 0 : index
    %c0_399 = arith.constant 0 : index
    %973 = vector.load %arg16[%c0_398, %c0_399] : memref<1x32xf32, #tpu.memory_space<vmem>>, vector<1x32xf32>
    %974 = vector.broadcast %973 : vector<1x32xf32> to vector<2x32xf32>
    %975 = arith.addf %972, %974 : vector<2x32xf32>
    %976 = math.tanh %975 : vector<2x32xf32>
    %cst_400 = arith.constant 1.000000e+00 : f32
    %977 = vector.broadcast %cst_400 : f32 to vector<2x32xf32>
    %978 = arith.subf %977, %956 : vector<2x32xf32>
    %979 = arith.mulf %978, %909 : vector<2x32xf32>
    %980 = arith.mulf %956, %976 : vector<2x32xf32>
    %981 = arith.addf %979, %980 : vector<2x32xf32>
    %c6_401 = arith.constant 6 : index
    %c0_402 = arith.constant 0 : index
    %c0_403 = arith.constant 0 : index
    %982 = vector.load %arg17[%c6_401, %c0_402, %c0_403] : memref<8x2x32xf32, #tpu.memory_space<vmem>>, vector<1x2x32xf32>
    %983 = vector.shape_cast %982 : vector<1x2x32xf32> to vector<2x32xf32>
    %984 = vector.shape_cast %981 : vector<2x32xf32> to vector<1x2x32xf32>
    tpu.vector_store %arg17[%c6_401, %c0_402, %c0_403], %984 {strides = array<i32>} : memref<8x2x32xf32, #tpu.memory_space<vmem>>, vector<1x2x32xf32>,
    %985 = arith.select %3, %877, %738 : vector<2x32xf32>
    %986 = arith.select %3, %875, %736 : vector<2x32xf32>
    %987 = arith.select %3, %981, %842 : vector<2x32xf32>
    %988 = arith.select %3, %907, %768 : vector<2x32xf32>
    %c7 = arith.constant 7 : index
    %c0_404 = arith.constant 0 : index
    %c0_405 = arith.constant 0 : index
    %989 = vector.load %arg1[%c7, %c0_404, %c0_405] : memref<8x2x128xbf16, #tpu.memory_space<vmem>>, vector<1x2x128xbf16>
    %990 = vector.shape_cast %989 : vector<1x2x128xbf16> to vector<2x128xbf16>
    %991 = arith.extf %990 : vector<2x128xbf16> to vector<2x128xf32>
    %992 = arith.truncf %985 : vector<2x32xf32> to vector<2x32xbf16>
    %c0_406 = arith.constant 0 : index
    %c0_407 = arith.constant 0 : index
    %993 = vector.load %arg8[%c0_406, %c0_407] : memref<32x128xbf16, #tpu.memory_space<vmem>>, vector<32x128xbf16>
    %cst_408 = arith.constant dense<0.000000e+00> : vector<2x128xf32>
    %994 = tpu.matmul %992, %993, %cst_408 {dimension_numbers = #tpu.dot_dimension_numbers<[1], [0], [0], [1], [0, 0, 1, 1], [], []>} : vector<2x32xbf16>, vector<32x128xbf16>, vector<2x128xf32> -> vector<2x128xf32>
    %995 = arith.addf %991, %994 : vector<2x128xf32>
    %996 = vector.extract_strided_slice %995 {offsets = [0, 0], sizes = [2, 32], strides = [1, 1]} : vector<2x128xf32> to vector<2x32xf32>
    %997 = arith.negf %996 : vector<2x32xf32>
    %998 = math.exp %997 : vector<2x32xf32>
    %cst_409 = arith.constant 1.000000e+00 : f32
    %999 = vector.broadcast %cst_409 : f32 to vector<2x32xf32>
    %1000 = arith.addf %999, %998 : vector<2x32xf32>
    %1001 = arith.divf %999, %1000 : vector<2x32xf32>
    %1002 = vector.extract_strided_slice %995 {offsets = [0, 32], sizes = [2, 32], strides = [1, 1]} : vector<2x128xf32> to vector<2x32xf32>
    %1003 = arith.negf %1002 : vector<2x32xf32>
    %1004 = math.exp %1003 : vector<2x32xf32>
    %cst_410 = arith.constant 1.000000e+00 : f32
    %1005 = vector.broadcast %cst_410 : f32 to vector<2x32xf32>
    %1006 = arith.addf %1005, %1004 : vector<2x32xf32>
    %1007 = arith.divf %1005, %1006 : vector<2x32xf32>
    %1008 = vector.extract_strided_slice %995 {offsets = [0, 64], sizes = [2, 32], strides = [1, 1]} : vector<2x128xf32> to vector<2x32xf32>
    %1009 = math.tanh %1008 : vector<2x32xf32>
    %1010 = vector.extract_strided_slice %995 {offsets = [0, 96], sizes = [2, 32], strides = [1, 1]} : vector<2x128xf32> to vector<2x32xf32>
    %1011 = arith.negf %1010 : vector<2x32xf32>
    %1012 = math.exp %1011 : vector<2x32xf32>
    %cst_411 = arith.constant 1.000000e+00 : f32
    %1013 = vector.broadcast %cst_411 : f32 to vector<2x32xf32>
    %1014 = arith.addf %1013, %1012 : vector<2x32xf32>
    %1015 = arith.divf %1013, %1014 : vector<2x32xf32>
    %1016 = arith.mulf %1007, %986 : vector<2x32xf32>
    %1017 = arith.mulf %1001, %1009 : vector<2x32xf32>
    %1018 = arith.addf %1016, %1017 : vector<2x32xf32>
    %1019 = math.tanh %1018 : vector<2x32xf32>
    %1020 = arith.mulf %1015, %1019 : vector<2x32xf32>
    %1021 = tpu.concatenate %1020, %987 in 1 : vector<2x32xf32>, vector<2x32xf32> -> vector<2x64xf32>
    %1022 = arith.truncf %1021 : vector<2x64xf32> to vector<2x64xbf16>
    %c0_412 = arith.constant 0 : index
    %c0_413 = arith.constant 0 : index
    %1023 = vector.load %arg9[%c0_412, %c0_413] : memref<64x128xbf16, #tpu.memory_space<vmem>>, vector<64x128xbf16>
    %cst_414 = arith.constant dense<0.000000e+00> : vector<2x128xf32>
    %1024 = tpu.matmul %1022, %1023, %cst_414 {dimension_numbers = #tpu.dot_dimension_numbers<[1], [0], [0], [1], [0, 0, 1, 1], [], []>} : vector<2x64xbf16>, vector<64x128xbf16>, vector<2x128xf32> -> vector<2x128xf32>
    %c0_415 = arith.constant 0 : index
    %c0_416 = arith.constant 0 : index
    %1025 = vector.load %arg10[%c0_415, %c0_416] : memref<1x128xf32, #tpu.memory_space<vmem>>, vector<1x128xf32>
    %1026 = vector.broadcast %1025 : vector<1x128xf32> to vector<2x128xf32>
    %1027 = arith.addf %1024, %1026 : vector<2x128xf32>
    %1028 = vector.extract_strided_slice %1027 {offsets = [0, 0], sizes = [2, 32], strides = [1, 1]} : vector<2x128xf32> to vector<2x32xf32>
    %1029 = arith.negf %1028 : vector<2x32xf32>
    %1030 = math.exp %1029 : vector<2x32xf32>
    %cst_417 = arith.constant 1.000000e+00 : f32
    %1031 = vector.broadcast %cst_417 : f32 to vector<2x32xf32>
    %1032 = arith.addf %1031, %1030 : vector<2x32xf32>
    %1033 = arith.divf %1031, %1032 : vector<2x32xf32>
    %1034 = vector.extract_strided_slice %1027 {offsets = [0, 32], sizes = [2, 32], strides = [1, 1]} : vector<2x128xf32> to vector<2x32xf32>
    %1035 = arith.negf %1034 : vector<2x32xf32>
    %1036 = math.exp %1035 : vector<2x32xf32>
    %cst_418 = arith.constant 1.000000e+00 : f32
    %1037 = vector.broadcast %cst_418 : f32 to vector<2x32xf32>
    %1038 = arith.addf %1037, %1036 : vector<2x32xf32>
    %1039 = arith.divf %1037, %1038 : vector<2x32xf32>
    %1040 = vector.extract_strided_slice %1027 {offsets = [0, 64], sizes = [2, 32], strides = [1, 1]} : vector<2x128xf32> to vector<2x32xf32>
    %1041 = math.tanh %1040 : vector<2x32xf32>
    %1042 = vector.extract_strided_slice %1027 {offsets = [0, 96], sizes = [2, 32], strides = [1, 1]} : vector<2x128xf32> to vector<2x32xf32>
    %1043 = arith.negf %1042 : vector<2x32xf32>
    %1044 = math.exp %1043 : vector<2x32xf32>
    %cst_419 = arith.constant 1.000000e+00 : f32
    %1045 = vector.broadcast %cst_419 : f32 to vector<2x32xf32>
    %1046 = arith.addf %1045, %1044 : vector<2x32xf32>
    %1047 = arith.divf %1045, %1046 : vector<2x32xf32>
    %1048 = arith.mulf %1039, %988 : vector<2x32xf32>
    %1049 = arith.mulf %1033, %1041 : vector<2x32xf32>
    %1050 = arith.addf %1048, %1049 : vector<2x32xf32>
    %1051 = math.tanh %1050 : vector<2x32xf32>
    %1052 = arith.mulf %1047, %1051 : vector<2x32xf32>
    %1053 = arith.truncf %1052 : vector<2x32xf32> to vector<2x32xbf16>
    %c0_420 = arith.constant 0 : index
    %c0_421 = arith.constant 0 : index
    %1054 = vector.load %arg13[%c0_420, %c0_421] : memref<32x192xbf16, #tpu.memory_space<vmem>>, vector<32x192xbf16>
    %cst_422 = arith.constant dense<0.000000e+00> : vector<2x192xf32>
    %1055 = tpu.matmul %1053, %1054, %cst_422 {dimension_numbers = #tpu.dot_dimension_numbers<[1], [0], [0], [1], [0, 0, 1, 1], [], []>} : vector<2x32xbf16>, vector<32x192xbf16>, vector<2x192xf32> -> vector<2x192xf32>
    %1056 = vector.extract_strided_slice %1055 {offsets = [0, 0], sizes = [2, 32], strides = [1, 1]} : vector<2x192xf32> to vector<2x32xf32>
    %1057 = vector.extract_strided_slice %1055 {offsets = [0, 32], sizes = [2, 32], strides = [1, 1]} : vector<2x192xf32> to vector<2x32xf32>
    %1058 = vector.extract_strided_slice %1055 {offsets = [0, 64], sizes = [2, 96], strides = [1, 1]} : vector<2x192xf32> to vector<2x96xf32>
    %1059 = vector.extract_strided_slice %1055 {offsets = [0, 160], sizes = [2, 32], strides = [1, 1]} : vector<2x192xf32> to vector<2x32xf32>
    %c0_423 = arith.constant 0 : index
    %c0_424 = arith.constant 0 : index
    %c0_425 = arith.constant 0 : index
    %1060 = vector.load %arg4[%c0_423, %c0_424, %c0_425] : memref<2x8x32xf32, #tpu.memory_space<vmem>>, vector<2x8x32xf32>
    %1061 = vector.shape_cast %1056 : vector<2x32xf32> to vector<2x1x32xf32>
    %1062 = vector.broadcast %1061 : vector<2x1x32xf32> to vector<2x8x32xf32>
    %1063 = arith.mulf %1060, %1062 : vector<2x8x32xf32>
    %cst_426 = arith.constant dense<0.000000e+00> : vector<2x8xf32>
    %1064 = vector.multi_reduction <add>, %1063, %cst_426 [2] : vector<2x8x32xf32> to vector<2x8xf32>
    %c0_427 = arith.constant 0 : index
    %c0_428 = arith.constant 0 : index
    %1065 = vector.load %arg3[%c0_427, %c0_428] : memref<2x8xf32, #tpu.memory_space<vmem>>, vector<2x8xf32>
    %1066 = arith.addf %1064, %1065 : vector<2x8xf32>
    %cst_429 = arith.constant dense<0xFF800000> : vector<2xf32>
    %1067 = vector.multi_reduction <maximumf>, %1066, %cst_429 [1] : vector<2x8xf32> to vector<2xf32>
    %1068 = vector.shape_cast %1067 : vector<2xf32> to vector<2x1xf32>
    %1069 = vector.broadcast %1068 : vector<2x1xf32> to vector<2x8xf32>
    %1070 = arith.subf %1066, %1069 : vector<2x8xf32>
    %1071 = math.exp %1070 : vector<2x8xf32>
    %cst_430 = arith.constant dense<0.000000e+00> : vector<2xf32>
    %1072 = vector.multi_reduction <add>, %1071, %cst_430 [1] : vector<2x8xf32> to vector<2xf32>
    %1073 = vector.shape_cast %1072 : vector<2xf32> to vector<2x1xf32>
    %1074 = tpu.reciprocal %1073 {approx = true} : vector<2x1xf32> -> vector<2x1xf32>
    %1075 = vector.broadcast %1074 : vector<2x1xf32> to vector<2x8xf32>
    %1076 = arith.mulf %1071, %1075 : vector<2x8xf32>
    %1077 = vector.shape_cast %1076 : vector<2x8xf32> to vector<2x8x1xf32>
    %c0_431 = arith.constant 0 : index
    %c0_432 = arith.constant 0 : index
    %c0_433 = arith.constant 0 : index
    %1078 = vector.load %arg2[%c0_431, %c0_432, %c0_433] : memref<2x8x64xf32, #tpu.memory_space<vmem>>, vector<2x8x64xf32>
    %1079 = vector.broadcast %1077 : vector<2x8x1xf32> to vector<2x8x64xf32>
    %1080 = arith.mulf %1079, %1078 : vector<2x8x64xf32>
    %cst_434 = arith.constant dense<0.000000e+00> : vector<2x64xf32>
    %1081 = vector.multi_reduction <add>, %1080, %cst_434 [1] : vector<2x8x64xf32> to vector<2x64xf32>
    %1082 = arith.truncf %1081 : vector<2x64xf32> to vector<2x64xbf16>
    %c0_435 = arith.constant 0 : index
    %c0_436 = arith.constant 0 : index
    %1083 = vector.load %arg11[%c0_435, %c0_436] : memref<64x32xbf16, #tpu.memory_space<vmem>>, vector<64x32xbf16>
    %cst_437 = arith.constant dense<0.000000e+00> : vector<2x32xf32>
    %1084 = tpu.matmul %1082, %1083, %cst_437 {dimension_numbers = #tpu.dot_dimension_numbers<[1], [0], [0], [1], [0, 0, 1, 1], [], []>} : vector<2x64xbf16>, vector<64x32xbf16>, vector<2x32xf32> -> vector<2x32xf32>
    %c0_438 = arith.constant 0 : index
    %c0_439 = arith.constant 0 : index
    %1085 = vector.load %arg12[%c0_438, %c0_439] : memref<1x32xf32, #tpu.memory_space<vmem>>, vector<1x32xf32>
    %1086 = vector.broadcast %1085 : vector<1x32xf32> to vector<2x32xf32>
    %1087 = arith.addf %1084, %1086 : vector<2x32xf32>
    %1088 = arith.truncf %1087 : vector<2x32xf32> to vector<2x32xbf16>
    %c0_440 = arith.constant 0 : index
    %c0_441 = arith.constant 0 : index
    %1089 = vector.load %arg14[%c0_440, %c0_441] : memref<32x128xbf16, #tpu.memory_space<vmem>>, vector<32x128xbf16>
    %cst_442 = arith.constant dense<0.000000e+00> : vector<2x128xf32>
    %1090 = tpu.matmul %1088, %1089, %cst_442 {dimension_numbers = #tpu.dot_dimension_numbers<[1], [0], [0], [1], [0, 0, 1, 1], [], []>} : vector<2x32xbf16>, vector<32x128xbf16>, vector<2x128xf32> -> vector<2x128xf32>
    %c0_443 = arith.constant 0 : index
    %c0_444 = arith.constant 0 : index
    %1091 = vector.load %arg6[%c0_443, %c0_444] : memref<2x32xf32, #tpu.memory_space<vmem>>, vector<2x32xf32>
    %1092 = vector.extract_strided_slice %1090 {offsets = [0, 0], sizes = [2, 32], strides = [1, 1]} : vector<2x128xf32> to vector<2x32xf32>
    %1093 = arith.addf %1091, %1092 : vector<2x32xf32>
    %1094 = arith.addf %1093, %1057 : vector<2x32xf32>
    %1095 = arith.negf %1094 : vector<2x32xf32>
    %1096 = math.exp %1095 : vector<2x32xf32>
    %cst_445 = arith.constant 1.000000e+00 : f32
    %1097 = vector.broadcast %cst_445 : f32 to vector<2x32xf32>
    %1098 = arith.addf %1097, %1096 : vector<2x32xf32>
    %1099 = arith.divf %1097, %1098 : vector<2x32xf32>
    %c0_446 = arith.constant 0 : index
    %c0_447 = arith.constant 0 : index
    %1100 = vector.load %arg7[%c0_446, %c0_447] : memref<2x96xf32, #tpu.memory_space<vmem>>, vector<2x96xf32>
    %1101 = vector.extract_strided_slice %1090 {offsets = [0, 32], sizes = [2, 96], strides = [1, 1]} : vector<2x128xf32> to vector<2x96xf32>
    %1102 = arith.addf %1100, %1101 : vector<2x96xf32>
    %1103 = arith.addf %1102, %1058 : vector<2x96xf32>
    %1104 = arith.negf %1103 : vector<2x96xf32>
    %1105 = math.exp %1104 : vector<2x96xf32>
    %cst_448 = arith.constant 1.000000e+00 : f32
    %1106 = vector.broadcast %cst_448 : f32 to vector<2x96xf32>
    %1107 = arith.addf %1106, %1105 : vector<2x96xf32>
    %1108 = arith.divf %1106, %1107 : vector<2x96xf32>
    %c0_449 = arith.constant 0 : index
    %c0_450 = arith.constant 0 : index
    %1109 = vector.load %arg5[%c0_449, %c0_450] : memref<2x64xf32, #tpu.memory_space<vmem>>, vector<2x64xf32>
    %1110 = tpu.concatenate %1109, %1087 in 1 : vector<2x64xf32>, vector<2x32xf32> -> vector<2x96xf32>
    %1111 = arith.mulf %1108, %1110 : vector<2x96xf32>
    %1112 = arith.truncf %1111 : vector<2x96xf32> to vector<2x96xbf16>
    %c0_451 = arith.constant 0 : index
    %c0_452 = arith.constant 0 : index
    %1113 = vector.load %arg15[%c0_451, %c0_452] : memref<96x32xbf16, #tpu.memory_space<vmem>>, vector<96x32xbf16>
    %cst_453 = arith.constant dense<0.000000e+00> : vector<2x32xf32>
    %1114 = tpu.matmul %1112, %1113, %cst_453 {dimension_numbers = #tpu.dot_dimension_numbers<[1], [0], [0], [1], [0, 0, 1, 1], [], []>} : vector<2x96xbf16>, vector<96x32xbf16>, vector<2x32xf32> -> vector<2x32xf32>
    %1115 = arith.addf %1114, %1059 : vector<2x32xf32>
    %c0_454 = arith.constant 0 : index
    %c0_455 = arith.constant 0 : index
    %1116 = vector.load %arg16[%c0_454, %c0_455] : memref<1x32xf32, #tpu.memory_space<vmem>>, vector<1x32xf32>
    %1117 = vector.broadcast %1116 : vector<1x32xf32> to vector<2x32xf32>
    %1118 = arith.addf %1115, %1117 : vector<2x32xf32>
    %1119 = math.tanh %1118 : vector<2x32xf32>
    %cst_456 = arith.constant 1.000000e+00 : f32
    %1120 = vector.broadcast %cst_456 : f32 to vector<2x32xf32>
    %1121 = arith.subf %1120, %1099 : vector<2x32xf32>
    %1122 = arith.mulf %1121, %1052 : vector<2x32xf32>
    %1123 = arith.mulf %1099, %1119 : vector<2x32xf32>
    %1124 = arith.addf %1122, %1123 : vector<2x32xf32>
    %c7_457 = arith.constant 7 : index
    %c0_458 = arith.constant 0 : index
    %c0_459 = arith.constant 0 : index
    %1125 = vector.load %arg17[%c7_457, %c0_458, %c0_459] : memref<8x2x32xf32, #tpu.memory_space<vmem>>, vector<1x2x32xf32>
    %1126 = vector.shape_cast %1125 : vector<1x2x32xf32> to vector<2x32xf32>
    %1127 = vector.shape_cast %1124 : vector<2x32xf32> to vector<1x2x32xf32>
    tpu.vector_store %arg17[%c7_457, %c0_458, %c0_459], %1127 {strides = array<i32>} : memref<8x2x32xf32, #tpu.memory_space<vmem>>, vector<1x2x32xf32>,
    %1128 = arith.select %3, %1020, %985 : vector<2x32xf32>
    %1129 = arith.select %3, %1018, %986 : vector<2x32xf32>
    %1130 = arith.select %3, %1124, %987 : vector<2x32xf32>
    %1131 = arith.select %3, %1050, %988 : vector<2x32xf32>
    %c0_460 = arith.constant 0 : index
    %c0_461 = arith.constant 0 : index
    %c0_462 = arith.constant 0 : index
    %1132 = vector.load %arg18[%c0_460, %c0_461, %c0_462] : memref<2x2x32xf32, #tpu.memory_space<vmem>>, vector<1x2x32xf32>
    %1133 = vector.shape_cast %1132 : vector<1x2x32xf32> to vector<2x32xf32>
    %1134 = vector.shape_cast %1128 : vector<2x32xf32> to vector<1x2x32xf32>
    tpu.vector_store %arg18[%c0_460, %c0_461, %c0_462], %1134 {strides = array<i32>} : memref<2x2x32xf32, #tpu.memory_space<vmem>>, vector<1x2x32xf32>,
    %c0_463 = arith.constant 0 : index
    %c0_464 = arith.constant 0 : index
    %c0_465 = arith.constant 0 : index
    %1135 = vector.load %arg19[%c0_463, %c0_464, %c0_465] : memref<2x2x32xf32, #tpu.memory_space<vmem>>, vector<1x2x32xf32>
    %1136 = vector.shape_cast %1135 : vector<1x2x32xf32> to vector<2x32xf32>
    %1137 = vector.shape_cast %1129 : vector<2x32xf32> to vector<1x2x32xf32>
    tpu.vector_store %arg19[%c0_463, %c0_464, %c0_465], %1137 {strides = array<i32>} : memref<2x2x32xf32, #tpu.memory_space<vmem>>, vector<1x2x32xf32>,
    %c1_466 = arith.constant 1 : index
    %c0_467 = arith.constant 0 : index
    %c0_468 = arith.constant 0 : index
    %1138 = vector.load %arg18[%c1_466, %c0_467, %c0_468] : memref<2x2x32xf32, #tpu.memory_space<vmem>>, vector<1x2x32xf32>
    %1139 = vector.shape_cast %1138 : vector<1x2x32xf32> to vector<2x32xf32>
    %1140 = vector.shape_cast %1130 : vector<2x32xf32> to vector<1x2x32xf32>
    tpu.vector_store %arg18[%c1_466, %c0_467, %c0_468], %1140 {strides = array<i32>} : memref<2x2x32xf32, #tpu.memory_space<vmem>>, vector<1x2x32xf32>,
    %c1_469 = arith.constant 1 : index
    %c0_470 = arith.constant 0 : index
    %c0_471 = arith.constant 0 : index
    %1141 = vector.load %arg19[%c1_469, %c0_470, %c0_471] : memref<2x2x32xf32, #tpu.memory_space<vmem>>, vector<1x2x32xf32>
    %1142 = vector.shape_cast %1141 : vector<1x2x32xf32> to vector<2x32xf32>
    %1143 = vector.shape_cast %1131 : vector<2x32xf32> to vector<1x2x32xf32>
    tpu.vector_store %arg19[%c1_469, %c0_470, %c0_471], %1143 {strides = array<i32>} : memref<2x2x32xf32, #tpu.memory_space<vmem>>, vector<1x2x32xf32>,
    return
  }
  func.func @transform_0(%arg0: i32) -> (i32, i32, i32) {
    %c0_i32 = arith.constant 0 : i32
    %c0_i32_0 = arith.constant 0 : i32
    %c0_i32_1 = arith.constant 0 : i32
    return %arg0, %c0_i32, %c0_i32_0 : i32, i32, i32
  }
  func.func @transform_1(%arg0: i32) -> (i32, i32, i32) {
    %c0_i32 = arith.constant 0 : i32
    %c0_i32_0 = arith.constant 0 : i32
    %c0_i32_1 = arith.constant 0 : i32
    %c0_i32_2 = arith.constant 0 : i32
    return %c0_i32, %c0_i32_0, %c0_i32_1 : i32, i32, i32
  }
  func.func @transform_2(%arg0: i32) -> (i32, i32) {
    %c0_i32 = arith.constant 0 : i32
    %c0_i32_0 = arith.constant 0 : i32
    %c0_i32_1 = arith.constant 0 : i32
    return %c0_i32, %c0_i32_0 : i32, i32
  }
  func.func @transform_3(%arg0: i32) -> (i32, i32, i32) {
    %c0_i32 = arith.constant 0 : i32
    %c0_i32_0 = arith.constant 0 : i32
    %c0_i32_1 = arith.constant 0 : i32
    %c0_i32_2 = arith.constant 0 : i32
    return %c0_i32, %c0_i32_0, %c0_i32_1 : i32, i32, i32
  }
  func.func @transform_4(%arg0: i32) -> (i32, i32) {
    %c0_i32 = arith.constant 0 : i32
    %c0_i32_0 = arith.constant 0 : i32
    %c0_i32_1 = arith.constant 0 : i32
    return %c0_i32, %c0_i32_0 : i32, i32
  }
  func.func @transform_5(%arg0: i32) -> (i32, i32) {
    %c0_i32 = arith.constant 0 : i32
    %c0_i32_0 = arith.constant 0 : i32
    %c0_i32_1 = arith.constant 0 : i32
    return %c0_i32, %c0_i32_0 : i32, i32
  }
  func.func @transform_6(%arg0: i32) -> (i32, i32) {
    %c0_i32 = arith.constant 0 : i32
    %c0_i32_0 = arith.constant 0 : i32
    %c0_i32_1 = arith.constant 0 : i32
    return %c0_i32, %c0_i32_0 : i32, i32
  }
  func.func @transform_7(%arg0: i32) -> (i32, i32) {
    %c0_i32 = arith.constant 0 : i32
    %c0_i32_0 = arith.constant 0 : i32
    %c0_i32_1 = arith.constant 0 : i32
    return %c0_i32, %c0_i32_0 : i32, i32
  }
  func.func @transform_8(%arg0: i32) -> (i32, i32) {
    %c0_i32 = arith.constant 0 : i32
    %c0_i32_0 = arith.constant 0 : i32
    %c0_i32_1 = arith.constant 0 : i32
    return %c0_i32, %c0_i32_0 : i32, i32
  }
  func.func @transform_9(%arg0: i32) -> (i32, i32) {
    %c0_i32 = arith.constant 0 : i32
    %c0_i32_0 = arith.constant 0 : i32
    %c0_i32_1 = arith.constant 0 : i32
    return %c0_i32, %c0_i32_0 : i32, i32
  }
  func.func @transform_10(%arg0: i32) -> (i32, i32) {
    %c0_i32 = arith.constant 0 : i32
    %c0_i32_0 = arith.constant 0 : i32
    %c0_i32_1 = arith.constant 0 : i32
    return %c0_i32, %c0_i32_0 : i32, i32
  }
  func.func @transform_11(%arg0: i32) -> (i32, i32) {
    %c0_i32 = arith.constant 0 : i32
    %c0_i32_0 = arith.constant 0 : i32
    %c0_i32_1 = arith.constant 0 : i32
    return %c0_i32, %c0_i32_0 : i32, i32
  }
  func.func @transform_12(%arg0: i32) -> (i32, i32) {
    %c0_i32 = arith.constant 0 : i32
    %c0_i32_0 = arith.constant 0 : i32
    %c0_i32_1 = arith.constant 0 : i32
    return %c0_i32, %c0_i32_0 : i32, i32
  }
  func.func @transform_13(%arg0: i32) -> (i32, i32) {
    %c0_i32 = arith.constant 0 : i32
    %c0_i32_0 = arith.constant 0 : i32
    %c0_i32_1 = arith.constant 0 : i32
    return %c0_i32, %c0_i32_0 : i32, i32
  }
  func.func @transform_14(%arg0: i32) -> (i32, i32) {
    %c0_i32 = arith.constant 0 : i32
    %c0_i32_0 = arith.constant 0 : i32
    %c0_i32_1 = arith.constant 0 : i32
    return %c0_i32, %c0_i32_0 : i32, i32
  }
  func.func @transform_15(%arg0: i32) -> (i32, i32) {
    %c0_i32 = arith.constant 0 : i32
    %c0_i32_0 = arith.constant 0 : i32
    %c0_i32_1 = arith.constant 0 : i32
    return %c0_i32, %c0_i32_0 : i32, i32
  }
  func.func @transform_16(%arg0: i32) -> (i32, i32, i32) {
    %c0_i32 = arith.constant 0 : i32
    %c0_i32_0 = arith.constant 0 : i32
    %c0_i32_1 = arith.constant 0 : i32
    return %arg0, %c0_i32, %c0_i32_0 : i32, i32, i32
  }
  func.func @transform_17(%arg0: i32) -> (i32, i32, i32) {
    %c0_i32 = arith.constant 0 : i32
    %c0_i32_0 = arith.constant 0 : i32
    %c0_i32_1 = arith.constant 0 : i32
    %c0_i32_2 = arith.constant 0 : i32
    return %c0_i32, %c0_i32_0, %c0_i32_1 : i32, i32, i32
  }
  func.func @transform_18(%arg0: i32) -> (i32, i32, i32) {
    %c0_i32 = arith.constant 0 : i32
    %c0_i32_0 = arith.constant 0 : i32
    %c0_i32_1 = arith.constant 0 : i32
    %c0_i32_2 = arith.constant 0 : i32
    return %c0_i32, %c0_i32_0, %c0_i32_1 : i32, i32, i32
  }
}

</mosaic_0001>

<llo_original>
// kernel: morpheme_ext_forward.1
$region0: #{morpheme_ext_forward.1}
  #allocation0 [shape = 'u32[]', space=smem, size = 0x4, offset = 0x4, fixed_abs, tag = 'smem constant byte address 0x4 - core index']
  #allocation1 [shape = 'u32[144,128]{1,0:T(1,128)}', space=vmem, size = 0x12000, scoped, tag = 'internal scratch']
  %s0 = inlined_call_operand.vmem [shape: bf16[16,2,128], index: 0, kind: input, shape index: {}]
  %s1 = inlined_call_operand.vmem [shape: f32[2,8,64], index: 1, kind: input, shape index: {}]
  %s2 = inlined_call_operand.vmem [shape: f32[2,8], index: 2, kind: input, shape index: {}]
  %s3 = inlined_call_operand.vmem [shape: f32[2,8,32], index: 3, kind: input, shape index: {}]
  %s4 = inlined_call_operand.vmem [shape: f32[2,64], index: 4, kind: input, shape index: {}]
  %s5 = inlined_call_operand.vmem [shape: f32[2,32], index: 5, kind: input, shape index: {}]
  %s6 = inlined_call_operand.vmem [shape: f32[2,96], index: 6, kind: input, shape index: {}]
  %s7 = inlined_call_operand.vmem [shape: bf16[32,128], index: 7, kind: input, shape index: {}]
  %s8 = inlined_call_operand.vmem [shape: bf16[64,128], index: 8, kind: input, shape index: {}]
  %s9 = inlined_call_operand.vmem [shape: f32[1,128], index: 9, kind: input, shape index: {}]
  %s10 = inlined_call_operand.vmem [shape: bf16[64,32], index: 10, kind: input, shape index: {}]
  %s11 = inlined_call_operand.vmem [shape: f32[1,32], index: 11, kind: input, shape index: {}]
  %s12 = inlined_call_operand.vmem [shape: bf16[32,192], index: 12, kind: input, shape index: {}]
  %s13 = inlined_call_operand.vmem [shape: bf16[32,128], index: 13, kind: input, shape index: {}]
  %s14 = inlined_call_operand.vmem [shape: bf16[96,32], index: 14, kind: input, shape index: {}]
  %s15 = inlined_call_operand.vmem [shape: f32[1,32], index: 15, kind: input, shape index: {}]
  %s16 = inlined_call_operand.vmem [shape: f32[16,2,32], index: 16, kind: output, shape index: {0}]
  %s17 = inlined_call_operand.hbm [shape: f32[2,2,32], index: 17, kind: output, shape index: {1}]
  %s18 = inlined_call_operand.hbm [shape: f32[2,2,32], index: 18, kind: output, shape index: {2}]
  %19 = xla_tuple %s16, %s17, %s18
  %s20 = sld [smem:[#allocation0]]
  $region117: #{morpheme_ext_forward.1} parent=0
    _
  %s22 = ssub.s32 1, %s20
  %s23 = scalar_select 0, %s22, %s20
  $region1: #{morpheme_ext_forward.1} parent=0
    #allocation2 [shape = 'u8[2048]{0}', space=vmem, size = 0x800, scoped, tag = 'output window, operand 1, single buffered']
    #allocation3 [shape = 's32[2]{0}', space=sflag, size = 0x8, scoped, tag = 'scoped memory for morpheme_ext_forward.1']
    #allocation4 [shape = 'u8[2048]{0}', space=vmem, size = 0x800, scoped, tag = 'output window, operand 2, single buffered']
    #allocation5 [shape = 's32[1]{0}', space=sflag, size = 0x4, scoped, tag = 'scoped memory for morpheme_ext_forward.1']
    %24 = vsyncpa [#allocation3], 0
    %25 = vsyncpa [#allocation5], 0
    loop: start=0, step=1, limit=4
    $region2: #{morpheme_ext_forward.1} parent=1 // loop_pre_header
      _
    $region3: #{morpheme_ext_forward.1} parent=1 // loop_header
      %s27 = sphi 0, %s31
      %p28 = scmp.ge.s32.totalorder %s27, 4
      %s37 = sphi 0, %s39
      %s40 = sphi 0, %s37
      %s41 = sphi 0, %s40
      %s57 = sphi 0, %s41
      %s61 = sphi 0, %s61
      %s63 = sphi 0, %s61
      %s64 = sphi 0, %s63
      %s78 = sphi 0, %s64
      %s82 = sphi 0, %s82
      %s84 = sphi 0, %s82
      %s85 = sphi 0, %s84
      %s99 = sphi 0, %s85
      %s103 = sphi 0, %s103
      %s105 = sphi 0, %s103
      %s106 = sphi 0, %s105
      %s120 = sphi 0, %s106
      %s124 = sphi 0, %s124
      %s126 = sphi 0, %s124
      %s127 = sphi 0, %s126
      %s141 = sphi 0, %s127
      %s145 = sphi 0, %s145
      %s147 = sphi 0, %s145
      %s148 = sphi 0, %s147
      %s162 = sphi 0, %s148
      %s166 = sphi 0, %s166
      %s168 = sphi 0, %s166
      %s169 = sphi 0, %s168
      %s183 = sphi 0, %s169
      %s187 = sphi 0, %s187
      %s189 = sphi 0, %s187
      %s190 = sphi 0, %s189
      %s204 = sphi 0, %s190
      %s208 = sphi 0, %s208
      %s210 = sphi 0, %s208
      %s211 = sphi 0, %s210
      %s225 = sphi 0, %s211
      %s229 = sphi 0, %s229
      %s231 = sphi 0, %s229
      %s232 = sphi 0, %s231
      %s246 = sphi 0, %s232
      %s250 = sphi 0, %s250
      %s252 = sphi 0, %s250
      %s253 = sphi 0, %s252
      %s267 = sphi 0, %s253
      %s271 = sphi 0, %s271
      %s273 = sphi 0, %s271
      %s274 = sphi 0, %s273
      %s288 = sphi 0, %s274
      %s292 = sphi 0, %s292
      %s294 = sphi 0, %s292
      %s295 = sphi 0, %s294
      %s309 = sphi 0, %s295
      %s313 = sphi 0, %s313
      %s315 = sphi 0, %s313
      %s316 = sphi 0, %s315
      %s330 = sphi 0, %s316
      %s334 = sphi 0, %s334
      %s336 = sphi 0, %s334
      %s337 = sphi 0, %s336
      %s351 = sphi 0, %s337
      %s355 = sphi 0, %s355
      %s357 = sphi 0, %s355
      %s358 = sphi 0, %s357
      %s372 = sphi 0, %s358
      %s378 = sphi 0, %s380
      %s381 = sphi 0, %s378
      %s382 = sphi 0, %s381
      %s398 = sphi 0, %s382
      %s402 = sphi 0, %s402
      %s404 = sphi 0, %s402
      %s405 = sphi 0, %s404
      %s419 = sphi 0, %s405
      %s423 = sphi 0, %s423
      %s425 = sphi 0, %s423
      %s426 = sphi 0, %s425
      %s440 = sphi 0, %s426
    $region4: #{morpheme_ext_forward.1} parent=1 // loop_header_branch
      %30 = sbr.rel (%p28) target = $region8
    $region5: #{morpheme_ext_forward.1} parent=1 // loop_body
      %s32 = ssub.s32 %s27, 1
      %s33 = ssub.s32 %s27, 2
      %s34 = sadd.s32 %s27, 1
      %s35 = ssub.s32 %s27, %s34
      %p36 = scmp.eq.s32.totalorder %s35, 0
      %s38 = sadd.s32 %s37, 1
      %s39 = scalar_select %p36, %s37, %s38
      %p42 = pneg %p36
      %p43 = scmp.eq.s32.totalorder %s27, 1
      %p44 = por %p42, %p43
      %p45 = scmp.ne.s32.totalorder %s37, %s40
      %p46 = scmp.eq.s32.totalorder %s27, 0
      %p47 = por %p45, %p46
      %p48 = scmp.ne.s32.totalorder %s37, %s40
      %p49 = scmp.eq.s32.totalorder %s32, 1
      %p50 = por %p48, %p49
      %p51 = scmp.ne.s32.totalorder %s40, %s41
      %p52 = scmp.eq.s32.totalorder %s32, 0
      %p53 = por %p51, %p52
      %p54 = scmp.ne.s32.totalorder %s40, %s41
      %p55 = scmp.eq.s32.totalorder %s33, 1
      %p56 = por %p54, %p55
      %p58 = scmp.ne.s32.totalorder %s41, %s57
      %p59 = scmp.eq.s32.totalorder %s33, 0
      %p60 = por %p58, %p59
      %s62 = sadd.s32 %s61, 1
      %p65 = scmp.eq.s32.totalorder %s27, 1
      %p66 = scmp.ne.s32.totalorder %s61, %s63
      %p67 = scmp.eq.s32.totalorder %s27, 0
      %p68 = por %p66, %p67
      %p69 = scmp.ne.s32.totalorder %s61, %s63
      %p70 = scmp.eq.s32.totalorder %s32, 1
      %p71 = por %p69, %p70
      %p72 = scmp.ne.s32.totalorder %s63, %s64
      %p73 = scmp.eq.s32.totalorder %s32, 0
      %p74 = por %p72, %p73
      %p75 = scmp.ne.s32.totalorder %s63, %s64
      %p76 = scmp.eq.s32.totalorder %s33, 1
      %p77 = por %p75, %p76
      %p79 = scmp.ne.s32.totalorder %s64, %s78
      %p80 = scmp.eq.s32.totalorder %s33, 0
      %p81 = por %p79, %p80
      %s83 = sadd.s32 %s82, 1
      %p86 = scmp.eq.s32.totalorder %s27, 1
      %p87 = scmp.ne.s32.totalorder %s82, %s84
      %p88 = scmp.eq.s32.totalorder %s27, 0
      %p89 = por %p87, %p88
      %p90 = scmp.ne.s32.totalorder %s82, %s84
      %p91 = scmp.eq.s32.totalorder %s32, 1
      %p92 = por %p90, %p91
      %p93 = scmp.ne.s32.totalorder %s84, %s85
      %p94 = scmp.eq.s32.totalorder %s32, 0
      %p95 = por %p93, %p94
      %p96 = scmp.ne.s32.totalorder %s84, %s85
      %p97 = scmp.eq.s32.totalorder %s33, 1
      %p98 = por %p96, %p97
      %p100 = scmp.ne.s32.totalorder %s85, %s99
      %p101 = scmp.eq.s32.totalorder %s33, 0
      %p102 = por %p100, %p101
      %s104 = sadd.s32 %s103, 1
      %p107 = scmp.eq.s32.totalorder %s27, 1
      %p108 = scmp.ne.s32.totalorder %s103, %s105
      %p109 = scmp.eq.s32.totalorder %s27, 0
      %p110 = por %p108, %p109
      %p111 = scmp.ne.s32.totalorder %s103, %s105
      %p112 = scmp.eq.s32.totalorder %s32, 1
      %p113 = por %p111, %p112
      %p114 = scmp.ne.s32.totalorder %s105, %s106
      %p115 = scmp.eq.s32.totalorder %s32, 0
      %p116 = por %p114, %p115
      %p117 = scmp.ne.s32.totalorder %s105, %s106
      %p118 = scmp.eq.s32.totalorder %s33, 1
      %p119 = por %p117, %p118
      %p121 = scmp.ne.s32.totalorder %s106, %s120
      %p122 = scmp.eq.s32.totalorder %s33, 0
      %p123 = por %p121, %p122
      %s125 = sadd.s32 %s124, 1
      %p128 = scmp.eq.s32.totalorder %s27, 1
      %p129 = scmp.ne.s32.totalorder %s124, %s126
      %p130 = scmp.eq.s32.totalorder %s27, 0
      %p131 = por %p129, %p130
      %p132 = scmp.ne.s32.totalorder %s124, %s126
      %p133 = scmp.eq.s32.totalorder %s32, 1
      %p134 = por %p132, %p133
      %p135 = scmp.ne.s32.totalorder %s126, %s127
      %p136 = scmp.eq.s32.totalorder %s32, 0
      %p137 = por %p135, %p136
      %p138 = scmp.ne.s32.totalorder %s126, %s127
      %p139 = scmp.eq.s32.totalorder %s33, 1
      %p140 = por %p138, %p139
      %p142 = scmp.ne.s32.totalorder %s127, %s141
      %p143 = scmp.eq.s32.totalorder %s33, 0
      %p144 = por %p142, %p143
      %s146 = sadd.s32 %s145, 1
      %p149 = scmp.eq.s32.totalorder %s27, 1
      %p150 = scmp.ne.s32.totalorder %s145, %s147
      %p151 = scmp.eq.s32.totalorder %s27, 0
      %p152 = por %p150, %p151
      %p153 = scmp.ne.s32.totalorder %s145, %s147
      %p154 = scmp.eq.s32.totalorder %s32, 1
      %p155 = por %p153, %p154
      %p156 = scmp.ne.s32.totalorder %s147, %s148
      %p157 = scmp.eq.s32.totalorder %s32, 0
      %p158 = por %p156, %p157
      %p159 = scmp.ne.s32.totalorder %s147, %s148
      %p160 = scmp.eq.s32.totalorder %s33, 1
      %p161 = por %p159, %p160
      %p163 = scmp.ne.s32.totalorder %s148, %s162
      %p164 = scmp.eq.s32.totalorder %s33, 0
      %p165 = por %p163, %p164
      %s167 = sadd.s32 %s166, 1
      %p170 = scmp.eq.s32.totalorder %s27, 1
      %p171 = scmp.ne.s32.totalorder %s166, %s168
      %p172 = scmp.eq.s32.totalorder %s27, 0
      %p173 = por %p171, %p172
      %p174 = scmp.ne.s32.totalorder %s166, %s168
      %p175 = scmp.eq.s32.totalorder %s32, 1
      %p176 = por %p174, %p175
      %p177 = scmp.ne.s32.totalorder %s168, %s169
      %p178 = scmp.eq.s32.totalorder %s32, 0
      %p179 = por %p177, %p178
      %p180 = scmp.ne.s32.totalorder %s168, %s169
      %p181 = scmp.eq.s32.totalorder %s33, 1
      %p182 = por %p180, %p181
      %p184 = scmp.ne.s32.totalorder %s169, %s183
      %p185 = scmp.eq.s32.totalorder %s33, 0
      %p186 = por %p184, %p185
      %s188 = sadd.s32 %s187, 1
      %p191 = scmp.eq.s32.totalorder %s27, 1
      %p192 = scmp.ne.s32.totalorder %s187, %s189
      %p193 = scmp.eq.s32.totalorder %s27, 0
      %p194 = por %p192, %p193
      %p195 = scmp.ne.s32.totalorder %s187, %s189
      %p196 = scmp.eq.s32.totalorder %s32, 1
      %p197 = por %p195, %p196
      %p198 = scmp.ne.s32.totalorder %s189, %s190
      %p199 = scmp.eq.s32.totalorder %s32, 0
      %p200 = por %p198, %p199
      %p201 = scmp.ne.s32.totalorder %s189, %s190
      %p202 = scmp.eq.s32.totalorder %s33, 1
      %p203 = por %p201, %p202
      %p205 = scmp.ne.s32.totalorder %s190, %s204
      %p206 = scmp.eq.s32.totalorder %s33, 0
      %p207 = por %p205, %p206
      %s209 = sadd.s32 %s208, 1
      %p212 = scmp.eq.s32.totalorder %s27, 1
      %p213 = scmp.ne.s32.totalorder %s208, %s210
      %p214 = scmp.eq.s32.totalorder %s27, 0
      %p215 = por %p213, %p214
      %p216 = scmp.ne.s32.totalorder %s208, %s210
      %p217 = scmp.eq.s32.totalorder %s32, 1
      %p218 = por %p216, %p217
      %p219 = scmp.ne.s32.totalorder %s210, %s211
      %p220 = scmp.eq.s32.totalorder %s32, 0
      %p221 = por %p219, %p220
      %p222 = scmp.ne.s32.totalorder %s210, %s211
      %p223 = scmp.eq.s32.totalorder %s33, 1
      %p224 = por %p222, %p223
      %p226 = scmp.ne.s32.totalorder %s211, %s225
      %p227 = scmp.eq.s32.totalorder %s33, 0
      %p228 = por %p226, %p227
      %s230 = sadd.s32 %s229, 1
      %p233 = scmp.eq.s32.totalorder %s27, 1
      %p234 = scmp.ne.s32.totalorder %s229, %s231
      %p235 = scmp.eq.s32.totalorder %s27, 0
      %p236 = por %p234, %p235
      %p237 = scmp.ne.s32.totalorder %s229, %s231
      %p238 = scmp.eq.s32.totalorder %s32, 1
      %p239 = por %p237, %p238
      %p240 = scmp.ne.s32.totalorder %s231, %s232
      %p241 = scmp.eq.s32.totalorder %s32, 0
      %p242 = por %p240, %p241
      %p243 = scmp.ne.s32.totalorder %s231, %s232
      %p244 = scmp.eq.s32.totalorder %s33, 1
      %p245 = por %p243, %p244
      %p247 = scmp.ne.s32.totalorder %s232, %s246
      %p248 = scmp.eq.s32.totalorder %s33, 0
      %p249 = por %p247, %p248
      %s251 = sadd.s32 %s250, 1
      %p254 = scmp.eq.s32.totalorder %s27, 1
      %p255 = scmp.ne.s32.totalorder %s250, %s252
      %p256 = scmp.eq.s32.totalorder %s27, 0
      %p257 = por %p255, %p256
      %p258 = scmp.ne.s32.totalorder %s250, %s252
      %p259 = scmp.eq.s32.totalorder %s32, 1
      %p260 = por %p258, %p259
      %p261 = scmp.ne.s32.totalorder %s252, %s253
      %p262 = scmp.eq.s32.totalorder %s32, 0
      %p263 = por %p261, %p262
      %p264 = scmp.ne.s32.totalorder %s252, %s253
      %p265 = scmp.eq.s32.totalorder %s33, 1
      %p266 = por %p264, %p265
      %p268 = scmp.ne.s32.totalorder %s253, %s267
      %p269 = scmp.eq.s32.totalorder %s33, 0
      %p270 = por %p268, %p269
      %s272 = sadd.s32 %s271, 1
      %p275 = scmp.eq.s32.totalorder %s27, 1
      %p276 = scmp.ne.s32.totalorder %s271, %s273
      %p277 = scmp.eq.s32.totalorder %s27, 0
      %p278 = por %p276, %p277
      %p279 = scmp.ne.s32.totalorder %s271, %s273
      %p280 = scmp.eq.s32.totalorder %s32, 1
      %p281 = por %p279, %p280
      %p282 = scmp.ne.s32.totalorder %s273, %s274
      %p283 = scmp.eq.s32.totalorder %s32, 0
      %p284 = por %p282, %p283
      %p285 = scmp.ne.s32.totalorder %s273, %s274
      %p286 = scmp.eq.s32.totalorder %s33, 1
      %p287 = por %p285, %p286
      %p289 = scmp.ne.s32.totalorder %s274, %s288
      %p290 = scmp.eq.s32.totalorder %s33, 0
      %p291 = por %p289, %p290
      %s293 = sadd.s32 %s292, 1
      %p296 = scmp.eq.s32.totalorder %s27, 1
      %p297 = scmp.ne.s32.totalorder %s292, %s294
      %p298 = scmp.eq.s32.totalorder %s27, 0
      %p299 = por %p297, %p298
      %p300 = scmp.ne.s32.totalorder %s292, %s294
      %p301 = scmp.eq.s32.totalorder %s32, 1
      %p302 = por %p300, %p301
      %p303 = scmp.ne.s32.totalorder %s294, %s295
      %p304 = scmp.eq.s32.totalorder %s32, 0
      %p305 = por %p303, %p304
      %p306 = scmp.ne.s32.totalorder %s294, %s295
      %p307 = scmp.eq.s32.totalorder %s33, 1
      %p308 = por %p306, %p307
      %p310 = scmp.ne.s32.totalorder %s295, %s309
      %p311 = scmp.eq.s32.totalorder %s33, 0
      %p312 = por %p310, %p311
      %s314 = sadd.s32 %s313, 1
      %p317 = scmp.eq.s32.totalorder %s27, 1
      %p318 = scmp.ne.s32.totalorder %s313, %s315
      %p319 = scmp.eq.s32.totalorder %s27, 0
      %p320 = por %p318, %p319
      %p321 = scmp.ne.s32.totalorder %s313, %s315
      %p322 = scmp.eq.s32.totalorder %s32, 1
      %p323 = por %p321, %p322
      %p324 = scmp.ne.s32.totalorder %s315, %s316
      %p325 = scmp.eq.s32.totalorder %s32, 0
      %p326 = por %p324, %p325
      %p327 = scmp.ne.s32.totalorder %s315, %s316
      %p328 = scmp.eq.s32.totalorder %s33, 1
      %p329 = por %p327, %p328
      %p331 = scmp.ne.s32.totalorder %s316, %s330
      %p332 = scmp.eq.s32.totalorder %s33, 0
      %p333 = por %p331, %p332
      %s335 = sadd.s32 %s334, 1
      %p338 = scmp.eq.s32.totalorder %s27, 1
      %p339 = scmp.ne.s32.totalorder %s334, %s336
      %p340 = scmp.eq.s32.totalorder %s27, 0
      %p341 = por %p339, %p340
      %p342 = scmp.ne.s32.totalorder %s334, %s336
      %p343 = scmp.eq.s32.totalorder %s32, 1
      %p344 = por %p342, %p343
      %p345 = scmp.ne.s32.totalorder %s336, %s337
      %p346 = scmp.eq.s32.totalorder %s32, 0
      %p347 = por %p345, %p346
      %p348 = scmp.ne.s32.totalorder %s336, %s337
      %p349 = scmp.eq.s32.totalorder %s33, 1
      %p350 = por %p348, %p349
      %p352 = scmp.ne.s32.totalorder %s337, %s351
      %p353 = scmp.eq.s32.totalorder %s33, 0
      %p354 = por %p352, %p353
      %s356 = sadd.s32 %s355, 1
      %p359 = scmp.eq.s32.totalorder %s27, 1
      %p360 = scmp.ne.s32.totalorder %s355, %s357
      %p361 = scmp.eq.s32.totalorder %s27, 0
      %p362 = por %p360, %p361
      %p363 = scmp.ne.s32.totalorder %s355, %s357
      %p364 = scmp.eq.s32.totalorder %s32, 1
      %p365 = por %p363, %p364
      %p366 = scmp.ne.s32.totalorder %s357, %s358
      %p367 = scmp.eq.s32.totalorder %s32, 0
      %p368 = por %p366, %p367
      %p369 = scmp.ne.s32.totalorder %s357, %s358
      %p370 = scmp.eq.s32.totalorder %s33, 1
      %p371 = por %p369, %p370
      %p373 = scmp.ne.s32.totalorder %s358, %s372
      %p374 = scmp.eq.s32.totalorder %s33, 0
      %p375 = por %p373, %p374
      %s376 = ssub.s32 %s27, %s34
      %p377 = scmp.eq.s32.totalorder %s376, 0
      %s379 = sadd.s32 %s378, 1
      %s380 = scalar_select %p377, %s378, %s379
      %p383 = pneg %p377
      %p384 = scmp.eq.s32.totalorder %s27, 1
      %p385 = por %p383, %p384
      %p386 = scmp.ne.s32.totalorder %s378, %s381
      %p387 = scmp.eq.s32.totalorder %s27, 0
      %p388 = por %p386, %p387
      %p389 = scmp.ne.s32.totalorder %s378, %s381
      %p390 = scmp.eq.s32.totalorder %s32, 1
      %p391 = por %p389, %p390
      %p392 = scmp.ne.s32.totalorder %s381, %s382
      %p393 = scmp.eq.s32.totalorder %s32, 0
      %p394 = por %p392, %p393
      %p395 = scmp.ne.s32.totalorder %s381, %s382
      %p396 = scmp.eq.s32.totalorder %s33, 1
      %p397 = por %p395, %p396
      %p399 = scmp.ne.s32.totalorder %s382, %s398
      %p400 = scmp.eq.s32.totalorder %s33, 0
      %p401 = por %p399, %p400
      %s403 = sadd.s32 %s402, 1
      %p406 = scmp.eq.s32.totalorder %s27, 1
      %p407 = scmp.ne.s32.totalorder %s402, %s404
      %p408 = scmp.eq.s32.totalorder %s27, 0
      %p409 = por %p407, %p408
      %p410 = scmp.ne.s32.totalorder %s402, %s404
      %p411 = scmp.eq.s32.totalorder %s32, 1
      %p412 = por %p410, %p411
      %p413 = scmp.ne.s32.totalorder %s404, %s405
      %p414 = scmp.eq.s32.totalorder %s32, 0
      %p415 = por %p413, %p414
      %p416 = scmp.ne.s32.totalorder %s404, %s405
      %p417 = scmp.eq.s32.totalorder %s33, 1
      %p418 = por %p416, %p417
      %p420 = scmp.ne.s32.totalorder %s405, %s419
      %p421 = scmp.eq.s32.totalorder %s33, 0
      %p422 = por %p420, %p421
      %s424 = sadd.s32 %s423, 1
      %p427 = scmp.eq.s32.totalorder %s27, 1
      %p428 = scmp.ne.s32.totalorder %s423, %s425
      %p429 = scmp.eq.s32.totalorder %s27, 0
      %p430 = por %p428, %p429
      %p431 = scmp.ne.s32.totalorder %s423, %s425
      %p432 = scmp.eq.s32.totalorder %s32, 1
      %p433 = por %p431, %p432
      %p434 = scmp.ne.s32.totalorder %s425, %s426
      %p435 = scmp.eq.s32.totalorder %s32, 0
      %p436 = por %p434, %p435
      %p437 = scmp.ne.s32.totalorder %s425, %s426
      %p438 = scmp.eq.s32.totalorder %s33, 1
      %p439 = por %p437, %p438
      %p441 = scmp.ne.s32.totalorder %s426, %s440
      %p442 = scmp.eq.s32.totalorder %s33, 0
      %p443 = por %p441, %p442
      %p444 = scmp.le.s32.totalorder 1, %s27
      %p445 = scmp.lt.s32.totalorder %s27, 3
      %p446 = pnand %p444, %p445
      %p447 = pneg %p446
      // Predicated region
      $region9: #{morpheme_ext_forward.1} parent=5 // pred_check
        _
      $region10: #{morpheme_ext_forward.1} parent=5 // pred_check_branch
        %449 = sbr.rel (%p446) target = $region12
      $region11: #{morpheme_ext_forward.1} parent=5 // pred_region
        %s450 = ssub.s32 %s27, 1
        // Predicated region
        $region13: #{morpheme_ext_forward.1} parent=11 // pred_check
          %p451 = pneg %p74
        $region14: #{morpheme_ext_forward.1} parent=11 // pred_check_branch
          %453 = sbr.rel (%p451) target = $region16
        $region15: #{morpheme_ext_forward.1} parent=11 // pred_region
          _
        $region16: #{morpheme_ext_forward.1} parent=11 // pred_fallthru
          _
        // Predicated region
        $region17: #{morpheme_ext_forward.1} parent=11 // pred_check
          %p454 = pneg %p95
        $region18: #{morpheme_ext_forward.1} parent=11 // pred_check_branch
          %456 = sbr.rel (%p454) target = $region20
        $region19: #{morpheme_ext_forward.1} parent=11 // pred_region
          _
        $region20: #{morpheme_ext_forward.1} parent=11 // pred_fallthru
          _
        // Predicated region
        $region21: #{morpheme_ext_forward.1} parent=11 // pred_check
          %p457 = pneg %p116
        $region22: #{morpheme_ext_forward.1} parent=11 // pred_check_branch
          %459 = sbr.rel (%p457) target = $region24
        $region23: #{morpheme_ext_forward.1} parent=11 // pred_region
          _
        $region24: #{morpheme_ext_forward.1} parent=11 // pred_fallthru
          _
        // Predicated region
        $region25: #{morpheme_ext_forward.1} parent=11 // pred_check
          %p460 = pneg %p137
        $region26: #{morpheme_ext_forward.1} parent=11 // pred_check_branch
          %462 = sbr.rel (%p460) target = $region28
        $region27: #{morpheme_ext_forward.1} parent=11 // pred_region
          _
        $region28: #{morpheme_ext_forward.1} parent=11 // pred_fallthru
          _
        // Predicated region
        $region29: #{morpheme_ext_forward.1} parent=11 // pred_check
          %p463 = pneg %p158
        $region30: #{morpheme_ext_forward.1} parent=11 // pred_check_branch
          %465 = sbr.rel (%p463) target = $region32
        $region31: #{morpheme_ext_forward.1} parent=11 // pred_region
          _
        $region32: #{morpheme_ext_forward.1} parent=11 // pred_fallthru
          _
        // Predicated region
        $region33: #{morpheme_ext_forward.1} parent=11 // pred_check
          %p466 = pneg %p179
        $region34: #{morpheme_ext_forward.1} parent=11 // pred_check_branch
          %468 = sbr.rel (%p466) target = $region36
        $region35: #{morpheme_ext_forward.1} parent=11 // pred_region
          _
        $region36: #{morpheme_ext_forward.1} parent=11 // pred_fallthru
          _
        // Predicated region
        $region37: #{morpheme_ext_forward.1} parent=11 // pred_check
          %p469 = pneg %p200
        $region38: #{morpheme_ext_forward.1} parent=11 // pred_check_branch
          %471 = sbr.rel (%p469) target = $region40
        $region39: #{morpheme_ext_forward.1} parent=11 // pred_region
          _
        $region40: #{morpheme_ext_forward.1} parent=11 // pred_fallthru
          _
        // Predicated region
        $region41: #{morpheme_ext_forward.1} parent=11 // pred_check
          %p472 = pneg %p221
        $region42: #{morpheme_ext_forward.1} parent=11 // pred_check_branch
          %474 = sbr.rel (%p472) target = $region44
        $region43: #{morpheme_ext_forward.1} parent=11 // pred_region
          _
        $region44: #{morpheme_ext_forward.1} parent=11 // pred_fallthru
          _
        // Predicated region
        $region45: #{morpheme_ext_forward.1} parent=11 // pred_check
          %p475 = pneg %p242
        $region46: #{morpheme_ext_forward.1} parent=11 // pred_check_branch
          %477 = sbr.rel (%p475) target = $region48
        $region47: #{morpheme_ext_forward.1} parent=11 // pred_region
          _
        $region48: #{morpheme_ext_forward.1} parent=11 // pred_fallthru
          _
        // Predicated region
        $region49: #{morpheme_ext_forward.1} parent=11 // pred_check
          %p478 = pneg %p263
        $region50: #{morpheme_ext_forward.1} parent=11 // pred_check_branch
          %480 = sbr.rel (%p478) target = $region52
        $region51: #{morpheme_ext_forward.1} parent=11 // pred_region
          _
        $region52: #{morpheme_ext_forward.1} parent=11 // pred_fallthru
          _
        // Predicated region
        $region53: #{morpheme_ext_forward.1} parent=11 // pred_check
          %p481 = pneg %p284
        $region54: #{morpheme_ext_forward.1} parent=11 // pred_check_branch
          %483 = sbr.rel (%p481) target = $region56
        $region55: #{morpheme_ext_forward.1} parent=11 // pred_region
          _
        $region56: #{morpheme_ext_forward.1} parent=11 // pred_fallthru
          _
        // Predicated region
        $region57: #{morpheme_ext_forward.1} parent=11 // pred_check
          %p484 = pneg %p305
        $region58: #{morpheme_ext_forward.1} parent=11 // pred_check_branch
          %486 = sbr.rel (%p484) target = $region60
        $region59: #{morpheme_ext_forward.1} parent=11 // pred_region
          _
        $region60: #{morpheme_ext_forward.1} parent=11 // pred_fallthru
          _
        // Predicated region
        $region61: #{morpheme_ext_forward.1} parent=11 // pred_check
          %p487 = pneg %p326
        $region62: #{morpheme_ext_forward.1} parent=11 // pred_check_branch
          %489 = sbr.rel (%p487) target = $region64
        $region63: #{morpheme_ext_forward.1} parent=11 // pred_region
          _
        $region64: #{morpheme_ext_forward.1} parent=11 // pred_fallthru
          _
        // Predicated region
        $region65: #{morpheme_ext_forward.1} parent=11 // pred_check
          %p490 = pneg %p347
        $region66: #{morpheme_ext_forward.1} parent=11 // pred_check_branch
          %492 = sbr.rel (%p490) target = $region68
        $region67: #{morpheme_ext_forward.1} parent=11 // pred_region
          _
        $region68: #{morpheme_ext_forward.1} parent=11 // pred_fallthru
          _
        // Predicated region
        $region69: #{morpheme_ext_forward.1} parent=11 // pred_check
          %p493 = pneg %p368
        $region70: #{morpheme_ext_forward.1} parent=11 // pred_check_branch
          %495 = sbr.rel (%p493) target = $region72
        $region71: #{morpheme_ext_forward.1} parent=11 // pred_region
          _
        $region72: #{morpheme_ext_forward.1} parent=11 // pred_fallthru
          _
      $region12: #{morpheme_ext_forward.1} parent=5 // pred_fallthru
        _
      %p496 = scmp.lt.s32.totalorder %s27, 2
      // Predicated region
      $region73: #{morpheme_ext_forward.1} parent=5 // pred_check
        %p497 = pneg %p496
      $region74: #{morpheme_ext_forward.1} parent=5 // pred_check_branch
        %499 = sbr.rel (%p497) target = $region76
      $region75: #{morpheme_ext_forward.1} parent=5 // pred_region
        // Predicated region
        $region77: #{morpheme_ext_forward.1} parent=75 // pred_check
          %p500 = pneg %p47
        $region78: #{morpheme_ext_forward.1} parent=75 // pred_check_branch
          %502 = sbr.rel (%p500) target = $region80
        $region79: #{morpheme_ext_forward.1} parent=75 // pred_region
          %s503 = smul.u32 8, %s27
          %p504 = scmp.lt.s32.totalorder %s503, 15
          %s505 = scalar_select %p504, %s503, 15
          %s506 = scalar_lea.vmem %s0, %s505
          %s507 = smul.u32 8, %s27
        $region80: #{morpheme_ext_forward.1} parent=75 // pred_fallthru
          _
      $region76: #{morpheme_ext_forward.1} parent=5 // pred_fallthru
        _
      %p508 = scmp.le.s32.totalorder 1, %s27
      %p509 = scmp.lt.s32.totalorder %s27, 3
      %p510 = pnand %p508, %p509
      %p511 = pneg %p510
      // Predicated region
      $region81: #{morpheme_ext_forward.1} parent=5 // pred_check
        _
      $region82: #{morpheme_ext_forward.1} parent=5 // pred_check_branch
        %513 = sbr.rel (%p510) target = $region84
      $region83: #{morpheme_ext_forward.1} parent=5 // pred_region
        %s514 = ssub.s32 %s27, 1
        %s515 = smul.u32 8, %s32
        %p516 = scmp.lt.s32.totalorder %s515, 15
        %s517 = scalar_select %p516, %s515, 15
        %s518 = scalar_lea.vmem %s0, %s517
        %p519 = pneg %p53
        %p520 = pneg %p50
        %p521 = pneg %p74
        %p522 = pneg %p71
        %p523 = pneg %p95
        %p524 = pneg %p92
        %p525 = pneg %p116
        %p526 = pneg %p113
        %p527 = pneg %p137
        %p528 = pneg %p134
        %p529 = pneg %p158
        %p530 = pneg %p155
        %p531 = pneg %p179
        %p532 = pneg %p176
        %p533 = pneg %p200
        %p534 = pneg %p197
        %p535 = pneg %p221
        %p536 = pneg %p218
        %p537 = pneg %p242
        %p538 = pneg %p239
        %p539 = pneg %p263
        %p540 = pneg %p260
        %p541 = pneg %p284
        %p542 = pneg %p281
        %p543 = pneg %p305
        %p544 = pneg %p302
        %p545 = pneg %p326
        %p546 = pneg %p323
        %p547 = pneg %p347
        %p548 = pneg %p344
        %p549 = pneg %p368
        %p550 = pneg %p365
        %p551 = pneg %p394
        %p552 = pneg %p391
        %s553 = smul.u32 8, %s32
        %p554 = scmp.lt.s32.totalorder %s553, 15
        %s555 = scalar_select %p554, %s553, 15
        %s556 = smul.addr %s555, 2
        %s557 = scalar_lea.vmem %s16, %s556
        %p558 = pneg %p415
        %p559 = pneg %p412
        %p560 = pneg %p436
        %p561 = pneg %p433
        %s562 = smul.u32 8, %s32
        %p563 = scmp.lt.s32.totalorder %s562, 15
        %s564 = scalar_select %p563, %s562, 15
        %s565 = scalar_lea.vmem %s0, %s564
        %s566 = smul.u32 8, %s32
        %s567 = smul.u32 8, %s32
        %p568 = scmp.lt.s32.totalorder %s567, 15
        %s569 = scalar_select %p568, %s567, 15
        %s570 = smul.addr %s569, 2
        %s571 = scalar_lea.vmem %s16, %s570
        %s572 = smul.u32 8, %s32
        %p574 = scmp.eq.s32.totalorder %s32, 0
        // Predicated region
        $region85: #{morpheme_ext_forward.1} parent=83 // pred_check
          %p575 = pneg %p574
        $region86: #{morpheme_ext_forward.1} parent=83 // pred_check_branch
          %577 = sbr.rel (%p575) target = $region88
        $region87: #{morpheme_ext_forward.1} parent=83 // pred_region
          %vm578 = vcmask 254976
          %579 = vst.msk [vmem:[#allocation2] sm:$0x3] %vm578, 0.0
          %580 = vst.msk [vmem:[#allocation2 + $0x2] sm:$0x3] %vm578, 0.0
          %581 = vst.msk [vmem:[#allocation4] sm:$0x3] %vm578, 0.0
          %582 = vst.msk [vmem:[#allocation4 + $0x2] sm:$0x3] %vm578, 0.0
        $region88: #{morpheme_ext_forward.1} parent=83 // pred_fallthru
          _
        %p583 = scmp.lt.s32.totalorder %s32, 1
        %v584 = vld [vmem:[#allocation2] sm:$0x3]
        %v585 = vld [vmem:[#allocation4] sm:$0x3]
        %s586 = scalar_lea.vmem [#allocation2], 2
        %v587 = vld [vmem:[%s586] sm:$0x3]
        %s588 = scalar_lea.vmem [#allocation4], 2
        %v589 = vld [vmem:[%s588] sm:$0x3]
        %v590 = vld [vmem:[%s565] sm:$0x1]
        %v591 = vunpack.c.l.bf16 %v590
        %v592 = vpack.c.bf16 %v584, %v584
        %v593 = vld [vmem:[%s7] sm:$0xf]
        %v594 = vld [vmem:[%s7 + $0x4] sm:$0xf]
        %v595 = vld [vmem:[%s7 + $0x8] sm:$0xf]
        %v596 = vld [vmem:[%s7 + $0xc] sm:$0xf]
        %v601 = vunpack.c.l.b16 %v593
        %v602 = vunpack.c.l.b16 %v594
        %v603 = vunpack.c.l.b16 %v595
        %v604 = vunpack.c.l.b16 %v596
        %v605 = vpack.c.b16 %v602, %v601
        %v606 = vpack.c.b16 %v604, %v603
        %vm609 = vcmask 261120
        %v611 = vsel %vm609, %v592, 0
        %613 = vmatprep.subr.bf16.mxu0 0
        %614 = vmatpush1.bf16.msra.mxu0 %v605
        %615 = vmatprep.subr.bf16.mxu0 0
        %616 = vmatpush1.bf16.msra.mxu0 %v606
        %617 = vmatprep.subr.bf16.mxu0 0
        %618 = vmatpush1.bf16.msra.mxu0 0
        %619 = vmatprep.subr.bf16.mxu0 0
        %620 = vmatpush1.bf16.msra.mxu0 0
        %621 = vmatprep.subr.bf16.mxu0 0
        %622 = vmatpush1.bf16.msra.mxu0 0
        %623 = vmatprep.subr.bf16.mxu0 0
        %624 = vmatpush1.bf16.msra.mxu0 0
        %625 = vmatprep.subr.bf16.mxu0 0
        %626 = vmatpush1.bf16.msra.mxu0 0
        %627 = vmatprep.subr.bf16.mxu0 0
        %628 = vmatpush1.bf16.msra.mxu0 0
        %629 = vmatprep.subr.bf16.mxu0 0
        %630 = vmatpush1.bf16.msra.mxu0 0
        %631 = vmatprep.subr.bf16.mxu0 0
        %632 = vmatpush1.bf16.msra.mxu0 0
        %633 = vmatprep.subr.bf16.mxu0 0
        %634 = vmatpush1.bf16.msra.mxu0 0
        %635 = vmatprep.subr.bf16.mxu0 0
        %636 = vmatpush1.bf16.msra.mxu0 0
        %637 = vmatprep.subr.bf16.mxu0 0
        %638 = vmatpush1.bf16.msra.mxu0 0
        %639 = vmatprep.subr.bf16.mxu0 0
        %640 = vmatpush1.bf16.msra.mxu0 0
        %641 = vmatprep.subr.bf16.mxu0 0
        %642 = vmatpush1.bf16.msra.mxu0 0
        %643 = vmatprep.subr.bf16.mxu0 0
        %644 = vmatpush1.bf16.msra.mxu0 0
        %645 = vmatprep.mubr.bf16.mxu0 0
        %646 = vmatmul.mubr.bf16.gmra.mrb[0].mxu0 %v611
        %v647 = vpop.f32.mrb[0].mxu0
        %v648 = vadd.f32 0.0, %v647
        %v649 = vpop.f32.mrb[0].mxu0
        %v650 = vpop.f32.mrb[0].mxu0
        %v651 = vpop.f32.mrb[0].mxu0
        %652 = vdwg.mxu0
        %v653 = vadd.f32 %v591, %v648
        %v654 = vxor.u32 %v653, 2147483648
        %v655 = vmul.f32 %v654, 1.442695
        %v656 = vpow.pop %v655
        %v657 = vadd.f32 %v656, 1.0
        %v658 = vrcp.pop %v657
        %v659 = vmul.f32 1.0, %v658
        %v660 = vtanh.pop %v653
        %v663 = vunpack.c.l.s4 1983009808
        %v664 = vunpack.c.0.s8 %v663
        %v665 = vlaneseq
        %v666 = vshrl.u32 %v665, 7
        %v667 = vsub.s32 %v664, %v666
        %v668 = vrot.slane %v585, %v667
        %669 = vrot.lane.b32.xlu0 %v668, 32
        %v670 = vpop.permute.xlu0 %669
        %v672 = vmul.f32 %v659, %v670
        %674 = vrot.lane.b32.xlu0 %v660, 64
        %v675 = vpop.permute.xlu0 %674
        %v677 = vmul.f32 %v659, %v675
        %679 = vrot.lane.b32.xlu0 %v677, 32
        %v680 = vpop.permute.xlu0 %679
        %v682 = vadd.f32 %v672, %v680
        %v683 = vtanh.pop %v682
        %685 = vrot.lane.b32.xlu0 %v683, 64
        %v686 = vpop.permute.xlu0 %685
        %v688 = vmul.f32 %v659, %v686
        %v691 = vunpack.c.l.s4 1983009808
        %v692 = vunpack.c.0.s8 %v691
        %v693 = vlaneseq
        %v694 = vshrl.u32 %v693, 7
        %v695 = vsub.s32 %v692, %v694
        %v696 = vrot.slane %v688, %v695
        %697 = vrot.lane.b32.xlu0 %v696, 32
        %v698 = vpop.permute.xlu0 %697
        %701 = vrot.lane.b32.xlu0 %v587, 32
        %v702 = vpop.permute.xlu0 %701
        %v704 = vsel %vm609, %v698, %v702
        %v705 = vpack.c.bf16 %v704, %v704
        %v706 = vld [vmem:[%s8] sm:$0xf]
        %v707 = vld [vmem:[%s8 + $0x4] sm:$0xf]
        %v708 = vld [vmem:[%s8 + $0x8] sm:$0xf]
        %v709 = vld [vmem:[%s8 + $0xc] sm:$0xf]
        %v710 = vld [vmem:[%s8 + $0x10] sm:$0xf]
        %v711 = vld [vmem:[%s8 + $0x14] sm:$0xf]
        %v712 = vld [vmem:[%s8 + $0x18] sm:$0xf]
        %v713 = vld [vmem:[%s8 + $0x1c] sm:$0xf]
        %v714 = vld [vmem:[%s9] sm:$0x1]
        %v716 = vlaneseq
        %v717 = vshrl.u32 %v716, 7
        %v718 = vsub.s32 0, %v717
        %v719 = vrot.slane %v714, %v718
        %v729 = vunpack.c.l.b16 %v706
        %v730 = vunpack.c.l.b16 %v707
        %v731 = vunpack.c.l.b16 %v708
        %v732 = vunpack.c.l.b16 %v709
        %v733 = vunpack.c.l.b16 %v710
        %v734 = vunpack.c.l.b16 %v711
        %v735 = vunpack.c.l.b16 %v712
        %v736 = vunpack.c.l.b16 %v713
        %v737 = vpack.c.b16 %v730, %v729
        %v738 = vpack.c.b16 %v732, %v731
        %v739 = vpack.c.b16 %v734, %v733
        %v740 = vpack.c.b16 %v736, %v735
        %vm745 = vcmask 523264
        %v747 = vsel %vm745, %v705, 0
        %749 = vmatprep.subr.bf16.mxu0 0
        %750 = vmatpush1.bf16.msra.mxu0 %v737
        %751 = vmatprep.subr.bf16.mxu0 0
        %752 = vmatpush1.bf16.msra.mxu0 %v738
        %753 = vmatprep.subr.bf16.mxu0 0
        %754 = vmatpush1.bf16.msra.mxu0 %v739
        %755 = vmatprep.subr.bf16.mxu0 0
        %756 = vmatpush1.bf16.msra.mxu0 %v740
        %757 = vmatprep.subr.bf16.mxu0 0
        %758 = vmatpush1.bf16.msra.mxu0 0
        %759 = vmatprep.subr.bf16.mxu0 0
        %760 = vmatpush1.bf16.msra.mxu0 0
        %761 = vmatprep.subr.bf16.mxu0 0
        %762 = vmatpush1.bf16.msra.mxu0 0
        %763 = vmatprep.subr.bf16.mxu0 0
        %764 = vmatpush1.bf16.msra.mxu0 0
        %765 = vmatprep.subr.bf16.mxu0 0
        %766 = vmatpush1.bf16.msra.mxu0 0
        %767 = vmatprep.subr.bf16.mxu0 0
        %768 = vmatpush1.bf16.msra.mxu0 0
        %769 = vmatprep.subr.bf16.mxu0 0
        %770 = vmatpush1.bf16.msra.mxu0 0
        %771 = vmatprep.subr.bf16.mxu0 0
        %772 = vmatpush1.bf16.msra.mxu0 0
        %773 = vmatprep.subr.bf16.mxu0 0
        %774 = vmatpush1.bf16.msra.mxu0 0
        %775 = vmatprep.subr.bf16.mxu0 0
        %776 = vmatpush1.bf16.msra.mxu0 0
        %777 = vmatprep.subr.bf16.mxu0 0
        %778 = vmatpush1.bf16.msra.mxu0 0
        %779 = vmatprep.subr.bf16.mxu0 0
        %780 = vmatpush1.bf16.msra.mxu0 0
        %781 = vmatprep.mubr.bf16.mxu0 0
        %782 = vmatmul.mubr.bf16.gmra.mrb[0].mxu0 %v747
        %v783 = vpop.f32.mrb[0].mxu0
        %v784 = vadd.f32 %v719, %v783
        %v785 = vpop.f32.mrb[0].mxu0
        %v786 = vpop.f32.mrb[0].mxu0
        %v787 = vpop.f32.mrb[0].mxu0
        %788 = vdwg.mxu0
        %v789 = vxor.u32 %v784, 2147483648
        %v790 = vmul.f32 %v789, 1.442695
        %v791 = vpow.pop %v790
        %v792 = vadd.f32 %v791, 1.0
        %v793 = vrcp.pop %v792
        %v794 = vmul.f32 1.0, %v793
        %v795 = vtanh.pop %v784
        %797 = vrot.lane.b32.xlu0 %v589, 32
        %v798 = vpop.permute.xlu0 %797
        %v800 = vmul.f32 %v794, %v798
        %802 = vrot.lane.b32.xlu0 %v795, 64
        %v803 = vpop.permute.xlu0 %802
        %v805 = vmul.f32 %v794, %v803
        %807 = vrot.lane.b32.xlu0 %v805, 32
        %v808 = vpop.permute.xlu0 %807
        %v810 = vadd.f32 %v800, %v808
        %v811 = vtanh.pop %v810
        %813 = vrot.lane.b32.xlu0 %v811, 64
        %v814 = vpop.permute.xlu0 %813
        %v816 = vmul.f32 %v794, %v814
        %v817 = vpack.c.bf16 %v816, %v816
        %v818 = vld [vmem:[%s12] sm:$0xff]
        %v819 = vld [vmem:[%s12 + $0x8] sm:$0xff]
        %v820 = vld [vmem:[%s12 + $0x10] sm:$0xff]
        %v821 = vld [vmem:[%s12 + $0x18] sm:$0xff]
        %823 = vrot.lane.b32.xlu0 %v817, 32
        %v824 = vpop.permute.xlu0 %823
        %v829 = vunpack.c.l.b16 %v818
        %v830 = vunpack.c.h.b16 %v818
        %v831 = vunpack.c.l.b16 %v819
        %v832 = vunpack.c.h.b16 %v819
        %v833 = vunpack.c.l.b16 %v820
        %v834 = vunpack.c.h.b16 %v820
        %v835 = vunpack.c.l.b16 %v821
        %v836 = vunpack.c.h.b16 %v821
        %v837 = vpack.c.b16 %v831, %v829
        %v838 = vpack.c.b16 %v832, %v830
        %v839 = vpack.c.b16 %v835, %v833
        %v840 = vpack.c.b16 %v836, %v834
        %v846 = vsel %vm609, %v824, 0
        %848 = vmatprep.subr.bf16.mxu0 %v838
        %849 = vmatpush1.bf16.msra.mxu0 %v837
        %850 = vmatprep.subr.bf16.mxu0 %v840
        %851 = vmatpush1.bf16.msra.mxu0 %v839
        %852 = vmatprep.subr.bf16.mxu0 0
        %853 = vmatpush1.bf16.msra.mxu0 0
        %854 = vmatprep.subr.bf16.mxu0 0
        %855 = vmatpush1.bf16.msra.mxu0 0
        %856 = vmatprep.subr.bf16.mxu0 0
        %857 = vmatpush1.bf16.msra.mxu0 0
        %858 = vmatprep.subr.bf16.mxu0 0
        %859 = vmatpush1.bf16.msra.mxu0 0
        %860 = vmatprep.subr.bf16.mxu0 0
        %861 = vmatpush1.bf16.msra.mxu0 0
        %862 = vmatprep.subr.bf16.mxu0 0
        %863 = vmatpush1.bf16.msra.mxu0 0
        %864 = vmatprep.subr.bf16.mxu0 0
        %865 = vmatpush1.bf16.msra.mxu0 0
        %866 = vmatprep.subr.bf16.mxu0 0
        %867 = vmatpush1.bf16.msra.mxu0 0
        %868 = vmatprep.subr.bf16.mxu0 0
        %869 = vmatpush1.bf16.msra.mxu0 0
        %870 = vmatprep.subr.bf16.mxu0 0
        %871 = vmatpush1.bf16.msra.mxu0 0
        %872 = vmatprep.subr.bf16.mxu0 0
        %873 = vmatpush1.bf16.msra.mxu0 0
        %874 = vmatprep.subr.bf16.mxu0 0
        %875 = vmatpush1.bf16.msra.mxu0 0
        %876 = vmatprep.subr.bf16.mxu0 0
        %877 = vmatpush1.bf16.msra.mxu0 0
        %878 = vmatprep.subr.bf16.mxu0 0
        %879 = vmatpush1.bf16.msra.mxu0 0
        %880 = vmatprep.mubr.bf16.mxu0 0
        %881 = vmatmul.mubr.bf16.gmra.mrb[0].mxu0 %v846
        %v882 = vpop.f32.mrb[0].mxu0
        %v883 = vadd.f32 0.0, %v882
        %v884 = vpop.f32.mrb[0].mxu0
        %v885 = vadd.f32 0.0, %v884
        %v886 = vpop.f32.mrb[0].mxu0
        %v887 = vpop.f32.mrb[0].mxu0
        %888 = vdwg.mxu0
        %v889 = vld [vmem:[%s3] sm:$0xff]
        %v890 = vld [vmem:[%s3 + $0x8] sm:$0xff]
        %v893 = vunpack.c.l.s4 1966171168
        %v894 = vunpack.c.0.s8 %v893
        %v895 = vlaneseq
        %v896 = vshrl.u32 %v895, 7
        %v897 = vsub.s32 %v894, %v896
        %v898 = vrot.slane %v883, %v897
        %v899 = vcombine.high %v898, %v898
        %v901 = vunpack.c.l.s4 1966171168
        %v902 = vunpack.c.0.s8 %v901
        %v903 = vlaneseq
        %v904 = vshrl.u32 %v903, 7
        %v905 = vsub.s32 %v902, %v904
        %v906 = vrot.slane %v898, %v905
        %v908 = vunpack.c.l.s4 1966171168
        %v909 = vunpack.c.0.s8 %v908
        %v910 = vlaneseq
        %v911 = vshrl.u32 %v910, 7
        %v912 = vsub.s32 %v909, %v911
        %v913 = vrot.slane %v899, %v912
        %v914 = vlaneseq
        %v915 = vshrl.u32 %v914, 7
        %v916 = vsub.s32 0, %v915
        %v917 = vrot.slane %v906, %v916
        %v918 = vlaneseq
        %v919 = vshrl.u32 %v918, 7
        %v920 = vsub.s32 0, %v919
        %v921 = vrot.slane %v913, %v920
        %v924 = vmul.f32 %v889, %v917
        %v925 = vmul.f32 %v890, %v921
        %v926 = vsel %vm609, %v924, 0.0
        %927 = vadd.xlane.f32.xlu0 %v926
        %v928 = vpop.xlane.xlu0 %927
        %v929 = vsel %vm609, %v925, 0.0
        %930 = vadd.xlane.f32.xlu0 %v929
        %v931 = vpop.xlane.xlu0 %930
        %v932 = vld [vmem:[%s2] sm:$0x3]
        %v934 = vlaneseq
        %v935 = vshrl.u32 %v934, 7
        %v936 = vsub.s32 0, %v935
        %v937 = vrot.slane %v932, %v936
        %939 = vbcast.lane.b32.xlu0 %v937, 256
        %v940 = vpop.permute.xlu0 %939
        %v941 = vlaneseq
        %v942 = vshrl.u32 %v941, 7
        %v943 = vsub.s32 1, %v942
        %v944 = vrot.slane %v932, %v943
        %946 = vbcast.lane.b32.xlu0 %v944, 256
        %v947 = vpop.permute.xlu0 %946
        %v950 = vadd.f32 %v928, %v940
        %v951 = vadd.f32 %v931, %v947
        %954 = vset.pattern.permute.xlu0 0
        %955 = vperm.xlu0 %954, %v950
        %v956 = vpop.permute.xlu0 %955
        %957 = vset.pattern.permute.xlu0 0
        %958 = vperm.xlu0 %957, %v951
        %v959 = vpop.permute.xlu0 %958
        %v960 = vlaneseq
        %v961 = vand.u32 %v960, 127
        %v962 = vlaneseq
        %v963 = vshrl.u32 %v962, 7
        %v964 = vsub.s32 %v961, %v963
        %v965 = vrot.slane %v956, %v964
        %v966 = vlaneseq
        %v967 = vshrl.u32 %v966, 7
        %v968 = vsub.s32 %v961, %v967
        %v969 = vrot.slane %v959, %v968
        %vm970 = vcmask 1041409
        %v971 = vsel %vm970, %v969, %v965
        %vm973 = vcmask 58368
        %v974 = vsel %vm973, %v971, -inf
        %975 = vmax.xlane.f32.xlu0 %v974
        %v976 = vpop.xlane.xlu0 %975
        %v978 = vlaneseq
        %v979 = vshrl.u32 %v978, 7
        %v980 = vsub.s32 0, %v979
        %v981 = vrot.slane %v976, %v980
        %v982 = vlaneseq
        %v983 = vshrl.u32 %v982, 7
        %v984 = vsub.s32 1, %v983
        %v985 = vrot.slane %v976, %v984
        %v988 = vsub.f32 %v950, %v981
        %v989 = vsub.f32 %v951, %v985
        %v990 = vmul.f32 %v988, 1.442695
        %v991 = vpow.pop %v990
        %v992 = vmul.f32 %v989, 1.442695
        %v993 = vpow.pop %v992
        %996 = vset.pattern.permute.xlu0 0
        %997 = vperm.xlu0 %996, %v991
        %v998 = vpop.permute.xlu0 %997
        %999 = vset.pattern.permute.xlu0 0
        %1000 = vperm.xlu0 %999, %v993
        %v1001 = vpop.permute.xlu0 %1000
        %v1002 = vlaneseq
        %v1003 = vshrl.u32 %v1002, 7
        %v1004 = vsub.s32 %v961, %v1003
        %v1005 = vrot.slane %v998, %v1004
        %v1006 = vlaneseq
        %v1007 = vshrl.u32 %v1006, 7
        %v1008 = vsub.s32 %v961, %v1007
        %v1009 = vrot.slane %v1001, %v1008
        %v1010 = vsel %vm970, %v1009, %v1005
        %v1012 = vsel %vm973, %v1010, 0.0
        %1013 = vadd.xlane.f32.xlu0 %v1012
        %v1014 = vpop.xlane.xlu0 %1013
        %v1015 = vrcp.pop %v1014
        %v1017 = vlaneseq
        %v1018 = vshrl.u32 %v1017, 7
        %v1019 = vsub.s32 0, %v1018
        %v1020 = vrot.slane %v1015, %v1019
        %v1021 = vlaneseq
        %v1022 = vshrl.u32 %v1021, 7
        %v1023 = vsub.s32 1, %v1022
        %v1024 = vrot.slane %v1015, %v1023
        %v1027 = vmul.f32 %v991, %v1020
        %v1028 = vmul.f32 %v993, %v1024
        %v1029 = vld [vmem:[%s1] sm:$0xff]
        %v1030 = vld [vmem:[%s1 + $0x8] sm:$0xff]
        %1032 = vset.pattern.permute.xlu0 0
        %1033 = vperm.xlu0 %1032, %v1027
        %v1034 = vpop.permute.xlu0 %1033
        %1037 = vset.pattern.permute.xlu0 0
        %1038 = vperm.xlu0 %1037, %v1028
        %v1039 = vpop.permute.xlu0 %1038
        %v1041 = vmul.f32 %v1034, %v1029
        %v1042 = vmul.f32 %v1039, %v1030
        %v1043 = vsel %vm745, %v1041, 0.0
        %v1044 = vrot.slane %v1043, 4
        %v1045 = vadd.f32 %v1043, %v1044
        %v1046 = vrot.slane %v1045, 2
        %v1047 = vadd.f32 %v1045, %v1046
        %v1048 = vrot.slane %v1047, 1
        %v1049 = vadd.f32 %v1047, %v1048
        %v1050 = vsel %vm745, %v1042, 0.0
        %v1051 = vrot.slane %v1050, 4
        %v1052 = vadd.f32 %v1050, %v1051
        %v1053 = vrot.slane %v1052, 2
        %v1054 = vadd.f32 %v1052, %v1053
        %v1055 = vrot.slane %v1054, 1
        %v1056 = vadd.f32 %v1054, %v1055
        %v1057 = vpack.c.bf16 %v1049, %v1049
        %v1058 = vpack.c.bf16 %v1056, %v1056
        %v1059 = vld [vmem:[%s10] sm:$0xf]
        %v1060 = vld [vmem:[%s10 + $0x4] sm:$0xf]
        %v1061 = vld [vmem:[%s10 + $0x8] sm:$0xf]
        %v1062 = vld [vmem:[%s10 + $0xc] sm:$0xf]
        %v1063 = vld [vmem:[%s10 + $0x10] sm:$0xf]
        %v1064 = vld [vmem:[%s10 + $0x14] sm:$0xf]
        %v1065 = vld [vmem:[%s10 + $0x18] sm:$0xf]
        %v1066 = vld [vmem:[%s10 + $0x1c] sm:$0xf]
        %v1067 = vld [vmem:[%s11] sm:$0x1]
        %v1069 = vlaneseq
        %v1070 = vshrl.u32 %v1069, 7
        %v1071 = vsub.s32 0, %v1070
        %v1072 = vrot.slane %v1067, %v1071
        %v1076 = vunpack.c.l.b16 %v1057
        %v1077 = vunpack.c.l.b16 %v1058
        %v1078 = vsel %vm970, %v1077, %v1076
        %v1079 = vpack.c.b16 %v1078, %v1078
        %v1088 = vunpack.c.l.b16 %v1059
        %v1089 = vunpack.c.l.b16 %v1060
        %v1090 = vunpack.c.l.b16 %v1061
        %v1091 = vunpack.c.l.b16 %v1062
        %v1092 = vunpack.c.l.b16 %v1063
        %v1093 = vunpack.c.l.b16 %v1064
        %v1094 = vunpack.c.l.b16 %v1065
        %v1095 = vunpack.c.l.b16 %v1066
        %v1096 = vpack.c.b16 %v1089, %v1088
        %v1097 = vpack.c.b16 %v1091, %v1090
        %v1098 = vpack.c.b16 %v1093, %v1092
        %v1099 = vpack.c.b16 %v1095, %v1094
        %v1105 = vsel %vm745, %v1079, 0
        %1107 = vmatprep.subr.bf16.mxu0 0
        %1108 = vmatpush1.bf16.msra.mxu0 %v1096
        %1109 = vmatprep.subr.bf16.mxu0 0
        %1110 = vmatpush1.bf16.msra.mxu0 %v1097
        %1111 = vmatprep.subr.bf16.mxu0 0
        %1112 = vmatpush1.bf16.msra.mxu0 %v1098
        %1113 = vmatprep.subr.bf16.mxu0 0
        %1114 = vmatpush1.bf16.msra.mxu0 %v1099
        %1115 = vmatprep.subr.bf16.mxu0 0
        %1116 = vmatpush1.bf16.msra.mxu0 0
        %1117 = vmatprep.subr.bf16.mxu0 0
        %1118 = vmatpush1.bf16.msra.mxu0 0
        %1119 = vmatprep.subr.bf16.mxu0 0
        %1120 = vmatpush1.bf16.msra.mxu0 0
        %1121 = vmatprep.subr.bf16.mxu0 0
        %1122 = vmatpush1.bf16.msra.mxu0 0
        %1123 = vmatprep.subr.bf16.mxu0 0
        %1124 = vmatpush1.bf16.msra.mxu0 0
        %1125 = vmatprep.subr.bf16.mxu0 0
        %1126 = vmatpush1.bf16.msra.mxu0 0
        %1127 = vmatprep.subr.bf16.mxu0 0
        %1128 = vmatpush1.bf16.msra.mxu0 0
        %1129 = vmatprep.subr.bf16.mxu0 0
        %1130 = vmatpush1.bf16.msra.mxu0 0
        %1131 = vmatprep.subr.bf16.mxu0 0
        %1132 = vmatpush1.bf16.msra.mxu0 0
        %1133 = vmatprep.subr.bf16.mxu0 0
        %1134 = vmatpush1.bf16.msra.mxu0 0
        %1135 = vmatprep.subr.bf16.mxu0 0
        %1136 = vmatpush1.bf16.msra.mxu0 0
        %1137 = vmatprep.subr.bf16.mxu0 0
        %1138 = vmatpush1.bf16.msra.mxu0 0
        %1139 = vmatprep.mubr.bf16.mxu0 0
        %1140 = vmatmul.mubr.bf16.gmra.mrb[0].mxu0 %v1105
        %v1141 = vpop.f32.mrb[0].mxu0
        %v1142 = vadd.f32 %v1072, %v1141
        %v1143 = vpop.f32.mrb[0].mxu0
        %v1144 = vpop.f32.mrb[0].mxu0
        %v1145 = vpop.f32.mrb[0].mxu0
        %1146 = vdwg.mxu0
        %v1147 = vpack.c.bf16 %v1142, %v1142
        %v1148 = vld [vmem:[%s13] sm:$0xf]
        %v1149 = vld [vmem:[%s13 + $0x4] sm:$0xf]
        %v1150 = vld [vmem:[%s13 + $0x8] sm:$0xf]
        %v1151 = vld [vmem:[%s13 + $0xc] sm:$0xf]
        %v1156 = vunpack.c.l.b16 %v1148
        %v1157 = vunpack.c.l.b16 %v1149
        %v1158 = vunpack.c.l.b16 %v1150
        %v1159 = vunpack.c.l.b16 %v1151
        %v1160 = vpack.c.b16 %v1157, %v1156
        %v1161 = vpack.c.b16 %v1159, %v1158
        %v1165 = vsel %vm609, %v1147, 0
        %1167 = vmatprep.subr.bf16.mxu0 0
        %1168 = vmatpush1.bf16.msra.mxu0 %v1160
        %1169 = vmatprep.subr.bf16.mxu0 0
        %1170 = vmatpush1.bf16.msra.mxu0 %v1161
        %1171 = vmatprep.subr.bf16.mxu0 0
        %1172 = vmatpush1.bf16.msra.mxu0 0
        %1173 = vmatprep.subr.bf16.mxu0 0
        %1174 = vmatpush1.bf16.msra.mxu0 0
        %1175 = vmatprep.subr.bf16.mxu0 0
        %1176 = vmatpush1.bf16.msra.mxu0 0
        %1177 = vmatprep.subr.bf16.mxu0 0
        %1178 = vmatpush1.bf16.msra.mxu0 0
        %1179 = vmatprep.subr.bf16.mxu0 0
        %1180 = vmatpush1.bf16.msra.mxu0 0
        %1181 = vmatprep.subr.bf16.mxu0 0
        %1182 = vmatpush1.bf16.msra.mxu0 0
        %1183 = vmatprep.subr.bf16.mxu0 0
        %1184 = vmatpush1.bf16.msra.mxu0 0
        %1185 = vmatprep.subr.bf16.mxu0 0
        %1186 = vmatpush1.bf16.msra.mxu0 0
        %1187 = vmatprep.subr.bf16.mxu0 0
        %1188 = vmatpush1.bf16.msra.mxu0 0
        %1189 = vmatprep.subr.bf16.mxu0 0
        %1190 = vmatpush1.bf16.msra.mxu0 0
        %1191 = vmatprep.subr.bf16.mxu0 0
        %1192 = vmatpush1.bf16.msra.mxu0 0
        %1193 = vmatprep.subr.bf16.mxu0 0
        %1194 = vmatpush1.bf16.msra.mxu0 0
        %1195 = vmatprep.subr.bf16.mxu0 0
        %1196 = vmatpush1.bf16.msra.mxu0 0
        %1197 = vmatprep.subr.bf16.mxu0 0
        %1198 = vmatpush1.bf16.msra.mxu0 0
        %1199 = vmatprep.mubr.bf16.mxu0 0
        %1200 = vmatmul.mubr.bf16.gmra.mrb[0].mxu0 %v1165
        %v1201 = vpop.f32.mrb[0].mxu0
        %v1202 = vadd.f32 0.0, %v1201
        %v1203 = vpop.f32.mrb[0].mxu0
        %v1204 = vpop.f32.mrb[0].mxu0
        %v1205 = vpop.f32.mrb[0].mxu0
        %1206 = vdwg.mxu0
        %v1207 = vld [vmem:[%s5] sm:$0x3]
        %v1208 = vadd.f32 %v1207, %v1202
        %1209 = vrot.lane.b32.xlu0 %v883, 96
        %v1210 = vpop.permute.xlu0 %1209
        %v1212 = vadd.f32 %v1208, %v1210
        %v1213 = vxor.u32 %v1212, 2147483648
        %v1214 = vmul.f32 %v1213, 1.442695
        %v1215 = vpow.pop %v1214
        %v1216 = vadd.f32 %v1215, 1.0
        %v1217 = vrcp.pop %v1216
        %v1218 = vmul.f32 1.0, %v1217
        %v1219 = vld [vmem:[%s6] sm:$0x3]
        %1221 = vrot.lane.b32.xlu0 %v1202, 96
        %v1222 = vpop.permute.xlu0 %1221
        %v1224 = vadd.f32 %v1219, %v1222
        %1226 = vrot.lane.b32.xlu0 %v883, 64
        %v1227 = vpop.permute.xlu0 %1226
        %1228 = vrot.lane.b32.xlu0 %v885, 64
        %v1229 = vpop.permute.xlu0 %1228
        %v1230 = vsel %vm745, %v1227, %v1229
        %v1232 = vadd.f32 %v1224, %v1230
        %v1233 = vxor.u32 %v1232, 2147483648
        %v1234 = vmul.f32 %v1233, 1.442695
        %v1235 = vpow.pop %v1234
        %v1236 = vadd.f32 %v1235, 1.0
        %v1237 = vrcp.pop %v1236
        %v1238 = vmul.f32 1.0, %v1237
        %v1239 = vld [vmem:[%s4] sm:$0x3]
        %1241 = vrot.lane.b32.xlu0 %v1142, 64
        %v1242 = vpop.permute.xlu0 %1241
        %v1244 = vsel %vm745, %v1239, %v1242
        %v1245 = vmul.f32 %v1238, %v1244
        %v1246 = vpack.c.bf16 %v1245, %v1245
        %v1247 = vld [vmem:[%s14] sm:$0xf]
        %v1248 = vld [vmem:[%s14 + $0x4] sm:$0xf]
        %v1249 = vld [vmem:[%s14 + $0x8] sm:$0xf]
        %v1250 = vld [vmem:[%s14 + $0xc] sm:$0xf]
        %v1251 = vld [vmem:[%s14 + $0x10] sm:$0xf]
        %v1252 = vld [vmem:[%s14 + $0x14] sm:$0xf]
        %v1253 = vld [vmem:[%s14 + $0x18] sm:$0xf]
        %v1254 = vld [vmem:[%s14 + $0x1c] sm:$0xf]
        %v1255 = vld [vmem:[%s14 + $0x20] sm:$0xf]
        %v1256 = vld [vmem:[%s14 + $0x24] sm:$0xf]
        %v1257 = vld [vmem:[%s14 + $0x28] sm:$0xf]
        %v1258 = vld [vmem:[%s14 + $0x2c] sm:$0xf]
        %v1271 = vunpack.c.l.b16 %v1247
        %v1272 = vunpack.c.l.b16 %v1248
        %v1273 = vunpack.c.l.b16 %v1249
        %v1274 = vunpack.c.l.b16 %v1250
        %v1275 = vunpack.c.l.b16 %v1251
        %v1276 = vunpack.c.l.b16 %v1252
        %v1277 = vunpack.c.l.b16 %v1253
        %v1278 = vunpack.c.l.b16 %v1254
        %v1279 = vunpack.c.l.b16 %v1255
        %v1280 = vunpack.c.l.b16 %v1256
        %v1281 = vunpack.c.l.b16 %v1257
        %v1282 = vunpack.c.l.b16 %v1258
        %v1283 = vpack.c.b16 %v1272, %v1271
        %v1284 = vpack.c.b16 %v1274, %v1273
        %v1285 = vpack.c.b16 %v1276, %v1275
        %v1286 = vpack.c.b16 %v1278, %v1277
        %v1287 = vpack.c.b16 %v1280, %v1279
        %v1288 = vpack.c.b16 %v1282, %v1281
        %1295 = vrot.lane.b32.xlu0 %v885, 96
        %v1296 = vpop.permute.xlu0 %1295
        %vm1298 = vcmask 785408
        %v1300 = vsel %vm1298, %v1246, 0
        %1302 = vmatprep.subr.bf16.mxu0 0
        %1303 = vmatpush1.bf16.msra.mxu0 %v1283
        %1304 = vmatprep.subr.bf16.mxu0 0
        %1305 = vmatpush1.bf16.msra.mxu0 %v1284
        %1306 = vmatprep.subr.bf16.mxu0 0
        %1307 = vmatpush1.bf16.msra.mxu0 %v1285
        %1308 = vmatprep.subr.bf16.mxu0 0
        %1309 = vmatpush1.bf16.msra.mxu0 %v1286
        %1310 = vmatprep.subr.bf16.mxu0 0
        %1311 = vmatpush1.bf16.msra.mxu0 %v1287
        %1312 = vmatprep.subr.bf16.mxu0 0
        %1313 = vmatpush1.bf16.msra.mxu0 %v1288
        %1314 = vmatprep.subr.bf16.mxu0 0
        %1315 = vmatpush1.bf16.msra.mxu0 0
        %1316 = vmatprep.subr.bf16.mxu0 0
        %1317 = vmatpush1.bf16.msra.mxu0 0
        %1318 = vmatprep.subr.bf16.mxu0 0
        %1319 = vmatpush1.bf16.msra.mxu0 0
        %1320 = vmatprep.subr.bf16.mxu0 0
        %1321 = vmatpush1.bf16.msra.mxu0 0
        %1322 = vmatprep.subr.bf16.mxu0 0
        %1323 = vmatpush1.bf16.msra.mxu0 0
        %1324 = vmatprep.subr.bf16.mxu0 0
        %1325 = vmatpush1.bf16.msra.mxu0 0
        %1326 = vmatprep.subr.bf16.mxu0 0
        %1327 = vmatpush1.bf16.msra.mxu0 0
        %1328 = vmatprep.subr.bf16.mxu0 0
        %1329 = vmatpush1.bf16.msra.mxu0 0
        %1330 = vmatprep.subr.bf16.mxu0 0
        %1331 = vmatpush1.bf16.msra.mxu0 0
        %1332 = vmatprep.subr.bf16.mxu0 0
        %1333 = vmatpush1.bf16.msra.mxu0 0
        %1334 = vmatprep.mubr.bf16.mxu0 0
        %1335 = vmatmul.mubr.bf16.gmra.mrb[0].mxu0 %v1300
        %v1336 = vpop.f32.mrb[0].mxu0
        %v1337 = vadd.f32 %v1296, %v1336
        %v1338 = vpop.f32.mrb[0].mxu0
        %v1339 = vpop.f32.mrb[0].mxu0
        %v1340 = vpop.f32.mrb[0].mxu0
        %1341 = vdwg.mxu0
        %v1342 = vld [vmem:[%s15] sm:$0x1]
        %v1344 = vlaneseq
        %v1345 = vshrl.u32 %v1344, 7
        %v1346 = vsub.s32 0, %v1345
        %v1347 = vrot.slane %v1342, %v1346
        %v1349 = vadd.f32 %v1337, %v1347
        %v1350 = vtanh.pop %v1349
        %v1351 = vsub.f32 1.0, %v1218
        %1353 = vrot.lane.b32.xlu0 %v816, 32
        %v1354 = vpop.permute.xlu0 %1353
        %v1356 = vmul.f32 %v1351, %v1354
        %v1357 = vmul.f32 %v1218, %v1350
        %v1358 = vadd.f32 %v1356, %v1357
        %vm1359 = vcmask 254976
        %1360 = vst.msk [vmem:[%s571] sm:$0x3] %vm1359, %v1358
        %s1361 = scalar_lea.vmem %s565, 1
        %v1362 = vld [vmem:[%s1361] sm:$0x1]
        %v1363 = vunpack.c.l.bf16 %v1362
        %v1364 = vpack.c.bf16 %v688, %v688
        %v1365 = vld [vmem:[%s7] sm:$0xf]
        %v1366 = vld [vmem:[%s7 + $0x4] sm:$0xf]
        %v1367 = vld [vmem:[%s7 + $0x8] sm:$0xf]
        %v1368 = vld [vmem:[%s7 + $0xc] sm:$0xf]
        %1370 = vrot.lane.b32.xlu0 %v1364, 32
        %v1371 = vpop.permute.xlu0 %1370
        %v1376 = vunpack.c.l.b16 %v1365
        %v1377 = vunpack.c.l.b16 %v1366
        %v1378 = vunpack.c.l.b16 %v1367
        %v1379 = vunpack.c.l.b16 %v1368
        %v1380 = vpack.c.b16 %v1377, %v1376
        %v1381 = vpack.c.b16 %v1379, %v1378
        %v1385 = vsel %vm609, %v1371, 0
        %1387 = vmatprep.subr.bf16.mxu0 0
        %1388 = vmatpush1.bf16.msra.mxu0 %v1380
        %1389 = vmatprep.subr.bf16.mxu0 0
        %1390 = vmatpush1.bf16.msra.mxu0 %v1381
        %1391 = vmatprep.subr.bf16.mxu0 0
        %1392 = vmatpush1.bf16.msra.mxu0 0
        %1393 = vmatprep.subr.bf16.mxu0 0
        %1394 = vmatpush1.bf16.msra.mxu0 0
        %1395 = vmatprep.subr.bf16.mxu0 0
        %1396 = vmatpush1.bf16.msra.mxu0 0
        %1397 = vmatprep.subr.bf16.mxu0 0
        %1398 = vmatpush1.bf16.msra.mxu0 0
        %1399 = vmatprep.subr.bf16.mxu0 0
        %1400 = vmatpush1.bf16.msra.mxu0 0
        %1401 = vmatprep.subr.bf16.mxu0 0
        %1402 = vmatpush1.bf16.msra.mxu0 0
        %1403 = vmatprep.subr.bf16.mxu0 0
        %1404 = vmatpush1.bf16.msra.mxu0 0
        %1405 = vmatprep.subr.bf16.mxu0 0
        %1406 = vmatpush1.bf16.msra.mxu0 0
        %1407 = vmatprep.subr.bf16.mxu0 0
        %1408 = vmatpush1.bf16.msra.mxu0 0
        %1409 = vmatprep.subr.bf16.mxu0 0
        %1410 = vmatpush1.bf16.msra.mxu0 0
        %1411 = vmatprep.subr.bf16.mxu0 0
        %1412 = vmatpush1.bf16.msra.mxu0 0
        %1413 = vmatprep.subr.bf16.mxu0 0
        %1414 = vmatpush1.bf16.msra.mxu0 0
        %1415 = vmatprep.subr.bf16.mxu0 0
        %1416 = vmatpush1.bf16.msra.mxu0 0
        %1417 = vmatprep.subr.bf16.mxu0 0
        %1418 = vmatpush1.bf16.msra.mxu0 0
        %1419 = vmatprep.mubr.bf16.mxu0 0
        %1420 = vmatmul.mubr.bf16.gmra.mrb[0].mxu0 %v1385
        %v1421 = vpop.f32.mrb[0].mxu0
        %v1422 = vadd.f32 0.0, %v1421
        %v1423 = vpop.f32.mrb[0].mxu0
        %v1424 = vpop.f32.mrb[0].mxu0
        %v1425 = vpop.f32.mrb[0].mxu0
        %1426 = vdwg.mxu0
        %v1427 = vadd.f32 %v1363, %v1422
        %v1428 = vxor.u32 %v1427, 2147483648
        %v1429 = vmul.f32 %v1428, 1.442695
        %v1430 = vpow.pop %v1429
        %v1431 = vadd.f32 %v1430, 1.0
        %v1432 = vrcp.pop %v1431
        %v1433 = vmul.f32 1.0, %v1432
        %v1434 = vtanh.pop %v1427
        %v1435 = vmul.f32 %v1433, %v682
        %1437 = vrot.lane.b32.xlu0 %v1434, 64
        %v1438 = vpop.permute.xlu0 %1437
        %v1440 = vmul.f32 %v1433, %v1438
        %1442 = vrot.lane.b32.xlu0 %v1440, 32
        %v1443 = vpop.permute.xlu0 %1442
        %v1445 = vadd.f32 %v1435, %v1443
        %v1446 = vtanh.pop %v1445
        %1448 = vrot.lane.b32.xlu0 %v1446, 64
        %v1449 = vpop.permute.xlu0 %1448
        %v1451 = vmul.f32 %v1433, %v1449
        %v1454 = vunpack.c.l.s4 1983009808
        %v1455 = vunpack.c.0.s8 %v1454
        %v1456 = vlaneseq
        %v1457 = vshrl.u32 %v1456, 7
        %v1458 = vsub.s32 %v1455, %v1457
        %v1459 = vrot.slane %v1451, %v1458
        %1460 = vrot.lane.b32.xlu0 %v1459, 32
        %v1461 = vpop.permute.xlu0 %1460
        %1464 = vrot.lane.b32.xlu0 %v1358, 32
        %v1465 = vpop.permute.xlu0 %1464
        %v1467 = vsel %vm609, %v1461, %v1465
        %v1468 = vpack.c.bf16 %v1467, %v1467
        %v1469 = vld [vmem:[%s8] sm:$0xf]
        %v1470 = vld [vmem:[%s8 + $0x4] sm:$0xf]
        %v1471 = vld [vmem:[%s8 + $0x8] sm:$0xf]
        %v1472 = vld [vmem:[%s8 + $0xc] sm:$0xf]
        %v1473 = vld [vmem:[%s8 + $0x10] sm:$0xf]
        %v1474 = vld [vmem:[%s8 + $0x14] sm:$0xf]
        %v1475 = vld [vmem:[%s8 + $0x18] sm:$0xf]
        %v1476 = vld [vmem:[%s8 + $0x1c] sm:$0xf]
        %v1477 = vld [vmem:[%s9] sm:$0x1]
        %v1479 = vlaneseq
        %v1480 = vshrl.u32 %v1479, 7
        %v1481 = vsub.s32 0, %v1480
        %v1482 = vrot.slane %v1477, %v1481
        %v1492 = vunpack.c.l.b16 %v1469
        %v1493 = vunpack.c.l.b16 %v1470
        %v1494 = vunpack.c.l.b16 %v1471
        %v1495 = vunpack.c.l.b16 %v1472
        %v1496 = vunpack.c.l.b16 %v1473
        %v1497 = vunpack.c.l.b16 %v1474
        %v1498 = vunpack.c.l.b16 %v1475
        %v1499 = vunpack.c.l.b16 %v1476
        %v1500 = vpack.c.b16 %v1493, %v1492
        %v1501 = vpack.c.b16 %v1495, %v1494
        %v1502 = vpack.c.b16 %v1497, %v1496
        %v1503 = vpack.c.b16 %v1499, %v1498
        %v1509 = vsel %vm745, %v1468, 0
        %1511 = vmatprep.subr.bf16.mxu0 0
        %1512 = vmatpush1.bf16.msra.mxu0 %v1500
        %1513 = vmatprep.subr.bf16.mxu0 0
        %1514 = vmatpush1.bf16.msra.mxu0 %v1501
        %1515 = vmatprep.subr.bf16.mxu0 0
        %1516 = vmatpush1.bf16.msra.mxu0 %v1502
        %1517 = vmatprep.subr.bf16.mxu0 0
        %1518 = vmatpush1.bf16.msra.mxu0 %v1503
        %1519 = vmatprep.subr.bf16.mxu0 0
        %1520 = vmatpush1.bf16.msra.mxu0 0
        %1521 = vmatprep.subr.bf16.mxu0 0
        %1522 = vmatpush1.bf16.msra.mxu0 0
        %1523 = vmatprep.subr.bf16.mxu0 0
        %1524 = vmatpush1.bf16.msra.mxu0 0
        %1525 = vmatprep.subr.bf16.mxu0 0
        %1526 = vmatpush1.bf16.msra.mxu0 0
        %1527 = vmatprep.subr.bf16.mxu0 0
        %1528 = vmatpush1.bf16.msra.mxu0 0
        %1529 = vmatprep.subr.bf16.mxu0 0
        %1530 = vmatpush1.bf16.msra.mxu0 0
        %1531 = vmatprep.subr.bf16.mxu0 0
        %1532 = vmatpush1.bf16.msra.mxu0 0
        %1533 = vmatprep.subr.bf16.mxu0 0
        %1534 = vmatpush1.bf16.msra.mxu0 0
        %1535 = vmatprep.subr.bf16.mxu0 0
        %1536 = vmatpush1.bf16.msra.mxu0 0
        %1537 = vmatprep.subr.bf16.mxu0 0
        %1538 = vmatpush1.bf16.msra.mxu0 0
        %1539 = vmatprep.subr.bf16.mxu0 0
        %1540 = vmatpush1.bf16.msra.mxu0 0
        %1541 = vmatprep.subr.bf16.mxu0 0
        %1542 = vmatpush1.bf16.msra.mxu0 0
        %1543 = vmatprep.mubr.bf16.mxu0 0
        %1544 = vmatmul.mubr.bf16.gmra.mrb[0].mxu0 %v1509
        %v1545 = vpop.f32.mrb[0].mxu0
        %v1546 = vadd.f32 %v1482, %v1545
        %v1547 = vpop.f32.mrb[0].mxu0
        %v1548 = vpop.f32.mrb[0].mxu0
        %v1549 = vpop.f32.mrb[0].mxu0
        %1550 = vdwg.mxu0
        %v1551 = vxor.u32 %v1546, 2147483648
        %v1552 = vmul.f32 %v1551, 1.442695
        %v1553 = vpow.pop %v1552
        %v1554 = vadd.f32 %v1553, 1.0
        %v1555 = vrcp.pop %v1554
        %v1556 = vmul.f32 1.0, %v1555
        %v1557 = vtanh.pop %v1546
        %v1558 = vmul.f32 %v1556, %v810
        %1560 = vrot.lane.b32.xlu0 %v1557, 64
        %v1561 = vpop.permute.xlu0 %1560
        %v1563 = vmul.f32 %v1556, %v1561
        %1565 = vrot.lane.b32.xlu0 %v1563, 32
        %v1566 = vpop.permute.xlu0 %1565
        %v1568 = vadd.f32 %v1558, %v1566
        %v1569 = vtanh.pop %v1568
        %1571 = vrot.lane.b32.xlu0 %v1569, 64
        %v1572 = vpop.permute.xlu0 %1571
        %v1574 = vmul.f32 %v1556, %v1572
        %v1575 = vpack.c.bf16 %v1574, %v1574
        %v1576 = vld [vmem:[%s12] sm:$0xff]
        %v1577 = vld [vmem:[%s12 + $0x8] sm:$0xff]
        %v1578 = vld [vmem:[%s12 + $0x10] sm:$0xff]
        %v1579 = vld [vmem:[%s12 + $0x18] sm:$0xff]
        %1581 = vrot.lane.b32.xlu0 %v1575, 32
        %v1582 = vpop.permute.xlu0 %1581
        %v1587 = vunpack.c.l.b16 %v1576
        %v1588 = vunpack.c.h.b16 %v1576
        %v1589 = vunpack.c.l.b16 %v1577
        %v1590 = vunpack.c.h.b16 %v1577
        %v1591 = vunpack.c.l.b16 %v1578
        %v1592 = vunpack.c.h.b16 %v1578
        %v1593 = vunpack.c.l.b16 %v1579
        %v1594 = vunpack.c.h.b16 %v1579
        %v1595 = vpack.c.b16 %v1589, %v1587
        %v1596 = vpack.c.b16 %v1590, %v1588
        %v1597 = vpack.c.b16 %v1593, %v1591
        %v1598 = vpack.c.b16 %v1594, %v1592
        %v1604 = vsel %vm609, %v1582, 0
        %1606 = vmatprep.subr.bf16.mxu0 %v1596
        %1607 = vmatpush1.bf16.msra.mxu0 %v1595
        %1608 = vmatprep.subr.bf16.mxu0 %v1598
        %1609 = vmatpush1.bf16.msra.mxu0 %v1597
        %1610 = vmatprep.subr.bf16.mxu0 0
        %1611 = vmatpush1.bf16.msra.mxu0 0
        %1612 = vmatprep.subr.bf16.mxu0 0
        %1613 = vmatpush1.bf16.msra.mxu0 0
        %1614 = vmatprep.subr.bf16.mxu0 0
        %1615 = vmatpush1.bf16.msra.mxu0 0
        %1616 = vmatprep.subr.bf16.mxu0 0
        %1617 = vmatpush1.bf16.msra.mxu0 0
        %1618 = vmatprep.subr.bf16.mxu0 0
        %1619 = vmatpush1.bf16.msra.mxu0 0
        %1620 = vmatprep.subr.bf16.mxu0 0
        %1621 = vmatpush1.bf16.msra.mxu0 0
        %1622 = vmatprep.subr.bf16.mxu0 0
        %1623 = vmatpush1.bf16.msra.mxu0 0
        %1624 = vmatprep.subr.bf16.mxu0 0
        %1625 = vmatpush1.bf16.msra.mxu0 0
        %1626 = vmatprep.subr.bf16.mxu0 0
        %1627 = vmatpush1.bf16.msra.mxu0 0
        %1628 = vmatprep.subr.bf16.mxu0 0
        %1629 = vmatpush1.bf16.msra.mxu0 0
        %1630 = vmatprep.subr.bf16.mxu0 0
        %1631 = vmatpush1.bf16.msra.mxu0 0
        %1632 = vmatprep.subr.bf16.mxu0 0
        %1633 = vmatpush1.bf16.msra.mxu0 0
        %1634 = vmatprep.subr.bf16.mxu0 0
        %1635 = vmatpush1.bf16.msra.mxu0 0
        %1636 = vmatprep.subr.bf16.mxu0 0
        %1637 = vmatpush1.bf16.msra.mxu0 0
        %1638 = vmatprep.mubr.bf16.mxu0 0
        %1639 = vmatmul.mubr.bf16.gmra.mrb[0].mxu0 %v1604
        %v1640 = vpop.f32.mrb[0].mxu0
        %v1641 = vadd.f32 0.0, %v1640
        %v1642 = vpop.f32.mrb[0].mxu0
        %v1643 = vadd.f32 0.0, %v1642
        %v1644 = vpop.f32.mrb[0].mxu0
        %v1645 = vpop.f32.mrb[0].mxu0
        %1646 = vdwg.mxu0
        %v1647 = vld [vmem:[%s3] sm:$0xff]
        %v1648 = vld [vmem:[%s3 + $0x8] sm:$0xff]
        %v1651 = vunpack.c.l.s4 1966171168
        %v1652 = vunpack.c.0.s8 %v1651
        %v1653 = vlaneseq
        %v1654 = vshrl.u32 %v1653, 7
        %v1655 = vsub.s32 %v1652, %v1654
        %v1656 = vrot.slane %v1641, %v1655
        %v1657 = vcombine.high %v1656, %v1656
        %v1659 = vunpack.c.l.s4 1966171168
        %v1660 = vunpack.c.0.s8 %v1659
        %v1661 = vlaneseq
        %v1662 = vshrl.u32 %v1661, 7
        %v1663 = vsub.s32 %v1660, %v1662
        %v1664 = vrot.slane %v1656, %v1663
        %v1666 = vunpack.c.l.s4 1966171168
        %v1667 = vunpack.c.0.s8 %v1666
        %v1668 = vlaneseq
        %v1669 = vshrl.u32 %v1668, 7
        %v1670 = vsub.s32 %v1667, %v1669
        %v1671 = vrot.slane %v1657, %v1670
        %v1672 = vlaneseq
        %v1673 = vshrl.u32 %v1672, 7
        %v1674 = vsub.s32 0, %v1673
        %v1675 = vrot.slane %v1664, %v1674
        %v1676 = vlaneseq
        %v1677 = vshrl.u32 %v1676, 7
        %v1678 = vsub.s32 0, %v1677
        %v1679 = vrot.slane %v1671, %v1678
        %v1682 = vmul.f32 %v1647, %v1675
        %v1683 = vmul.f32 %v1648, %v1679
        %v1684 = vsel %vm609, %v1682, 0.0
        %1685 = vadd.xlane.f32.xlu0 %v1684
        %v1686 = vpop.xlane.xlu0 %1685
        %v1687 = vsel %vm609, %v1683, 0.0
        %1688 = vadd.xlane.f32.xlu0 %v1687
        %v1689 = vpop.xlane.xlu0 %1688
        %v1690 = vld [vmem:[%s2] sm:$0x3]
        %v1692 = vlaneseq
        %v1693 = vshrl.u32 %v1692, 7
        %v1694 = vsub.s32 0, %v1693
        %v1695 = vrot.slane %v1690, %v1694
        %1697 = vbcast.lane.b32.xlu0 %v1695, 256
        %v1698 = vpop.permute.xlu0 %1697
        %v1699 = vlaneseq
        %v1700 = vshrl.u32 %v1699, 7
        %v1701 = vsub.s32 1, %v1700
        %v1702 = vrot.slane %v1690, %v1701
        %1704 = vbcast.lane.b32.xlu0 %v1702, 256
        %v1705 = vpop.permute.xlu0 %1704
        %v1708 = vadd.f32 %v1686, %v1698
        %v1709 = vadd.f32 %v1689, %v1705
        %1712 = vset.pattern.permute.xlu0 0
        %1713 = vperm.xlu0 %1712, %v1708
        %v1714 = vpop.permute.xlu0 %1713
        %1715 = vset.pattern.permute.xlu0 0
        %1716 = vperm.xlu0 %1715, %v1709
        %v1717 = vpop.permute.xlu0 %1716
        %v1718 = vlaneseq
        %v1719 = vshrl.u32 %v1718, 7
        %v1720 = vsub.s32 %v961, %v1719
        %v1721 = vrot.slane %v1714, %v1720
        %v1722 = vlaneseq
        %v1723 = vshrl.u32 %v1722, 7
        %v1724 = vsub.s32 %v961, %v1723
        %v1725 = vrot.slane %v1717, %v1724
        %v1726 = vsel %vm970, %v1725, %v1721
        %v1728 = vsel %vm973, %v1726, -inf
        %1729 = vmax.xlane.f32.xlu0 %v1728
        %v1730 = vpop.xlane.xlu0 %1729
        %v1732 = vlaneseq
        %v1733 = vshrl.u32 %v1732, 7
        %v1734 = vsub.s32 0, %v1733
        %v1735 = vrot.slane %v1730, %v1734
        %v1736 = vlaneseq
        %v1737 = vshrl.u32 %v1736, 7
        %v1738 = vsub.s32 1, %v1737
        %v1739 = vrot.slane %v1730, %v1738
        %v1742 = vsub.f32 %v1708, %v1735
        %v1743 = vsub.f32 %v1709, %v1739
        %v1744 = vmul.f32 %v1742, 1.442695
        %v1745 = vpow.pop %v1744
        %v1746 = vmul.f32 %v1743, 1.442695
        %v1747 = vpow.pop %v1746
        %1750 = vset.pattern.permute.xlu0 0
        %1751 = vperm.xlu0 %1750, %v1745
        %v1752 = vpop.permute.xlu0 %1751
        %1753 = vset.pattern.permute.xlu0 0
        %1754 = vperm.xlu0 %1753, %v1747
        %v1755 = vpop.permute.xlu0 %1754
        %v1756 = vlaneseq
        %v1757 = vshrl.u32 %v1756, 7
        %v1758 = vsub.s32 %v961, %v1757
        %v1759 = vrot.slane %v1752, %v1758
        %v1760 = vlaneseq
        %v1761 = vshrl.u32 %v1760, 7
        %v1762 = vsub.s32 %v961, %v1761
        %v1763 = vrot.slane %v1755, %v1762
        %v1764 = vsel %vm970, %v1763, %v1759
        %v1766 = vsel %vm973, %v1764, 0.0
        %1767 = vadd.xlane.f32.xlu0 %v1766
        %v1768 = vpop.xlane.xlu0 %1767
        %v1769 = vrcp.pop %v1768
        %v1771 = vlaneseq
        %v1772 = vshrl.u32 %v1771, 7
        %v1773 = vsub.s32 0, %v1772
        %v1774 = vrot.slane %v1769, %v1773
        %v1775 = vlaneseq
        %v1776 = vshrl.u32 %v1775, 7
        %v1777 = vsub.s32 1, %v1776
        %v1778 = vrot.slane %v1769, %v1777
        %v1781 = vmul.f32 %v1745, %v1774
        %v1782 = vmul.f32 %v1747, %v1778
        %v1783 = vld [vmem:[%s1] sm:$0xff]
        %v1784 = vld [vmem:[%s1 + $0x8] sm:$0xff]
        %1786 = vset.pattern.permute.xlu0 0
        %1787 = vperm.xlu0 %1786, %v1781
        %v1788 = vpop.permute.xlu0 %1787
        %1791 = vset.pattern.permute.xlu0 0
        %1792 = vperm.xlu0 %1791, %v1782
        %v1793 = vpop.permute.xlu0 %1792
        %v1795 = vmul.f32 %v1788, %v1783
        %v1796 = vmul.f32 %v1793, %v1784
        %v1797 = vsel %vm745, %v1795, 0.0
        %v1798 = vrot.slane %v1797, 4
        %v1799 = vadd.f32 %v1797, %v1798
        %v1800 = vrot.slane %v1799, 2
        %v1801 = vadd.f32 %v1799, %v1800
        %v1802 = vrot.slane %v1801, 1
        %v1803 = vadd.f32 %v1801, %v1802
        %v1804 = vsel %vm745, %v1796, 0.0
        %v1805 = vrot.slane %v1804, 4
        %v1806 = vadd.f32 %v1804, %v1805
        %v1807 = vrot.slane %v1806, 2
        %v1808 = vadd.f32 %v1806, %v1807
        %v1809 = vrot.slane %v1808, 1
        %v1810 = vadd.f32 %v1808, %v1809
        %v1811 = vpack.c.bf16 %v1803, %v1803
        %v1812 = vpack.c.bf16 %v1810, %v1810
        %v1813 = vld [vmem:[%s10] sm:$0xf]
        %v1814 = vld [vmem:[%s10 + $0x4] sm:$0xf]
        %v1815 = vld [vmem:[%s10 + $0x8] sm:$0xf]
        %v1816 = vld [vmem:[%s10 + $0xc] sm:$0xf]
        %v1817 = vld [vmem:[%s10 + $0x10] sm:$0xf]
        %v1818 = vld [vmem:[%s10 + $0x14] sm:$0xf]
        %v1819 = vld [vmem:[%s10 + $0x18] sm:$0xf]
        %v1820 = vld [vmem:[%s10 + $0x1c] sm:$0xf]
        %v1821 = vld [vmem:[%s11] sm:$0x1]
        %v1823 = vlaneseq
        %v1824 = vshrl.u32 %v1823, 7
        %v1825 = vsub.s32 0, %v1824
        %v1826 = vrot.slane %v1821, %v1825
        %v1830 = vunpack.c.l.b16 %v1811
        %v1831 = vunpack.c.l.b16 %v1812
        %v1832 = vsel %vm970, %v1831, %v1830
        %v1833 = vpack.c.b16 %v1832, %v1832
        %v1842 = vunpack.c.l.b16 %v1813
        %v1843 = vunpack.c.l.b16 %v1814
        %v1844 = vunpack.c.l.b16 %v1815
        %v1845 = vunpack.c.l.b16 %v1816
        %v1846 = vunpack.c.l.b16 %v1817
        %v1847 = vunpack.c.l.b16 %v1818
        %v1848 = vunpack.c.l.b16 %v1819
        %v1849 = vunpack.c.l.b16 %v1820
        %v1850 = vpack.c.b16 %v1843, %v1842
        %v1851 = vpack.c.b16 %v1845, %v1844
        %v1852 = vpack.c.b16 %v1847, %v1846
        %v1853 = vpack.c.b16 %v1849, %v1848
        %v1859 = vsel %vm745, %v1833, 0
        %1861 = vmatprep.subr.bf16.mxu0 0
        %1862 = vmatpush1.bf16.msra.mxu0 %v1850
        %1863 = vmatprep.subr.bf16.mxu0 0
        %1864 = vmatpush1.bf16.msra.mxu0 %v1851
        %1865 = vmatprep.subr.bf16.mxu0 0
        %1866 = vmatpush1.bf16.msra.mxu0 %v1852
        %1867 = vmatprep.subr.bf16.mxu0 0
        %1868 = vmatpush1.bf16.msra.mxu0 %v1853
        %1869 = vmatprep.subr.bf16.mxu0 0
        %1870 = vmatpush1.bf16.msra.mxu0 0
        %1871 = vmatprep.subr.bf16.mxu0 0
        %1872 = vmatpush1.bf16.msra.mxu0 0
        %1873 = vmatprep.subr.bf16.mxu0 0
        %1874 = vmatpush1.bf16.msra.mxu0 0
        %1875 = vmatprep.subr.bf16.mxu0 0
        %1876 = vmatpush1.bf16.msra.mxu0 0
        %1877 = vmatprep.subr.bf16.mxu0 0
        %1878 = vmatpush1.bf16.msra.mxu0 0
        %1879 = vmatprep.subr.bf16.mxu0 0
        %1880 = vmatpush1.bf16.msra.mxu0 0
        %1881 = vmatprep.subr.bf16.mxu0 0
        %1882 = vmatpush1.bf16.msra.mxu0 0
        %1883 = vmatprep.subr.bf16.mxu0 0
        %1884 = vmatpush1.bf16.msra.mxu0 0
        %1885 = vmatprep.subr.bf16.mxu0 0
        %1886 = vmatpush1.bf16.msra.mxu0 0
        %1887 = vmatprep.subr.bf16.mxu0 0
        %1888 = vmatpush1.bf16.msra.mxu0 0
        %1889 = vmatprep.subr.bf16.mxu0 0
        %1890 = vmatpush1.bf16.msra.mxu0 0
        %1891 = vmatprep.subr.bf16.mxu0 0
        %1892 = vmatpush1.bf16.msra.mxu0 0
        %1893 = vmatprep.mubr.bf16.mxu0 0
        %1894 = vmatmul.mubr.bf16.gmra.mrb[0].mxu0 %v1859
        %v1895 = vpop.f32.mrb[0].mxu0
        %v1896 = vadd.f32 %v1826, %v1895
        %v1897 = vpop.f32.mrb[0].mxu0
        %v1898 = vpop.f32.mrb[0].mxu0
        %v1899 = vpop.f32.mrb[0].mxu0
        %1900 = vdwg.mxu0
        %v1901 = vpack.c.bf16 %v1896, %v1896
        %v1902 = vld [vmem:[%s13] sm:$0xf]
        %v1903 = vld [vmem:[%s13 + $0x4] sm:$0xf]
        %v1904 = vld [vmem:[%s13 + $0x8] sm:$0xf]
        %v1905 = vld [vmem:[%s13 + $0xc] sm:$0xf]
        %v1910 = vunpack.c.l.b16 %v1902
        %v1911 = vunpack.c.l.b16 %v1903
        %v1912 = vunpack.c.l.b16 %v1904
        %v1913 = vunpack.c.l.b16 %v1905
        %v1914 = vpack.c.b16 %v1911, %v1910
        %v1915 = vpack.c.b16 %v1913, %v1912
        %v1919 = vsel %vm609, %v1901, 0
        %1921 = vmatprep.subr.bf16.mxu0 0
        %1922 = vmatpush1.bf16.msra.mxu0 %v1914
        %1923 = vmatprep.subr.bf16.mxu0 0
        %1924 = vmatpush1.bf16.msra.mxu0 %v1915
        %1925 = vmatprep.subr.bf16.mxu0 0
        %1926 = vmatpush1.bf16.msra.mxu0 0
        %1927 = vmatprep.subr.bf16.mxu0 0
        %1928 = vmatpush1.bf16.msra.mxu0 0
        %1929 = vmatprep.subr.bf16.mxu0 0
        %1930 = vmatpush1.bf16.msra.mxu0 0
        %1931 = vmatprep.subr.bf16.mxu0 0
        %1932 = vmatpush1.bf16.msra.mxu0 0
        %1933 = vmatprep.subr.bf16.mxu0 0
        %1934 = vmatpush1.bf16.msra.mxu0 0
        %1935 = vmatprep.subr.bf16.mxu0 0
        %1936 = vmatpush1.bf16.msra.mxu0 0
        %1937 = vmatprep.subr.bf16.mxu0 0
        %1938 = vmatpush1.bf16.msra.mxu0 0
        %1939 = vmatprep.subr.bf16.mxu0 0
        %1940 = vmatpush1.bf16.msra.mxu0 0
        %1941 = vmatprep.subr.bf16.mxu0 0
        %1942 = vmatpush1.bf16.msra.mxu0 0
        %1943 = vmatprep.subr.bf16.mxu0 0
        %1944 = vmatpush1.bf16.msra.mxu0 0
        %1945 = vmatprep.subr.bf16.mxu0 0
        %1946 = vmatpush1.bf16.msra.mxu0 0
        %1947 = vmatprep.subr.bf16.mxu0 0
        %1948 = vmatpush1.bf16.msra.mxu0 0
        %1949 = vmatprep.subr.bf16.mxu0 0
        %1950 = vmatpush1.bf16.msra.mxu0 0
        %1951 = vmatprep.subr.bf16.mxu0 0
        %1952 = vmatpush1.bf16.msra.mxu0 0
        %1953 = vmatprep.mubr.bf16.mxu0 0
        %1954 = vmatmul.mubr.bf16.gmra.mrb[0].mxu0 %v1919
        %v1955 = vpop.f32.mrb[0].mxu0
        %v1956 = vadd.f32 0.0, %v1955
        %v1957 = vpop.f32.mrb[0].mxu0
        %v1958 = vpop.f32.mrb[0].mxu0
        %v1959 = vpop.f32.mrb[0].mxu0
        %1960 = vdwg.mxu0
        %v1961 = vld [vmem:[%s5] sm:$0x3]
        %v1962 = vadd.f32 %v1961, %v1956
        %1963 = vrot.lane.b32.xlu0 %v1641, 96
        %v1964 = vpop.permute.xlu0 %1963
        %v1966 = vadd.f32 %v1962, %v1964
        %v1967 = vxor.u32 %v1966, 2147483648
        %v1968 = vmul.f32 %v1967, 1.442695
        %v1969 = vpow.pop %v1968
        %v1970 = vadd.f32 %v1969, 1.0
        %v1971 = vrcp.pop %v1970
        %v1972 = vmul.f32 1.0, %v1971
        %v1973 = vld [vmem:[%s6] sm:$0x3]
        %1975 = vrot.lane.b32.xlu0 %v1956, 96
        %v1976 = vpop.permute.xlu0 %1975
        %v1978 = vadd.f32 %v1973, %v1976
        %1980 = vrot.lane.b32.xlu0 %v1641, 64
        %v1981 = vpop.permute.xlu0 %1980
        %1982 = vrot.lane.b32.xlu0 %v1643, 64
        %v1983 = vpop.permute.xlu0 %1982
        %v1984 = vsel %vm745, %v1981, %v1983
        %v1986 = vadd.f32 %v1978, %v1984
        %v1987 = vxor.u32 %v1986, 2147483648
        %v1988 = vmul.f32 %v1987, 1.442695
        %v1989 = vpow.pop %v1988
        %v1990 = vadd.f32 %v1989, 1.0
        %v1991 = vrcp.pop %v1990
        %v1992 = vmul.f32 1.0, %v1991
        %v1993 = vld [vmem:[%s4] sm:$0x3]
        %1995 = vrot.lane.b32.xlu0 %v1896, 64
        %v1996 = vpop.permute.xlu0 %1995
        %v1998 = vsel %vm745, %v1993, %v1996
        %v1999 = vmul.f32 %v1992, %v1998
        %v2000 = vpack.c.bf16 %v1999, %v1999
        %v2001 = vld [vmem:[%s14] sm:$0xf]
        %v2002 = vld [vmem:[%s14 + $0x4] sm:$0xf]
        %v2003 = vld [vmem:[%s14 + $0x8] sm:$0xf]
        %v2004 = vld [vmem:[%s14 + $0xc] sm:$0xf]
        %v2005 = vld [vmem:[%s14 + $0x10] sm:$0xf]
        %v2006 = vld [vmem:[%s14 + $0x14] sm:$0xf]
        %v2007 = vld [vmem:[%s14 + $0x18] sm:$0xf]
        %v2008 = vld [vmem:[%s14 + $0x1c] sm:$0xf]
        %v2009 = vld [vmem:[%s14 + $0x20] sm:$0xf]
        %v2010 = vld [vmem:[%s14 + $0x24] sm:$0xf]
        %v2011 = vld [vmem:[%s14 + $0x28] sm:$0xf]
        %v2012 = vld [vmem:[%s14 + $0x2c] sm:$0xf]
        %v2025 = vunpack.c.l.b16 %v2001
        %v2026 = vunpack.c.l.b16 %v2002
        %v2027 = vunpack.c.l.b16 %v2003
        %v2028 = vunpack.c.l.b16 %v2004
        %v2029 = vunpack.c.l.b16 %v2005
        %v2030 = vunpack.c.l.b16 %v2006
        %v2031 = vunpack.c.l.b16 %v2007
        %v2032 = vunpack.c.l.b16 %v2008
        %v2033 = vunpack.c.l.b16 %v2009
        %v2034 = vunpack.c.l.b16 %v2010
        %v2035 = vunpack.c.l.b16 %v2011
        %v2036 = vunpack.c.l.b16 %v2012
        %v2037 = vpack.c.b16 %v2026, %v2025
        %v2038 = vpack.c.b16 %v2028, %v2027
        %v2039 = vpack.c.b16 %v2030, %v2029
        %v2040 = vpack.c.b16 %v2032, %v2031
        %v2041 = vpack.c.b16 %v2034, %v2033
        %v2042 = vpack.c.b16 %v2036, %v2035
        %2049 = vrot.lane.b32.xlu0 %v1643, 96
        %v2050 = vpop.permute.xlu0 %2049
        %v2053 = vsel %vm1298, %v2000, 0
        %2055 = vmatprep.subr.bf16.mxu0 0
        %2056 = vmatpush1.bf16.msra.mxu0 %v2037
        %2057 = vmatprep.subr.bf16.mxu0 0
        %2058 = vmatpush1.bf16.msra.mxu0 %v2038
        %2059 = vmatprep.subr.bf16.mxu0 0
        %2060 = vmatpush1.bf16.msra.mxu0 %v2039
        %2061 = vmatprep.subr.bf16.mxu0 0
        %2062 = vmatpush1.bf16.msra.mxu0 %v2040
        %2063 = vmatprep.subr.bf16.mxu0 0
        %2064 = vmatpush1.bf16.msra.mxu0 %v2041
        %2065 = vmatprep.subr.bf16.mxu0 0
        %2066 = vmatpush1.bf16.msra.mxu0 %v2042
        %2067 = vmatprep.subr.bf16.mxu0 0
        %2068 = vmatpush1.bf16.msra.mxu0 0
        %2069 = vmatprep.subr.bf16.mxu0 0
        %2070 = vmatpush1.bf16.msra.mxu0 0
        %2071 = vmatprep.subr.bf16.mxu0 0
        %2072 = vmatpush1.bf16.msra.mxu0 0
        %2073 = vmatprep.subr.bf16.mxu0 0
        %2074 = vmatpush1.bf16.msra.mxu0 0
        %2075 = vmatprep.subr.bf16.mxu0 0
        %2076 = vmatpush1.bf16.msra.mxu0 0
        %2077 = vmatprep.subr.bf16.mxu0 0
        %2078 = vmatpush1.bf16.msra.mxu0 0
        %2079 = vmatprep.subr.bf16.mxu0 0
        %2080 = vmatpush1.bf16.msra.mxu0 0
        %2081 = vmatprep.subr.bf16.mxu0 0
        %2082 = vmatpush1.bf16.msra.mxu0 0
        %2083 = vmatprep.subr.bf16.mxu0 0
        %2084 = vmatpush1.bf16.msra.mxu0 0
        %2085 = vmatprep.subr.bf16.mxu0 0
        %2086 = vmatpush1.bf16.msra.mxu0 0
        %2087 = vmatprep.mubr.bf16.mxu0 0
        %2088 = vmatmul.mubr.bf16.gmra.mrb[0].mxu0 %v2053
        %v2089 = vpop.f32.mrb[0].mxu0
        %v2090 = vadd.f32 %v2050, %v2089
        %v2091 = vpop.f32.mrb[0].mxu0
        %v2092 = vpop.f32.mrb[0].mxu0
        %v2093 = vpop.f32.mrb[0].mxu0
        %2094 = vdwg.mxu0
        %v2095 = vld [vmem:[%s15] sm:$0x1]
        %v2097 = vlaneseq
        %v2098 = vshrl.u32 %v2097, 7
        %v2099 = vsub.s32 0, %v2098
        %v2100 = vrot.slane %v2095, %v2099
        %v2102 = vadd.f32 %v2090, %v2100
        %v2103 = vtanh.pop %v2102
        %v2104 = vsub.f32 1.0, %v1972
        %2106 = vrot.lane.b32.xlu0 %v1574, 32
        %v2107 = vpop.permute.xlu0 %2106
        %v2109 = vmul.f32 %v2104, %v2107
        %v2110 = vmul.f32 %v1972, %v2103
        %v2111 = vadd.f32 %v2109, %v2110
        %s2112 = scalar_lea.vmem %s571, 2
        %2113 = vst.msk [vmem:[%s2112] sm:$0x3] %vm1359, %v2111
        %s2114 = scalar_lea.vmem %s565, 2
        %v2115 = vld [vmem:[%s2114] sm:$0x1]
        %v2116 = vunpack.c.l.bf16 %v2115
        %v2117 = vpack.c.bf16 %v1451, %v1451
        %v2118 = vld [vmem:[%s7] sm:$0xf]
        %v2119 = vld [vmem:[%s7 + $0x4] sm:$0xf]
        %v2120 = vld [vmem:[%s7 + $0x8] sm:$0xf]
        %v2121 = vld [vmem:[%s7 + $0xc] sm:$0xf]
        %2123 = vrot.lane.b32.xlu0 %v2117, 32
        %v2124 = vpop.permute.xlu0 %2123
        %v2129 = vunpack.c.l.b16 %v2118
        %v2130 = vunpack.c.l.b16 %v2119
        %v2131 = vunpack.c.l.b16 %v2120
        %v2132 = vunpack.c.l.b16 %v2121
        %v2133 = vpack.c.b16 %v2130, %v2129
        %v2134 = vpack.c.b16 %v2132, %v2131
        %v2138 = vsel %vm609, %v2124, 0
        %2140 = vmatprep.subr.bf16.mxu0 0
        %2141 = vmatpush1.bf16.msra.mxu0 %v2133
        %2142 = vmatprep.subr.bf16.mxu0 0
        %2143 = vmatpush1.bf16.msra.mxu0 %v2134
        %2144 = vmatprep.subr.bf16.mxu0 0
        %2145 = vmatpush1.bf16.msra.mxu0 0
        %2146 = vmatprep.subr.bf16.mxu0 0
        %2147 = vmatpush1.bf16.msra.mxu0 0
        %2148 = vmatprep.subr.bf16.mxu0 0
        %2149 = vmatpush1.bf16.msra.mxu0 0
        %2150 = vmatprep.subr.bf16.mxu0 0
        %2151 = vmatpush1.bf16.msra.mxu0 0
        %2152 = vmatprep.subr.bf16.mxu0 0
        %2153 = vmatpush1.bf16.msra.mxu0 0
        %2154 = vmatprep.subr.bf16.mxu0 0
        %2155 = vmatpush1.bf16.msra.mxu0 0
        %2156 = vmatprep.subr.bf16.mxu0 0
        %2157 = vmatpush1.bf16.msra.mxu0 0
        %2158 = vmatprep.subr.bf16.mxu0 0
        %2159 = vmatpush1.bf16.msra.mxu0 0
        %2160 = vmatprep.subr.bf16.mxu0 0
        %2161 = vmatpush1.bf16.msra.mxu0 0
        %2162 = vmatprep.subr.bf16.mxu0 0
        %2163 = vmatpush1.bf16.msra.mxu0 0
        %2164 = vmatprep.subr.bf16.mxu0 0
        %2165 = vmatpush1.bf16.msra.mxu0 0
        %2166 = vmatprep.subr.bf16.mxu0 0
        %2167 = vmatpush1.bf16.msra.mxu0 0
        %2168 = vmatprep.subr.bf16.mxu0 0
        %2169 = vmatpush1.bf16.msra.mxu0 0
        %2170 = vmatprep.subr.bf16.mxu0 0
        %2171 = vmatpush1.bf16.msra.mxu0 0
        %2172 = vmatprep.mubr.bf16.mxu0 0
        %2173 = vmatmul.mubr.bf16.gmra.mrb[0].mxu0 %v2138
        %v2174 = vpop.f32.mrb[0].mxu0
        %v2175 = vadd.f32 0.0, %v2174
        %v2176 = vpop.f32.mrb[0].mxu0
        %v2177 = vpop.f32.mrb[0].mxu0
        %v2178 = vpop.f32.mrb[0].mxu0
        %2179 = vdwg.mxu0
        %v2180 = vadd.f32 %v2116, %v2175
        %v2181 = vxor.u32 %v2180, 2147483648
        %v2182 = vmul.f32 %v2181, 1.442695
        %v2183 = vpow.pop %v2182
        %v2184 = vadd.f32 %v2183, 1.0
        %v2185 = vrcp.pop %v2184
        %v2186 = vmul.f32 1.0, %v2185
        %v2187 = vtanh.pop %v2180
        %v2188 = vmul.f32 %v2186, %v1445
        %2190 = vrot.lane.b32.xlu0 %v2187, 64
        %v2191 = vpop.permute.xlu0 %2190
        %v2193 = vmul.f32 %v2186, %v2191
        %2195 = vrot.lane.b32.xlu0 %v2193, 32
        %v2196 = vpop.permute.xlu0 %2195
        %v2198 = vadd.f32 %v2188, %v2196
        %v2199 = vtanh.pop %v2198
        %2201 = vrot.lane.b32.xlu0 %v2199, 64
        %v2202 = vpop.permute.xlu0 %2201
        %v2204 = vmul.f32 %v2186, %v2202
        %v2207 = vunpack.c.l.s4 1983009808
        %v2208 = vunpack.c.0.s8 %v2207
        %v2209 = vlaneseq
        %v2210 = vshrl.u32 %v2209, 7
        %v2211 = vsub.s32 %v2208, %v2210
        %v2212 = vrot.slane %v2204, %v2211
        %2213 = vrot.lane.b32.xlu0 %v2212, 32
        %v2214 = vpop.permute.xlu0 %2213
        %2217 = vrot.lane.b32.xlu0 %v2111, 32
        %v2218 = vpop.permute.xlu0 %2217
        %v2220 = vsel %vm609, %v2214, %v2218
        %v2221 = vpack.c.bf16 %v2220, %v2220
        %v2222 = vld [vmem:[%s8] sm:$0xf]
        %v2223 = vld [vmem:[%s8 + $0x4] sm:$0xf]
        %v2224 = vld [vmem:[%s8 + $0x8] sm:$0xf]
        %v2225 = vld [vmem:[%s8 + $0xc] sm:$0xf]
        %v2226 = vld [vmem:[%s8 + $0x10] sm:$0xf]
        %v2227 = vld [vmem:[%s8 + $0x14] sm:$0xf]
        %v2228 = vld [vmem:[%s8 + $0x18] sm:$0xf]
        %v2229 = vld [vmem:[%s8 + $0x1c] sm:$0xf]
        %v2230 = vld [vmem:[%s9] sm:$0x1]
        %v2232 = vlaneseq
        %v2233 = vshrl.u32 %v2232, 7
        %v2234 = vsub.s32 0, %v2233
        %v2235 = vrot.slane %v2230, %v2234
        %v2245 = vunpack.c.l.b16 %v2222
        %v2246 = vunpack.c.l.b16 %v2223
        %v2247 = vunpack.c.l.b16 %v2224
        %v2248 = vunpack.c.l.b16 %v2225
        %v2249 = vunpack.c.l.b16 %v2226
        %v2250 = vunpack.c.l.b16 %v2227
        %v2251 = vunpack.c.l.b16 %v2228
        %v2252 = vunpack.c.l.b16 %v2229
        %v2253 = vpack.c.b16 %v2246, %v2245
        %v2254 = vpack.c.b16 %v2248, %v2247
        %v2255 = vpack.c.b16 %v2250, %v2249
        %v2256 = vpack.c.b16 %v2252, %v2251
        %v2262 = vsel %vm745, %v2221, 0
        %2264 = vmatprep.subr.bf16.mxu0 0
        %2265 = vmatpush1.bf16.msra.mxu0 %v2253
        %2266 = vmatprep.subr.bf16.mxu0 0
        %2267 = vmatpush1.bf16.msra.mxu0 %v2254
        %2268 = vmatprep.subr.bf16.mxu0 0
        %2269 = vmatpush1.bf16.msra.mxu0 %v2255
        %2270 = vmatprep.subr.bf16.mxu0 0
        %2271 = vmatpush1.bf16.msra.mxu0 %v2256
        %2272 = vmatprep.subr.bf16.mxu0 0
        %2273 = vmatpush1.bf16.msra.mxu0 0
        %2274 = vmatprep.subr.bf16.mxu0 0
        %2275 = vmatpush1.bf16.msra.mxu0 0
        %2276 = vmatprep.subr.bf16.mxu0 0
        %2277 = vmatpush1.bf16.msra.mxu0 0
        %2278 = vmatprep.subr.bf16.mxu0 0
        %2279 = vmatpush1.bf16.msra.mxu0 0
        %2280 = vmatprep.subr.bf16.mxu0 0
        %2281 = vmatpush1.bf16.msra.mxu0 0
        %2282 = vmatprep.subr.bf16.mxu0 0
        %2283 = vmatpush1.bf16.msra.mxu0 0
        %2284 = vmatprep.subr.bf16.mxu0 0
        %2285 = vmatpush1.bf16.msra.mxu0 0
        %2286 = vmatprep.subr.bf16.mxu0 0
        %2287 = vmatpush1.bf16.msra.mxu0 0
        %2288 = vmatprep.subr.bf16.mxu0 0
        %2289 = vmatpush1.bf16.msra.mxu0 0
        %2290 = vmatprep.subr.bf16.mxu0 0
        %2291 = vmatpush1.bf16.msra.mxu0 0
        %2292 = vmatprep.subr.bf16.mxu0 0
        %2293 = vmatpush1.bf16.msra.mxu0 0
        %2294 = vmatprep.subr.bf16.mxu0 0
        %2295 = vmatpush1.bf16.msra.mxu0 0
        %2296 = vmatprep.mubr.bf16.mxu0 0
        %2297 = vmatmul.mubr.bf16.gmra.mrb[0].mxu0 %v2262
        %v2298 = vpop.f32.mrb[0].mxu0
        %v2299 = vadd.f32 %v2235, %v2298
        %v2300 = vpop.f32.mrb[0].mxu0
        %v2301 = vpop.f32.mrb[0].mxu0
        %v2302 = vpop.f32.mrb[0].mxu0
        %2303 = vdwg.mxu0
        %v2304 = vxor.u32 %v2299, 2147483648
        %v2305 = vmul.f32 %v2304, 1.442695
        %v2306 = vpow.pop %v2305
        %v2307 = vadd.f32 %v2306, 1.0
        %v2308 = vrcp.pop %v2307
        %v2309 = vmul.f32 1.0, %v2308
        %v2310 = vtanh.pop %v2299
        %v2311 = vmul.f32 %v2309, %v1568
        %2313 = vrot.lane.b32.xlu0 %v2310, 64
        %v2314 = vpop.permute.xlu0 %2313
        %v2316 = vmul.f32 %v2309, %v2314
        %2318 = vrot.lane.b32.xlu0 %v2316, 32
        %v2319 = vpop.permute.xlu0 %2318
        %v2321 = vadd.f32 %v2311, %v2319
        %v2322 = vtanh.pop %v2321
        %2324 = vrot.lane.b32.xlu0 %v2322, 64
        %v2325 = vpop.permute.xlu0 %2324
        %v2327 = vmul.f32 %v2309, %v2325
        %v2328 = vpack.c.bf16 %v2327, %v2327
        %v2329 = vld [vmem:[%s12] sm:$0xff]
        %v2330 = vld [vmem:[%s12 + $0x8] sm:$0xff]
        %v2331 = vld [vmem:[%s12 + $0x10] sm:$0xff]
        %v2332 = vld [vmem:[%s12 + $0x18] sm:$0xff]
        %2334 = vrot.lane.b32.xlu0 %v2328, 32
        %v2335 = vpop.permute.xlu0 %2334
        %v2340 = vunpack.c.l.b16 %v2329
        %v2341 = vunpack.c.h.b16 %v2329
        %v2342 = vunpack.c.l.b16 %v2330
        %v2343 = vunpack.c.h.b16 %v2330
        %v2344 = vunpack.c.l.b16 %v2331
        %v2345 = vunpack.c.h.b16 %v2331
        %v2346 = vunpack.c.l.b16 %v2332
        %v2347 = vunpack.c.h.b16 %v2332
        %v2348 = vpack.c.b16 %v2342, %v2340
        %v2349 = vpack.c.b16 %v2343, %v2341
        %v2350 = vpack.c.b16 %v2346, %v2344
        %v2351 = vpack.c.b16 %v2347, %v2345
        %v2357 = vsel %vm609, %v2335, 0
        %2359 = vmatprep.subr.bf16.mxu0 %v2349
        %2360 = vmatpush1.bf16.msra.mxu0 %v2348
        %2361 = vmatprep.subr.bf16.mxu0 %v2351
        %2362 = vmatpush1.bf16.msra.mxu0 %v2350
        %2363 = vmatprep.subr.bf16.mxu0 0
        %2364 = vmatpush1.bf16.msra.mxu0 0
        %2365 = vmatprep.subr.bf16.mxu0 0
        %2366 = vmatpush1.bf16.msra.mxu0 0
        %2367 = vmatprep.subr.bf16.mxu0 0
        %2368 = vmatpush1.bf16.msra.mxu0 0
        %2369 = vmatprep.subr.bf16.mxu0 0
        %2370 = vmatpush1.bf16.msra.mxu0 0
        %2371 = vmatprep.subr.bf16.mxu0 0
        %2372 = vmatpush1.bf16.msra.mxu0 0
        %2373 = vmatprep.subr.bf16.mxu0 0
        %2374 = vmatpush1.bf16.msra.mxu0 0
        %2375 = vmatprep.subr.bf16.mxu0 0
        %2376 = vmatpush1.bf16.msra.mxu0 0
        %2377 = vmatprep.subr.bf16.mxu0 0
        %2378 = vmatpush1.bf16.msra.mxu0 0
        %2379 = vmatprep.subr.bf16.mxu0 0
        %2380 = vmatpush1.bf16.msra.mxu0 0
        %2381 = vmatprep.subr.bf16.mxu0 0
        %2382 = vmatpush1.bf16.msra.mxu0 0
        %2383 = vmatprep.subr.bf16.mxu0 0
        %2384 = vmatpush1.bf16.msra.mxu0 0
        %2385 = vmatprep.subr.bf16.mxu0 0
        %2386 = vmatpush1.bf16.msra.mxu0 0
        %2387 = vmatprep.subr.bf16.mxu0 0
        %2388 = vmatpush1.bf16.msra.mxu0 0
        %2389 = vmatprep.subr.bf16.mxu0 0
        %2390 = vmatpush1.bf16.msra.mxu0 0
        %2391 = vmatprep.mubr.bf16.mxu0 0
        %2392 = vmatmul.mubr.bf16.gmra.mrb[0].mxu0 %v2357
        %v2393 = vpop.f32.mrb[0].mxu0
        %v2394 = vadd.f32 0.0, %v2393
        %v2395 = vpop.f32.mrb[0].mxu0
        %v2396 = vadd.f32 0.0, %v2395
        %v2397 = vpop.f32.mrb[0].mxu0
        %v2398 = vpop.f32.mrb[0].mxu0
        %2399 = vdwg.mxu0
        %v2400 = vld [vmem:[%s3] sm:$0xff]
        %v2401 = vld [vmem:[%s3 + $0x8] sm:$0xff]
        %v2404 = vunpack.c.l.s4 1966171168
        %v2405 = vunpack.c.0.s8 %v2404
        %v2406 = vlaneseq
        %v2407 = vshrl.u32 %v2406, 7
        %v2408 = vsub.s32 %v2405, %v2407
        %v2409 = vrot.slane %v2394, %v2408
        %v2410 = vcombine.high %v2409, %v2409
        %v2412 = vunpack.c.l.s4 1966171168
        %v2413 = vunpack.c.0.s8 %v2412
        %v2414 = vlaneseq
        %v2415 = vshrl.u32 %v2414, 7
        %v2416 = vsub.s32 %v2413, %v2415
        %v2417 = vrot.slane %v2409, %v2416
        %v2419 = vunpack.c.l.s4 1966171168
        %v2420 = vunpack.c.0.s8 %v2419
        %v2421 = vlaneseq
        %v2422 = vshrl.u32 %v2421, 7
        %v2423 = vsub.s32 %v2420, %v2422
        %v2424 = vrot.slane %v2410, %v2423
        %v2425 = vlaneseq
        %v2426 = vshrl.u32 %v2425, 7
        %v2427 = vsub.s32 0, %v2426
        %v2428 = vrot.slane %v2417, %v2427
        %v2429 = vlaneseq
        %v2430 = vshrl.u32 %v2429, 7
        %v2431 = vsub.s32 0, %v2430
        %v2432 = vrot.slane %v2424, %v2431
        %v2435 = vmul.f32 %v2400, %v2428
        %v2436 = vmul.f32 %v2401, %v2432
        %v2437 = vsel %vm609, %v2435, 0.0
        %2438 = vadd.xlane.f32.xlu0 %v2437
        %v2439 = vpop.xlane.xlu0 %2438
        %v2440 = vsel %vm609, %v2436, 0.0
        %2441 = vadd.xlane.f32.xlu0 %v2440
        %v2442 = vpop.xlane.xlu0 %2441
        %v2443 = vld [vmem:[%s2] sm:$0x3]
        %v2445 = vlaneseq
        %v2446 = vshrl.u32 %v2445, 7
        %v2447 = vsub.s32 0, %v2446
        %v2448 = vrot.slane %v2443, %v2447
        %2450 = vbcast.lane.b32.xlu0 %v2448, 256
        %v2451 = vpop.permute.xlu0 %2450
        %v2452 = vlaneseq
        %v2453 = vshrl.u32 %v2452, 7
        %v2454 = vsub.s32 1, %v2453
        %v2455 = vrot.slane %v2443, %v2454
        %2457 = vbcast.lane.b32.xlu0 %v2455, 256
        %v2458 = vpop.permute.xlu0 %2457
        %v2461 = vadd.f32 %v2439, %v2451
        %v2462 = vadd.f32 %v2442, %v2458
        %2465 = vset.pattern.permute.xlu0 0
        %2466 = vperm.xlu0 %2465, %v2461
        %v2467 = vpop.permute.xlu0 %2466
        %2468 = vset.pattern.permute.xlu0 0
        %2469 = vperm.xlu0 %2468, %v2462
        %v2470 = vpop.permute.xlu0 %2469
        %v2471 = vlaneseq
        %v2472 = vshrl.u32 %v2471, 7
        %v2473 = vsub.s32 %v961, %v2472
        %v2474 = vrot.slane %v2467, %v2473
        %v2475 = vlaneseq
        %v2476 = vshrl.u32 %v2475, 7
        %v2477 = vsub.s32 %v961, %v2476
        %v2478 = vrot.slane %v2470, %v2477
        %v2479 = vsel %vm970, %v2478, %v2474
        %v2481 = vsel %vm973, %v2479, -inf
        %2482 = vmax.xlane.f32.xlu0 %v2481
        %v2483 = vpop.xlane.xlu0 %2482
        %v2485 = vlaneseq
        %v2486 = vshrl.u32 %v2485, 7
        %v2487 = vsub.s32 0, %v2486
        %v2488 = vrot.slane %v2483, %v2487
        %v2489 = vlaneseq
        %v2490 = vshrl.u32 %v2489, 7
        %v2491 = vsub.s32 1, %v2490
        %v2492 = vrot.slane %v2483, %v2491
        %v2495 = vsub.f32 %v2461, %v2488
        %v2496 = vsub.f32 %v2462, %v2492
        %v2497 = vmul.f32 %v2495, 1.442695
        %v2498 = vpow.pop %v2497
        %v2499 = vmul.f32 %v2496, 1.442695
        %v2500 = vpow.pop %v2499
        %2503 = vset.pattern.permute.xlu0 0
        %2504 = vperm.xlu0 %2503, %v2498
        %v2505 = vpop.permute.xlu0 %2504
        %2506 = vset.pattern.permute.xlu0 0
        %2507 = vperm.xlu0 %2506, %v2500
        %v2508 = vpop.permute.xlu0 %2507
        %v2509 = vlaneseq
        %v2510 = vshrl.u32 %v2509, 7
        %v2511 = vsub.s32 %v961, %v2510
        %v2512 = vrot.slane %v2505, %v2511
        %v2513 = vlaneseq
        %v2514 = vshrl.u32 %v2513, 7
        %v2515 = vsub.s32 %v961, %v2514
        %v2516 = vrot.slane %v2508, %v2515
        %v2517 = vsel %vm970, %v2516, %v2512
        %v2519 = vsel %vm973, %v2517, 0.0
        %2520 = vadd.xlane.f32.xlu0 %v2519
        %v2521 = vpop.xlane.xlu0 %2520
        %v2522 = vrcp.pop %v2521
        %v2524 = vlaneseq
        %v2525 = vshrl.u32 %v2524, 7
        %v2526 = vsub.s32 0, %v2525
        %v2527 = vrot.slane %v2522, %v2526
        %v2528 = vlaneseq
        %v2529 = vshrl.u32 %v2528, 7
        %v2530 = vsub.s32 1, %v2529
        %v2531 = vrot.slane %v2522, %v2530
        %v2534 = vmul.f32 %v2498, %v2527
        %v2535 = vmul.f32 %v2500, %v2531
        %v2536 = vld [vmem:[%s1] sm:$0xff]
        %v2537 = vld [vmem:[%s1 + $0x8] sm:$0xff]
        %2539 = vset.pattern.permute.xlu0 0
        %2540 = vperm.xlu0 %2539, %v2534
        %v2541 = vpop.permute.xlu0 %2540
        %2544 = vset.pattern.permute.xlu0 0
        %2545 = vperm.xlu0 %2544, %v2535
        %v2546 = vpop.permute.xlu0 %2545
        %v2548 = vmul.f32 %v2541, %v2536
        %v2549 = vmul.f32 %v2546, %v2537
        %v2550 = vsel %vm745, %v2548, 0.0
        %v2551 = vrot.slane %v2550, 4
        %v2552 = vadd.f32 %v2550, %v2551
        %v2553 = vrot.slane %v2552, 2
        %v2554 = vadd.f32 %v2552, %v2553
        %v2555 = vrot.slane %v2554, 1
        %v2556 = vadd.f32 %v2554, %v2555
        %v2557 = vsel %vm745, %v2549, 0.0
        %v2558 = vrot.slane %v2557, 4
        %v2559 = vadd.f32 %v2557, %v2558
        %v2560 = vrot.slane %v2559, 2
        %v2561 = vadd.f32 %v2559, %v2560
        %v2562 = vrot.slane %v2561, 1
        %v2563 = vadd.f32 %v2561, %v2562
        %v2564 = vpack.c.bf16 %v2556, %v2556
        %v2565 = vpack.c.bf16 %v2563, %v2563
        %v2566 = vld [vmem:[%s10] sm:$0xf]
        %v2567 = vld [vmem:[%s10 + $0x4] sm:$0xf]
        %v2568 = vld [vmem:[%s10 + $0x8] sm:$0xf]
        %v2569 = vld [vmem:[%s10 + $0xc] sm:$0xf]
        %v2570 = vld [vmem:[%s10 + $0x10] sm:$0xf]
        %v2571 = vld [vmem:[%s10 + $0x14] sm:$0xf]
        %v2572 = vld [vmem:[%s10 + $0x18] sm:$0xf]
        %v2573 = vld [vmem:[%s10 + $0x1c] sm:$0xf]
        %v2574 = vld [vmem:[%s11] sm:$0x1]
        %v2576 = vlaneseq
        %v2577 = vshrl.u32 %v2576, 7
        %v2578 = vsub.s32 0, %v2577
        %v2579 = vrot.slane %v2574, %v2578
        %v2583 = vunpack.c.l.b16 %v2564
        %v2584 = vunpack.c.l.b16 %v2565
        %v2585 = vsel %vm970, %v2584, %v2583
        %v2586 = vpack.c.b16 %v2585, %v2585
        %v2595 = vunpack.c.l.b16 %v2566
        %v2596 = vunpack.c.l.b16 %v2567
        %v2597 = vunpack.c.l.b16 %v2568
        %v2598 = vunpack.c.l.b16 %v2569
        %v2599 = vunpack.c.l.b16 %v2570
        %v2600 = vunpack.c.l.b16 %v2571
        %v2601 = vunpack.c.l.b16 %v2572
        %v2602 = vunpack.c.l.b16 %v2573
        %v2603 = vpack.c.b16 %v2596, %v2595
        %v2604 = vpack.c.b16 %v2598, %v2597
        %v2605 = vpack.c.b16 %v2600, %v2599
        %v2606 = vpack.c.b16 %v2602, %v2601
        %v2612 = vsel %vm745, %v2586, 0
        %2614 = vmatprep.subr.bf16.mxu0 0
        %2615 = vmatpush1.bf16.msra.mxu0 %v2603
        %2616 = vmatprep.subr.bf16.mxu0 0
        %2617 = vmatpush1.bf16.msra.mxu0 %v2604
        %2618 = vmatprep.subr.bf16.mxu0 0
        %2619 = vmatpush1.bf16.msra.mxu0 %v2605
        %2620 = vmatprep.subr.bf16.mxu0 0
        %2621 = vmatpush1.bf16.msra.mxu0 %v2606
        %2622 = vmatprep.subr.bf16.mxu0 0
        %2623 = vmatpush1.bf16.msra.mxu0 0
        %2624 = vmatprep.subr.bf16.mxu0 0
        %2625 = vmatpush1.bf16.msra.mxu0 0
        %2626 = vmatprep.subr.bf16.mxu0 0
        %2627 = vmatpush1.bf16.msra.mxu0 0
        %2628 = vmatprep.subr.bf16.mxu0 0
        %2629 = vmatpush1.bf16.msra.mxu0 0
        %2630 = vmatprep.subr.bf16.mxu0 0
        %2631 = vmatpush1.bf16.msra.mxu0 0
        %2632 = vmatprep.subr.bf16.mxu0 0
        %2633 = vmatpush1.bf16.msra.mxu0 0
        %2634 = vmatprep.subr.bf16.mxu0 0
        %2635 = vmatpush1.bf16.msra.mxu0 0
        %2636 = vmatprep.subr.bf16.mxu0 0
        %2637 = vmatpush1.bf16.msra.mxu0 0
        %2638 = vmatprep.subr.bf16.mxu0 0
        %2639 = vmatpush1.bf16.msra.mxu0 0
        %2640 = vmatprep.subr.bf16.mxu0 0
        %2641 = vmatpush1.bf16.msra.mxu0 0
        %2642 = vmatprep.subr.bf16.mxu0 0
        %2643 = vmatpush1.bf16.msra.mxu0 0
        %2644 = vmatprep.subr.bf16.mxu0 0
        %2645 = vmatpush1.bf16.msra.mxu0 0
        %2646 = vmatprep.mubr.bf16.mxu0 0
        %2647 = vmatmul.mubr.bf16.gmra.mrb[0].mxu0 %v2612
        %v2648 = vpop.f32.mrb[0].mxu0
        %v2649 = vadd.f32 %v2579, %v2648
        %v2650 = vpop.f32.mrb[0].mxu0
        %v2651 = vpop.f32.mrb[0].mxu0
        %v2652 = vpop.f32.mrb[0].mxu0
        %2653 = vdwg.mxu0
        %v2654 = vpack.c.bf16 %v2649, %v2649
        %v2655 = vld [vmem:[%s13] sm:$0xf]
        %v2656 = vld [vmem:[%s13 + $0x4] sm:$0xf]
        %v2657 = vld [vmem:[%s13 + $0x8] sm:$0xf]
        %v2658 = vld [vmem:[%s13 + $0xc] sm:$0xf]
        %v2663 = vunpack.c.l.b16 %v2655
        %v2664 = vunpack.c.l.b16 %v2656
        %v2665 = vunpack.c.l.b16 %v2657
        %v2666 = vunpack.c.l.b16 %v2658
        %v2667 = vpack.c.b16 %v2664, %v2663
        %v2668 = vpack.c.b16 %v2666, %v2665
        %v2672 = vsel %vm609, %v2654, 0
        %2674 = vmatprep.subr.bf16.mxu0 0
        %2675 = vmatpush1.bf16.msra.mxu0 %v2667
        %2676 = vmatprep.subr.bf16.mxu0 0
        %2677 = vmatpush1.bf16.msra.mxu0 %v2668
        %2678 = vmatprep.subr.bf16.mxu0 0
        %2679 = vmatpush1.bf16.msra.mxu0 0
        %2680 = vmatprep.subr.bf16.mxu0 0
        %2681 = vmatpush1.bf16.msra.mxu0 0
        %2682 = vmatprep.subr.bf16.mxu0 0
        %2683 = vmatpush1.bf16.msra.mxu0 0
        %2684 = vmatprep.subr.bf16.mxu0 0
        %2685 = vmatpush1.bf16.msra.mxu0 0
        %2686 = vmatprep.subr.bf16.mxu0 0
        %2687 = vmatpush1.bf16.msra.mxu0 0
        %2688 = vmatprep.subr.bf16.mxu0 0
        %2689 = vmatpush1.bf16.msra.mxu0 0
        %2690 = vmatprep.subr.bf16.mxu0 0
        %2691 = vmatpush1.bf16.msra.mxu0 0
        %2692 = vmatprep.subr.bf16.mxu0 0
        %2693 = vmatpush1.bf16.msra.mxu0 0
        %2694 = vmatprep.subr.bf16.mxu0 0
        %2695 = vmatpush1.bf16.msra.mxu0 0
        %2696 = vmatprep.subr.bf16.mxu0 0
        %2697 = vmatpush1.bf16.msra.mxu0 0
        %2698 = vmatprep.subr.bf16.mxu0 0
        %2699 = vmatpush1.bf16.msra.mxu0 0
        %2700 = vmatprep.subr.bf16.mxu0 0
        %2701 = vmatpush1.bf16.msra.mxu0 0
        %2702 = vmatprep.subr.bf16.mxu0 0
        %2703 = vmatpush1.bf16.msra.mxu0 0
        %2704 = vmatprep.subr.bf16.mxu0 0
        %2705 = vmatpush1.bf16.msra.mxu0 0
        %2706 = vmatprep.mubr.bf16.mxu0 0
        %2707 = vmatmul.mubr.bf16.gmra.mrb[0].mxu0 %v2672
        %v2708 = vpop.f32.mrb[0].mxu0
        %v2709 = vadd.f32 0.0, %v2708
        %v2710 = vpop.f32.mrb[0].mxu0
        %v2711 = vpop.f32.mrb[0].mxu0
        %v2712 = vpop.f32.mrb[0].mxu0
        %2713 = vdwg.mxu0
        %v2714 = vld [vmem:[%s5] sm:$0x3]
        %v2715 = vadd.f32 %v2714, %v2709
        %2716 = vrot.lane.b32.xlu0 %v2394, 96
        %v2717 = vpop.permute.xlu0 %2716
        %v2719 = vadd.f32 %v2715, %v2717
        %v2720 = vxor.u32 %v2719, 2147483648
        %v2721 = vmul.f32 %v2720, 1.442695
        %v2722 = vpow.pop %v2721
        %v2723 = vadd.f32 %v2722, 1.0
        %v2724 = vrcp.pop %v2723
        %v2725 = vmul.f32 1.0, %v2724
        %v2726 = vld [vmem:[%s6] sm:$0x3]
        %2728 = vrot.lane.b32.xlu0 %v2709, 96
        %v2729 = vpop.permute.xlu0 %2728
        %v2731 = vadd.f32 %v2726, %v2729
        %2733 = vrot.lane.b32.xlu0 %v2394, 64
        %v2734 = vpop.permute.xlu0 %2733
        %2735 = vrot.lane.b32.xlu0 %v2396, 64
        %v2736 = vpop.permute.xlu0 %2735
        %v2737 = vsel %vm745, %v2734, %v2736
        %v2739 = vadd.f32 %v2731, %v2737
        %v2740 = vxor.u32 %v2739, 2147483648
        %v2741 = vmul.f32 %v2740, 1.442695
        %v2742 = vpow.pop %v2741
        %v2743 = vadd.f32 %v2742, 1.0
        %v2744 = vrcp.pop %v2743
        %v2745 = vmul.f32 1.0, %v2744
        %v2746 = vld [vmem:[%s4] sm:$0x3]
        %2748 = vrot.lane.b32.xlu0 %v2649, 64
        %v2749 = vpop.permute.xlu0 %2748
        %v2751 = vsel %vm745, %v2746, %v2749
        %v2752 = vmul.f32 %v2745, %v2751
        %v2753 = vpack.c.bf16 %v2752, %v2752
        %v2754 = vld [vmem:[%s14] sm:$0xf]
        %v2755 = vld [vmem:[%s14 + $0x4] sm:$0xf]
        %v2756 = vld [vmem:[%s14 + $0x8] sm:$0xf]
        %v2757 = vld [vmem:[%s14 + $0xc] sm:$0xf]
        %v2758 = vld [vmem:[%s14 + $0x10] sm:$0xf]
        %v2759 = vld [vmem:[%s14 + $0x14] sm:$0xf]
        %v2760 = vld [vmem:[%s14 + $0x18] sm:$0xf]
        %v2761 = vld [vmem:[%s14 + $0x1c] sm:$0xf]
        %v2762 = vld [vmem:[%s14 + $0x20] sm:$0xf]
        %v2763 = vld [vmem:[%s14 + $0x24] sm:$0xf]
        %v2764 = vld [vmem:[%s14 + $0x28] sm:$0xf]
        %v2765 = vld [vmem:[%s14 + $0x2c] sm:$0xf]
        %v2778 = vunpack.c.l.b16 %v2754
        %v2779 = vunpack.c.l.b16 %v2755
        %v2780 = vunpack.c.l.b16 %v2756
        %v2781 = vunpack.c.l.b16 %v2757
        %v2782 = vunpack.c.l.b16 %v2758
        %v2783 = vunpack.c.l.b16 %v2759
        %v2784 = vunpack.c.l.b16 %v2760
        %v2785 = vunpack.c.l.b16 %v2761
        %v2786 = vunpack.c.l.b16 %v2762
        %v2787 = vunpack.c.l.b16 %v2763
        %v2788 = vunpack.c.l.b16 %v2764
        %v2789 = vunpack.c.l.b16 %v2765
        %v2790 = vpack.c.b16 %v2779, %v2778
        %v2791 = vpack.c.b16 %v2781, %v2780
        %v2792 = vpack.c.b16 %v2783, %v2782
        %v2793 = vpack.c.b16 %v2785, %v2784
        %v2794 = vpack.c.b16 %v2787, %v2786
        %v2795 = vpack.c.b16 %v2789, %v2788
        %2802 = vrot.lane.b32.xlu0 %v2396, 96
        %v2803 = vpop.permute.xlu0 %2802
        %v2806 = vsel %vm1298, %v2753, 0
        %2808 = vmatprep.subr.bf16.mxu0 0
        %2809 = vmatpush1.bf16.msra.mxu0 %v2790
        %2810 = vmatprep.subr.bf16.mxu0 0
        %2811 = vmatpush1.bf16.msra.mxu0 %v2791
        %2812 = vmatprep.subr.bf16.mxu0 0
        %2813 = vmatpush1.bf16.msra.mxu0 %v2792
        %2814 = vmatprep.subr.bf16.mxu0 0
        %2815 = vmatpush1.bf16.msra.mxu0 %v2793
        %2816 = vmatprep.subr.bf16.mxu0 0
        %2817 = vmatpush1.bf16.msra.mxu0 %v2794
        %2818 = vmatprep.subr.bf16.mxu0 0
        %2819 = vmatpush1.bf16.msra.mxu0 %v2795
        %2820 = vmatprep.subr.bf16.mxu0 0
        %2821 = vmatpush1.bf16.msra.mxu0 0
        %2822 = vmatprep.subr.bf16.mxu0 0
        %2823 = vmatpush1.bf16.msra.mxu0 0
        %2824 = vmatprep.subr.bf16.mxu0 0
        %2825 = vmatpush1.bf16.msra.mxu0 0
        %2826 = vmatprep.subr.bf16.mxu0 0
        %2827 = vmatpush1.bf16.msra.mxu0 0
        %2828 = vmatprep.subr.bf16.mxu0 0
        %2829 = vmatpush1.bf16.msra.mxu0 0
        %2830 = vmatprep.subr.bf16.mxu0 0
        %2831 = vmatpush1.bf16.msra.mxu0 0
        %2832 = vmatprep.subr.bf16.mxu0 0
        %2833 = vmatpush1.bf16.msra.mxu0 0
        %2834 = vmatprep.subr.bf16.mxu0 0
        %2835 = vmatpush1.bf16.msra.mxu0 0
        %2836 = vmatprep.subr.bf16.mxu0 0
        %2837 = vmatpush1.bf16.msra.mxu0 0
        %2838 = vmatprep.subr.bf16.mxu0 0
        %2839 = vmatpush1.bf16.msra.mxu0 0
        %2840 = vmatprep.mubr.bf16.mxu0 0
        %2841 = vmatmul.mubr.bf16.gmra.mrb[0].mxu0 %v2806
        %v2842 = vpop.f32.mrb[0].mxu0
        %v2843 = vadd.f32 %v2803, %v2842
        %v2844 = vpop.f32.mrb[0].mxu0
        %v2845 = vpop.f32.mrb[0].mxu0
        %v2846 = vpop.f32.mrb[0].mxu0
        %2847 = vdwg.mxu0
        %v2848 = vld [vmem:[%s15] sm:$0x1]
        %v2850 = vlaneseq
        %v2851 = vshrl.u32 %v2850, 7
        %v2852 = vsub.s32 0, %v2851
        %v2853 = vrot.slane %v2848, %v2852
        %v2855 = vadd.f32 %v2843, %v2853
        %v2856 = vtanh.pop %v2855
        %v2857 = vsub.f32 1.0, %v2725
        %2859 = vrot.lane.b32.xlu0 %v2327, 32
        %v2860 = vpop.permute.xlu0 %2859
        %v2862 = vmul.f32 %v2857, %v2860
        %v2863 = vmul.f32 %v2725, %v2856
        %v2864 = vadd.f32 %v2862, %v2863
        %s2865 = scalar_lea.vmem %s571, 4
        %2866 = vst.msk [vmem:[%s2865] sm:$0x3] %vm1359, %v2864
        %s2867 = scalar_lea.vmem %s565, 3
        %v2868 = vld [vmem:[%s2867] sm:$0x1]
        %v2869 = vunpack.c.l.bf16 %v2868
        %v2870 = vpack.c.bf16 %v2204, %v2204
        %v2871 = vld [vmem:[%s7] sm:$0xf]
        %v2872 = vld [vmem:[%s7 + $0x4] sm:$0xf]
        %v2873 = vld [vmem:[%s7 + $0x8] sm:$0xf]
        %v2874 = vld [vmem:[%s7 + $0xc] sm:$0xf]
        %2876 = vrot.lane.b32.xlu0 %v2870, 32
        %v2877 = vpop.permute.xlu0 %2876
        %v2882 = vunpack.c.l.b16 %v2871
        %v2883 = vunpack.c.l.b16 %v2872
        %v2884 = vunpack.c.l.b16 %v2873
        %v2885 = vunpack.c.l.b16 %v2874
        %v2886 = vpack.c.b16 %v2883, %v2882
        %v2887 = vpack.c.b16 %v2885, %v2884
        %v2891 = vsel %vm609, %v2877, 0
        %2893 = vmatprep.subr.bf16.mxu0 0
        %2894 = vmatpush1.bf16.msra.mxu0 %v2886
        %2895 = vmatprep.subr.bf16.mxu0 0
        %2896 = vmatpush1.bf16.msra.mxu0 %v2887
        %2897 = vmatprep.subr.bf16.mxu0 0
        %2898 = vmatpush1.bf16.msra.mxu0 0
        %2899 = vmatprep.subr.bf16.mxu0 0
        %2900 = vmatpush1.bf16.msra.mxu0 0
        %2901 = vmatprep.subr.bf16.mxu0 0
        %2902 = vmatpush1.bf16.msra.mxu0 0
        %2903 = vmatprep.subr.bf16.mxu0 0
        %2904 = vmatpush1.bf16.msra.mxu0 0
        %2905 = vmatprep.subr.bf16.mxu0 0
        %2906 = vmatpush1.bf16.msra.mxu0 0
        %2907 = vmatprep.subr.bf16.mxu0 0
        %2908 = vmatpush1.bf16.msra.mxu0 0
        %2909 = vmatprep.subr.bf16.mxu0 0
        %2910 = vmatpush1.bf16.msra.mxu0 0
        %2911 = vmatprep.subr.bf16.mxu0 0
        %2912 = vmatpush1.bf16.msra.mxu0 0
        %2913 = vmatprep.subr.bf16.mxu0 0
        %2914 = vmatpush1.bf16.msra.mxu0 0
        %2915 = vmatprep.subr.bf16.mxu0 0
        %2916 = vmatpush1.bf16.msra.mxu0 0
        %2917 = vmatprep.subr.bf16.mxu0 0
        %2918 = vmatpush1.bf16.msra.mxu0 0
        %2919 = vmatprep.subr.bf16.mxu0 0
        %2920 = vmatpush1.bf16.msra.mxu0 0
        %2921 = vmatprep.subr.bf16.mxu0 0
        %2922 = vmatpush1.bf16.msra.mxu0 0
        %2923 = vmatprep.subr.bf16.mxu0 0
        %2924 = vmatpush1.bf16.msra.mxu0 0
        %2925 = vmatprep.mubr.bf16.mxu0 0
        %2926 = vmatmul.mubr.bf16.gmra.mrb[0].mxu0 %v2891
        %v2927 = vpop.f32.mrb[0].mxu0
        %v2928 = vadd.f32 0.0, %v2927
        %v2929 = vpop.f32.mrb[0].mxu0
        %v2930 = vpop.f32.mrb[0].mxu0
        %v2931 = vpop.f32.mrb[0].mxu0
        %2932 = vdwg.mxu0
        %v2933 = vadd.f32 %v2869, %v2928
        %v2934 = vxor.u32 %v2933, 2147483648
        %v2935 = vmul.f32 %v2934, 1.442695
        %v2936 = vpow.pop %v2935
        %v2937 = vadd.f32 %v2936, 1.0
        %v2938 = vrcp.pop %v2937
        %v2939 = vmul.f32 1.0, %v2938
        %v2940 = vtanh.pop %v2933
        %v2941 = vmul.f32 %v2939, %v2198
        %2943 = vrot.lane.b32.xlu0 %v2940, 64
        %v2944 = vpop.permute.xlu0 %2943
        %v2946 = vmul.f32 %v2939, %v2944
        %2948 = vrot.lane.b32.xlu0 %v2946, 32
        %v2949 = vpop.permute.xlu0 %2948
        %v2951 = vadd.f32 %v2941, %v2949
        %v2952 = vtanh.pop %v2951
        %2954 = vrot.lane.b32.xlu0 %v2952, 64
        %v2955 = vpop.permute.xlu0 %2954
        %v2957 = vmul.f32 %v2939, %v2955
        %v2960 = vunpack.c.l.s4 1983009808
        %v2961 = vunpack.c.0.s8 %v2960
        %v2962 = vlaneseq
        %v2963 = vshrl.u32 %v2962, 7
        %v2964 = vsub.s32 %v2961, %v2963
        %v2965 = vrot.slane %v2957, %v2964
        %2966 = vrot.lane.b32.xlu0 %v2965, 32
        %v2967 = vpop.permute.xlu0 %2966
        %2970 = vrot.lane.b32.xlu0 %v2864, 32
        %v2971 = vpop.permute.xlu0 %2970
        %v2973 = vsel %vm609, %v2967, %v2971
        %v2974 = vpack.c.bf16 %v2973, %v2973
        %v2975 = vld [vmem:[%s8] sm:$0xf]
        %v2976 = vld [vmem:[%s8 + $0x4] sm:$0xf]
        %v2977 = vld [vmem:[%s8 + $0x8] sm:$0xf]
        %v2978 = vld [vmem:[%s8 + $0xc] sm:$0xf]
        %v2979 = vld [vmem:[%s8 + $0x10] sm:$0xf]
        %v2980 = vld [vmem:[%s8 + $0x14] sm:$0xf]
        %v2981 = vld [vmem:[%s8 + $0x18] sm:$0xf]
        %v2982 = vld [vmem:[%s8 + $0x1c] sm:$0xf]
        %v2983 = vld [vmem:[%s9] sm:$0x1]
        %v2985 = vlaneseq
        %v2986 = vshrl.u32 %v2985, 7
        %v2987 = vsub.s32 0, %v2986
        %v2988 = vrot.slane %v2983, %v2987
        %v2998 = vunpack.c.l.b16 %v2975
        %v2999 = vunpack.c.l.b16 %v2976
        %v3000 = vunpack.c.l.b16 %v2977
        %v3001 = vunpack.c.l.b16 %v2978
        %v3002 = vunpack.c.l.b16 %v2979
        %v3003 = vunpack.c.l.b16 %v2980
        %v3004 = vunpack.c.l.b16 %v2981
        %v3005 = vunpack.c.l.b16 %v2982
        %v3006 = vpack.c.b16 %v2999, %v2998
        %v3007 = vpack.c.b16 %v3001, %v3000
        %v3008 = vpack.c.b16 %v3003, %v3002
        %v3009 = vpack.c.b16 %v3005, %v3004
        %v3015 = vsel %vm745, %v2974, 0
        %3017 = vmatprep.subr.bf16.mxu0 0
        %3018 = vmatpush1.bf16.msra.mxu0 %v3006
        %3019 = vmatprep.subr.bf16.mxu0 0
        %3020 = vmatpush1.bf16.msra.mxu0 %v3007
        %3021 = vmatprep.subr.bf16.mxu0 0
        %3022 = vmatpush1.bf16.msra.mxu0 %v3008
        %3023 = vmatprep.subr.bf16.mxu0 0
        %3024 = vmatpush1.bf16.msra.mxu0 %v3009
        %3025 = vmatprep.subr.bf16.mxu0 0
        %3026 = vmatpush1.bf16.msra.mxu0 0
        %3027 = vmatprep.subr.bf16.mxu0 0
        %3028 = vmatpush1.bf16.msra.mxu0 0
        %3029 = vmatprep.subr.bf16.mxu0 0
        %3030 = vmatpush1.bf16.msra.mxu0 0
        %3031 = vmatprep.subr.bf16.mxu0 0
        %3032 = vmatpush1.bf16.msra.mxu0 0
        %3033 = vmatprep.subr.bf16.mxu0 0
        %3034 = vmatpush1.bf16.msra.mxu0 0
        %3035 = vmatprep.subr.bf16.mxu0 0
        %3036 = vmatpush1.bf16.msra.mxu0 0
        %3037 = vmatprep.subr.bf16.mxu0 0
        %3038 = vmatpush1.bf16.msra.mxu0 0
        %3039 = vmatprep.subr.bf16.mxu0 0
        %3040 = vmatpush1.bf16.msra.mxu0 0
        %3041 = vmatprep.subr.bf16.mxu0 0
        %3042 = vmatpush1.bf16.msra.mxu0 0
        %3043 = vmatprep.subr.bf16.mxu0 0
        %3044 = vmatpush1.bf16.msra.mxu0 0
        %3045 = vmatprep.subr.bf16.mxu0 0
        %3046 = vmatpush1.bf16.msra.mxu0 0
        %3047 = vmatprep.subr.bf16.mxu0 0
        %3048 = vmatpush1.bf16.msra.mxu0 0
        %3049 = vmatprep.mubr.bf16.mxu0 0
        %3050 = vmatmul.mubr.bf16.gmra.mrb[0].mxu0 %v3015
        %v3051 = vpop.f32.mrb[0].mxu0
        %v3052 = vadd.f32 %v2988, %v3051
        %v3053 = vpop.f32.mrb[0].mxu0
        %v3054 = vpop.f32.mrb[0].mxu0
        %v3055 = vpop.f32.mrb[0].mxu0
        %3056 = vdwg.mxu0
        %v3057 = vxor.u32 %v3052, 2147483648
        %v3058 = vmul.f32 %v3057, 1.442695
        %v3059 = vpow.pop %v3058
        %v3060 = vadd.f32 %v3059, 1.0
        %v3061 = vrcp.pop %v3060
        %v3062 = vmul.f32 1.0, %v3061
        %v3063 = vtanh.pop %v3052
        %v3064 = vmul.f32 %v3062, %v2321
        %3066 = vrot.lane.b32.xlu0 %v3063, 64
        %v3067 = vpop.permute.xlu0 %3066
        %v3069 = vmul.f32 %v3062, %v3067
        %3071 = vrot.lane.b32.xlu0 %v3069, 32
        %v3072 = vpop.permute.xlu0 %3071
        %v3074 = vadd.f32 %v3064, %v3072
        %v3075 = vtanh.pop %v3074
        %3077 = vrot.lane.b32.xlu0 %v3075, 64
        %v3078 = vpop.permute.xlu0 %3077
        %v3080 = vmul.f32 %v3062, %v3078
        %v3081 = vpack.c.bf16 %v3080, %v3080
        %v3082 = vld [vmem:[%s12] sm:$0xff]
        %v3083 = vld [vmem:[%s12 + $0x8] sm:$0xff]
        %v3084 = vld [vmem:[%s12 + $0x10] sm:$0xff]
        %v3085 = vld [vmem:[%s12 + $0x18] sm:$0xff]
        %3087 = vrot.lane.b32.xlu0 %v3081, 32
        %v3088 = vpop.permute.xlu0 %3087
        %v3093 = vunpack.c.l.b16 %v3082
        %v3094 = vunpack.c.h.b16 %v3082
        %v3095 = vunpack.c.l.b16 %v3083
        %v3096 = vunpack.c.h.b16 %v3083
        %v3097 = vunpack.c.l.b16 %v3084
        %v3098 = vunpack.c.h.b16 %v3084
        %v3099 = vunpack.c.l.b16 %v3085
        %v3100 = vunpack.c.h.b16 %v3085
        %v3101 = vpack.c.b16 %v3095, %v3093
        %v3102 = vpack.c.b16 %v3096, %v3094
        %v3103 = vpack.c.b16 %v3099, %v3097
        %v3104 = vpack.c.b16 %v3100, %v3098
        %v3110 = vsel %vm609, %v3088, 0
        %3112 = vmatprep.subr.bf16.mxu0 %v3102
        %3113 = vmatpush1.bf16.msra.mxu0 %v3101
        %3114 = vmatprep.subr.bf16.mxu0 %v3104
        %3115 = vmatpush1.bf16.msra.mxu0 %v3103
        %3116 = vmatprep.subr.bf16.mxu0 0
        %3117 = vmatpush1.bf16.msra.mxu0 0
        %3118 = vmatprep.subr.bf16.mxu0 0
        %3119 = vmatpush1.bf16.msra.mxu0 0
        %3120 = vmatprep.subr.bf16.mxu0 0
        %3121 = vmatpush1.bf16.msra.mxu0 0
        %3122 = vmatprep.subr.bf16.mxu0 0
        %3123 = vmatpush1.bf16.msra.mxu0 0
        %3124 = vmatprep.subr.bf16.mxu0 0
        %3125 = vmatpush1.bf16.msra.mxu0 0
        %3126 = vmatprep.subr.bf16.mxu0 0
        %3127 = vmatpush1.bf16.msra.mxu0 0
        %3128 = vmatprep.subr.bf16.mxu0 0
        %3129 = vmatpush1.bf16.msra.mxu0 0
        %3130 = vmatprep.subr.bf16.mxu0 0
        %3131 = vmatpush1.bf16.msra.mxu0 0
        %3132 = vmatprep.subr.bf16.mxu0 0
        %3133 = vmatpush1.bf16.msra.mxu0 0
        %3134 = vmatprep.subr.bf16.mxu0 0
        %3135 = vmatpush1.bf16.msra.mxu0 0
        %3136 = vmatprep.subr.bf16.mxu0 0
        %3137 = vmatpush1.bf16.msra.mxu0 0
        %3138 = vmatprep.subr.bf16.mxu0 0
        %3139 = vmatpush1.bf16.msra.mxu0 0
        %3140 = vmatprep.subr.bf16.mxu0 0
        %3141 = vmatpush1.bf16.msra.mxu0 0
        %3142 = vmatprep.subr.bf16.mxu0 0
        %3143 = vmatpush1.bf16.msra.mxu0 0
        %3144 = vmatprep.mubr.bf16.mxu0 0
        %3145 = vmatmul.mubr.bf16.gmra.mrb[0].mxu0 %v3110
        %v3146 = vpop.f32.mrb[0].mxu0
        %v3147 = vadd.f32 0.0, %v3146
        %v3148 = vpop.f32.mrb[0].mxu0
        %v3149 = vadd.f32 0.0, %v3148
        %v3150 = vpop.f32.mrb[0].mxu0
        %v3151 = vpop.f32.mrb[0].mxu0
        %3152 = vdwg.mxu0
        %v3153 = vld [vmem:[%s3] sm:$0xff]
        %v3154 = vld [vmem:[%s3 + $0x8] sm:$0xff]
        %v3157 = vunpack.c.l.s4 1966171168
        %v3158 = vunpack.c.0.s8 %v3157
        %v3159 = vlaneseq
        %v3160 = vshrl.u32 %v3159, 7
        %v3161 = vsub.s32 %v3158, %v3160
        %v3162 = vrot.slane %v3147, %v3161
        %v3163 = vcombine.high %v3162, %v3162
        %v3165 = vunpack.c.l.s4 1966171168
        %v3166 = vunpack.c.0.s8 %v3165
        %v3167 = vlaneseq
        %v3168 = vshrl.u32 %v3167, 7
        %v3169 = vsub.s32 %v3166, %v3168
        %v3170 = vrot.slane %v3162, %v3169
        %v3172 = vunpack.c.l.s4 1966171168
        %v3173 = vunpack.c.0.s8 %v3172
        %v3174 = vlaneseq
        %v3175 = vshrl.u32 %v3174, 7
        %v3176 = vsub.s32 %v3173, %v3175
        %v3177 = vrot.slane %v3163, %v3176
        %v3178 = vlaneseq
        %v3179 = vshrl.u32 %v3178, 7
        %v3180 = vsub.s32 0, %v3179
        %v3181 = vrot.slane %v3170, %v3180
        %v3182 = vlaneseq
        %v3183 = vshrl.u32 %v3182, 7
        %v3184 = vsub.s32 0, %v3183
        %v3185 = vrot.slane %v3177, %v3184
        %v3188 = vmul.f32 %v3153, %v3181
        %v3189 = vmul.f32 %v3154, %v3185
        %v3190 = vsel %vm609, %v3188, 0.0
        %3191 = vadd.xlane.f32.xlu0 %v3190
        %v3192 = vpop.xlane.xlu0 %3191
        %v3193 = vsel %vm609, %v3189, 0.0
        %3194 = vadd.xlane.f32.xlu0 %v3193
        %v3195 = vpop.xlane.xlu0 %3194
        %v3196 = vld [vmem:[%s2] sm:$0x3]
        %v3198 = vlaneseq
        %v3199 = vshrl.u32 %v3198, 7
        %v3200 = vsub.s32 0, %v3199
        %v3201 = vrot.slane %v3196, %v3200
        %3203 = vbcast.lane.b32.xlu0 %v3201, 256
        %v3204 = vpop.permute.xlu0 %3203
        %v3205 = vlaneseq
        %v3206 = vshrl.u32 %v3205, 7
        %v3207 = vsub.s32 1, %v3206
        %v3208 = vrot.slane %v3196, %v3207
        %3210 = vbcast.lane.b32.xlu0 %v3208, 256
        %v3211 = vpop.permute.xlu0 %3210
        %v3214 = vadd.f32 %v3192, %v3204
        %v3215 = vadd.f32 %v3195, %v3211
        %3218 = vset.pattern.permute.xlu0 0
        %3219 = vperm.xlu0 %3218, %v3214
        %v3220 = vpop.permute.xlu0 %3219
        %3221 = vset.pattern.permute.xlu0 0
        %3222 = vperm.xlu0 %3221, %v3215
        %v3223 = vpop.permute.xlu0 %3222
        %v3224 = vlaneseq
        %v3225 = vshrl.u32 %v3224, 7
        %v3226 = vsub.s32 %v961, %v3225
        %v3227 = vrot.slane %v3220, %v3226
        %v3228 = vlaneseq
        %v3229 = vshrl.u32 %v3228, 7
        %v3230 = vsub.s32 %v961, %v3229
        %v3231 = vrot.slane %v3223, %v3230
        %v3232 = vsel %vm970, %v3231, %v3227
        %v3234 = vsel %vm973, %v3232, -inf
        %3235 = vmax.xlane.f32.xlu0 %v3234
        %v3236 = vpop.xlane.xlu0 %3235
        %v3238 = vlaneseq
        %v3239 = vshrl.u32 %v3238, 7
        %v3240 = vsub.s32 0, %v3239
        %v3241 = vrot.slane %v3236, %v3240
        %v3242 = vlaneseq
        %v3243 = vshrl.u32 %v3242, 7
        %v3244 = vsub.s32 1, %v3243
        %v3245 = vrot.slane %v3236, %v3244
        %v3248 = vsub.f32 %v3214, %v3241
        %v3249 = vsub.f32 %v3215, %v3245
        %v3250 = vmul.f32 %v3248, 1.442695
        %v3251 = vpow.pop %v3250
        %v3252 = vmul.f32 %v3249, 1.442695
        %v3253 = vpow.pop %v3252
        %3256 = vset.pattern.permute.xlu0 0
        %3257 = vperm.xlu0 %3256, %v3251
        %v3258 = vpop.permute.xlu0 %3257
        %3259 = vset.pattern.permute.xlu0 0
        %3260 = vperm.xlu0 %3259, %v3253
        %v3261 = vpop.permute.xlu0 %3260
        %v3262 = vlaneseq
        %v3263 = vshrl.u32 %v3262, 7
        %v3264 = vsub.s32 %v961, %v3263
        %v3265 = vrot.slane %v3258, %v3264
        %v3266 = vlaneseq
        %v3267 = vshrl.u32 %v3266, 7
        %v3268 = vsub.s32 %v961, %v3267
        %v3269 = vrot.slane %v3261, %v3268
        %v3270 = vsel %vm970, %v3269, %v3265
        %v3272 = vsel %vm973, %v3270, 0.0
        %3273 = vadd.xlane.f32.xlu0 %v3272
        %v3274 = vpop.xlane.xlu0 %3273
        %v3275 = vrcp.pop %v3274
        %v3277 = vlaneseq
        %v3278 = vshrl.u32 %v3277, 7
        %v3279 = vsub.s32 0, %v3278
        %v3280 = vrot.slane %v3275, %v3279
        %v3281 = vlaneseq
        %v3282 = vshrl.u32 %v3281, 7
        %v3283 = vsub.s32 1, %v3282
        %v3284 = vrot.slane %v3275, %v3283
        %v3287 = vmul.f32 %v3251, %v3280
        %v3288 = vmul.f32 %v3253, %v3284
        %v3289 = vld [vmem:[%s1] sm:$0xff]
        %v3290 = vld [vmem:[%s1 + $0x8] sm:$0xff]
        %3292 = vset.pattern.permute.xlu0 0
        %3293 = vperm.xlu0 %3292, %v3287
        %v3294 = vpop.permute.xlu0 %3293
        %3297 = vset.pattern.permute.xlu0 0
        %3298 = vperm.xlu0 %3297, %v3288
        %v3299 = vpop.permute.xlu0 %3298
        %v3301 = vmul.f32 %v3294, %v3289
        %v3302 = vmul.f32 %v3299, %v3290
        %v3303 = vsel %vm745, %v3301, 0.0
        %v3304 = vrot.slane %v3303, 4
        %v3305 = vadd.f32 %v3303, %v3304
        %v3306 = vrot.slane %v3305, 2
        %v3307 = vadd.f32 %v3305, %v3306
        %v3308 = vrot.slane %v3307, 1
        %v3309 = vadd.f32 %v3307, %v3308
        %v3310 = vsel %vm745, %v3302, 0.0
        %v3311 = vrot.slane %v3310, 4
        %v3312 = vadd.f32 %v3310, %v3311
        %v3313 = vrot.slane %v3312, 2
        %v3314 = vadd.f32 %v3312, %v3313
        %v3315 = vrot.slane %v3314, 1
        %v3316 = vadd.f32 %v3314, %v3315
        %v3317 = vpack.c.bf16 %v3309, %v3309
        %v3318 = vpack.c.bf16 %v3316, %v3316
        %v3319 = vld [vmem:[%s10] sm:$0xf]
        %v3320 = vld [vmem:[%s10 + $0x4] sm:$0xf]
        %v3321 = vld [vmem:[%s10 + $0x8] sm:$0xf]
        %v3322 = vld [vmem:[%s10 + $0xc] sm:$0xf]
        %v3323 = vld [vmem:[%s10 + $0x10] sm:$0xf]
        %v3324 = vld [vmem:[%s10 + $0x14] sm:$0xf]
        %v3325 = vld [vmem:[%s10 + $0x18] sm:$0xf]
        %v3326 = vld [vmem:[%s10 + $0x1c] sm:$0xf]
        %v3327 = vld [vmem:[%s11] sm:$0x1]
        %v3329 = vlaneseq
        %v3330 = vshrl.u32 %v3329, 7
        %v3331 = vsub.s32 0, %v3330
        %v3332 = vrot.slane %v3327, %v3331
        %v3336 = vunpack.c.l.b16 %v3317
        %v3337 = vunpack.c.l.b16 %v3318
        %v3338 = vsel %vm970, %v3337, %v3336
        %v3339 = vpack.c.b16 %v3338, %v3338
        %v3348 = vunpack.c.l.b16 %v3319
        %v3349 = vunpack.c.l.b16 %v3320
        %v3350 = vunpack.c.l.b16 %v3321
        %v3351 = vunpack.c.l.b16 %v3322
        %v3352 = vunpack.c.l.b16 %v3323
        %v3353 = vunpack.c.l.b16 %v3324
        %v3354 = vunpack.c.l.b16 %v3325
        %v3355 = vunpack.c.l.b16 %v3326
        %v3356 = vpack.c.b16 %v3349, %v3348
        %v3357 = vpack.c.b16 %v3351, %v3350
        %v3358 = vpack.c.b16 %v3353, %v3352
        %v3359 = vpack.c.b16 %v3355, %v3354
        %v3365 = vsel %vm745, %v3339, 0
        %3367 = vmatprep.subr.bf16.mxu0 0
        %3368 = vmatpush1.bf16.msra.mxu0 %v3356
        %3369 = vmatprep.subr.bf16.mxu0 0
        %3370 = vmatpush1.bf16.msra.mxu0 %v3357
        %3371 = vmatprep.subr.bf16.mxu0 0
        %3372 = vmatpush1.bf16.msra.mxu0 %v3358
        %3373 = vmatprep.subr.bf16.mxu0 0
        %3374 = vmatpush1.bf16.msra.mxu0 %v3359
        %3375 = vmatprep.subr.bf16.mxu0 0
        %3376 = vmatpush1.bf16.msra.mxu0 0
        %3377 = vmatprep.subr.bf16.mxu0 0
        %3378 = vmatpush1.bf16.msra.mxu0 0
        %3379 = vmatprep.subr.bf16.mxu0 0
        %3380 = vmatpush1.bf16.msra.mxu0 0
        %3381 = vmatprep.subr.bf16.mxu0 0
        %3382 = vmatpush1.bf16.msra.mxu0 0
        %3383 = vmatprep.subr.bf16.mxu0 0
        %3384 = vmatpush1.bf16.msra.mxu0 0
        %3385 = vmatprep.subr.bf16.mxu0 0
        %3386 = vmatpush1.bf16.msra.mxu0 0
        %3387 = vmatprep.subr.bf16.mxu0 0
        %3388 = vmatpush1.bf16.msra.mxu0 0
        %3389 = vmatprep.subr.bf16.mxu0 0
        %3390 = vmatpush1.bf16.msra.mxu0 0
        %3391 = vmatprep.subr.bf16.mxu0 0
        %3392 = vmatpush1.bf16.msra.mxu0 0
        %3393 = vmatprep.subr.bf16.mxu0 0
        %3394 = vmatpush1.bf16.msra.mxu0 0
        %3395 = vmatprep.subr.bf16.mxu0 0
        %3396 = vmatpush1.bf16.msra.mxu0 0
        %3397 = vmatprep.subr.bf16.mxu0 0
        %3398 = vmatpush1.bf16.msra.mxu0 0
        %3399 = vmatprep.mubr.bf16.mxu0 0
        %3400 = vmatmul.mubr.bf16.gmra.mrb[0].mxu0 %v3365
        %v3401 = vpop.f32.mrb[0].mxu0
        %v3402 = vadd.f32 %v3332, %v3401
        %v3403 = vpop.f32.mrb[0].mxu0
        %v3404 = vpop.f32.mrb[0].mxu0
        %v3405 = vpop.f32.mrb[0].mxu0
        %3406 = vdwg.mxu0
        %v3407 = vpack.c.bf16 %v3402, %v3402
        %v3408 = vld [vmem:[%s13] sm:$0xf]
        %v3409 = vld [vmem:[%s13 + $0x4] sm:$0xf]
        %v3410 = vld [vmem:[%s13 + $0x8] sm:$0xf]
        %v3411 = vld [vmem:[%s13 + $0xc] sm:$0xf]
        %v3416 = vunpack.c.l.b16 %v3408
        %v3417 = vunpack.c.l.b16 %v3409
        %v3418 = vunpack.c.l.b16 %v3410
        %v3419 = vunpack.c.l.b16 %v3411
        %v3420 = vpack.c.b16 %v3417, %v3416
        %v3421 = vpack.c.b16 %v3419, %v3418
        %v3425 = vsel %vm609, %v3407, 0
        %3427 = vmatprep.subr.bf16.mxu0 0
        %3428 = vmatpush1.bf16.msra.mxu0 %v3420
        %3429 = vmatprep.subr.bf16.mxu0 0
        %3430 = vmatpush1.bf16.msra.mxu0 %v3421
        %3431 = vmatprep.subr.bf16.mxu0 0
        %3432 = vmatpush1.bf16.msra.mxu0 0
        %3433 = vmatprep.subr.bf16.mxu0 0
        %3434 = vmatpush1.bf16.msra.mxu0 0
        %3435 = vmatprep.subr.bf16.mxu0 0
        %3436 = vmatpush1.bf16.msra.mxu0 0
        %3437 = vmatprep.subr.bf16.mxu0 0
        %3438 = vmatpush1.bf16.msra.mxu0 0
        %3439 = vmatprep.subr.bf16.mxu0 0
        %3440 = vmatpush1.bf16.msra.mxu0 0
        %3441 = vmatprep.subr.bf16.mxu0 0
        %3442 = vmatpush1.bf16.msra.mxu0 0
        %3443 = vmatprep.subr.bf16.mxu0 0
        %3444 = vmatpush1.bf16.msra.mxu0 0
        %3445 = vmatprep.subr.bf16.mxu0 0
        %3446 = vmatpush1.bf16.msra.mxu0 0
        %3447 = vmatprep.subr.bf16.mxu0 0
        %3448 = vmatpush1.bf16.msra.mxu0 0
        %3449 = vmatprep.subr.bf16.mxu0 0
        %3450 = vmatpush1.bf16.msra.mxu0 0
        %3451 = vmatprep.subr.bf16.mxu0 0
        %3452 = vmatpush1.bf16.msra.mxu0 0
        %3453 = vmatprep.subr.bf16.mxu0 0
        %3454 = vmatpush1.bf16.msra.mxu0 0
        %3455 = vmatprep.subr.bf16.mxu0 0
        %3456 = vmatpush1.bf16.msra.mxu0 0
        %3457 = vmatprep.subr.bf16.mxu0 0
        %3458 = vmatpush1.bf16.msra.mxu0 0
        %3459 = vmatprep.mubr.bf16.mxu0 0
        %3460 = vmatmul.mubr.bf16.gmra.mrb[0].mxu0 %v3425
        %v3461 = vpop.f32.mrb[0].mxu0
        %v3462 = vadd.f32 0.0, %v3461
        %v3463 = vpop.f32.mrb[0].mxu0
        %v3464 = vpop.f32.mrb[0].mxu0
        %v3465 = vpop.f32.mrb[0].mxu0
        %3466 = vdwg.mxu0
        %v3467 = vld [vmem:[%s5] sm:$0x3]
        %v3468 = vadd.f32 %v3467, %v3462
        %3469 = vrot.lane.b32.xlu0 %v3147, 96
        %v3470 = vpop.permute.xlu0 %3469
        %v3472 = vadd.f32 %v3468, %v3470
        %v3473 = vxor.u32 %v3472, 2147483648
        %v3474 = vmul.f32 %v3473, 1.442695
        %v3475 = vpow.pop %v3474
        %v3476 = vadd.f32 %v3475, 1.0
        %v3477 = vrcp.pop %v3476
        %v3478 = vmul.f32 1.0, %v3477
        %v3479 = vld [vmem:[%s6] sm:$0x3]
        %3481 = vrot.lane.b32.xlu0 %v3462, 96
        %v3482 = vpop.permute.xlu0 %3481
        %v3484 = vadd.f32 %v3479, %v3482
        %3486 = vrot.lane.b32.xlu0 %v3147, 64
        %v3487 = vpop.permute.xlu0 %3486
        %3488 = vrot.lane.b32.xlu0 %v3149, 64
        %v3489 = vpop.permute.xlu0 %3488
        %v3490 = vsel %vm745, %v3487, %v3489
        %v3492 = vadd.f32 %v3484, %v3490
        %v3493 = vxor.u32 %v3492, 2147483648
        %v3494 = vmul.f32 %v3493, 1.442695
        %v3495 = vpow.pop %v3494
        %v3496 = vadd.f32 %v3495, 1.0
        %v3497 = vrcp.pop %v3496
        %v3498 = vmul.f32 1.0, %v3497
        %v3499 = vld [vmem:[%s4] sm:$0x3]
        %3501 = vrot.lane.b32.xlu0 %v3402, 64
        %v3502 = vpop.permute.xlu0 %3501
        %v3504 = vsel %vm745, %v3499, %v3502
        %v3505 = vmul.f32 %v3498, %v3504
        %v3506 = vpack.c.bf16 %v3505, %v3505
        %v3507 = vld [vmem:[%s14] sm:$0xf]
        %v3508 = vld [vmem:[%s14 + $0x4] sm:$0xf]
        %v3509 = vld [vmem:[%s14 + $0x8] sm:$0xf]
        %v3510 = vld [vmem:[%s14 + $0xc] sm:$0xf]
        %v3511 = vld [vmem:[%s14 + $0x10] sm:$0xf]
        %v3512 = vld [vmem:[%s14 + $0x14] sm:$0xf]
        %v3513 = vld [vmem:[%s14 + $0x18] sm:$0xf]
        %v3514 = vld [vmem:[%s14 + $0x1c] sm:$0xf]
        %v3515 = vld [vmem:[%s14 + $0x20] sm:$0xf]
        %v3516 = vld [vmem:[%s14 + $0x24] sm:$0xf]
        %v3517 = vld [vmem:[%s14 + $0x28] sm:$0xf]
        %v3518 = vld [vmem:[%s14 + $0x2c] sm:$0xf]
        %v3531 = vunpack.c.l.b16 %v3507
        %v3532 = vunpack.c.l.b16 %v3508
        %v3533 = vunpack.c.l.b16 %v3509
        %v3534 = vunpack.c.l.b16 %v3510
        %v3535 = vunpack.c.l.b16 %v3511
        %v3536 = vunpack.c.l.b16 %v3512
        %v3537 = vunpack.c.l.b16 %v3513
        %v3538 = vunpack.c.l.b16 %v3514
        %v3539 = vunpack.c.l.b16 %v3515
        %v3540 = vunpack.c.l.b16 %v3516
        %v3541 = vunpack.c.l.b16 %v3517
        %v3542 = vunpack.c.l.b16 %v3518
        %v3543 = vpack.c.b16 %v3532, %v3531
        %v3544 = vpack.c.b16 %v3534, %v3533
        %v3545 = vpack.c.b16 %v3536, %v3535
        %v3546 = vpack.c.b16 %v3538, %v3537
        %v3547 = vpack.c.b16 %v3540, %v3539
        %v3548 = vpack.c.b16 %v3542, %v3541
        %3555 = vrot.lane.b32.xlu0 %v3149, 96
        %v3556 = vpop.permute.xlu0 %3555
        %v3559 = vsel %vm1298, %v3506, 0
        %3561 = vmatprep.subr.bf16.mxu0 0
        %3562 = vmatpush1.bf16.msra.mxu0 %v3543
        %3563 = vmatprep.subr.bf16.mxu0 0
        %3564 = vmatpush1.bf16.msra.mxu0 %v3544
        %3565 = vmatprep.subr.bf16.mxu0 0
        %3566 = vmatpush1.bf16.msra.mxu0 %v3545
        %3567 = vmatprep.subr.bf16.mxu0 0
        %3568 = vmatpush1.bf16.msra.mxu0 %v3546
        %3569 = vmatprep.subr.bf16.mxu0 0
        %3570 = vmatpush1.bf16.msra.mxu0 %v3547
        %3571 = vmatprep.subr.bf16.mxu0 0
        %3572 = vmatpush1.bf16.msra.mxu0 %v3548
        %3573 = vmatprep.subr.bf16.mxu0 0
        %3574 = vmatpush1.bf16.msra.mxu0 0
        %3575 = vmatprep.subr.bf16.mxu0 0
        %3576 = vmatpush1.bf16.msra.mxu0 0
        %3577 = vmatprep.subr.bf16.mxu0 0
        %3578 = vmatpush1.bf16.msra.mxu0 0
        %3579 = vmatprep.subr.bf16.mxu0 0
        %3580 = vmatpush1.bf16.msra.mxu0 0
        %3581 = vmatprep.subr.bf16.mxu0 0
        %3582 = vmatpush1.bf16.msra.mxu0 0
        %3583 = vmatprep.subr.bf16.mxu0 0
        %3584 = vmatpush1.bf16.msra.mxu0 0
        %3585 = vmatprep.subr.bf16.mxu0 0
        %3586 = vmatpush1.bf16.msra.mxu0 0
        %3587 = vmatprep.subr.bf16.mxu0 0
        %3588 = vmatpush1.bf16.msra.mxu0 0
        %3589 = vmatprep.subr.bf16.mxu0 0
        %3590 = vmatpush1.bf16.msra.mxu0 0
        %3591 = vmatprep.subr.bf16.mxu0 0
        %3592 = vmatpush1.bf16.msra.mxu0 0
        %3593 = vmatprep.mubr.bf16.mxu0 0
        %3594 = vmatmul.mubr.bf16.gmra.mrb[0].mxu0 %v3559
        %v3595 = vpop.f32.mrb[0].mxu0
        %v3596 = vadd.f32 %v3556, %v3595
        %v3597 = vpop.f32.mrb[0].mxu0
        %v3598 = vpop.f32.mrb[0].mxu0
        %v3599 = vpop.f32.mrb[0].mxu0
        %3600 = vdwg.mxu0
        %v3601 = vld [vmem:[%s15] sm:$0x1]
        %v3603 = vlaneseq
        %v3604 = vshrl.u32 %v3603, 7
        %v3605 = vsub.s32 0, %v3604
        %v3606 = vrot.slane %v3601, %v3605
        %v3608 = vadd.f32 %v3596, %v3606
        %v3609 = vtanh.pop %v3608
        %v3610 = vsub.f32 1.0, %v3478
        %3612 = vrot.lane.b32.xlu0 %v3080, 32
        %v3613 = vpop.permute.xlu0 %3612
        %v3615 = vmul.f32 %v3610, %v3613
        %v3616 = vmul.f32 %v3478, %v3609
        %v3617 = vadd.f32 %v3615, %v3616
        %s3618 = scalar_lea.vmem %s571, 6
        %3619 = vst.msk [vmem:[%s3618] sm:$0x3] %vm1359, %v3617
        %s3620 = scalar_lea.vmem %s565, 4
        %v3621 = vld [vmem:[%s3620] sm:$0x1]
        %v3622 = vunpack.c.l.bf16 %v3621
        %v3623 = vpack.c.bf16 %v2957, %v2957
        %v3624 = vld [vmem:[%s7] sm:$0xf]
        %v3625 = vld [vmem:[%s7 + $0x4] sm:$0xf]
        %v3626 = vld [vmem:[%s7 + $0x8] sm:$0xf]
        %v3627 = vld [vmem:[%s7 + $0xc] sm:$0xf]
        %3629 = vrot.lane.b32.xlu0 %v3623, 32
        %v3630 = vpop.permute.xlu0 %3629
        %v3635 = vunpack.c.l.b16 %v3624
        %v3636 = vunpack.c.l.b16 %v3625
        %v3637 = vunpack.c.l.b16 %v3626
        %v3638 = vunpack.c.l.b16 %v3627
        %v3639 = vpack.c.b16 %v3636, %v3635
        %v3640 = vpack.c.b16 %v3638, %v3637
        %v3644 = vsel %vm609, %v3630, 0
        %3646 = vmatprep.subr.bf16.mxu0 0
        %3647 = vmatpush1.bf16.msra.mxu0 %v3639
        %3648 = vmatprep.subr.bf16.mxu0 0
        %3649 = vmatpush1.bf16.msra.mxu0 %v3640
        %3650 = vmatprep.subr.bf16.mxu0 0
        %3651 = vmatpush1.bf16.msra.mxu0 0
        %3652 = vmatprep.subr.bf16.mxu0 0
        %3653 = vmatpush1.bf16.msra.mxu0 0
        %3654 = vmatprep.subr.bf16.mxu0 0
        %3655 = vmatpush1.bf16.msra.mxu0 0
        %3656 = vmatprep.subr.bf16.mxu0 0
        %3657 = vmatpush1.bf16.msra.mxu0 0
        %3658 = vmatprep.subr.bf16.mxu0 0
        %3659 = vmatpush1.bf16.msra.mxu0 0
        %3660 = vmatprep.subr.bf16.mxu0 0
        %3661 = vmatpush1.bf16.msra.mxu0 0
        %3662 = vmatprep.subr.bf16.mxu0 0
        %3663 = vmatpush1.bf16.msra.mxu0 0
        %3664 = vmatprep.subr.bf16.mxu0 0
        %3665 = vmatpush1.bf16.msra.mxu0 0
        %3666 = vmatprep.subr.bf16.mxu0 0
        %3667 = vmatpush1.bf16.msra.mxu0 0
        %3668 = vmatprep.subr.bf16.mxu0 0
        %3669 = vmatpush1.bf16.msra.mxu0 0
        %3670 = vmatprep.subr.bf16.mxu0 0
        %3671 = vmatpush1.bf16.msra.mxu0 0
        %3672 = vmatprep.subr.bf16.mxu0 0
        %3673 = vmatpush1.bf16.msra.mxu0 0
        %3674 = vmatprep.subr.bf16.mxu0 0
        %3675 = vmatpush1.bf16.msra.mxu0 0
        %3676 = vmatprep.subr.bf16.mxu0 0
        %3677 = vmatpush1.bf16.msra.mxu0 0
        %3678 = vmatprep.mubr.bf16.mxu0 0
        %3679 = vmatmul.mubr.bf16.gmra.mrb[0].mxu0 %v3644
        %v3680 = vpop.f32.mrb[0].mxu0
        %v3681 = vadd.f32 0.0, %v3680
        %v3682 = vpop.f32.mrb[0].mxu0
        %v3683 = vpop.f32.mrb[0].mxu0
        %v3684 = vpop.f32.mrb[0].mxu0
        %3685 = vdwg.mxu0
        %v3686 = vadd.f32 %v3622, %v3681
        %v3687 = vxor.u32 %v3686, 2147483648
        %v3688 = vmul.f32 %v3687, 1.442695
        %v3689 = vpow.pop %v3688
        %v3690 = vadd.f32 %v3689, 1.0
        %v3691 = vrcp.pop %v3690
        %v3692 = vmul.f32 1.0, %v3691
        %v3693 = vtanh.pop %v3686
        %v3694 = vmul.f32 %v3692, %v2951
        %3696 = vrot.lane.b32.xlu0 %v3693, 64
        %v3697 = vpop.permute.xlu0 %3696
        %v3699 = vmul.f32 %v3692, %v3697
        %3701 = vrot.lane.b32.xlu0 %v3699, 32
        %v3702 = vpop.permute.xlu0 %3701
        %v3704 = vadd.f32 %v3694, %v3702
        %v3705 = vtanh.pop %v3704
        %3707 = vrot.lane.b32.xlu0 %v3705, 64
        %v3708 = vpop.permute.xlu0 %3707
        %v3710 = vmul.f32 %v3692, %v3708
        %v3713 = vunpack.c.l.s4 1983009808
        %v3714 = vunpack.c.0.s8 %v3713
        %v3715 = vlaneseq
        %v3716 = vshrl.u32 %v3715, 7
        %v3717 = vsub.s32 %v3714, %v3716
        %v3718 = vrot.slane %v3710, %v3717
        %3719 = vrot.lane.b32.xlu0 %v3718, 32
        %v3720 = vpop.permute.xlu0 %3719
        %3723 = vrot.lane.b32.xlu0 %v3617, 32
        %v3724 = vpop.permute.xlu0 %3723
        %v3726 = vsel %vm609, %v3720, %v3724
        %v3727 = vpack.c.bf16 %v3726, %v3726
        %v3728 = vld [vmem:[%s8] sm:$0xf]
        %v3729 = vld [vmem:[%s8 + $0x4] sm:$0xf]
        %v3730 = vld [vmem:[%s8 + $0x8] sm:$0xf]
        %v3731 = vld [vmem:[%s8 + $0xc] sm:$0xf]
        %v3732 = vld [vmem:[%s8 + $0x10] sm:$0xf]
        %v3733 = vld [vmem:[%s8 + $0x14] sm:$0xf]
        %v3734 = vld [vmem:[%s8 + $0x18] sm:$0xf]
        %v3735 = vld [vmem:[%s8 + $0x1c] sm:$0xf]
        %v3736 = vld [vmem:[%s9] sm:$0x1]
        %v3738 = vlaneseq
        %v3739 = vshrl.u32 %v3738, 7
        %v3740 = vsub.s32 0, %v3739
        %v3741 = vrot.slane %v3736, %v3740
        %v3751 = vunpack.c.l.b16 %v3728
        %v3752 = vunpack.c.l.b16 %v3729
        %v3753 = vunpack.c.l.b16 %v3730
        %v3754 = vunpack.c.l.b16 %v3731
        %v3755 = vunpack.c.l.b16 %v3732
        %v3756 = vunpack.c.l.b16 %v3733
        %v3757 = vunpack.c.l.b16 %v3734
        %v3758 = vunpack.c.l.b16 %v3735
        %v3759 = vpack.c.b16 %v3752, %v3751
        %v3760 = vpack.c.b16 %v3754, %v3753
        %v3761 = vpack.c.b16 %v3756, %v3755
        %v3762 = vpack.c.b16 %v3758, %v3757
        %v3768 = vsel %vm745, %v3727, 0
        %3770 = vmatprep.subr.bf16.mxu0 0
        %3771 = vmatpush1.bf16.msra.mxu0 %v3759
        %3772 = vmatprep.subr.bf16.mxu0 0
        %3773 = vmatpush1.bf16.msra.mxu0 %v3760
        %3774 = vmatprep.subr.bf16.mxu0 0
        %3775 = vmatpush1.bf16.msra.mxu0 %v3761
        %3776 = vmatprep.subr.bf16.mxu0 0
        %3777 = vmatpush1.bf16.msra.mxu0 %v3762
        %3778 = vmatprep.subr.bf16.mxu0 0
        %3779 = vmatpush1.bf16.msra.mxu0 0
        %3780 = vmatprep.subr.bf16.mxu0 0
        %3781 = vmatpush1.bf16.msra.mxu0 0
        %3782 = vmatprep.subr.bf16.mxu0 0
        %3783 = vmatpush1.bf16.msra.mxu0 0
        %3784 = vmatprep.subr.bf16.mxu0 0
        %3785 = vmatpush1.bf16.msra.mxu0 0
        %3786 = vmatprep.subr.bf16.mxu0 0
        %3787 = vmatpush1.bf16.msra.mxu0 0
        %3788 = vmatprep.subr.bf16.mxu0 0
        %3789 = vmatpush1.bf16.msra.mxu0 0
        %3790 = vmatprep.subr.bf16.mxu0 0
        %3791 = vmatpush1.bf16.msra.mxu0 0
        %3792 = vmatprep.subr.bf16.mxu0 0
        %3793 = vmatpush1.bf16.msra.mxu0 0
        %3794 = vmatprep.subr.bf16.mxu0 0
        %3795 = vmatpush1.bf16.msra.mxu0 0
        %3796 = vmatprep.subr.bf16.mxu0 0
        %3797 = vmatpush1.bf16.msra.mxu0 0
        %3798 = vmatprep.subr.bf16.mxu0 0
        %3799 = vmatpush1.bf16.msra.mxu0 0
        %3800 = vmatprep.subr.bf16.mxu0 0
        %3801 = vmatpush1.bf16.msra.mxu0 0
        %3802 = vmatprep.mubr.bf16.mxu0 0
        %3803 = vmatmul.mubr.bf16.gmra.mrb[0].mxu0 %v3768
        %v3804 = vpop.f32.mrb[0].mxu0
        %v3805 = vadd.f32 %v3741, %v3804
        %v3806 = vpop.f32.mrb[0].mxu0
        %v3807 = vpop.f32.mrb[0].mxu0
        %v3808 = vpop.f32.mrb[0].mxu0
        %3809 = vdwg.mxu0
        %v3810 = vxor.u32 %v3805, 2147483648
        %v3811 = vmul.f32 %v3810, 1.442695
        %v3812 = vpow.pop %v3811
        %v3813 = vadd.f32 %v3812, 1.0
        %v3814 = vrcp.pop %v3813
        %v3815 = vmul.f32 1.0, %v3814
        %v3816 = vtanh.pop %v3805
        %v3817 = vmul.f32 %v3815, %v3074
        %3819 = vrot.lane.b32.xlu0 %v3816, 64
        %v3820 = vpop.permute.xlu0 %3819
        %v3822 = vmul.f32 %v3815, %v3820
        %3824 = vrot.lane.b32.xlu0 %v3822, 32
        %v3825 = vpop.permute.xlu0 %3824
        %v3827 = vadd.f32 %v3817, %v3825
        %v3828 = vtanh.pop %v3827
        %3830 = vrot.lane.b32.xlu0 %v3828, 64
        %v3831 = vpop.permute.xlu0 %3830
        %v3833 = vmul.f32 %v3815, %v3831
        %v3834 = vpack.c.bf16 %v3833, %v3833
        %v3835 = vld [vmem:[%s12] sm:$0xff]
        %v3836 = vld [vmem:[%s12 + $0x8] sm:$0xff]
        %v3837 = vld [vmem:[%s12 + $0x10] sm:$0xff]
        %v3838 = vld [vmem:[%s12 + $0x18] sm:$0xff]
        %3840 = vrot.lane.b32.xlu0 %v3834, 32
        %v3841 = vpop.permute.xlu0 %3840
        %v3846 = vunpack.c.l.b16 %v3835
        %v3847 = vunpack.c.h.b16 %v3835
        %v3848 = vunpack.c.l.b16 %v3836
        %v3849 = vunpack.c.h.b16 %v3836
        %v3850 = vunpack.c.l.b16 %v3837
        %v3851 = vunpack.c.h.b16 %v3837
        %v3852 = vunpack.c.l.b16 %v3838
        %v3853 = vunpack.c.h.b16 %v3838
        %v3854 = vpack.c.b16 %v3848, %v3846
        %v3855 = vpack.c.b16 %v3849, %v3847
        %v3856 = vpack.c.b16 %v3852, %v3850
        %v3857 = vpack.c.b16 %v3853, %v3851
        %v3863 = vsel %vm609, %v3841, 0
        %3865 = vmatprep.subr.bf16.mxu0 %v3855
        %3866 = vmatpush1.bf16.msra.mxu0 %v3854
        %3867 = vmatprep.subr.bf16.mxu0 %v3857
        %3868 = vmatpush1.bf16.msra.mxu0 %v3856
        %3869 = vmatprep.subr.bf16.mxu0 0
        %3870 = vmatpush1.bf16.msra.mxu0 0
        %3871 = vmatprep.subr.bf16.mxu0 0
        %3872 = vmatpush1.bf16.msra.mxu0 0
        %3873 = vmatprep.subr.bf16.mxu0 0
        %3874 = vmatpush1.bf16.msra.mxu0 0
        %3875 = vmatprep.subr.bf16.mxu0 0
        %3876 = vmatpush1.bf16.msra.mxu0 0
        %3877 = vmatprep.subr.bf16.mxu0 0
        %3878 = vmatpush1.bf16.msra.mxu0 0
        %3879 = vmatprep.subr.bf16.mxu0 0
        %3880 = vmatpush1.bf16.msra.mxu0 0
        %3881 = vmatprep.subr.bf16.mxu0 0
        %3882 = vmatpush1.bf16.msra.mxu0 0
        %3883 = vmatprep.subr.bf16.mxu0 0
        %3884 = vmatpush1.bf16.msra.mxu0 0
        %3885 = vmatprep.subr.bf16.mxu0 0
        %3886 = vmatpush1.bf16.msra.mxu0 0
        %3887 = vmatprep.subr.bf16.mxu0 0
        %3888 = vmatpush1.bf16.msra.mxu0 0
        %3889 = vmatprep.subr.bf16.mxu0 0
        %3890 = vmatpush1.bf16.msra.mxu0 0
        %3891 = vmatprep.subr.bf16.mxu0 0
        %3892 = vmatpush1.bf16.msra.mxu0 0
        %3893 = vmatprep.subr.bf16.mxu0 0
        %3894 = vmatpush1.bf16.msra.mxu0 0
        %3895 = vmatprep.subr.bf16.mxu0 0
        %3896 = vmatpush1.bf16.msra.mxu0 0
        %3897 = vmatprep.mubr.bf16.mxu0 0
        %3898 = vmatmul.mubr.bf16.gmra.mrb[0].mxu0 %v3863
        %v3899 = vpop.f32.mrb[0].mxu0
        %v3900 = vadd.f32 0.0, %v3899
        %v3901 = vpop.f32.mrb[0].mxu0
        %v3902 = vadd.f32 0.0, %v3901
        %v3903 = vpop.f32.mrb[0].mxu0
        %v3904 = vpop.f32.mrb[0].mxu0
        %3905 = vdwg.mxu0
        %v3906 = vld [vmem:[%s3] sm:$0xff]
        %v3907 = vld [vmem:[%s3 + $0x8] sm:$0xff]
        %v3910 = vunpack.c.l.s4 1966171168
        %v3911 = vunpack.c.0.s8 %v3910
        %v3912 = vlaneseq
        %v3913 = vshrl.u32 %v3912, 7
        %v3914 = vsub.s32 %v3911, %v3913
        %v3915 = vrot.slane %v3900, %v3914
        %v3916 = vcombine.high %v3915, %v3915
        %v3918 = vunpack.c.l.s4 1966171168
        %v3919 = vunpack.c.0.s8 %v3918
        %v3920 = vlaneseq
        %v3921 = vshrl.u32 %v3920, 7
        %v3922 = vsub.s32 %v3919, %v3921
        %v3923 = vrot.slane %v3915, %v3922
        %v3925 = vunpack.c.l.s4 1966171168
        %v3926 = vunpack.c.0.s8 %v3925
        %v3927 = vlaneseq
        %v3928 = vshrl.u32 %v3927, 7
        %v3929 = vsub.s32 %v3926, %v3928
        %v3930 = vrot.slane %v3916, %v3929
        %v3931 = vlaneseq
        %v3932 = vshrl.u32 %v3931, 7
        %v3933 = vsub.s32 0, %v3932
        %v3934 = vrot.slane %v3923, %v3933
        %v3935 = vlaneseq
        %v3936 = vshrl.u32 %v3935, 7
        %v3937 = vsub.s32 0, %v3936
        %v3938 = vrot.slane %v3930, %v3937
        %v3941 = vmul.f32 %v3906, %v3934
        %v3942 = vmul.f32 %v3907, %v3938
        %v3943 = vsel %vm609, %v3941, 0.0
        %3944 = vadd.xlane.f32.xlu0 %v3943
        %v3945 = vpop.xlane.xlu0 %3944
        %v3946 = vsel %vm609, %v3942, 0.0
        %3947 = vadd.xlane.f32.xlu0 %v3946
        %v3948 = vpop.xlane.xlu0 %3947
        %v3949 = vld [vmem:[%s2] sm:$0x3]
        %v3951 = vlaneseq
        %v3952 = vshrl.u32 %v3951, 7
        %v3953 = vsub.s32 0, %v3952
        %v3954 = vrot.slane %v3949, %v3953
        %3956 = vbcast.lane.b32.xlu0 %v3954, 256
        %v3957 = vpop.permute.xlu0 %3956
        %v3958 = vlaneseq
        %v3959 = vshrl.u32 %v3958, 7
        %v3960 = vsub.s32 1, %v3959
        %v3961 = vrot.slane %v3949, %v3960
        %3963 = vbcast.lane.b32.xlu0 %v3961, 256
        %v3964 = vpop.permute.xlu0 %3963
        %v3967 = vadd.f32 %v3945, %v3957
        %v3968 = vadd.f32 %v3948, %v3964
        %3971 = vset.pattern.permute.xlu0 0
        %3972 = vperm.xlu0 %3971, %v3967
        %v3973 = vpop.permute.xlu0 %3972
        %3974 = vset.pattern.permute.xlu0 0
        %3975 = vperm.xlu0 %3974, %v3968
        %v3976 = vpop.permute.xlu0 %3975
        %v3977 = vlaneseq
        %v3978 = vshrl.u32 %v3977, 7
        %v3979 = vsub.s32 %v961, %v3978
        %v3980 = vrot.slane %v3973, %v3979
        %v3981 = vlaneseq
        %v3982 = vshrl.u32 %v3981, 7
        %v3983 = vsub.s32 %v961, %v3982
        %v3984 = vrot.slane %v3976, %v3983
        %v3985 = vsel %vm970, %v3984, %v3980
        %v3987 = vsel %vm973, %v3985, -inf
        %3988 = vmax.xlane.f32.xlu0 %v3987
        %v3989 = vpop.xlane.xlu0 %3988
        %v3991 = vlaneseq
        %v3992 = vshrl.u32 %v3991, 7
        %v3993 = vsub.s32 0, %v3992
        %v3994 = vrot.slane %v3989, %v3993
        %v3995 = vlaneseq
        %v3996 = vshrl.u32 %v3995, 7
        %v3997 = vsub.s32 1, %v3996
        %v3998 = vrot.slane %v3989, %v3997
        %v4001 = vsub.f32 %v3967, %v3994
        %v4002 = vsub.f32 %v3968, %v3998
        %v4003 = vmul.f32 %v4001, 1.442695
        %v4004 = vpow.pop %v4003
        %v4005 = vmul.f32 %v4002, 1.442695
        %v4006 = vpow.pop %v4005
        %4009 = vset.pattern.permute.xlu0 0
        %4010 = vperm.xlu0 %4009, %v4004
        %v4011 = vpop.permute.xlu0 %4010
        %4012 = vset.pattern.permute.xlu0 0
        %4013 = vperm.xlu0 %4012, %v4006
        %v4014 = vpop.permute.xlu0 %4013
        %v4015 = vlaneseq
        %v4016 = vshrl.u32 %v4015, 7
        %v4017 = vsub.s32 %v961, %v4016
        %v4018 = vrot.slane %v4011, %v4017
        %v4019 = vlaneseq
        %v4020 = vshrl.u32 %v4019, 7
        %v4021 = vsub.s32 %v961, %v4020
        %v4022 = vrot.slane %v4014, %v4021
        %v4023 = vsel %vm970, %v4022, %v4018
        %v4025 = vsel %vm973, %v4023, 0.0
        %4026 = vadd.xlane.f32.xlu0 %v4025
        %v4027 = vpop.xlane.xlu0 %4026
        %v4028 = vrcp.pop %v4027
        %v4030 = vlaneseq
        %v4031 = vshrl.u32 %v4030, 7
        %v4032 = vsub.s32 0, %v4031
        %v4033 = vrot.slane %v4028, %v4032
        %v4034 = vlaneseq
        %v4035 = vshrl.u32 %v4034, 7
        %v4036 = vsub.s32 1, %v4035
        %v4037 = vrot.slane %v4028, %v4036
        %v4040 = vmul.f32 %v4004, %v4033
        %v4041 = vmul.f32 %v4006, %v4037
        %v4042 = vld [vmem:[%s1] sm:$0xff]
        %v4043 = vld [vmem:[%s1 + $0x8] sm:$0xff]
        %4045 = vset.pattern.permute.xlu0 0
        %4046 = vperm.xlu0 %4045, %v4040
        %v4047 = vpop.permute.xlu0 %4046
        %4050 = vset.pattern.permute.xlu0 0
        %4051 = vperm.xlu0 %4050, %v4041
        %v4052 = vpop.permute.xlu0 %4051
        %v4054 = vmul.f32 %v4047, %v4042
        %v4055 = vmul.f32 %v4052, %v4043
        %v4056 = vsel %vm745, %v4054, 0.0
        %v4057 = vrot.slane %v4056, 4
        %v4058 = vadd.f32 %v4056, %v4057
        %v4059 = vrot.slane %v4058, 2
        %v4060 = vadd.f32 %v4058, %v4059
        %v4061 = vrot.slane %v4060, 1
        %v4062 = vadd.f32 %v4060, %v4061
        %v4063 = vsel %vm745, %v4055, 0.0
        %v4064 = vrot.slane %v4063, 4
        %v4065 = vadd.f32 %v4063, %v4064
        %v4066 = vrot.slane %v4065, 2
        %v4067 = vadd.f32 %v4065, %v4066
        %v4068 = vrot.slane %v4067, 1
        %v4069 = vadd.f32 %v4067, %v4068
        %v4070 = vpack.c.bf16 %v4062, %v4062
        %v4071 = vpack.c.bf16 %v4069, %v4069
        %v4072 = vld [vmem:[%s10] sm:$0xf]
        %v4073 = vld [vmem:[%s10 + $0x4] sm:$0xf]
        %v4074 = vld [vmem:[%s10 + $0x8] sm:$0xf]
        %v4075 = vld [vmem:[%s10 + $0xc] sm:$0xf]
        %v4076 = vld [vmem:[%s10 + $0x10] sm:$0xf]
        %v4077 = vld [vmem:[%s10 + $0x14] sm:$0xf]
        %v4078 = vld [vmem:[%s10 + $0x18] sm:$0xf]
        %v4079 = vld [vmem:[%s10 + $0x1c] sm:$0xf]
        %v4080 = vld [vmem:[%s11] sm:$0x1]
        %v4082 = vlaneseq
        %v4083 = vshrl.u32 %v4082, 7
        %v4084 = vsub.s32 0, %v4083
        %v4085 = vrot.slane %v4080, %v4084
        %v4089 = vunpack.c.l.b16 %v4070
        %v4090 = vunpack.c.l.b16 %v4071
        %v4091 = vsel %vm970, %v4090, %v4089
        %v4092 = vpack.c.b16 %v4091, %v4091
        %v4101 = vunpack.c.l.b16 %v4072
        %v4102 = vunpack.c.l.b16 %v4073
        %v4103 = vunpack.c.l.b16 %v4074
        %v4104 = vunpack.c.l.b16 %v4075
        %v4105 = vunpack.c.l.b16 %v4076
        %v4106 = vunpack.c.l.b16 %v4077
        %v4107 = vunpack.c.l.b16 %v4078
        %v4108 = vunpack.c.l.b16 %v4079
        %v4109 = vpack.c.b16 %v4102, %v4101
        %v4110 = vpack.c.b16 %v4104, %v4103
        %v4111 = vpack.c.b16 %v4106, %v4105
        %v4112 = vpack.c.b16 %v4108, %v4107
        %v4118 = vsel %vm745, %v4092, 0
        %4120 = vmatprep.subr.bf16.mxu0 0
        %4121 = vmatpush1.bf16.msra.mxu0 %v4109
        %4122 = vmatprep.subr.bf16.mxu0 0
        %4123 = vmatpush1.bf16.msra.mxu0 %v4110
        %4124 = vmatprep.subr.bf16.mxu0 0
        %4125 = vmatpush1.bf16.msra.mxu0 %v4111
        %4126 = vmatprep.subr.bf16.mxu0 0
        %4127 = vmatpush1.bf16.msra.mxu0 %v4112
        %4128 = vmatprep.subr.bf16.mxu0 0
        %4129 = vmatpush1.bf16.msra.mxu0 0
        %4130 = vmatprep.subr.bf16.mxu0 0
        %4131 = vmatpush1.bf16.msra.mxu0 0
        %4132 = vmatprep.subr.bf16.mxu0 0
        %4133 = vmatpush1.bf16.msra.mxu0 0
        %4134 = vmatprep.subr.bf16.mxu0 0
        %4135 = vmatpush1.bf16.msra.mxu0 0
        %4136 = vmatprep.subr.bf16.mxu0 0
        %4137 = vmatpush1.bf16.msra.mxu0 0
        %4138 = vmatprep.subr.bf16.mxu0 0
        %4139 = vmatpush1.bf16.msra.mxu0 0
        %4140 = vmatprep.subr.bf16.mxu0 0
        %4141 = vmatpush1.bf16.msra.mxu0 0
        %4142 = vmatprep.subr.bf16.mxu0 0
        %4143 = vmatpush1.bf16.msra.mxu0 0
        %4144 = vmatprep.subr.bf16.mxu0 0
        %4145 = vmatpush1.bf16.msra.mxu0 0
        %4146 = vmatprep.subr.bf16.mxu0 0
        %4147 = vmatpush1.bf16.msra.mxu0 0
        %4148 = vmatprep.subr.bf16.mxu0 0
        %4149 = vmatpush1.bf16.msra.mxu0 0
        %4150 = vmatprep.subr.bf16.mxu0 0
        %4151 = vmatpush1.bf16.msra.mxu0 0
        %4152 = vmatprep.mubr.bf16.mxu0 0
        %4153 = vmatmul.mubr.bf16.gmra.mrb[0].mxu0 %v4118
        %v4154 = vpop.f32.mrb[0].mxu0
        %v4155 = vadd.f32 %v4085, %v4154
        %v4156 = vpop.f32.mrb[0].mxu0
        %v4157 = vpop.f32.mrb[0].mxu0
        %v4158 = vpop.f32.mrb[0].mxu0
        %4159 = vdwg.mxu0
        %v4160 = vpack.c.bf16 %v4155, %v4155
        %v4161 = vld [vmem:[%s13] sm:$0xf]
        %v4162 = vld [vmem:[%s13 + $0x4] sm:$0xf]
        %v4163 = vld [vmem:[%s13 + $0x8] sm:$0xf]
        %v4164 = vld [vmem:[%s13 + $0xc] sm:$0xf]
        %v4169 = vunpack.c.l.b16 %v4161
        %v4170 = vunpack.c.l.b16 %v4162
        %v4171 = vunpack.c.l.b16 %v4163
        %v4172 = vunpack.c.l.b16 %v4164
        %v4173 = vpack.c.b16 %v4170, %v4169
        %v4174 = vpack.c.b16 %v4172, %v4171
        %v4178 = vsel %vm609, %v4160, 0
        %4180 = vmatprep.subr.bf16.mxu0 0
        %4181 = vmatpush1.bf16.msra.mxu0 %v4173
        %4182 = vmatprep.subr.bf16.mxu0 0
        %4183 = vmatpush1.bf16.msra.mxu0 %v4174
        %4184 = vmatprep.subr.bf16.mxu0 0
        %4185 = vmatpush1.bf16.msra.mxu0 0
        %4186 = vmatprep.subr.bf16.mxu0 0
        %4187 = vmatpush1.bf16.msra.mxu0 0
        %4188 = vmatprep.subr.bf16.mxu0 0
        %4189 = vmatpush1.bf16.msra.mxu0 0
        %4190 = vmatprep.subr.bf16.mxu0 0
        %4191 = vmatpush1.bf16.msra.mxu0 0
        %4192 = vmatprep.subr.bf16.mxu0 0
        %4193 = vmatpush1.bf16.msra.mxu0 0
        %4194 = vmatprep.subr.bf16.mxu0 0
        %4195 = vmatpush1.bf16.msra.mxu0 0
        %4196 = vmatprep.subr.bf16.mxu0 0
        %4197 = vmatpush1.bf16.msra.mxu0 0
        %4198 = vmatprep.subr.bf16.mxu0 0
        %4199 = vmatpush1.bf16.msra.mxu0 0
        %4200 = vmatprep.subr.bf16.mxu0 0
        %4201 = vmatpush1.bf16.msra.mxu0 0
        %4202 = vmatprep.subr.bf16.mxu0 0
        %4203 = vmatpush1.bf16.msra.mxu0 0
        %4204 = vmatprep.subr.bf16.mxu0 0
        %4205 = vmatpush1.bf16.msra.mxu0 0
        %4206 = vmatprep.subr.bf16.mxu0 0
        %4207 = vmatpush1.bf16.msra.mxu0 0
        %4208 = vmatprep.subr.bf16.mxu0 0
        %4209 = vmatpush1.bf16.msra.mxu0 0
        %4210 = vmatprep.subr.bf16.mxu0 0
        %4211 = vmatpush1.bf16.msra.mxu0 0
        %4212 = vmatprep.mubr.bf16.mxu0 0
        %4213 = vmatmul.mubr.bf16.gmra.mrb[0].mxu0 %v4178
        %v4214 = vpop.f32.mrb[0].mxu0
        %v4215 = vadd.f32 0.0, %v4214
        %v4216 = vpop.f32.mrb[0].mxu0
        %v4217 = vpop.f32.mrb[0].mxu0
        %v4218 = vpop.f32.mrb[0].mxu0
        %4219 = vdwg.mxu0
        %v4220 = vld [vmem:[%s5] sm:$0x3]
        %v4221 = vadd.f32 %v4220, %v4215
        %4222 = vrot.lane.b32.xlu0 %v3900, 96
        %v4223 = vpop.permute.xlu0 %4222
        %v4225 = vadd.f32 %v4221, %v4223
        %v4226 = vxor.u32 %v4225, 2147483648
        %v4227 = vmul.f32 %v4226, 1.442695
        %v4228 = vpow.pop %v4227
        %v4229 = vadd.f32 %v4228, 1.0
        %v4230 = vrcp.pop %v4229
        %v4231 = vmul.f32 1.0, %v4230
        %v4232 = vld [vmem:[%s6] sm:$0x3]
        %4234 = vrot.lane.b32.xlu0 %v4215, 96
        %v4235 = vpop.permute.xlu0 %4234
        %v4237 = vadd.f32 %v4232, %v4235
        %4239 = vrot.lane.b32.xlu0 %v3900, 64
        %v4240 = vpop.permute.xlu0 %4239
        %4241 = vrot.lane.b32.xlu0 %v3902, 64
        %v4242 = vpop.permute.xlu0 %4241
        %v4243 = vsel %vm745, %v4240, %v4242
        %v4245 = vadd.f32 %v4237, %v4243
        %v4246 = vxor.u32 %v4245, 2147483648
        %v4247 = vmul.f32 %v4246, 1.442695
        %v4248 = vpow.pop %v4247
        %v4249 = vadd.f32 %v4248, 1.0
        %v4250 = vrcp.pop %v4249
        %v4251 = vmul.f32 1.0, %v4250
        %v4252 = vld [vmem:[%s4] sm:$0x3]
        %4254 = vrot.lane.b32.xlu0 %v4155, 64
        %v4255 = vpop.permute.xlu0 %4254
        %v4257 = vsel %vm745, %v4252, %v4255
        %v4258 = vmul.f32 %v4251, %v4257
        %v4259 = vpack.c.bf16 %v4258, %v4258
        %v4260 = vld [vmem:[%s14] sm:$0xf]
        %v4261 = vld [vmem:[%s14 + $0x4] sm:$0xf]
        %v4262 = vld [vmem:[%s14 + $0x8] sm:$0xf]
        %v4263 = vld [vmem:[%s14 + $0xc] sm:$0xf]
        %v4264 = vld [vmem:[%s14 + $0x10] sm:$0xf]
        %v4265 = vld [vmem:[%s14 + $0x14] sm:$0xf]
        %v4266 = vld [vmem:[%s14 + $0x18] sm:$0xf]
        %v4267 = vld [vmem:[%s14 + $0x1c] sm:$0xf]
        %v4268 = vld [vmem:[%s14 + $0x20] sm:$0xf]
        %v4269 = vld [vmem:[%s14 + $0x24] sm:$0xf]
        %v4270 = vld [vmem:[%s14 + $0x28] sm:$0xf]
        %v4271 = vld [vmem:[%s14 + $0x2c] sm:$0xf]
        %v4284 = vunpack.c.l.b16 %v4260
        %v4285 = vunpack.c.l.b16 %v4261
        %v4286 = vunpack.c.l.b16 %v4262
        %v4287 = vunpack.c.l.b16 %v4263
        %v4288 = vunpack.c.l.b16 %v4264
        %v4289 = vunpack.c.l.b16 %v4265
        %v4290 = vunpack.c.l.b16 %v4266
        %v4291 = vunpack.c.l.b16 %v4267
        %v4292 = vunpack.c.l.b16 %v4268
        %v4293 = vunpack.c.l.b16 %v4269
        %v4294 = vunpack.c.l.b16 %v4270
        %v4295 = vunpack.c.l.b16 %v4271
        %v4296 = vpack.c.b16 %v4285, %v4284
        %v4297 = vpack.c.b16 %v4287, %v4286
        %v4298 = vpack.c.b16 %v4289, %v4288
        %v4299 = vpack.c.b16 %v4291, %v4290
        %v4300 = vpack.c.b16 %v4293, %v4292
        %v4301 = vpack.c.b16 %v4295, %v4294
        %4308 = vrot.lane.b32.xlu0 %v3902, 96
        %v4309 = vpop.permute.xlu0 %4308
        %v4312 = vsel %vm1298, %v4259, 0
        %4314 = vmatprep.subr.bf16.mxu0 0
        %4315 = vmatpush1.bf16.msra.mxu0 %v4296
        %4316 = vmatprep.subr.bf16.mxu0 0
        %4317 = vmatpush1.bf16.msra.mxu0 %v4297
        %4318 = vmatprep.subr.bf16.mxu0 0
        %4319 = vmatpush1.bf16.msra.mxu0 %v4298
        %4320 = vmatprep.subr.bf16.mxu0 0
        %4321 = vmatpush1.bf16.msra.mxu0 %v4299
        %4322 = vmatprep.subr.bf16.mxu0 0
        %4323 = vmatpush1.bf16.msra.mxu0 %v4300
        %4324 = vmatprep.subr.bf16.mxu0 0
        %4325 = vmatpush1.bf16.msra.mxu0 %v4301
        %4326 = vmatprep.subr.bf16.mxu0 0
        %4327 = vmatpush1.bf16.msra.mxu0 0
        %4328 = vmatprep.subr.bf16.mxu0 0
        %4329 = vmatpush1.bf16.msra.mxu0 0
        %4330 = vmatprep.subr.bf16.mxu0 0
        %4331 = vmatpush1.bf16.msra.mxu0 0
        %4332 = vmatprep.subr.bf16.mxu0 0
        %4333 = vmatpush1.bf16.msra.mxu0 0
        %4334 = vmatprep.subr.bf16.mxu0 0
        %4335 = vmatpush1.bf16.msra.mxu0 0
        %4336 = vmatprep.subr.bf16.mxu0 0
        %4337 = vmatpush1.bf16.msra.mxu0 0
        %4338 = vmatprep.subr.bf16.mxu0 0
        %4339 = vmatpush1.bf16.msra.mxu0 0
        %4340 = vmatprep.subr.bf16.mxu0 0
        %4341 = vmatpush1.bf16.msra.mxu0 0
        %4342 = vmatprep.subr.bf16.mxu0 0
        %4343 = vmatpush1.bf16.msra.mxu0 0
        %4344 = vmatprep.subr.bf16.mxu0 0
        %4345 = vmatpush1.bf16.msra.mxu0 0
        %4346 = vmatprep.mubr.bf16.mxu0 0
        %4347 = vmatmul.mubr.bf16.gmra.mrb[0].mxu0 %v4312
        %v4348 = vpop.f32.mrb[0].mxu0
        %v4349 = vadd.f32 %v4309, %v4348
        %v4350 = vpop.f32.mrb[0].mxu0
        %v4351 = vpop.f32.mrb[0].mxu0
        %v4352 = vpop.f32.mrb[0].mxu0
        %4353 = vdwg.mxu0
        %v4354 = vld [vmem:[%s15] sm:$0x1]
        %v4356 = vlaneseq
        %v4357 = vshrl.u32 %v4356, 7
        %v4358 = vsub.s32 0, %v4357
        %v4359 = vrot.slane %v4354, %v4358
        %v4361 = vadd.f32 %v4349, %v4359
        %v4362 = vtanh.pop %v4361
        %v4363 = vsub.f32 1.0, %v4231
        %4365 = vrot.lane.b32.xlu0 %v3833, 32
        %v4366 = vpop.permute.xlu0 %4365
        %v4368 = vmul.f32 %v4363, %v4366
        %v4369 = vmul.f32 %v4231, %v4362
        %v4370 = vadd.f32 %v4368, %v4369
        %s4371 = scalar_lea.vmem %s571, 8
        %4372 = vst.msk [vmem:[%s4371] sm:$0x3] %vm1359, %v4370
        %s4373 = scalar_lea.vmem %s565, 5
        %v4374 = vld [vmem:[%s4373] sm:$0x1]
        %v4375 = vunpack.c.l.bf16 %v4374
        %v4376 = vpack.c.bf16 %v3710, %v3710
        %v4377 = vld [vmem:[%s7] sm:$0xf]
        %v4378 = vld [vmem:[%s7 + $0x4] sm:$0xf]
        %v4379 = vld [vmem:[%s7 + $0x8] sm:$0xf]
        %v4380 = vld [vmem:[%s7 + $0xc] sm:$0xf]
        %4382 = vrot.lane.b32.xlu0 %v4376, 32
        %v4383 = vpop.permute.xlu0 %4382
        %v4388 = vunpack.c.l.b16 %v4377
        %v4389 = vunpack.c.l.b16 %v4378
        %v4390 = vunpack.c.l.b16 %v4379
        %v4391 = vunpack.c.l.b16 %v4380
        %v4392 = vpack.c.b16 %v4389, %v4388
        %v4393 = vpack.c.b16 %v4391, %v4390
        %v4397 = vsel %vm609, %v4383, 0
        %4399 = vmatprep.subr.bf16.mxu0 0
        %4400 = vmatpush1.bf16.msra.mxu0 %v4392
        %4401 = vmatprep.subr.bf16.mxu0 0
        %4402 = vmatpush1.bf16.msra.mxu0 %v4393
        %4403 = vmatprep.subr.bf16.mxu0 0
        %4404 = vmatpush1.bf16.msra.mxu0 0
        %4405 = vmatprep.subr.bf16.mxu0 0
        %4406 = vmatpush1.bf16.msra.mxu0 0
        %4407 = vmatprep.subr.bf16.mxu0 0
        %4408 = vmatpush1.bf16.msra.mxu0 0
        %4409 = vmatprep.subr.bf16.mxu0 0
        %4410 = vmatpush1.bf16.msra.mxu0 0
        %4411 = vmatprep.subr.bf16.mxu0 0
        %4412 = vmatpush1.bf16.msra.mxu0 0
        %4413 = vmatprep.subr.bf16.mxu0 0
        %4414 = vmatpush1.bf16.msra.mxu0 0
        %4415 = vmatprep.subr.bf16.mxu0 0
        %4416 = vmatpush1.bf16.msra.mxu0 0
        %4417 = vmatprep.subr.bf16.mxu0 0
        %4418 = vmatpush1.bf16.msra.mxu0 0
        %4419 = vmatprep.subr.bf16.mxu0 0
        %4420 = vmatpush1.bf16.msra.mxu0 0
        %4421 = vmatprep.subr.bf16.mxu0 0
        %4422 = vmatpush1.bf16.msra.mxu0 0
        %4423 = vmatprep.subr.bf16.mxu0 0
        %4424 = vmatpush1.bf16.msra.mxu0 0
        %4425 = vmatprep.subr.bf16.mxu0 0
        %4426 = vmatpush1.bf16.msra.mxu0 0
        %4427 = vmatprep.subr.bf16.mxu0 0
        %4428 = vmatpush1.bf16.msra.mxu0 0
        %4429 = vmatprep.subr.bf16.mxu0 0
        %4430 = vmatpush1.bf16.msra.mxu0 0
        %4431 = vmatprep.mubr.bf16.mxu0 0
        %4432 = vmatmul.mubr.bf16.gmra.mrb[0].mxu0 %v4397
        %v4433 = vpop.f32.mrb[0].mxu0
        %v4434 = vadd.f32 0.0, %v4433
        %v4435 = vpop.f32.mrb[0].mxu0
        %v4436 = vpop.f32.mrb[0].mxu0
        %v4437 = vpop.f32.mrb[0].mxu0
        %4438 = vdwg.mxu0
        %v4439 = vadd.f32 %v4375, %v4434
        %v4440 = vxor.u32 %v4439, 2147483648
        %v4441 = vmul.f32 %v4440, 1.442695
        %v4442 = vpow.pop %v4441
        %v4443 = vadd.f32 %v4442, 1.0
        %v4444 = vrcp.pop %v4443
        %v4445 = vmul.f32 1.0, %v4444
        %v4446 = vtanh.pop %v4439
        %v4447 = vmul.f32 %v4445, %v3704
        %4449 = vrot.lane.b32.xlu0 %v4446, 64
        %v4450 = vpop.permute.xlu0 %4449
        %v4452 = vmul.f32 %v4445, %v4450
        %4454 = vrot.lane.b32.xlu0 %v4452, 32
        %v4455 = vpop.permute.xlu0 %4454
        %v4457 = vadd.f32 %v4447, %v4455
        %v4458 = vtanh.pop %v4457
        %4460 = vrot.lane.b32.xlu0 %v4458, 64
        %v4461 = vpop.permute.xlu0 %4460
        %v4463 = vmul.f32 %v4445, %v4461
        %v4466 = vunpack.c.l.s4 1983009808
        %v4467 = vunpack.c.0.s8 %v4466
        %v4468 = vlaneseq
        %v4469 = vshrl.u32 %v4468, 7
        %v4470 = vsub.s32 %v4467, %v4469
        %v4471 = vrot.slane %v4463, %v4470
        %4472 = vrot.lane.b32.xlu0 %v4471, 32
        %v4473 = vpop.permute.xlu0 %4472
        %4476 = vrot.lane.b32.xlu0 %v4370, 32
        %v4477 = vpop.permute.xlu0 %4476
        %v4479 = vsel %vm609, %v4473, %v4477
        %v4480 = vpack.c.bf16 %v4479, %v4479
        %v4481 = vld [vmem:[%s8] sm:$0xf]
        %v4482 = vld [vmem:[%s8 + $0x4] sm:$0xf]
        %v4483 = vld [vmem:[%s8 + $0x8] sm:$0xf]
        %v4484 = vld [vmem:[%s8 + $0xc] sm:$0xf]
        %v4485 = vld [vmem:[%s8 + $0x10] sm:$0xf]
        %v4486 = vld [vmem:[%s8 + $0x14] sm:$0xf]
        %v4487 = vld [vmem:[%s8 + $0x18] sm:$0xf]
        %v4488 = vld [vmem:[%s8 + $0x1c] sm:$0xf]
        %v4489 = vld [vmem:[%s9] sm:$0x1]
        %v4491 = vlaneseq
        %v4492 = vshrl.u32 %v4491, 7
        %v4493 = vsub.s32 0, %v4492
        %v4494 = vrot.slane %v4489, %v4493
        %v4504 = vunpack.c.l.b16 %v4481
        %v4505 = vunpack.c.l.b16 %v4482
        %v4506 = vunpack.c.l.b16 %v4483
        %v4507 = vunpack.c.l.b16 %v4484
        %v4508 = vunpack.c.l.b16 %v4485
        %v4509 = vunpack.c.l.b16 %v4486
        %v4510 = vunpack.c.l.b16 %v4487
        %v4511 = vunpack.c.l.b16 %v4488
        %v4512 = vpack.c.b16 %v4505, %v4504
        %v4513 = vpack.c.b16 %v4507, %v4506
        %v4514 = vpack.c.b16 %v4509, %v4508
        %v4515 = vpack.c.b16 %v4511, %v4510
        %v4521 = vsel %vm745, %v4480, 0
        %4523 = vmatprep.subr.bf16.mxu0 0
        %4524 = vmatpush1.bf16.msra.mxu0 %v4512
        %4525 = vmatprep.subr.bf16.mxu0 0
        %4526 = vmatpush1.bf16.msra.mxu0 %v4513
        %4527 = vmatprep.subr.bf16.mxu0 0
        %4528 = vmatpush1.bf16.msra.mxu0 %v4514
        %4529 = vmatprep.subr.bf16.mxu0 0
        %4530 = vmatpush1.bf16.msra.mxu0 %v4515
        %4531 = vmatprep.subr.bf16.mxu0 0
        %4532 = vmatpush1.bf16.msra.mxu0 0
        %4533 = vmatprep.subr.bf16.mxu0 0
        %4534 = vmatpush1.bf16.msra.mxu0 0
        %4535 = vmatprep.subr.bf16.mxu0 0
        %4536 = vmatpush1.bf16.msra.mxu0 0
        %4537 = vmatprep.subr.bf16.mxu0 0
        %4538 = vmatpush1.bf16.msra.mxu0 0
        %4539 = vmatprep.subr.bf16.mxu0 0
        %4540 = vmatpush1.bf16.msra.mxu0 0
        %4541 = vmatprep.subr.bf16.mxu0 0
        %4542 = vmatpush1.bf16.msra.mxu0 0
        %4543 = vmatprep.subr.bf16.mxu0 0
        %4544 = vmatpush1.bf16.msra.mxu0 0
        %4545 = vmatprep.subr.bf16.mxu0 0
        %4546 = vmatpush1.bf16.msra.mxu0 0
        %4547 = vmatprep.subr.bf16.mxu0 0
        %4548 = vmatpush1.bf16.msra.mxu0 0
        %4549 = vmatprep.subr.bf16.mxu0 0
        %4550 = vmatpush1.bf16.msra.mxu0 0
        %4551 = vmatprep.subr.bf16.mxu0 0
        %4552 = vmatpush1.bf16.msra.mxu0 0
        %4553 = vmatprep.subr.bf16.mxu0 0
        %4554 = vmatpush1.bf16.msra.mxu0 0
        %4555 = vmatprep.mubr.bf16.mxu0 0
        %4556 = vmatmul.mubr.bf16.gmra.mrb[0].mxu0 %v4521
        %v4557 = vpop.f32.mrb[0].mxu0
        %v4558 = vadd.f32 %v4494, %v4557
        %v4559 = vpop.f32.mrb[0].mxu0
        %v4560 = vpop.f32.mrb[0].mxu0
        %v4561 = vpop.f32.mrb[0].mxu0
        %4562 = vdwg.mxu0
        %v4563 = vxor.u32 %v4558, 2147483648
        %v4564 = vmul.f32 %v4563, 1.442695
        %v4565 = vpow.pop %v4564
        %v4566 = vadd.f32 %v4565, 1.0
        %v4567 = vrcp.pop %v4566
        %v4568 = vmul.f32 1.0, %v4567
        %v4569 = vtanh.pop %v4558
        %v4570 = vmul.f32 %v4568, %v3827
        %4572 = vrot.lane.b32.xlu0 %v4569, 64
        %v4573 = vpop.permute.xlu0 %4572
        %v4575 = vmul.f32 %v4568, %v4573
        %4577 = vrot.lane.b32.xlu0 %v4575, 32
        %v4578 = vpop.permute.xlu0 %4577
        %v4580 = vadd.f32 %v4570, %v4578
        %v4581 = vtanh.pop %v4580
        %4583 = vrot.lane.b32.xlu0 %v4581, 64
        %v4584 = vpop.permute.xlu0 %4583
        %v4586 = vmul.f32 %v4568, %v4584
        %v4587 = vpack.c.bf16 %v4586, %v4586
        %v4588 = vld [vmem:[%s12] sm:$0xff]
        %v4589 = vld [vmem:[%s12 + $0x8] sm:$0xff]
        %v4590 = vld [vmem:[%s12 + $0x10] sm:$0xff]
        %v4591 = vld [vmem:[%s12 + $0x18] sm:$0xff]
        %4593 = vrot.lane.b32.xlu0 %v4587, 32
        %v4594 = vpop.permute.xlu0 %4593
        %v4599 = vunpack.c.l.b16 %v4588
        %v4600 = vunpack.c.h.b16 %v4588
        %v4601 = vunpack.c.l.b16 %v4589
        %v4602 = vunpack.c.h.b16 %v4589
        %v4603 = vunpack.c.l.b16 %v4590
        %v4604 = vunpack.c.h.b16 %v4590
        %v4605 = vunpack.c.l.b16 %v4591
        %v4606 = vunpack.c.h.b16 %v4591
        %v4607 = vpack.c.b16 %v4601, %v4599
        %v4608 = vpack.c.b16 %v4602, %v4600
        %v4609 = vpack.c.b16 %v4605, %v4603
        %v4610 = vpack.c.b16 %v4606, %v4604
        %v4616 = vsel %vm609, %v4594, 0
        %4618 = vmatprep.subr.bf16.mxu0 %v4608
        %4619 = vmatpush1.bf16.msra.mxu0 %v4607
        %4620 = vmatprep.subr.bf16.mxu0 %v4610
        %4621 = vmatpush1.bf16.msra.mxu0 %v4609
        %4622 = vmatprep.subr.bf16.mxu0 0
        %4623 = vmatpush1.bf16.msra.mxu0 0
        %4624 = vmatprep.subr.bf16.mxu0 0
        %4625 = vmatpush1.bf16.msra.mxu0 0
        %4626 = vmatprep.subr.bf16.mxu0 0
        %4627 = vmatpush1.bf16.msra.mxu0 0
        %4628 = vmatprep.subr.bf16.mxu0 0
        %4629 = vmatpush1.bf16.msra.mxu0 0
        %4630 = vmatprep.subr.bf16.mxu0 0
        %4631 = vmatpush1.bf16.msra.mxu0 0
        %4632 = vmatprep.subr.bf16.mxu0 0
        %4633 = vmatpush1.bf16.msra.mxu0 0
        %4634 = vmatprep.subr.bf16.mxu0 0
        %4635 = vmatpush1.bf16.msra.mxu0 0
        %4636 = vmatprep.subr.bf16.mxu0 0
        %4637 = vmatpush1.bf16.msra.mxu0 0
        %4638 = vmatprep.subr.bf16.mxu0 0
        %4639 = vmatpush1.bf16.msra.mxu0 0
        %4640 = vmatprep.subr.bf16.mxu0 0
        %4641 = vmatpush1.bf16.msra.mxu0 0
        %4642 = vmatprep.subr.bf16.mxu0 0
        %4643 = vmatpush1.bf16.msra.mxu0 0
        %4644 = vmatprep.subr.bf16.mxu0 0
        %4645 = vmatpush1.bf16.msra.mxu0 0
        %4646 = vmatprep.subr.bf16.mxu0 0
        %4647 = vmatpush1.bf16.msra.mxu0 0
        %4648 = vmatprep.subr.bf16.mxu0 0
        %4649 = vmatpush1.bf16.msra.mxu0 0
        %4650 = vmatprep.mubr.bf16.mxu0 0
        %4651 = vmatmul.mubr.bf16.gmra.mrb[0].mxu0 %v4616
        %v4652 = vpop.f32.mrb[0].mxu0
        %v4653 = vadd.f32 0.0, %v4652
        %v4654 = vpop.f32.mrb[0].mxu0
        %v4655 = vadd.f32 0.0, %v4654
        %v4656 = vpop.f32.mrb[0].mxu0
        %v4657 = vpop.f32.mrb[0].mxu0
        %4658 = vdwg.mxu0
        %v4659 = vld [vmem:[%s3] sm:$0xff]
        %v4660 = vld [vmem:[%s3 + $0x8] sm:$0xff]
        %v4663 = vunpack.c.l.s4 1966171168
        %v4664 = vunpack.c.0.s8 %v4663
        %v4665 = vlaneseq
        %v4666 = vshrl.u32 %v4665, 7
        %v4667 = vsub.s32 %v4664, %v4666
        %v4668 = vrot.slane %v4653, %v4667
        %v4669 = vcombine.high %v4668, %v4668
        %v4671 = vunpack.c.l.s4 1966171168
        %v4672 = vunpack.c.0.s8 %v4671
        %v4673 = vlaneseq
        %v4674 = vshrl.u32 %v4673, 7
        %v4675 = vsub.s32 %v4672, %v4674
        %v4676 = vrot.slane %v4668, %v4675
        %v4678 = vunpack.c.l.s4 1966171168
        %v4679 = vunpack.c.0.s8 %v4678
        %v4680 = vlaneseq
        %v4681 = vshrl.u32 %v4680, 7
        %v4682 = vsub.s32 %v4679, %v4681
        %v4683 = vrot.slane %v4669, %v4682
        %v4684 = vlaneseq
        %v4685 = vshrl.u32 %v4684, 7
        %v4686 = vsub.s32 0, %v4685
        %v4687 = vrot.slane %v4676, %v4686
        %v4688 = vlaneseq
        %v4689 = vshrl.u32 %v4688, 7
        %v4690 = vsub.s32 0, %v4689
        %v4691 = vrot.slane %v4683, %v4690
        %v4694 = vmul.f32 %v4659, %v4687
        %v4695 = vmul.f32 %v4660, %v4691
        %v4696 = vsel %vm609, %v4694, 0.0
        %4697 = vadd.xlane.f32.xlu0 %v4696
        %v4698 = vpop.xlane.xlu0 %4697
        %v4699 = vsel %vm609, %v4695, 0.0
        %4700 = vadd.xlane.f32.xlu0 %v4699
        %v4701 = vpop.xlane.xlu0 %4700
        %v4702 = vld [vmem:[%s2] sm:$0x3]
        %v4704 = vlaneseq
        %v4705 = vshrl.u32 %v4704, 7
        %v4706 = vsub.s32 0, %v4705
        %v4707 = vrot.slane %v4702, %v4706
        %4709 = vbcast.lane.b32.xlu0 %v4707, 256
        %v4710 = vpop.permute.xlu0 %4709
        %v4711 = vlaneseq
        %v4712 = vshrl.u32 %v4711, 7
        %v4713 = vsub.s32 1, %v4712
        %v4714 = vrot.slane %v4702, %v4713
        %4716 = vbcast.lane.b32.xlu0 %v4714, 256
        %v4717 = vpop.permute.xlu0 %4716
        %v4720 = vadd.f32 %v4698, %v4710
        %v4721 = vadd.f32 %v4701, %v4717
        %4724 = vset.pattern.permute.xlu0 0
        %4725 = vperm.xlu0 %4724, %v4720
        %v4726 = vpop.permute.xlu0 %4725
        %4727 = vset.pattern.permute.xlu0 0
        %4728 = vperm.xlu0 %4727, %v4721
        %v4729 = vpop.permute.xlu0 %4728
        %v4730 = vlaneseq
        %v4731 = vshrl.u32 %v4730, 7
        %v4732 = vsub.s32 %v961, %v4731
        %v4733 = vrot.slane %v4726, %v4732
        %v4734 = vlaneseq
        %v4735 = vshrl.u32 %v4734, 7
        %v4736 = vsub.s32 %v961, %v4735
        %v4737 = vrot.slane %v4729, %v4736
        %v4738 = vsel %vm970, %v4737, %v4733
        %v4740 = vsel %vm973, %v4738, -inf
        %4741 = vmax.xlane.f32.xlu0 %v4740
        %v4742 = vpop.xlane.xlu0 %4741
        %v4744 = vlaneseq
        %v4745 = vshrl.u32 %v4744, 7
        %v4746 = vsub.s32 0, %v4745
        %v4747 = vrot.slane %v4742, %v4746
        %v4748 = vlaneseq
        %v4749 = vshrl.u32 %v4748, 7
        %v4750 = vsub.s32 1, %v4749
        %v4751 = vrot.slane %v4742, %v4750
        %v4754 = vsub.f32 %v4720, %v4747
        %v4755 = vsub.f32 %v4721, %v4751
        %v4756 = vmul.f32 %v4754, 1.442695
        %v4757 = vpow.pop %v4756
        %v4758 = vmul.f32 %v4755, 1.442695
        %v4759 = vpow.pop %v4758
        %4762 = vset.pattern.permute.xlu0 0
        %4763 = vperm.xlu0 %4762, %v4757
        %v4764 = vpop.permute.xlu0 %4763
        %4765 = vset.pattern.permute.xlu0 0
        %4766 = vperm.xlu0 %4765, %v4759
        %v4767 = vpop.permute.xlu0 %4766
        %v4768 = vlaneseq
        %v4769 = vshrl.u32 %v4768, 7
        %v4770 = vsub.s32 %v961, %v4769
        %v4771 = vrot.slane %v4764, %v4770
        %v4772 = vlaneseq
        %v4773 = vshrl.u32 %v4772, 7
        %v4774 = vsub.s32 %v961, %v4773
        %v4775 = vrot.slane %v4767, %v4774
        %v4776 = vsel %vm970, %v4775, %v4771
        %v4778 = vsel %vm973, %v4776, 0.0
        %4779 = vadd.xlane.f32.xlu0 %v4778
        %v4780 = vpop.xlane.xlu0 %4779
        %v4781 = vrcp.pop %v4780
        %v4783 = vlaneseq
        %v4784 = vshrl.u32 %v4783, 7
        %v4785 = vsub.s32 0, %v4784
        %v4786 = vrot.slane %v4781, %v4785
        %v4787 = vlaneseq
        %v4788 = vshrl.u32 %v4787, 7
        %v4789 = vsub.s32 1, %v4788
        %v4790 = vrot.slane %v4781, %v4789
        %v4793 = vmul.f32 %v4757, %v4786
        %v4794 = vmul.f32 %v4759, %v4790
        %v4795 = vld [vmem:[%s1] sm:$0xff]
        %v4796 = vld [vmem:[%s1 + $0x8] sm:$0xff]
        %4798 = vset.pattern.permute.xlu0 0
        %4799 = vperm.xlu0 %4798, %v4793
        %v4800 = vpop.permute.xlu0 %4799
        %4803 = vset.pattern.permute.xlu0 0
        %4804 = vperm.xlu0 %4803, %v4794
        %v4805 = vpop.permute.xlu0 %4804
        %v4807 = vmul.f32 %v4800, %v4795
        %v4808 = vmul.f32 %v4805, %v4796
        %v4809 = vsel %vm745, %v4807, 0.0
        %v4810 = vrot.slane %v4809, 4
        %v4811 = vadd.f32 %v4809, %v4810
        %v4812 = vrot.slane %v4811, 2
        %v4813 = vadd.f32 %v4811, %v4812
        %v4814 = vrot.slane %v4813, 1
        %v4815 = vadd.f32 %v4813, %v4814
        %v4816 = vsel %vm745, %v4808, 0.0
        %v4817 = vrot.slane %v4816, 4
        %v4818 = vadd.f32 %v4816, %v4817
        %v4819 = vrot.slane %v4818, 2
        %v4820 = vadd.f32 %v4818, %v4819
        %v4821 = vrot.slane %v4820, 1
        %v4822 = vadd.f32 %v4820, %v4821
        %v4823 = vpack.c.bf16 %v4815, %v4815
        %v4824 = vpack.c.bf16 %v4822, %v4822
        %v4825 = vld [vmem:[%s10] sm:$0xf]
        %v4826 = vld [vmem:[%s10 + $0x4] sm:$0xf]
        %v4827 = vld [vmem:[%s10 + $0x8] sm:$0xf]
        %v4828 = vld [vmem:[%s10 + $0xc] sm:$0xf]
        %v4829 = vld [vmem:[%s10 + $0x10] sm:$0xf]
        %v4830 = vld [vmem:[%s10 + $0x14] sm:$0xf]
        %v4831 = vld [vmem:[%s10 + $0x18] sm:$0xf]
        %v4832 = vld [vmem:[%s10 + $0x1c] sm:$0xf]
        %v4833 = vld [vmem:[%s11] sm:$0x1]
        %v4835 = vlaneseq
        %v4836 = vshrl.u32 %v4835, 7
        %v4837 = vsub.s32 0, %v4836
        %v4838 = vrot.slane %v4833, %v4837
        %v4842 = vunpack.c.l.b16 %v4823
        %v4843 = vunpack.c.l.b16 %v4824
        %v4844 = vsel %vm970, %v4843, %v4842
        %v4845 = vpack.c.b16 %v4844, %v4844
        %v4854 = vunpack.c.l.b16 %v4825
        %v4855 = vunpack.c.l.b16 %v4826
        %v4856 = vunpack.c.l.b16 %v4827
        %v4857 = vunpack.c.l.b16 %v4828
        %v4858 = vunpack.c.l.b16 %v4829
        %v4859 = vunpack.c.l.b16 %v4830
        %v4860 = vunpack.c.l.b16 %v4831
        %v4861 = vunpack.c.l.b16 %v4832
        %v4862 = vpack.c.b16 %v4855, %v4854
        %v4863 = vpack.c.b16 %v4857, %v4856
        %v4864 = vpack.c.b16 %v4859, %v4858
        %v4865 = vpack.c.b16 %v4861, %v4860
        %v4871 = vsel %vm745, %v4845, 0
        %4873 = vmatprep.subr.bf16.mxu0 0
        %4874 = vmatpush1.bf16.msra.mxu0 %v4862
        %4875 = vmatprep.subr.bf16.mxu0 0
        %4876 = vmatpush1.bf16.msra.mxu0 %v4863
        %4877 = vmatprep.subr.bf16.mxu0 0
        %4878 = vmatpush1.bf16.msra.mxu0 %v4864
        %4879 = vmatprep.subr.bf16.mxu0 0
        %4880 = vmatpush1.bf16.msra.mxu0 %v4865
        %4881 = vmatprep.subr.bf16.mxu0 0
        %4882 = vmatpush1.bf16.msra.mxu0 0
        %4883 = vmatprep.subr.bf16.mxu0 0
        %4884 = vmatpush1.bf16.msra.mxu0 0
        %4885 = vmatprep.subr.bf16.mxu0 0
        %4886 = vmatpush1.bf16.msra.mxu0 0
        %4887 = vmatprep.subr.bf16.mxu0 0
        %4888 = vmatpush1.bf16.msra.mxu0 0
        %4889 = vmatprep.subr.bf16.mxu0 0
        %4890 = vmatpush1.bf16.msra.mxu0 0
        %4891 = vmatprep.subr.bf16.mxu0 0
        %4892 = vmatpush1.bf16.msra.mxu0 0
        %4893 = vmatprep.subr.bf16.mxu0 0
        %4894 = vmatpush1.bf16.msra.mxu0 0
        %4895 = vmatprep.subr.bf16.mxu0 0
        %4896 = vmatpush1.bf16.msra.mxu0 0
        %4897 = vmatprep.subr.bf16.mxu0 0
        %4898 = vmatpush1.bf16.msra.mxu0 0
        %4899 = vmatprep.subr.bf16.mxu0 0
        %4900 = vmatpush1.bf16.msra.mxu0 0
        %4901 = vmatprep.subr.bf16.mxu0 0
        %4902 = vmatpush1.bf16.msra.mxu0 0
        %4903 = vmatprep.subr.bf16.mxu0 0
        %4904 = vmatpush1.bf16.msra.mxu0 0
        %4905 = vmatprep.mubr.bf16.mxu0 0
        %4906 = vmatmul.mubr.bf16.gmra.mrb[0].mxu0 %v4871
        %v4907 = vpop.f32.mrb[0].mxu0
        %v4908 = vadd.f32 %v4838, %v4907
        %v4909 = vpop.f32.mrb[0].mxu0
        %v4910 = vpop.f32.mrb[0].mxu0
        %v4911 = vpop.f32.mrb[0].mxu0
        %4912 = vdwg.mxu0
        %v4913 = vpack.c.bf16 %v4908, %v4908
        %v4914 = vld [vmem:[%s13] sm:$0xf]
        %v4915 = vld [vmem:[%s13 + $0x4] sm:$0xf]
        %v4916 = vld [vmem:[%s13 + $0x8] sm:$0xf]
        %v4917 = vld [vmem:[%s13 + $0xc] sm:$0xf]
        %v4922 = vunpack.c.l.b16 %v4914
        %v4923 = vunpack.c.l.b16 %v4915
        %v4924 = vunpack.c.l.b16 %v4916
        %v4925 = vunpack.c.l.b16 %v4917
        %v4926 = vpack.c.b16 %v4923, %v4922
        %v4927 = vpack.c.b16 %v4925, %v4924
        %v4931 = vsel %vm609, %v4913, 0
        %4933 = vmatprep.subr.bf16.mxu0 0
        %4934 = vmatpush1.bf16.msra.mxu0 %v4926
        %4935 = vmatprep.subr.bf16.mxu0 0
        %4936 = vmatpush1.bf16.msra.mxu0 %v4927
        %4937 = vmatprep.subr.bf16.mxu0 0
        %4938 = vmatpush1.bf16.msra.mxu0 0
        %4939 = vmatprep.subr.bf16.mxu0 0
        %4940 = vmatpush1.bf16.msra.mxu0 0
        %4941 = vmatprep.subr.bf16.mxu0 0
        %4942 = vmatpush1.bf16.msra.mxu0 0
        %4943 = vmatprep.subr.bf16.mxu0 0
        %4944 = vmatpush1.bf16.msra.mxu0 0
        %4945 = vmatprep.subr.bf16.mxu0 0
        %4946 = vmatpush1.bf16.msra.mxu0 0
        %4947 = vmatprep.subr.bf16.mxu0 0
        %4948 = vmatpush1.bf16.msra.mxu0 0
        %4949 = vmatprep.subr.bf16.mxu0 0
        %4950 = vmatpush1.bf16.msra.mxu0 0
        %4951 = vmatprep.subr.bf16.mxu0 0
        %4952 = vmatpush1.bf16.msra.mxu0 0
        %4953 = vmatprep.subr.bf16.mxu0 0
        %4954 = vmatpush1.bf16.msra.mxu0 0
        %4955 = vmatprep.subr.bf16.mxu0 0
        %4956 = vmatpush1.bf16.msra.mxu0 0
        %4957 = vmatprep.subr.bf16.mxu0 0
        %4958 = vmatpush1.bf16.msra.mxu0 0
        %4959 = vmatprep.subr.bf16.mxu0 0
        %4960 = vmatpush1.bf16.msra.mxu0 0
        %4961 = vmatprep.subr.bf16.mxu0 0
        %4962 = vmatpush1.bf16.msra.mxu0 0
        %4963 = vmatprep.subr.bf16.mxu0 0
        %4964 = vmatpush1.bf16.msra.mxu0 0
        %4965 = vmatprep.mubr.bf16.mxu0 0
        %4966 = vmatmul.mubr.bf16.gmra.mrb[0].mxu0 %v4931
        %v4967 = vpop.f32.mrb[0].mxu0
        %v4968 = vadd.f32 0.0, %v4967
        %v4969 = vpop.f32.mrb[0].mxu0
        %v4970 = vpop.f32.mrb[0].mxu0
        %v4971 = vpop.f32.mrb[0].mxu0
        %4972 = vdwg.mxu0
        %v4973 = vld [vmem:[%s5] sm:$0x3]
        %v4974 = vadd.f32 %v4973, %v4968
        %4975 = vrot.lane.b32.xlu0 %v4653, 96
        %v4976 = vpop.permute.xlu0 %4975
        %v4978 = vadd.f32 %v4974, %v4976
        %v4979 = vxor.u32 %v4978, 2147483648
        %v4980 = vmul.f32 %v4979, 1.442695
        %v4981 = vpow.pop %v4980
        %v4982 = vadd.f32 %v4981, 1.0
        %v4983 = vrcp.pop %v4982
        %v4984 = vmul.f32 1.0, %v4983
        %v4985 = vld [vmem:[%s6] sm:$0x3]
        %4987 = vrot.lane.b32.xlu0 %v4968, 96
        %v4988 = vpop.permute.xlu0 %4987
        %v4990 = vadd.f32 %v4985, %v4988
        %4992 = vrot.lane.b32.xlu0 %v4653, 64
        %v4993 = vpop.permute.xlu0 %4992
        %4994 = vrot.lane.b32.xlu0 %v4655, 64
        %v4995 = vpop.permute.xlu0 %4994
        %v4996 = vsel %vm745, %v4993, %v4995
        %v4998 = vadd.f32 %v4990, %v4996
        %v4999 = vxor.u32 %v4998, 2147483648
        %v5000 = vmul.f32 %v4999, 1.442695
        %v5001 = vpow.pop %v5000
        %v5002 = vadd.f32 %v5001, 1.0
        %v5003 = vrcp.pop %v5002
        %v5004 = vmul.f32 1.0, %v5003
        %v5005 = vld [vmem:[%s4] sm:$0x3]
        %5007 = vrot.lane.b32.xlu0 %v4908, 64
        %v5008 = vpop.permute.xlu0 %5007
        %v5010 = vsel %vm745, %v5005, %v5008
        %v5011 = vmul.f32 %v5004, %v5010
        %v5012 = vpack.c.bf16 %v5011, %v5011
        %v5013 = vld [vmem:[%s14] sm:$0xf]
        %v5014 = vld [vmem:[%s14 + $0x4] sm:$0xf]
        %v5015 = vld [vmem:[%s14 + $0x8] sm:$0xf]
        %v5016 = vld [vmem:[%s14 + $0xc] sm:$0xf]
        %v5017 = vld [vmem:[%s14 + $0x10] sm:$0xf]
        %v5018 = vld [vmem:[%s14 + $0x14] sm:$0xf]
        %v5019 = vld [vmem:[%s14 + $0x18] sm:$0xf]
        %v5020 = vld [vmem:[%s14 + $0x1c] sm:$0xf]
        %v5021 = vld [vmem:[%s14 + $0x20] sm:$0xf]
        %v5022 = vld [vmem:[%s14 + $0x24] sm:$0xf]
        %v5023 = vld [vmem:[%s14 + $0x28] sm:$0xf]
        %v5024 = vld [vmem:[%s14 + $0x2c] sm:$0xf]
        %v5037 = vunpack.c.l.b16 %v5013
        %v5038 = vunpack.c.l.b16 %v5014
        %v5039 = vunpack.c.l.b16 %v5015
        %v5040 = vunpack.c.l.b16 %v5016
        %v5041 = vunpack.c.l.b16 %v5017
        %v5042 = vunpack.c.l.b16 %v5018
        %v5043 = vunpack.c.l.b16 %v5019
        %v5044 = vunpack.c.l.b16 %v5020
        %v5045 = vunpack.c.l.b16 %v5021
        %v5046 = vunpack.c.l.b16 %v5022
        %v5047 = vunpack.c.l.b16 %v5023
        %v5048 = vunpack.c.l.b16 %v5024
        %v5049 = vpack.c.b16 %v5038, %v5037
        %v5050 = vpack.c.b16 %v5040, %v5039
        %v5051 = vpack.c.b16 %v5042, %v5041
        %v5052 = vpack.c.b16 %v5044, %v5043
        %v5053 = vpack.c.b16 %v5046, %v5045
        %v5054 = vpack.c.b16 %v5048, %v5047
        %5061 = vrot.lane.b32.xlu0 %v4655, 96
        %v5062 = vpop.permute.xlu0 %5061
        %v5065 = vsel %vm1298, %v5012, 0
        %5067 = vmatprep.subr.bf16.mxu0 0
        %5068 = vmatpush1.bf16.msra.mxu0 %v5049
        %5069 = vmatprep.subr.bf16.mxu0 0
        %5070 = vmatpush1.bf16.msra.mxu0 %v5050
        %5071 = vmatprep.subr.bf16.mxu0 0
        %5072 = vmatpush1.bf16.msra.mxu0 %v5051
        %5073 = vmatprep.subr.bf16.mxu0 0
        %5074 = vmatpush1.bf16.msra.mxu0 %v5052
        %5075 = vmatprep.subr.bf16.mxu0 0
        %5076 = vmatpush1.bf16.msra.mxu0 %v5053
        %5077 = vmatprep.subr.bf16.mxu0 0
        %5078 = vmatpush1.bf16.msra.mxu0 %v5054
        %5079 = vmatprep.subr.bf16.mxu0 0
        %5080 = vmatpush1.bf16.msra.mxu0 0
        %5081 = vmatprep.subr.bf16.mxu0 0
        %5082 = vmatpush1.bf16.msra.mxu0 0
        %5083 = vmatprep.subr.bf16.mxu0 0
        %5084 = vmatpush1.bf16.msra.mxu0 0
        %5085 = vmatprep.subr.bf16.mxu0 0
        %5086 = vmatpush1.bf16.msra.mxu0 0
        %5087 = vmatprep.subr.bf16.mxu0 0
        %5088 = vmatpush1.bf16.msra.mxu0 0
        %5089 = vmatprep.subr.bf16.mxu0 0
        %5090 = vmatpush1.bf16.msra.mxu0 0
        %5091 = vmatprep.subr.bf16.mxu0 0
        %5092 = vmatpush1.bf16.msra.mxu0 0
        %5093 = vmatprep.subr.bf16.mxu0 0
        %5094 = vmatpush1.bf16.msra.mxu0 0
        %5095 = vmatprep.subr.bf16.mxu0 0
        %5096 = vmatpush1.bf16.msra.mxu0 0
        %5097 = vmatprep.subr.bf16.mxu0 0
        %5098 = vmatpush1.bf16.msra.mxu0 0
        %5099 = vmatprep.mubr.bf16.mxu0 0
        %5100 = vmatmul.mubr.bf16.gmra.mrb[0].mxu0 %v5065
        %v5101 = vpop.f32.mrb[0].mxu0
        %v5102 = vadd.f32 %v5062, %v5101
        %v5103 = vpop.f32.mrb[0].mxu0
        %v5104 = vpop.f32.mrb[0].mxu0
        %v5105 = vpop.f32.mrb[0].mxu0
        %5106 = vdwg.mxu0
        %v5107 = vld [vmem:[%s15] sm:$0x1]
        %v5109 = vlaneseq
        %v5110 = vshrl.u32 %v5109, 7
        %v5111 = vsub.s32 0, %v5110
        %v5112 = vrot.slane %v5107, %v5111
        %v5114 = vadd.f32 %v5102, %v5112
        %v5115 = vtanh.pop %v5114
        %v5116 = vsub.f32 1.0, %v4984
        %5118 = vrot.lane.b32.xlu0 %v4586, 32
        %v5119 = vpop.permute.xlu0 %5118
        %v5121 = vmul.f32 %v5116, %v5119
        %v5122 = vmul.f32 %v4984, %v5115
        %v5123 = vadd.f32 %v5121, %v5122
        %s5124 = scalar_lea.vmem %s571, 10
        %5125 = vst.msk [vmem:[%s5124] sm:$0x3] %vm1359, %v5123
        %s5126 = scalar_lea.vmem %s565, 6
        %v5127 = vld [vmem:[%s5126] sm:$0x1]
        %v5128 = vunpack.c.l.bf16 %v5127
        %v5129 = vpack.c.bf16 %v4463, %v4463
        %v5130 = vld [vmem:[%s7] sm:$0xf]
        %v5131 = vld [vmem:[%s7 + $0x4] sm:$0xf]
        %v5132 = vld [vmem:[%s7 + $0x8] sm:$0xf]
        %v5133 = vld [vmem:[%s7 + $0xc] sm:$0xf]
        %5135 = vrot.lane.b32.xlu0 %v5129, 32
        %v5136 = vpop.permute.xlu0 %5135
        %v5141 = vunpack.c.l.b16 %v5130
        %v5142 = vunpack.c.l.b16 %v5131
        %v5143 = vunpack.c.l.b16 %v5132
        %v5144 = vunpack.c.l.b16 %v5133
        %v5145 = vpack.c.b16 %v5142, %v5141
        %v5146 = vpack.c.b16 %v5144, %v5143
        %v5150 = vsel %vm609, %v5136, 0
        %5152 = vmatprep.subr.bf16.mxu0 0
        %5153 = vmatpush1.bf16.msra.mxu0 %v5145
        %5154 = vmatprep.subr.bf16.mxu0 0
        %5155 = vmatpush1.bf16.msra.mxu0 %v5146
        %5156 = vmatprep.subr.bf16.mxu0 0
        %5157 = vmatpush1.bf16.msra.mxu0 0
        %5158 = vmatprep.subr.bf16.mxu0 0
        %5159 = vmatpush1.bf16.msra.mxu0 0
        %5160 = vmatprep.subr.bf16.mxu0 0
        %5161 = vmatpush1.bf16.msra.mxu0 0
        %5162 = vmatprep.subr.bf16.mxu0 0
        %5163 = vmatpush1.bf16.msra.mxu0 0
        %5164 = vmatprep.subr.bf16.mxu0 0
        %5165 = vmatpush1.bf16.msra.mxu0 0
        %5166 = vmatprep.subr.bf16.mxu0 0
        %5167 = vmatpush1.bf16.msra.mxu0 0
        %5168 = vmatprep.subr.bf16.mxu0 0
        %5169 = vmatpush1.bf16.msra.mxu0 0
        %5170 = vmatprep.subr.bf16.mxu0 0
        %5171 = vmatpush1.bf16.msra.mxu0 0
        %5172 = vmatprep.subr.bf16.mxu0 0
        %5173 = vmatpush1.bf16.msra.mxu0 0
        %5174 = vmatprep.subr.bf16.mxu0 0
        %5175 = vmatpush1.bf16.msra.mxu0 0
        %5176 = vmatprep.subr.bf16.mxu0 0
        %5177 = vmatpush1.bf16.msra.mxu0 0
        %5178 = vmatprep.subr.bf16.mxu0 0
        %5179 = vmatpush1.bf16.msra.mxu0 0
        %5180 = vmatprep.subr.bf16.mxu0 0
        %5181 = vmatpush1.bf16.msra.mxu0 0
        %5182 = vmatprep.subr.bf16.mxu0 0
        %5183 = vmatpush1.bf16.msra.mxu0 0
        %5184 = vmatprep.mubr.bf16.mxu0 0
        %5185 = vmatmul.mubr.bf16.gmra.mrb[0].mxu0 %v5150
        %v5186 = vpop.f32.mrb[0].mxu0
        %v5187 = vadd.f32 0.0, %v5186
        %v5188 = vpop.f32.mrb[0].mxu0
        %v5189 = vpop.f32.mrb[0].mxu0
        %v5190 = vpop.f32.mrb[0].mxu0
        %5191 = vdwg.mxu0
        %v5192 = vadd.f32 %v5128, %v5187
        %v5193 = vxor.u32 %v5192, 2147483648
        %v5194 = vmul.f32 %v5193, 1.442695
        %v5195 = vpow.pop %v5194
        %v5196 = vadd.f32 %v5195, 1.0
        %v5197 = vrcp.pop %v5196
        %v5198 = vmul.f32 1.0, %v5197
        %v5199 = vtanh.pop %v5192
        %v5200 = vmul.f32 %v5198, %v4457
        %5202 = vrot.lane.b32.xlu0 %v5199, 64
        %v5203 = vpop.permute.xlu0 %5202
        %v5205 = vmul.f32 %v5198, %v5203
        %5207 = vrot.lane.b32.xlu0 %v5205, 32
        %v5208 = vpop.permute.xlu0 %5207
        %v5210 = vadd.f32 %v5200, %v5208
        %v5211 = vtanh.pop %v5210
        %5213 = vrot.lane.b32.xlu0 %v5211, 64
        %v5214 = vpop.permute.xlu0 %5213
        %v5216 = vmul.f32 %v5198, %v5214
        %v5219 = vunpack.c.l.s4 1983009808
        %v5220 = vunpack.c.0.s8 %v5219
        %v5221 = vlaneseq
        %v5222 = vshrl.u32 %v5221, 7
        %v5223 = vsub.s32 %v5220, %v5222
        %v5224 = vrot.slane %v5216, %v5223
        %5225 = vrot.lane.b32.xlu0 %v5224, 32
        %v5226 = vpop.permute.xlu0 %5225
        %5229 = vrot.lane.b32.xlu0 %v5123, 32
        %v5230 = vpop.permute.xlu0 %5229
        %v5232 = vsel %vm609, %v5226, %v5230
        %v5233 = vpack.c.bf16 %v5232, %v5232
        %v5234 = vld [vmem:[%s8] sm:$0xf]
        %v5235 = vld [vmem:[%s8 + $0x4] sm:$0xf]
        %v5236 = vld [vmem:[%s8 + $0x8] sm:$0xf]
        %v5237 = vld [vmem:[%s8 + $0xc] sm:$0xf]
        %v5238 = vld [vmem:[%s8 + $0x10] sm:$0xf]
        %v5239 = vld [vmem:[%s8 + $0x14] sm:$0xf]
        %v5240 = vld [vmem:[%s8 + $0x18] sm:$0xf]
        %v5241 = vld [vmem:[%s8 + $0x1c] sm:$0xf]
        %v5242 = vld [vmem:[%s9] sm:$0x1]
        %v5244 = vlaneseq
        %v5245 = vshrl.u32 %v5244, 7
        %v5246 = vsub.s32 0, %v5245
        %v5247 = vrot.slane %v5242, %v5246
        %v5257 = vunpack.c.l.b16 %v5234
        %v5258 = vunpack.c.l.b16 %v5235
        %v5259 = vunpack.c.l.b16 %v5236
        %v5260 = vunpack.c.l.b16 %v5237
        %v5261 = vunpack.c.l.b16 %v5238
        %v5262 = vunpack.c.l.b16 %v5239
        %v5263 = vunpack.c.l.b16 %v5240
        %v5264 = vunpack.c.l.b16 %v5241
        %v5265 = vpack.c.b16 %v5258, %v5257
        %v5266 = vpack.c.b16 %v5260, %v5259
        %v5267 = vpack.c.b16 %v5262, %v5261
        %v5268 = vpack.c.b16 %v5264, %v5263
        %v5274 = vsel %vm745, %v5233, 0
        %5276 = vmatprep.subr.bf16.mxu0 0
        %5277 = vmatpush1.bf16.msra.mxu0 %v5265
        %5278 = vmatprep.subr.bf16.mxu0 0
        %5279 = vmatpush1.bf16.msra.mxu0 %v5266
        %5280 = vmatprep.subr.bf16.mxu0 0
        %5281 = vmatpush1.bf16.msra.mxu0 %v5267
        %5282 = vmatprep.subr.bf16.mxu0 0
        %5283 = vmatpush1.bf16.msra.mxu0 %v5268
        %5284 = vmatprep.subr.bf16.mxu0 0
        %5285 = vmatpush1.bf16.msra.mxu0 0
        %5286 = vmatprep.subr.bf16.mxu0 0
        %5287 = vmatpush1.bf16.msra.mxu0 0
        %5288 = vmatprep.subr.bf16.mxu0 0
        %5289 = vmatpush1.bf16.msra.mxu0 0
        %5290 = vmatprep.subr.bf16.mxu0 0
        %5291 = vmatpush1.bf16.msra.mxu0 0
        %5292 = vmatprep.subr.bf16.mxu0 0
        %5293 = vmatpush1.bf16.msra.mxu0 0
        %5294 = vmatprep.subr.bf16.mxu0 0
        %5295 = vmatpush1.bf16.msra.mxu0 0
        %5296 = vmatprep.subr.bf16.mxu0 0
        %5297 = vmatpush1.bf16.msra.mxu0 0
        %5298 = vmatprep.subr.bf16.mxu0 0
        %5299 = vmatpush1.bf16.msra.mxu0 0
        %5300 = vmatprep.subr.bf16.mxu0 0
        %5301 = vmatpush1.bf16.msra.mxu0 0
        %5302 = vmatprep.subr.bf16.mxu0 0
        %5303 = vmatpush1.bf16.msra.mxu0 0
        %5304 = vmatprep.subr.bf16.mxu0 0
        %5305 = vmatpush1.bf16.msra.mxu0 0
        %5306 = vmatprep.subr.bf16.mxu0 0
        %5307 = vmatpush1.bf16.msra.mxu0 0
        %5308 = vmatprep.mubr.bf16.mxu0 0
        %5309 = vmatmul.mubr.bf16.gmra.mrb[0].mxu0 %v5274
        %v5310 = vpop.f32.mrb[0].mxu0
        %v5311 = vadd.f32 %v5247, %v5310
        %v5312 = vpop.f32.mrb[0].mxu0
        %v5313 = vpop.f32.mrb[0].mxu0
        %v5314 = vpop.f32.mrb[0].mxu0
        %5315 = vdwg.mxu0
        %v5316 = vxor.u32 %v5311, 2147483648
        %v5317 = vmul.f32 %v5316, 1.442695
        %v5318 = vpow.pop %v5317
        %v5319 = vadd.f32 %v5318, 1.0
        %v5320 = vrcp.pop %v5319
        %v5321 = vmul.f32 1.0, %v5320
        %v5322 = vtanh.pop %v5311
        %v5323 = vmul.f32 %v5321, %v4580
        %5325 = vrot.lane.b32.xlu0 %v5322, 64
        %v5326 = vpop.permute.xlu0 %5325
        %v5328 = vmul.f32 %v5321, %v5326
        %5330 = vrot.lane.b32.xlu0 %v5328, 32
        %v5331 = vpop.permute.xlu0 %5330
        %v5333 = vadd.f32 %v5323, %v5331
        %v5334 = vtanh.pop %v5333
        %5336 = vrot.lane.b32.xlu0 %v5334, 64
        %v5337 = vpop.permute.xlu0 %5336
        %v5339 = vmul.f32 %v5321, %v5337
        %v5340 = vpack.c.bf16 %v5339, %v5339
        %v5341 = vld [vmem:[%s12] sm:$0xff]
        %v5342 = vld [vmem:[%s12 + $0x8] sm:$0xff]
        %v5343 = vld [vmem:[%s12 + $0x10] sm:$0xff]
        %v5344 = vld [vmem:[%s12 + $0x18] sm:$0xff]
        %5346 = vrot.lane.b32.xlu0 %v5340, 32
        %v5347 = vpop.permute.xlu0 %5346
        %v5352 = vunpack.c.l.b16 %v5341
        %v5353 = vunpack.c.h.b16 %v5341
        %v5354 = vunpack.c.l.b16 %v5342
        %v5355 = vunpack.c.h.b16 %v5342
        %v5356 = vunpack.c.l.b16 %v5343
        %v5357 = vunpack.c.h.b16 %v5343
        %v5358 = vunpack.c.l.b16 %v5344
        %v5359 = vunpack.c.h.b16 %v5344
        %v5360 = vpack.c.b16 %v5354, %v5352
        %v5361 = vpack.c.b16 %v5355, %v5353
        %v5362 = vpack.c.b16 %v5358, %v5356
        %v5363 = vpack.c.b16 %v5359, %v5357
        %v5369 = vsel %vm609, %v5347, 0
        %5371 = vmatprep.subr.bf16.mxu0 %v5361
        %5372 = vmatpush1.bf16.msra.mxu0 %v5360
        %5373 = vmatprep.subr.bf16.mxu0 %v5363
        %5374 = vmatpush1.bf16.msra.mxu0 %v5362
        %5375 = vmatprep.subr.bf16.mxu0 0
        %5376 = vmatpush1.bf16.msra.mxu0 0
        %5377 = vmatprep.subr.bf16.mxu0 0
        %5378 = vmatpush1.bf16.msra.mxu0 0
        %5379 = vmatprep.subr.bf16.mxu0 0
        %5380 = vmatpush1.bf16.msra.mxu0 0
        %5381 = vmatprep.subr.bf16.mxu0 0
        %5382 = vmatpush1.bf16.msra.mxu0 0
        %5383 = vmatprep.subr.bf16.mxu0 0
        %5384 = vmatpush1.bf16.msra.mxu0 0
        %5385 = vmatprep.subr.bf16.mxu0 0
        %5386 = vmatpush1.bf16.msra.mxu0 0
        %5387 = vmatprep.subr.bf16.mxu0 0
        %5388 = vmatpush1.bf16.msra.mxu0 0
        %5389 = vmatprep.subr.bf16.mxu0 0
        %5390 = vmatpush1.bf16.msra.mxu0 0
        %5391 = vmatprep.subr.bf16.mxu0 0
        %5392 = vmatpush1.bf16.msra.mxu0 0
        %5393 = vmatprep.subr.bf16.mxu0 0
        %5394 = vmatpush1.bf16.msra.mxu0 0
        %5395 = vmatprep.subr.bf16.mxu0 0
        %5396 = vmatpush1.bf16.msra.mxu0 0
        %5397 = vmatprep.subr.bf16.mxu0 0
        %5398 = vmatpush1.bf16.msra.mxu0 0
        %5399 = vmatprep.subr.bf16.mxu0 0
        %5400 = vmatpush1.bf16.msra.mxu0 0
        %5401 = vmatprep.subr.bf16.mxu0 0
        %5402 = vmatpush1.bf16.msra.mxu0 0
        %5403 = vmatprep.mubr.bf16.mxu0 0
        %5404 = vmatmul.mubr.bf16.gmra.mrb[0].mxu0 %v5369
        %v5405 = vpop.f32.mrb[0].mxu0
        %v5406 = vadd.f32 0.0, %v5405
        %v5407 = vpop.f32.mrb[0].mxu0
        %v5408 = vadd.f32 0.0, %v5407
        %v5409 = vpop.f32.mrb[0].mxu0
        %v5410 = vpop.f32.mrb[0].mxu0
        %5411 = vdwg.mxu0
        %v5412 = vld [vmem:[%s3] sm:$0xff]
        %v5413 = vld [vmem:[%s3 + $0x8] sm:$0xff]
        %v5416 = vunpack.c.l.s4 1966171168
        %v5417 = vunpack.c.0.s8 %v5416
        %v5418 = vlaneseq
        %v5419 = vshrl.u32 %v5418, 7
        %v5420 = vsub.s32 %v5417, %v5419
        %v5421 = vrot.slane %v5406, %v5420
        %v5422 = vcombine.high %v5421, %v5421
        %v5424 = vunpack.c.l.s4 1966171168
        %v5425 = vunpack.c.0.s8 %v5424
        %v5426 = vlaneseq
        %v5427 = vshrl.u32 %v5426, 7
        %v5428 = vsub.s32 %v5425, %v5427
        %v5429 = vrot.slane %v5421, %v5428
        %v5431 = vunpack.c.l.s4 1966171168
        %v5432 = vunpack.c.0.s8 %v5431
        %v5433 = vlaneseq
        %v5434 = vshrl.u32 %v5433, 7
        %v5435 = vsub.s32 %v5432, %v5434
        %v5436 = vrot.slane %v5422, %v5435
        %v5437 = vlaneseq
        %v5438 = vshrl.u32 %v5437, 7
        %v5439 = vsub.s32 0, %v5438
        %v5440 = vrot.slane %v5429, %v5439
        %v5441 = vlaneseq
        %v5442 = vshrl.u32 %v5441, 7
        %v5443 = vsub.s32 0, %v5442
        %v5444 = vrot.slane %v5436, %v5443
        %v5447 = vmul.f32 %v5412, %v5440
        %v5448 = vmul.f32 %v5413, %v5444
        %v5449 = vsel %vm609, %v5447, 0.0
        %5450 = vadd.xlane.f32.xlu0 %v5449
        %v5451 = vpop.xlane.xlu0 %5450
        %v5452 = vsel %vm609, %v5448, 0.0
        %5453 = vadd.xlane.f32.xlu0 %v5452
        %v5454 = vpop.xlane.xlu0 %5453
        %v5455 = vld [vmem:[%s2] sm:$0x3]
        %v5457 = vlaneseq
        %v5458 = vshrl.u32 %v5457, 7
        %v5459 = vsub.s32 0, %v5458
        %v5460 = vrot.slane %v5455, %v5459
        %5462 = vbcast.lane.b32.xlu0 %v5460, 256
        %v5463 = vpop.permute.xlu0 %5462
        %v5464 = vlaneseq
        %v5465 = vshrl.u32 %v5464, 7
        %v5466 = vsub.s32 1, %v5465
        %v5467 = vrot.slane %v5455, %v5466
        %5469 = vbcast.lane.b32.xlu0 %v5467, 256
        %v5470 = vpop.permute.xlu0 %5469
        %v5473 = vadd.f32 %v5451, %v5463
        %v5474 = vadd.f32 %v5454, %v5470
        %5477 = vset.pattern.permute.xlu0 0
        %5478 = vperm.xlu0 %5477, %v5473
        %v5479 = vpop.permute.xlu0 %5478
        %5480 = vset.pattern.permute.xlu0 0
        %5481 = vperm.xlu0 %5480, %v5474
        %v5482 = vpop.permute.xlu0 %5481
        %v5483 = vlaneseq
        %v5484 = vshrl.u32 %v5483, 7
        %v5485 = vsub.s32 %v961, %v5484
        %v5486 = vrot.slane %v5479, %v5485
        %v5487 = vlaneseq
        %v5488 = vshrl.u32 %v5487, 7
        %v5489 = vsub.s32 %v961, %v5488
        %v5490 = vrot.slane %v5482, %v5489
        %v5491 = vsel %vm970, %v5490, %v5486
        %v5493 = vsel %vm973, %v5491, -inf
        %5494 = vmax.xlane.f32.xlu0 %v5493
        %v5495 = vpop.xlane.xlu0 %5494
        %v5497 = vlaneseq
        %v5498 = vshrl.u32 %v5497, 7
        %v5499 = vsub.s32 0, %v5498
        %v5500 = vrot.slane %v5495, %v5499
        %v5501 = vlaneseq
        %v5502 = vshrl.u32 %v5501, 7
        %v5503 = vsub.s32 1, %v5502
        %v5504 = vrot.slane %v5495, %v5503
        %v5507 = vsub.f32 %v5473, %v5500
        %v5508 = vsub.f32 %v5474, %v5504
        %v5509 = vmul.f32 %v5507, 1.442695
        %v5510 = vpow.pop %v5509
        %v5511 = vmul.f32 %v5508, 1.442695
        %v5512 = vpow.pop %v5511
        %5515 = vset.pattern.permute.xlu0 0
        %5516 = vperm.xlu0 %5515, %v5510
        %v5517 = vpop.permute.xlu0 %5516
        %5518 = vset.pattern.permute.xlu0 0
        %5519 = vperm.xlu0 %5518, %v5512
        %v5520 = vpop.permute.xlu0 %5519
        %v5521 = vlaneseq
        %v5522 = vshrl.u32 %v5521, 7
        %v5523 = vsub.s32 %v961, %v5522
        %v5524 = vrot.slane %v5517, %v5523
        %v5525 = vlaneseq
        %v5526 = vshrl.u32 %v5525, 7
        %v5527 = vsub.s32 %v961, %v5526
        %v5528 = vrot.slane %v5520, %v5527
        %v5529 = vsel %vm970, %v5528, %v5524
        %v5531 = vsel %vm973, %v5529, 0.0
        %5532 = vadd.xlane.f32.xlu0 %v5531
        %v5533 = vpop.xlane.xlu0 %5532
        %v5534 = vrcp.pop %v5533
        %v5536 = vlaneseq
        %v5537 = vshrl.u32 %v5536, 7
        %v5538 = vsub.s32 0, %v5537
        %v5539 = vrot.slane %v5534, %v5538
        %v5540 = vlaneseq
        %v5541 = vshrl.u32 %v5540, 7
        %v5542 = vsub.s32 1, %v5541
        %v5543 = vrot.slane %v5534, %v5542
        %v5546 = vmul.f32 %v5510, %v5539
        %v5547 = vmul.f32 %v5512, %v5543
        %v5548 = vld [vmem:[%s1] sm:$0xff]
        %v5549 = vld [vmem:[%s1 + $0x8] sm:$0xff]
        %5551 = vset.pattern.permute.xlu0 0
        %5552 = vperm.xlu0 %5551, %v5546
        %v5553 = vpop.permute.xlu0 %5552
        %5556 = vset.pattern.permute.xlu0 0
        %5557 = vperm.xlu0 %5556, %v5547
        %v5558 = vpop.permute.xlu0 %5557
        %v5560 = vmul.f32 %v5553, %v5548
        %v5561 = vmul.f32 %v5558, %v5549
        %v5562 = vsel %vm745, %v5560, 0.0
        %v5563 = vrot.slane %v5562, 4
        %v5564 = vadd.f32 %v5562, %v5563
        %v5565 = vrot.slane %v5564, 2
        %v5566 = vadd.f32 %v5564, %v5565
        %v5567 = vrot.slane %v5566, 1
        %v5568 = vadd.f32 %v5566, %v5567
        %v5569 = vsel %vm745, %v5561, 0.0
        %v5570 = vrot.slane %v5569, 4
        %v5571 = vadd.f32 %v5569, %v5570
        %v5572 = vrot.slane %v5571, 2
        %v5573 = vadd.f32 %v5571, %v5572
        %v5574 = vrot.slane %v5573, 1
        %v5575 = vadd.f32 %v5573, %v5574
        %v5576 = vpack.c.bf16 %v5568, %v5568
        %v5577 = vpack.c.bf16 %v5575, %v5575
        %v5578 = vld [vmem:[%s10] sm:$0xf]
        %v5579 = vld [vmem:[%s10 + $0x4] sm:$0xf]
        %v5580 = vld [vmem:[%s10 + $0x8] sm:$0xf]
        %v5581 = vld [vmem:[%s10 + $0xc] sm:$0xf]
        %v5582 = vld [vmem:[%s10 + $0x10] sm:$0xf]
        %v5583 = vld [vmem:[%s10 + $0x14] sm:$0xf]
        %v5584 = vld [vmem:[%s10 + $0x18] sm:$0xf]
        %v5585 = vld [vmem:[%s10 + $0x1c] sm:$0xf]
        %v5586 = vld [vmem:[%s11] sm:$0x1]
        %v5588 = vlaneseq
        %v5589 = vshrl.u32 %v5588, 7
        %v5590 = vsub.s32 0, %v5589
        %v5591 = vrot.slane %v5586, %v5590
        %v5595 = vunpack.c.l.b16 %v5576
        %v5596 = vunpack.c.l.b16 %v5577
        %v5597 = vsel %vm970, %v5596, %v5595
        %v5598 = vpack.c.b16 %v5597, %v5597
        %v5607 = vunpack.c.l.b16 %v5578
        %v5608 = vunpack.c.l.b16 %v5579
        %v5609 = vunpack.c.l.b16 %v5580
        %v5610 = vunpack.c.l.b16 %v5581
        %v5611 = vunpack.c.l.b16 %v5582
        %v5612 = vunpack.c.l.b16 %v5583
        %v5613 = vunpack.c.l.b16 %v5584
        %v5614 = vunpack.c.l.b16 %v5585
        %v5615 = vpack.c.b16 %v5608, %v5607
        %v5616 = vpack.c.b16 %v5610, %v5609
        %v5617 = vpack.c.b16 %v5612, %v5611
        %v5618 = vpack.c.b16 %v5614, %v5613
        %v5624 = vsel %vm745, %v5598, 0
        %5626 = vmatprep.subr.bf16.mxu0 0
        %5627 = vmatpush1.bf16.msra.mxu0 %v5615
        %5628 = vmatprep.subr.bf16.mxu0 0
        %5629 = vmatpush1.bf16.msra.mxu0 %v5616
        %5630 = vmatprep.subr.bf16.mxu0 0
        %5631 = vmatpush1.bf16.msra.mxu0 %v5617
        %5632 = vmatprep.subr.bf16.mxu0 0
        %5633 = vmatpush1.bf16.msra.mxu0 %v5618
        %5634 = vmatprep.subr.bf16.mxu0 0
        %5635 = vmatpush1.bf16.msra.mxu0 0
        %5636 = vmatprep.subr.bf16.mxu0 0
        %5637 = vmatpush1.bf16.msra.mxu0 0
        %5638 = vmatprep.subr.bf16.mxu0 0
        %5639 = vmatpush1.bf16.msra.mxu0 0
        %5640 = vmatprep.subr.bf16.mxu0 0
        %5641 = vmatpush1.bf16.msra.mxu0 0
        %5642 = vmatprep.subr.bf16.mxu0 0
        %5643 = vmatpush1.bf16.msra.mxu0 0
        %5644 = vmatprep.subr.bf16.mxu0 0
        %5645 = vmatpush1.bf16.msra.mxu0 0
        %5646 = vmatprep.subr.bf16.mxu0 0
        %5647 = vmatpush1.bf16.msra.mxu0 0
        %5648 = vmatprep.subr.bf16.mxu0 0
        %5649 = vmatpush1.bf16.msra.mxu0 0
        %5650 = vmatprep.subr.bf16.mxu0 0
        %5651 = vmatpush1.bf16.msra.mxu0 0
        %5652 = vmatprep.subr.bf16.mxu0 0
        %5653 = vmatpush1.bf16.msra.mxu0 0
        %5654 = vmatprep.subr.bf16.mxu0 0
        %5655 = vmatpush1.bf16.msra.mxu0 0
        %5656 = vmatprep.subr.bf16.mxu0 0
        %5657 = vmatpush1.bf16.msra.mxu0 0
        %5658 = vmatprep.mubr.bf16.mxu0 0
        %5659 = vmatmul.mubr.bf16.gmra.mrb[0].mxu0 %v5624
        %v5660 = vpop.f32.mrb[0].mxu0
        %v5661 = vadd.f32 %v5591, %v5660
        %v5662 = vpop.f32.mrb[0].mxu0
        %v5663 = vpop.f32.mrb[0].mxu0
        %v5664 = vpop.f32.mrb[0].mxu0
        %5665 = vdwg.mxu0
        %v5666 = vpack.c.bf16 %v5661, %v5661
        %v5667 = vld [vmem:[%s13] sm:$0xf]
        %v5668 = vld [vmem:[%s13 + $0x4] sm:$0xf]
        %v5669 = vld [vmem:[%s13 + $0x8] sm:$0xf]
        %v5670 = vld [vmem:[%s13 + $0xc] sm:$0xf]
        %v5675 = vunpack.c.l.b16 %v5667
        %v5676 = vunpack.c.l.b16 %v5668
        %v5677 = vunpack.c.l.b16 %v5669
        %v5678 = vunpack.c.l.b16 %v5670
        %v5679 = vpack.c.b16 %v5676, %v5675
        %v5680 = vpack.c.b16 %v5678, %v5677
        %v5684 = vsel %vm609, %v5666, 0
        %5686 = vmatprep.subr.bf16.mxu0 0
        %5687 = vmatpush1.bf16.msra.mxu0 %v5679
        %5688 = vmatprep.subr.bf16.mxu0 0
        %5689 = vmatpush1.bf16.msra.mxu0 %v5680
        %5690 = vmatprep.subr.bf16.mxu0 0
        %5691 = vmatpush1.bf16.msra.mxu0 0
        %5692 = vmatprep.subr.bf16.mxu0 0
        %5693 = vmatpush1.bf16.msra.mxu0 0
        %5694 = vmatprep.subr.bf16.mxu0 0
        %5695 = vmatpush1.bf16.msra.mxu0 0
        %5696 = vmatprep.subr.bf16.mxu0 0
        %5697 = vmatpush1.bf16.msra.mxu0 0
        %5698 = vmatprep.subr.bf16.mxu0 0
        %5699 = vmatpush1.bf16.msra.mxu0 0
        %5700 = vmatprep.subr.bf16.mxu0 0
        %5701 = vmatpush1.bf16.msra.mxu0 0
        %5702 = vmatprep.subr.bf16.mxu0 0
        %5703 = vmatpush1.bf16.msra.mxu0 0
        %5704 = vmatprep.subr.bf16.mxu0 0
        %5705 = vmatpush1.bf16.msra.mxu0 0
        %5706 = vmatprep.subr.bf16.mxu0 0
        %5707 = vmatpush1.bf16.msra.mxu0 0
        %5708 = vmatprep.subr.bf16.mxu0 0
        %5709 = vmatpush1.bf16.msra.mxu0 0
        %5710 = vmatprep.subr.bf16.mxu0 0
        %5711 = vmatpush1.bf16.msra.mxu0 0
        %5712 = vmatprep.subr.bf16.mxu0 0
        %5713 = vmatpush1.bf16.msra.mxu0 0
        %5714 = vmatprep.subr.bf16.mxu0 0
        %5715 = vmatpush1.bf16.msra.mxu0 0
        %5716 = vmatprep.subr.bf16.mxu0 0
        %5717 = vmatpush1.bf16.msra.mxu0 0
        %5718 = vmatprep.mubr.bf16.mxu0 0
        %5719 = vmatmul.mubr.bf16.gmra.mrb[0].mxu0 %v5684
        %v5720 = vpop.f32.mrb[0].mxu0
        %v5721 = vadd.f32 0.0, %v5720
        %v5722 = vpop.f32.mrb[0].mxu0
        %v5723 = vpop.f32.mrb[0].mxu0
        %v5724 = vpop.f32.mrb[0].mxu0
        %5725 = vdwg.mxu0
        %v5726 = vld [vmem:[%s5] sm:$0x3]
        %v5727 = vadd.f32 %v5726, %v5721
        %5728 = vrot.lane.b32.xlu0 %v5406, 96
        %v5729 = vpop.permute.xlu0 %5728
        %v5731 = vadd.f32 %v5727, %v5729
        %v5732 = vxor.u32 %v5731, 2147483648
        %v5733 = vmul.f32 %v5732, 1.442695
        %v5734 = vpow.pop %v5733
        %v5735 = vadd.f32 %v5734, 1.0
        %v5736 = vrcp.pop %v5735
        %v5737 = vmul.f32 1.0, %v5736
        %v5738 = vld [vmem:[%s6] sm:$0x3]
        %5740 = vrot.lane.b32.xlu0 %v5721, 96
        %v5741 = vpop.permute.xlu0 %5740
        %v5743 = vadd.f32 %v5738, %v5741
        %5745 = vrot.lane.b32.xlu0 %v5406, 64
        %v5746 = vpop.permute.xlu0 %5745
        %5747 = vrot.lane.b32.xlu0 %v5408, 64
        %v5748 = vpop.permute.xlu0 %5747
        %v5749 = vsel %vm745, %v5746, %v5748
        %v5751 = vadd.f32 %v5743, %v5749
        %v5752 = vxor.u32 %v5751, 2147483648
        %v5753 = vmul.f32 %v5752, 1.442695
        %v5754 = vpow.pop %v5753
        %v5755 = vadd.f32 %v5754, 1.0
        %v5756 = vrcp.pop %v5755
        %v5757 = vmul.f32 1.0, %v5756
        %v5758 = vld [vmem:[%s4] sm:$0x3]
        %5760 = vrot.lane.b32.xlu0 %v5661, 64
        %v5761 = vpop.permute.xlu0 %5760
        %v5763 = vsel %vm745, %v5758, %v5761
        %v5764 = vmul.f32 %v5757, %v5763
        %v5765 = vpack.c.bf16 %v5764, %v5764
        %v5766 = vld [vmem:[%s14] sm:$0xf]
        %v5767 = vld [vmem:[%s14 + $0x4] sm:$0xf]
        %v5768 = vld [vmem:[%s14 + $0x8] sm:$0xf]
        %v5769 = vld [vmem:[%s14 + $0xc] sm:$0xf]
        %v5770 = vld [vmem:[%s14 + $0x10] sm:$0xf]
        %v5771 = vld [vmem:[%s14 + $0x14] sm:$0xf]
        %v5772 = vld [vmem:[%s14 + $0x18] sm:$0xf]
        %v5773 = vld [vmem:[%s14 + $0x1c] sm:$0xf]
        %v5774 = vld [vmem:[%s14 + $0x20] sm:$0xf]
        %v5775 = vld [vmem:[%s14 + $0x24] sm:$0xf]
        %v5776 = vld [vmem:[%s14 + $0x28] sm:$0xf]
        %v5777 = vld [vmem:[%s14 + $0x2c] sm:$0xf]
        %v5790 = vunpack.c.l.b16 %v5766
        %v5791 = vunpack.c.l.b16 %v5767
        %v5792 = vunpack.c.l.b16 %v5768
        %v5793 = vunpack.c.l.b16 %v5769
        %v5794 = vunpack.c.l.b16 %v5770
        %v5795 = vunpack.c.l.b16 %v5771
        %v5796 = vunpack.c.l.b16 %v5772
        %v5797 = vunpack.c.l.b16 %v5773
        %v5798 = vunpack.c.l.b16 %v5774
        %v5799 = vunpack.c.l.b16 %v5775
        %v5800 = vunpack.c.l.b16 %v5776
        %v5801 = vunpack.c.l.b16 %v5777
        %v5802 = vpack.c.b16 %v5791, %v5790
        %v5803 = vpack.c.b16 %v5793, %v5792
        %v5804 = vpack.c.b16 %v5795, %v5794
        %v5805 = vpack.c.b16 %v5797, %v5796
        %v5806 = vpack.c.b16 %v5799, %v5798
        %v5807 = vpack.c.b16 %v5801, %v5800
        %5814 = vrot.lane.b32.xlu0 %v5408, 96
        %v5815 = vpop.permute.xlu0 %5814
        %v5818 = vsel %vm1298, %v5765, 0
        %5820 = vmatprep.subr.bf16.mxu0 0
        %5821 = vmatpush1.bf16.msra.mxu0 %v5802
        %5822 = vmatprep.subr.bf16.mxu0 0
        %5823 = vmatpush1.bf16.msra.mxu0 %v5803
        %5824 = vmatprep.subr.bf16.mxu0 0
        %5825 = vmatpush1.bf16.msra.mxu0 %v5804
        %5826 = vmatprep.subr.bf16.mxu0 0
        %5827 = vmatpush1.bf16.msra.mxu0 %v5805
        %5828 = vmatprep.subr.bf16.mxu0 0
        %5829 = vmatpush1.bf16.msra.mxu0 %v5806
        %5830 = vmatprep.subr.bf16.mxu0 0
        %5831 = vmatpush1.bf16.msra.mxu0 %v5807
        %5832 = vmatprep.subr.bf16.mxu0 0
        %5833 = vmatpush1.bf16.msra.mxu0 0
        %5834 = vmatprep.subr.bf16.mxu0 0
        %5835 = vmatpush1.bf16.msra.mxu0 0
        %5836 = vmatprep.subr.bf16.mxu0 0
        %5837 = vmatpush1.bf16.msra.mxu0 0
        %5838 = vmatprep.subr.bf16.mxu0 0
        %5839 = vmatpush1.bf16.msra.mxu0 0
        %5840 = vmatprep.subr.bf16.mxu0 0
        %5841 = vmatpush1.bf16.msra.mxu0 0
        %5842 = vmatprep.subr.bf16.mxu0 0
        %5843 = vmatpush1.bf16.msra.mxu0 0
        %5844 = vmatprep.subr.bf16.mxu0 0
        %5845 = vmatpush1.bf16.msra.mxu0 0
        %5846 = vmatprep.subr.bf16.mxu0 0
        %5847 = vmatpush1.bf16.msra.mxu0 0
        %5848 = vmatprep.subr.bf16.mxu0 0
        %5849 = vmatpush1.bf16.msra.mxu0 0
        %5850 = vmatprep.subr.bf16.mxu0 0
        %5851 = vmatpush1.bf16.msra.mxu0 0
        %5852 = vmatprep.mubr.bf16.mxu0 0
        %5853 = vmatmul.mubr.bf16.gmra.mrb[0].mxu0 %v5818
        %v5854 = vpop.f32.mrb[0].mxu0
        %v5855 = vadd.f32 %v5815, %v5854
        %v5856 = vpop.f32.mrb[0].mxu0
        %v5857 = vpop.f32.mrb[0].mxu0
        %v5858 = vpop.f32.mrb[0].mxu0
        %5859 = vdwg.mxu0
        %v5860 = vld [vmem:[%s15] sm:$0x1]
        %v5862 = vlaneseq
        %v5863 = vshrl.u32 %v5862, 7
        %v5864 = vsub.s32 0, %v5863
        %v5865 = vrot.slane %v5860, %v5864
        %v5867 = vadd.f32 %v5855, %v5865
        %v5868 = vtanh.pop %v5867
        %v5869 = vsub.f32 1.0, %v5737
        %5871 = vrot.lane.b32.xlu0 %v5339, 32
        %v5872 = vpop.permute.xlu0 %5871
        %v5874 = vmul.f32 %v5869, %v5872
        %v5875 = vmul.f32 %v5737, %v5868
        %v5876 = vadd.f32 %v5874, %v5875
        %s5877 = scalar_lea.vmem %s571, 12
        %5878 = vst.msk [vmem:[%s5877] sm:$0x3] %vm1359, %v5876
        %s5879 = scalar_select %p583, 1, 0
        %v5880 = vstv %s5879
        %vm5881 = vcmp.eq.s32.totalorder %v5880, 1
        %v5882 = vsel %vm5881, %v5216, %v4463
        %v5883 = vsel %vm5881, %v5210, %v4457
        %v5884 = vsel %vm5881, %v5876, %v5123
        %v5885 = vsel %vm5881, %v5333, %v4580
        %s5886 = scalar_lea.vmem %s565, 7
        %v5887 = vld [vmem:[%s5886] sm:$0x1]
        %v5888 = vunpack.c.l.bf16 %v5887
        %v5889 = vpack.c.bf16 %v5882, %v5882
        %v5890 = vld [vmem:[%s7] sm:$0xf]
        %v5891 = vld [vmem:[%s7 + $0x4] sm:$0xf]
        %v5892 = vld [vmem:[%s7 + $0x8] sm:$0xf]
        %v5893 = vld [vmem:[%s7 + $0xc] sm:$0xf]
        %5895 = vrot.lane.b32.xlu0 %v5889, 32
        %v5896 = vpop.permute.xlu0 %5895
        %v5901 = vunpack.c.l.b16 %v5890
        %v5902 = vunpack.c.l.b16 %v5891
        %v5903 = vunpack.c.l.b16 %v5892
        %v5904 = vunpack.c.l.b16 %v5893
        %v5905 = vpack.c.b16 %v5902, %v5901
        %v5906 = vpack.c.b16 %v5904, %v5903
        %v5910 = vsel %vm609, %v5896, 0
        %5912 = vmatprep.subr.bf16.mxu0 0
        %5913 = vmatpush1.bf16.msra.mxu0 %v5905
        %5914 = vmatprep.subr.bf16.mxu0 0
        %5915 = vmatpush1.bf16.msra.mxu0 %v5906
        %5916 = vmatprep.subr.bf16.mxu0 0
        %5917 = vmatpush1.bf16.msra.mxu0 0
        %5918 = vmatprep.subr.bf16.mxu0 0
        %5919 = vmatpush1.bf16.msra.mxu0 0
        %5920 = vmatprep.subr.bf16.mxu0 0
        %5921 = vmatpush1.bf16.msra.mxu0 0
        %5922 = vmatprep.subr.bf16.mxu0 0
        %5923 = vmatpush1.bf16.msra.mxu0 0
        %5924 = vmatprep.subr.bf16.mxu0 0
        %5925 = vmatpush1.bf16.msra.mxu0 0
        %5926 = vmatprep.subr.bf16.mxu0 0
        %5927 = vmatpush1.bf16.msra.mxu0 0
        %5928 = vmatprep.subr.bf16.mxu0 0
        %5929 = vmatpush1.bf16.msra.mxu0 0
        %5930 = vmatprep.subr.bf16.mxu0 0
        %5931 = vmatpush1.bf16.msra.mxu0 0
        %5932 = vmatprep.subr.bf16.mxu0 0
        %5933 = vmatpush1.bf16.msra.mxu0 0
        %5934 = vmatprep.subr.bf16.mxu0 0
        %5935 = vmatpush1.bf16.msra.mxu0 0
        %5936 = vmatprep.subr.bf16.mxu0 0
        %5937 = vmatpush1.bf16.msra.mxu0 0
        %5938 = vmatprep.subr.bf16.mxu0 0
        %5939 = vmatpush1.bf16.msra.mxu0 0
        %5940 = vmatprep.subr.bf16.mxu0 0
        %5941 = vmatpush1.bf16.msra.mxu0 0
        %5942 = vmatprep.subr.bf16.mxu0 0
        %5943 = vmatpush1.bf16.msra.mxu0 0
        %5944 = vmatprep.mubr.bf16.mxu0 0
        %5945 = vmatmul.mubr.bf16.gmra.mrb[0].mxu0 %v5910
        %v5946 = vpop.f32.mrb[0].mxu0
        %v5947 = vadd.f32 0.0, %v5946
        %v5948 = vpop.f32.mrb[0].mxu0
        %v5949 = vpop.f32.mrb[0].mxu0
        %v5950 = vpop.f32.mrb[0].mxu0
        %5951 = vdwg.mxu0
        %v5952 = vadd.f32 %v5888, %v5947
        %v5953 = vxor.u32 %v5952, 2147483648
        %v5954 = vmul.f32 %v5953, 1.442695
        %v5955 = vpow.pop %v5954
        %v5956 = vadd.f32 %v5955, 1.0
        %v5957 = vrcp.pop %v5956
        %v5958 = vmul.f32 1.0, %v5957
        %v5959 = vtanh.pop %v5952
        %v5960 = vmul.f32 %v5958, %v5883
        %5962 = vrot.lane.b32.xlu0 %v5959, 64
        %v5963 = vpop.permute.xlu0 %5962
        %v5965 = vmul.f32 %v5958, %v5963
        %5967 = vrot.lane.b32.xlu0 %v5965, 32
        %v5968 = vpop.permute.xlu0 %5967
        %v5970 = vadd.f32 %v5960, %v5968
        %v5971 = vtanh.pop %v5970
        %5973 = vrot.lane.b32.xlu0 %v5971, 64
        %v5974 = vpop.permute.xlu0 %5973
        %v5976 = vmul.f32 %v5958, %v5974
        %v5979 = vunpack.c.l.s4 1983009808
        %v5980 = vunpack.c.0.s8 %v5979
        %v5981 = vlaneseq
        %v5982 = vshrl.u32 %v5981, 7
        %v5983 = vsub.s32 %v5980, %v5982
        %v5984 = vrot.slane %v5976, %v5983
        %5985 = vrot.lane.b32.xlu0 %v5984, 32
        %v5986 = vpop.permute.xlu0 %5985
        %5989 = vrot.lane.b32.xlu0 %v5884, 32
        %v5990 = vpop.permute.xlu0 %5989
        %v5992 = vsel %vm609, %v5986, %v5990
        %v5993 = vpack.c.bf16 %v5992, %v5992
        %v5994 = vld [vmem:[%s8] sm:$0xf]
        %v5995 = vld [vmem:[%s8 + $0x4] sm:$0xf]
        %v5996 = vld [vmem:[%s8 + $0x8] sm:$0xf]
        %v5997 = vld [vmem:[%s8 + $0xc] sm:$0xf]
        %v5998 = vld [vmem:[%s8 + $0x10] sm:$0xf]
        %v5999 = vld [vmem:[%s8 + $0x14] sm:$0xf]
        %v6000 = vld [vmem:[%s8 + $0x18] sm:$0xf]
        %v6001 = vld [vmem:[%s8 + $0x1c] sm:$0xf]
        %v6002 = vld [vmem:[%s9] sm:$0x1]
        %v6004 = vlaneseq
        %v6005 = vshrl.u32 %v6004, 7
        %v6006 = vsub.s32 0, %v6005
        %v6007 = vrot.slane %v6002, %v6006
        %v6017 = vunpack.c.l.b16 %v5994
        %v6018 = vunpack.c.l.b16 %v5995
        %v6019 = vunpack.c.l.b16 %v5996
        %v6020 = vunpack.c.l.b16 %v5997
        %v6021 = vunpack.c.l.b16 %v5998
        %v6022 = vunpack.c.l.b16 %v5999
        %v6023 = vunpack.c.l.b16 %v6000
        %v6024 = vunpack.c.l.b16 %v6001
        %v6025 = vpack.c.b16 %v6018, %v6017
        %v6026 = vpack.c.b16 %v6020, %v6019
        %v6027 = vpack.c.b16 %v6022, %v6021
        %v6028 = vpack.c.b16 %v6024, %v6023
        %v6034 = vsel %vm745, %v5993, 0
        %6036 = vmatprep.subr.bf16.mxu0 0
        %6037 = vmatpush1.bf16.msra.mxu0 %v6025
        %6038 = vmatprep.subr.bf16.mxu0 0
        %6039 = vmatpush1.bf16.msra.mxu0 %v6026
        %6040 = vmatprep.subr.bf16.mxu0 0
        %6041 = vmatpush1.bf16.msra.mxu0 %v6027
        %6042 = vmatprep.subr.bf16.mxu0 0
        %6043 = vmatpush1.bf16.msra.mxu0 %v6028
        %6044 = vmatprep.subr.bf16.mxu0 0
        %6045 = vmatpush1.bf16.msra.mxu0 0
        %6046 = vmatprep.subr.bf16.mxu0 0
        %6047 = vmatpush1.bf16.msra.mxu0 0
        %6048 = vmatprep.subr.bf16.mxu0 0
        %6049 = vmatpush1.bf16.msra.mxu0 0
        %6050 = vmatprep.subr.bf16.mxu0 0
        %6051 = vmatpush1.bf16.msra.mxu0 0
        %6052 = vmatprep.subr.bf16.mxu0 0
        %6053 = vmatpush1.bf16.msra.mxu0 0
        %6054 = vmatprep.subr.bf16.mxu0 0
        %6055 = vmatpush1.bf16.msra.mxu0 0
        %6056 = vmatprep.subr.bf16.mxu0 0
        %6057 = vmatpush1.bf16.msra.mxu0 0
        %6058 = vmatprep.subr.bf16.mxu0 0
        %6059 = vmatpush1.bf16.msra.mxu0 0
        %6060 = vmatprep.subr.bf16.mxu0 0
        %6061 = vmatpush1.bf16.msra.mxu0 0
        %6062 = vmatprep.subr.bf16.mxu0 0
        %6063 = vmatpush1.bf16.msra.mxu0 0
        %6064 = vmatprep.subr.bf16.mxu0 0
        %6065 = vmatpush1.bf16.msra.mxu0 0
        %6066 = vmatprep.subr.bf16.mxu0 0
        %6067 = vmatpush1.bf16.msra.mxu0 0
        %6068 = vmatprep.mubr.bf16.mxu0 0
        %6069 = vmatmul.mubr.bf16.gmra.mrb[0].mxu0 %v6034
        %v6070 = vpop.f32.mrb[0].mxu0
        %v6071 = vadd.f32 %v6007, %v6070
        %v6072 = vpop.f32.mrb[0].mxu0
        %v6073 = vpop.f32.mrb[0].mxu0
        %v6074 = vpop.f32.mrb[0].mxu0
        %6075 = vdwg.mxu0
        %v6076 = vxor.u32 %v6071, 2147483648
        %v6077 = vmul.f32 %v6076, 1.442695
        %v6078 = vpow.pop %v6077
        %v6079 = vadd.f32 %v6078, 1.0
        %v6080 = vrcp.pop %v6079
        %v6081 = vmul.f32 1.0, %v6080
        %v6082 = vtanh.pop %v6071
        %v6083 = vmul.f32 %v6081, %v5885
        %6085 = vrot.lane.b32.xlu0 %v6082, 64
        %v6086 = vpop.permute.xlu0 %6085
        %v6088 = vmul.f32 %v6081, %v6086
        %6090 = vrot.lane.b32.xlu0 %v6088, 32
        %v6091 = vpop.permute.xlu0 %6090
        %v6093 = vadd.f32 %v6083, %v6091
        %v6094 = vtanh.pop %v6093
        %6096 = vrot.lane.b32.xlu0 %v6094, 64
        %v6097 = vpop.permute.xlu0 %6096
        %v6099 = vmul.f32 %v6081, %v6097
        %v6100 = vpack.c.bf16 %v6099, %v6099
        %v6101 = vld [vmem:[%s12] sm:$0xff]
        %v6102 = vld [vmem:[%s12 + $0x8] sm:$0xff]
        %v6103 = vld [vmem:[%s12 + $0x10] sm:$0xff]
        %v6104 = vld [vmem:[%s12 + $0x18] sm:$0xff]
        %6106 = vrot.lane.b32.xlu0 %v6100, 32
        %v6107 = vpop.permute.xlu0 %6106
        %v6112 = vunpack.c.l.b16 %v6101
        %v6113 = vunpack.c.h.b16 %v6101
        %v6114 = vunpack.c.l.b16 %v6102
        %v6115 = vunpack.c.h.b16 %v6102
        %v6116 = vunpack.c.l.b16 %v6103
        %v6117 = vunpack.c.h.b16 %v6103
        %v6118 = vunpack.c.l.b16 %v6104
        %v6119 = vunpack.c.h.b16 %v6104
        %v6120 = vpack.c.b16 %v6114, %v6112
        %v6121 = vpack.c.b16 %v6115, %v6113
        %v6122 = vpack.c.b16 %v6118, %v6116
        %v6123 = vpack.c.b16 %v6119, %v6117
        %v6129 = vsel %vm609, %v6107, 0
        %6131 = vmatprep.subr.bf16.mxu0 %v6121
        %6132 = vmatpush1.bf16.msra.mxu0 %v6120
        %6133 = vmatprep.subr.bf16.mxu0 %v6123
        %6134 = vmatpush1.bf16.msra.mxu0 %v6122
        %6135 = vmatprep.subr.bf16.mxu0 0
        %6136 = vmatpush1.bf16.msra.mxu0 0
        %6137 = vmatprep.subr.bf16.mxu0 0
        %6138 = vmatpush1.bf16.msra.mxu0 0
        %6139 = vmatprep.subr.bf16.mxu0 0
        %6140 = vmatpush1.bf16.msra.mxu0 0
        %6141 = vmatprep.subr.bf16.mxu0 0
        %6142 = vmatpush1.bf16.msra.mxu0 0
        %6143 = vmatprep.subr.bf16.mxu0 0
        %6144 = vmatpush1.bf16.msra.mxu0 0
        %6145 = vmatprep.subr.bf16.mxu0 0
        %6146 = vmatpush1.bf16.msra.mxu0 0
        %6147 = vmatprep.subr.bf16.mxu0 0
        %6148 = vmatpush1.bf16.msra.mxu0 0
        %6149 = vmatprep.subr.bf16.mxu0 0
        %6150 = vmatpush1.bf16.msra.mxu0 0
        %6151 = vmatprep.subr.bf16.mxu0 0
        %6152 = vmatpush1.bf16.msra.mxu0 0
        %6153 = vmatprep.subr.bf16.mxu0 0
        %6154 = vmatpush1.bf16.msra.mxu0 0
        %6155 = vmatprep.subr.bf16.mxu0 0
        %6156 = vmatpush1.bf16.msra.mxu0 0
        %6157 = vmatprep.subr.bf16.mxu0 0
        %6158 = vmatpush1.bf16.msra.mxu0 0
        %6159 = vmatprep.subr.bf16.mxu0 0
        %6160 = vmatpush1.bf16.msra.mxu0 0
        %6161 = vmatprep.subr.bf16.mxu0 0
        %6162 = vmatpush1.bf16.msra.mxu0 0
        %6163 = vmatprep.mubr.bf16.mxu0 0
        %6164 = vmatmul.mubr.bf16.gmra.mrb[0].mxu0 %v6129
        %v6165 = vpop.f32.mrb[0].mxu0
        %v6166 = vadd.f32 0.0, %v6165
        %v6167 = vpop.f32.mrb[0].mxu0
        %v6168 = vadd.f32 0.0, %v6167
        %v6169 = vpop.f32.mrb[0].mxu0
        %v6170 = vpop.f32.mrb[0].mxu0
        %6171 = vdwg.mxu0
        %v6172 = vld [vmem:[%s3] sm:$0xff]
        %v6173 = vld [vmem:[%s3 + $0x8] sm:$0xff]
        %v6176 = vunpack.c.l.s4 1966171168
        %v6177 = vunpack.c.0.s8 %v6176
        %v6178 = vlaneseq
        %v6179 = vshrl.u32 %v6178, 7
        %v6180 = vsub.s32 %v6177, %v6179
        %v6181 = vrot.slane %v6166, %v6180
        %v6182 = vcombine.high %v6181, %v6181
        %v6184 = vunpack.c.l.s4 1966171168
        %v6185 = vunpack.c.0.s8 %v6184
        %v6186 = vlaneseq
        %v6187 = vshrl.u32 %v6186, 7
        %v6188 = vsub.s32 %v6185, %v6187
        %v6189 = vrot.slane %v6181, %v6188
        %v6191 = vunpack.c.l.s4 1966171168
        %v6192 = vunpack.c.0.s8 %v6191
        %v6193 = vlaneseq
        %v6194 = vshrl.u32 %v6193, 7
        %v6195 = vsub.s32 %v6192, %v6194
        %v6196 = vrot.slane %v6182, %v6195
        %v6197 = vlaneseq
        %v6198 = vshrl.u32 %v6197, 7
        %v6199 = vsub.s32 0, %v6198
        %v6200 = vrot.slane %v6189, %v6199
        %v6201 = vlaneseq
        %v6202 = vshrl.u32 %v6201, 7
        %v6203 = vsub.s32 0, %v6202
        %v6204 = vrot.slane %v6196, %v6203
        %v6207 = vmul.f32 %v6172, %v6200
        %v6208 = vmul.f32 %v6173, %v6204
        %v6209 = vsel %vm609, %v6207, 0.0
        %6210 = vadd.xlane.f32.xlu0 %v6209
        %v6211 = vpop.xlane.xlu0 %6210
        %v6212 = vsel %vm609, %v6208, 0.0
        %6213 = vadd.xlane.f32.xlu0 %v6212
        %v6214 = vpop.xlane.xlu0 %6213
        %v6215 = vld [vmem:[%s2] sm:$0x3]
        %v6217 = vlaneseq
        %v6218 = vshrl.u32 %v6217, 7
        %v6219 = vsub.s32 0, %v6218
        %v6220 = vrot.slane %v6215, %v6219
        %6222 = vbcast.lane.b32.xlu0 %v6220, 256
        %v6223 = vpop.permute.xlu0 %6222
        %v6224 = vlaneseq
        %v6225 = vshrl.u32 %v6224, 7
        %v6226 = vsub.s32 1, %v6225
        %v6227 = vrot.slane %v6215, %v6226
        %6229 = vbcast.lane.b32.xlu0 %v6227, 256
        %v6230 = vpop.permute.xlu0 %6229
        %v6233 = vadd.f32 %v6211, %v6223
        %v6234 = vadd.f32 %v6214, %v6230
        %6237 = vset.pattern.permute.xlu0 0
        %6238 = vperm.xlu0 %6237, %v6233
        %v6239 = vpop.permute.xlu0 %6238
        %6240 = vset.pattern.permute.xlu0 0
        %6241 = vperm.xlu0 %6240, %v6234
        %v6242 = vpop.permute.xlu0 %6241
        %v6243 = vlaneseq
        %v6244 = vshrl.u32 %v6243, 7
        %v6245 = vsub.s32 %v961, %v6244
        %v6246 = vrot.slane %v6239, %v6245
        %v6247 = vlaneseq
        %v6248 = vshrl.u32 %v6247, 7
        %v6249 = vsub.s32 %v961, %v6248
        %v6250 = vrot.slane %v6242, %v6249
        %v6251 = vsel %vm970, %v6250, %v6246
        %v6253 = vsel %vm973, %v6251, -inf
        %6254 = vmax.xlane.f32.xlu0 %v6253
        %v6255 = vpop.xlane.xlu0 %6254
        %v6257 = vlaneseq
        %v6258 = vshrl.u32 %v6257, 7
        %v6259 = vsub.s32 0, %v6258
        %v6260 = vrot.slane %v6255, %v6259
        %v6261 = vlaneseq
        %v6262 = vshrl.u32 %v6261, 7
        %v6263 = vsub.s32 1, %v6262
        %v6264 = vrot.slane %v6255, %v6263
        %v6267 = vsub.f32 %v6233, %v6260
        %v6268 = vsub.f32 %v6234, %v6264
        %v6269 = vmul.f32 %v6267, 1.442695
        %v6270 = vpow.pop %v6269
        %v6271 = vmul.f32 %v6268, 1.442695
        %v6272 = vpow.pop %v6271
        %6275 = vset.pattern.permute.xlu0 0
        %6276 = vperm.xlu0 %6275, %v6270
        %v6277 = vpop.permute.xlu0 %6276
        %6278 = vset.pattern.permute.xlu0 0
        %6279 = vperm.xlu0 %6278, %v6272
        %v6280 = vpop.permute.xlu0 %6279
        %v6281 = vlaneseq
        %v6282 = vshrl.u32 %v6281, 7
        %v6283 = vsub.s32 %v961, %v6282
        %v6284 = vrot.slane %v6277, %v6283
        %v6285 = vlaneseq
        %v6286 = vshrl.u32 %v6285, 7
        %v6287 = vsub.s32 %v961, %v6286
        %v6288 = vrot.slane %v6280, %v6287
        %v6289 = vsel %vm970, %v6288, %v6284
        %v6291 = vsel %vm973, %v6289, 0.0
        %6292 = vadd.xlane.f32.xlu0 %v6291
        %v6293 = vpop.xlane.xlu0 %6292
        %v6294 = vrcp.pop %v6293
        %v6296 = vlaneseq
        %v6297 = vshrl.u32 %v6296, 7
        %v6298 = vsub.s32 0, %v6297
        %v6299 = vrot.slane %v6294, %v6298
        %v6300 = vlaneseq
        %v6301 = vshrl.u32 %v6300, 7
        %v6302 = vsub.s32 1, %v6301
        %v6303 = vrot.slane %v6294, %v6302
        %v6306 = vmul.f32 %v6270, %v6299
        %v6307 = vmul.f32 %v6272, %v6303
        %v6308 = vld [vmem:[%s1] sm:$0xff]
        %v6309 = vld [vmem:[%s1 + $0x8] sm:$0xff]
        %6311 = vset.pattern.permute.xlu0 0
        %6312 = vperm.xlu0 %6311, %v6306
        %v6313 = vpop.permute.xlu0 %6312
        %6316 = vset.pattern.permute.xlu0 0
        %6317 = vperm.xlu0 %6316, %v6307
        %v6318 = vpop.permute.xlu0 %6317
        %v6320 = vmul.f32 %v6313, %v6308
        %v6321 = vmul.f32 %v6318, %v6309
        %v6322 = vsel %vm745, %v6320, 0.0
        %v6323 = vrot.slane %v6322, 4
        %v6324 = vadd.f32 %v6322, %v6323
        %v6325 = vrot.slane %v6324, 2
        %v6326 = vadd.f32 %v6324, %v6325
        %v6327 = vrot.slane %v6326, 1
        %v6328 = vadd.f32 %v6326, %v6327
        %v6329 = vsel %vm745, %v6321, 0.0
        %v6330 = vrot.slane %v6329, 4
        %v6331 = vadd.f32 %v6329, %v6330
        %v6332 = vrot.slane %v6331, 2
        %v6333 = vadd.f32 %v6331, %v6332
        %v6334 = vrot.slane %v6333, 1
        %v6335 = vadd.f32 %v6333, %v6334
        %v6336 = vpack.c.bf16 %v6328, %v6328
        %v6337 = vpack.c.bf16 %v6335, %v6335
        %v6338 = vld [vmem:[%s10] sm:$0xf]
        %v6339 = vld [vmem:[%s10 + $0x4] sm:$0xf]
        %v6340 = vld [vmem:[%s10 + $0x8] sm:$0xf]
        %v6341 = vld [vmem:[%s10 + $0xc] sm:$0xf]
        %v6342 = vld [vmem:[%s10 + $0x10] sm:$0xf]
        %v6343 = vld [vmem:[%s10 + $0x14] sm:$0xf]
        %v6344 = vld [vmem:[%s10 + $0x18] sm:$0xf]
        %v6345 = vld [vmem:[%s10 + $0x1c] sm:$0xf]
        %v6346 = vld [vmem:[%s11] sm:$0x1]
        %v6348 = vlaneseq
        %v6349 = vshrl.u32 %v6348, 7
        %v6350 = vsub.s32 0, %v6349
        %v6351 = vrot.slane %v6346, %v6350
        %v6355 = vunpack.c.l.b16 %v6336
        %v6356 = vunpack.c.l.b16 %v6337
        %v6357 = vsel %vm970, %v6356, %v6355
        %v6358 = vpack.c.b16 %v6357, %v6357
        %v6367 = vunpack.c.l.b16 %v6338
        %v6368 = vunpack.c.l.b16 %v6339
        %v6369 = vunpack.c.l.b16 %v6340
        %v6370 = vunpack.c.l.b16 %v6341
        %v6371 = vunpack.c.l.b16 %v6342
        %v6372 = vunpack.c.l.b16 %v6343
        %v6373 = vunpack.c.l.b16 %v6344
        %v6374 = vunpack.c.l.b16 %v6345
        %v6375 = vpack.c.b16 %v6368, %v6367
        %v6376 = vpack.c.b16 %v6370, %v6369
        %v6377 = vpack.c.b16 %v6372, %v6371
        %v6378 = vpack.c.b16 %v6374, %v6373
        %v6384 = vsel %vm745, %v6358, 0
        %6386 = vmatprep.subr.bf16.mxu0 0
        %6387 = vmatpush1.bf16.msra.mxu0 %v6375
        %6388 = vmatprep.subr.bf16.mxu0 0
        %6389 = vmatpush1.bf16.msra.mxu0 %v6376
        %6390 = vmatprep.subr.bf16.mxu0 0
        %6391 = vmatpush1.bf16.msra.mxu0 %v6377
        %6392 = vmatprep.subr.bf16.mxu0 0
        %6393 = vmatpush1.bf16.msra.mxu0 %v6378
        %6394 = vmatprep.subr.bf16.mxu0 0
        %6395 = vmatpush1.bf16.msra.mxu0 0
        %6396 = vmatprep.subr.bf16.mxu0 0
        %6397 = vmatpush1.bf16.msra.mxu0 0
        %6398 = vmatprep.subr.bf16.mxu0 0
        %6399 = vmatpush1.bf16.msra.mxu0 0
        %6400 = vmatprep.subr.bf16.mxu0 0
        %6401 = vmatpush1.bf16.msra.mxu0 0
        %6402 = vmatprep.subr.bf16.mxu0 0
        %6403 = vmatpush1.bf16.msra.mxu0 0
        %6404 = vmatprep.subr.bf16.mxu0 0
        %6405 = vmatpush1.bf16.msra.mxu0 0
        %6406 = vmatprep.subr.bf16.mxu0 0
        %6407 = vmatpush1.bf16.msra.mxu0 0
        %6408 = vmatprep.subr.bf16.mxu0 0
        %6409 = vmatpush1.bf16.msra.mxu0 0
        %6410 = vmatprep.subr.bf16.mxu0 0
        %6411 = vmatpush1.bf16.msra.mxu0 0
        %6412 = vmatprep.subr.bf16.mxu0 0
        %6413 = vmatpush1.bf16.msra.mxu0 0
        %6414 = vmatprep.subr.bf16.mxu0 0
        %6415 = vmatpush1.bf16.msra.mxu0 0
        %6416 = vmatprep.subr.bf16.mxu0 0
        %6417 = vmatpush1.bf16.msra.mxu0 0
        %6418 = vmatprep.mubr.bf16.mxu0 0
        %6419 = vmatmul.mubr.bf16.gmra.mrb[0].mxu0 %v6384
        %v6420 = vpop.f32.mrb[0].mxu0
        %v6421 = vadd.f32 %v6351, %v6420
        %v6422 = vpop.f32.mrb[0].mxu0
        %v6423 = vpop.f32.mrb[0].mxu0
        %v6424 = vpop.f32.mrb[0].mxu0
        %6425 = vdwg.mxu0
        %v6426 = vpack.c.bf16 %v6421, %v6421
        %v6427 = vld [vmem:[%s13] sm:$0xf]
        %v6428 = vld [vmem:[%s13 + $0x4] sm:$0xf]
        %v6429 = vld [vmem:[%s13 + $0x8] sm:$0xf]
        %v6430 = vld [vmem:[%s13 + $0xc] sm:$0xf]
        %v6435 = vunpack.c.l.b16 %v6427
        %v6436 = vunpack.c.l.b16 %v6428
        %v6437 = vunpack.c.l.b16 %v6429
        %v6438 = vunpack.c.l.b16 %v6430
        %v6439 = vpack.c.b16 %v6436, %v6435
        %v6440 = vpack.c.b16 %v6438, %v6437
        %v6444 = vsel %vm609, %v6426, 0
        %6446 = vmatprep.subr.bf16.mxu0 0
        %6447 = vmatpush1.bf16.msra.mxu0 %v6439
        %6448 = vmatprep.subr.bf16.mxu0 0
        %6449 = vmatpush1.bf16.msra.mxu0 %v6440
        %6450 = vmatprep.subr.bf16.mxu0 0
        %6451 = vmatpush1.bf16.msra.mxu0 0
        %6452 = vmatprep.subr.bf16.mxu0 0
        %6453 = vmatpush1.bf16.msra.mxu0 0
        %6454 = vmatprep.subr.bf16.mxu0 0
        %6455 = vmatpush1.bf16.msra.mxu0 0
        %6456 = vmatprep.subr.bf16.mxu0 0
        %6457 = vmatpush1.bf16.msra.mxu0 0
        %6458 = vmatprep.subr.bf16.mxu0 0
        %6459 = vmatpush1.bf16.msra.mxu0 0
        %6460 = vmatprep.subr.bf16.mxu0 0
        %6461 = vmatpush1.bf16.msra.mxu0 0
        %6462 = vmatprep.subr.bf16.mxu0 0
        %6463 = vmatpush1.bf16.msra.mxu0 0
        %6464 = vmatprep.subr.bf16.mxu0 0
        %6465 = vmatpush1.bf16.msra.mxu0 0
        %6466 = vmatprep.subr.bf16.mxu0 0
        %6467 = vmatpush1.bf16.msra.mxu0 0
        %6468 = vmatprep.subr.bf16.mxu0 0
        %6469 = vmatpush1.bf16.msra.mxu0 0
        %6470 = vmatprep.subr.bf16.mxu0 0
        %6471 = vmatpush1.bf16.msra.mxu0 0
        %6472 = vmatprep.subr.bf16.mxu0 0
        %6473 = vmatpush1.bf16.msra.mxu0 0
        %6474 = vmatprep.subr.bf16.mxu0 0
        %6475 = vmatpush1.bf16.msra.mxu0 0
        %6476 = vmatprep.subr.bf16.mxu0 0
        %6477 = vmatpush1.bf16.msra.mxu0 0
        %6478 = vmatprep.mubr.bf16.mxu0 0
        %6479 = vmatmul.mubr.bf16.gmra.mrb[0].mxu0 %v6444
        %v6480 = vpop.f32.mrb[0].mxu0
        %v6481 = vadd.f32 0.0, %v6480
        %v6482 = vpop.f32.mrb[0].mxu0
        %v6483 = vpop.f32.mrb[0].mxu0
        %v6484 = vpop.f32.mrb[0].mxu0
        %6485 = vdwg.mxu0
        %v6486 = vld [vmem:[%s5] sm:$0x3]
        %v6487 = vadd.f32 %v6486, %v6481
        %6488 = vrot.lane.b32.xlu0 %v6166, 96
        %v6489 = vpop.permute.xlu0 %6488
        %v6491 = vadd.f32 %v6487, %v6489
        %v6492 = vxor.u32 %v6491, 2147483648
        %v6493 = vmul.f32 %v6492, 1.442695
        %v6494 = vpow.pop %v6493
        %v6495 = vadd.f32 %v6494, 1.0
        %v6496 = vrcp.pop %v6495
        %v6497 = vmul.f32 1.0, %v6496
        %v6498 = vld [vmem:[%s6] sm:$0x3]
        %6500 = vrot.lane.b32.xlu0 %v6481, 96
        %v6501 = vpop.permute.xlu0 %6500
        %v6503 = vadd.f32 %v6498, %v6501
        %6505 = vrot.lane.b32.xlu0 %v6166, 64
        %v6506 = vpop.permute.xlu0 %6505
        %6507 = vrot.lane.b32.xlu0 %v6168, 64
        %v6508 = vpop.permute.xlu0 %6507
        %v6509 = vsel %vm745, %v6506, %v6508
        %v6511 = vadd.f32 %v6503, %v6509
        %v6512 = vxor.u32 %v6511, 2147483648
        %v6513 = vmul.f32 %v6512, 1.442695
        %v6514 = vpow.pop %v6513
        %v6515 = vadd.f32 %v6514, 1.0
        %v6516 = vrcp.pop %v6515
        %v6517 = vmul.f32 1.0, %v6516
        %v6518 = vld [vmem:[%s4] sm:$0x3]
        %6520 = vrot.lane.b32.xlu0 %v6421, 64
        %v6521 = vpop.permute.xlu0 %6520
        %v6523 = vsel %vm745, %v6518, %v6521
        %v6524 = vmul.f32 %v6517, %v6523
        %v6525 = vpack.c.bf16 %v6524, %v6524
        %v6526 = vld [vmem:[%s14] sm:$0xf]
        %v6527 = vld [vmem:[%s14 + $0x4] sm:$0xf]
        %v6528 = vld [vmem:[%s14 + $0x8] sm:$0xf]
        %v6529 = vld [vmem:[%s14 + $0xc] sm:$0xf]
        %v6530 = vld [vmem:[%s14 + $0x10] sm:$0xf]
        %v6531 = vld [vmem:[%s14 + $0x14] sm:$0xf]
        %v6532 = vld [vmem:[%s14 + $0x18] sm:$0xf]
        %v6533 = vld [vmem:[%s14 + $0x1c] sm:$0xf]
        %v6534 = vld [vmem:[%s14 + $0x20] sm:$0xf]
        %v6535 = vld [vmem:[%s14 + $0x24] sm:$0xf]
        %v6536 = vld [vmem:[%s14 + $0x28] sm:$0xf]
        %v6537 = vld [vmem:[%s14 + $0x2c] sm:$0xf]
        %v6550 = vunpack.c.l.b16 %v6526
        %v6551 = vunpack.c.l.b16 %v6527
        %v6552 = vunpack.c.l.b16 %v6528
        %v6553 = vunpack.c.l.b16 %v6529
        %v6554 = vunpack.c.l.b16 %v6530
        %v6555 = vunpack.c.l.b16 %v6531
        %v6556 = vunpack.c.l.b16 %v6532
        %v6557 = vunpack.c.l.b16 %v6533
        %v6558 = vunpack.c.l.b16 %v6534
        %v6559 = vunpack.c.l.b16 %v6535
        %v6560 = vunpack.c.l.b16 %v6536
        %v6561 = vunpack.c.l.b16 %v6537
        %v6562 = vpack.c.b16 %v6551, %v6550
        %v6563 = vpack.c.b16 %v6553, %v6552
        %v6564 = vpack.c.b16 %v6555, %v6554
        %v6565 = vpack.c.b16 %v6557, %v6556
        %v6566 = vpack.c.b16 %v6559, %v6558
        %v6567 = vpack.c.b16 %v6561, %v6560
        %6574 = vrot.lane.b32.xlu0 %v6168, 96
        %v6575 = vpop.permute.xlu0 %6574
        %v6578 = vsel %vm1298, %v6525, 0
        %6580 = vmatprep.subr.bf16.mxu0 0
        %6581 = vmatpush1.bf16.msra.mxu0 %v6562
        %6582 = vmatprep.subr.bf16.mxu0 0
        %6583 = vmatpush1.bf16.msra.mxu0 %v6563
        %6584 = vmatprep.subr.bf16.mxu0 0
        %6585 = vmatpush1.bf16.msra.mxu0 %v6564
        %6586 = vmatprep.subr.bf16.mxu0 0
        %6587 = vmatpush1.bf16.msra.mxu0 %v6565
        %6588 = vmatprep.subr.bf16.mxu0 0
        %6589 = vmatpush1.bf16.msra.mxu0 %v6566
        %6590 = vmatprep.subr.bf16.mxu0 0
        %6591 = vmatpush1.bf16.msra.mxu0 %v6567
        %6592 = vmatprep.subr.bf16.mxu0 0
        %6593 = vmatpush1.bf16.msra.mxu0 0
        %6594 = vmatprep.subr.bf16.mxu0 0
        %6595 = vmatpush1.bf16.msra.mxu0 0
        %6596 = vmatprep.subr.bf16.mxu0 0
        %6597 = vmatpush1.bf16.msra.mxu0 0
        %6598 = vmatprep.subr.bf16.mxu0 0
        %6599 = vmatpush1.bf16.msra.mxu0 0
        %6600 = vmatprep.subr.bf16.mxu0 0
        %6601 = vmatpush1.bf16.msra.mxu0 0
        %6602 = vmatprep.subr.bf16.mxu0 0
        %6603 = vmatpush1.bf16.msra.mxu0 0
        %6604 = vmatprep.subr.bf16.mxu0 0
        %6605 = vmatpush1.bf16.msra.mxu0 0
        %6606 = vmatprep.subr.bf16.mxu0 0
        %6607 = vmatpush1.bf16.msra.mxu0 0
        %6608 = vmatprep.subr.bf16.mxu0 0
        %6609 = vmatpush1.bf16.msra.mxu0 0
        %6610 = vmatprep.subr.bf16.mxu0 0
        %6611 = vmatpush1.bf16.msra.mxu0 0
        %6612 = vmatprep.mubr.bf16.mxu0 0
        %6613 = vmatmul.mubr.bf16.gmra.mrb[0].mxu0 %v6578
        %v6614 = vpop.f32.mrb[0].mxu0
        %v6615 = vadd.f32 %v6575, %v6614
        %v6616 = vpop.f32.mrb[0].mxu0
        %v6617 = vpop.f32.mrb[0].mxu0
        %v6618 = vpop.f32.mrb[0].mxu0
        %6619 = vdwg.mxu0
        %v6620 = vld [vmem:[%s15] sm:$0x1]
        %v6622 = vlaneseq
        %v6623 = vshrl.u32 %v6622, 7
        %v6624 = vsub.s32 0, %v6623
        %v6625 = vrot.slane %v6620, %v6624
        %v6627 = vadd.f32 %v6615, %v6625
        %v6628 = vtanh.pop %v6627
        %v6629 = vsub.f32 1.0, %v6497
        %6631 = vrot.lane.b32.xlu0 %v6099, 32
        %v6632 = vpop.permute.xlu0 %6631
        %v6634 = vmul.f32 %v6629, %v6632
        %v6635 = vmul.f32 %v6497, %v6628
        %v6636 = vadd.f32 %v6634, %v6635
        %s6637 = scalar_lea.vmem %s571, 14
        %6638 = vst.msk [vmem:[%s6637] sm:$0x3] %vm1359, %v6636
        %v6639 = vsel %vm5881, %v5976, %v4463
        %v6640 = vsel %vm5881, %v5970, %v4457
        %v6641 = vsel %vm5881, %v6636, %v5123
        %v6642 = vsel %vm5881, %v6093, %v4580
        %v6645 = vunpack.c.l.s4 1983009808
        %v6646 = vunpack.c.0.s8 %v6645
        %v6647 = vlaneseq
        %v6648 = vshrl.u32 %v6647, 7
        %v6649 = vsub.s32 %v6646, %v6648
        %v6650 = vrot.slane %v6639, %v6649
        %6651 = vrot.lane.b32.xlu0 %v6650, 32
        %v6652 = vpop.permute.xlu0 %6651
        %6654 = vst.msk [vmem:[#allocation2] sm:$0x3] %vm1359, %v6652
        %v6657 = vunpack.c.l.s4 1983009808
        %v6658 = vunpack.c.0.s8 %v6657
        %v6659 = vlaneseq
        %v6660 = vshrl.u32 %v6659, 7
        %v6661 = vsub.s32 %v6658, %v6660
        %v6662 = vrot.slane %v6640, %v6661
        %6663 = vrot.lane.b32.xlu0 %v6662, 96
        %v6664 = vpop.permute.xlu0 %6663
        %6666 = vst.msk [vmem:[#allocation4] sm:$0x3] %vm1359, %v6664
        %6667 = vst.msk [vmem:[%s586] sm:$0x3] %vm1359, %v6641
        %6669 = vrot.lane.b32.xlu0 %v6642, 96
        %v6670 = vpop.permute.xlu0 %6669
        %6672 = vst.msk [vmem:[%s588] sm:$0x3] %vm1359, %v6670
        %s6673 = smul.u32 8, %s32
        %p6674 = scmp.lt.s32.totalorder %s6673, 15
        %s6675 = scalar_select %p6674, %s6673, 15
        %s6676 = smul.addr %s6675, 2
        %s6677 = scalar_lea.vmem %s16, %s6676
        // Predicated region
        $region89: #{morpheme_ext_forward.1} parent=83 // pred_check
          %p6678 = pneg %p391
        $region90: #{morpheme_ext_forward.1} parent=83 // pred_check_branch
          %6680 = sbr.rel (%p6678) target = $region92
        $region91: #{morpheme_ext_forward.1} parent=83 // pred_region
          %s6681 = smul.u32 8, %s32
        $region92: #{morpheme_ext_forward.1} parent=83 // pred_fallthru
          _
        // Predicated region
        $region93: #{morpheme_ext_forward.1} parent=83 // pred_check
          %p6682 = pneg %p412
        $region94: #{morpheme_ext_forward.1} parent=83 // pred_check_branch
          %6684 = sbr.rel (%p6682) target = $region96
        $region95: #{morpheme_ext_forward.1} parent=83 // pred_region
          %s6686 = ssub.s32 64, 64
          %6687 = vsyncadd [#allocation3], %s6686
          %s6688 = sshll.u32 [#allocation2], 4
          %s6689 = int_to_ptr.vmem [resolvable:$true] %s6688
          %6694 = dma.vmem_to_hbm [thread:$0]  %s6689, 64, %s17, [#allocation3], 32, 32, 2
        $region96: #{morpheme_ext_forward.1} parent=83 // pred_fallthru
          _
        // Predicated region
        $region97: #{morpheme_ext_forward.1} parent=83 // pred_check
          %p6695 = pneg %p433
        $region98: #{morpheme_ext_forward.1} parent=83 // pred_check_branch
          %6697 = sbr.rel (%p6695) target = $region100
        $region99: #{morpheme_ext_forward.1} parent=83 // pred_region
          %s6699 = ssub.s32 64, 64
          %6700 = vsyncadd [#allocation5], %s6699
          %s6701 = sshll.u32 [#allocation4], 4
          %s6702 = int_to_ptr.vmem [resolvable:$true] %s6701
          %6707 = dma.vmem_to_hbm [thread:$0]  %s6702, 64, %s18, [#allocation5], 32, 32, 2
        $region100: #{morpheme_ext_forward.1} parent=83 // pred_fallthru
          _
        // Predicated region
        $region101: #{morpheme_ext_forward.1} parent=83 // pred_check
          %p6708 = pneg %p412
        $region102: #{morpheme_ext_forward.1} parent=83 // pred_check_branch
          %6710 = sbr.rel (%p6708) target = $region104
        $region103: #{morpheme_ext_forward.1} parent=83 // pred_region
          %6711 = dma.done [#allocation3], 64
        $region104: #{morpheme_ext_forward.1} parent=83 // pred_fallthru
          _
        // Predicated region
        $region105: #{morpheme_ext_forward.1} parent=83 // pred_check
          %p6712 = pneg %p433
        $region106: #{morpheme_ext_forward.1} parent=83 // pred_check_branch
          %6714 = sbr.rel (%p6712) target = $region108
        $region107: #{morpheme_ext_forward.1} parent=83 // pred_region
          %6715 = dma.done [#allocation5], 64
        $region108: #{morpheme_ext_forward.1} parent=83 // pred_fallthru
          _
      $region84: #{morpheme_ext_forward.1} parent=5 // pred_fallthru
        _
      %p6716 = scmp.le.s32.totalorder 2, %s27
      // Predicated region
      $region109: #{morpheme_ext_forward.1} parent=5 // pred_check
        %p6717 = pneg %p6716
      $region110: #{morpheme_ext_forward.1} parent=5 // pred_check_branch
        %6719 = sbr.rel (%p6717) target = $region112
      $region111: #{morpheme_ext_forward.1} parent=5 // pred_region
        %s6720 = ssub.s32 %s27, 2
        // Predicated region
        $region113: #{morpheme_ext_forward.1} parent=111 // pred_check
          %p6721 = pneg %p397
        $region114: #{morpheme_ext_forward.1} parent=111 // pred_check_branch
          %6723 = sbr.rel (%p6721) target = $region116
        $region115: #{morpheme_ext_forward.1} parent=111 // pred_region
          %s6724 = smul.u32 8, %s33
          %p6725 = scmp.lt.s32.totalorder %s6724, 15
          %s6726 = scalar_select %p6725, %s6724, 15
          %s6727 = smul.addr %s6726, 2
          %s6728 = scalar_lea.vmem %s16, %s6727
        $region116: #{morpheme_ext_forward.1} parent=111 // pred_fallthru
          _
      $region112: #{morpheme_ext_forward.1} parent=5 // pred_fallthru
        _
    $region6: #{morpheme_ext_forward.1} parent=1 // loop_footer
      %s31 = sadd.s32 1, %s27
    $region7: #{morpheme_ext_forward.1} parent=1 // loop_footer_branch
      %26 = sbr.rel target = $region3
    $region8: #{morpheme_ext_forward.1} parent=1 // loop_exit
      _
    %6729 = vsyncpa [#allocation3], 1
    %s6730 = scalar_lea.sflag [#allocation3], 1
    %6731 = vsyncpa %s6730, 1
    %6732 = vsyncpa [#allocation5], 1

</llo_original>
